<compile_context>
chip_gen: v6e
topology: v6e:2x2x1
jax: 0.10.0
libtpu: 0.0.40
codegen_flags: <defaults>
</compile_context>

<pallas_src>
import jax
import jax.numpy as jnp
from jax import lax
from jax.experimental import pallas as pl
from jax.experimental.pallas import tpu as pltpu


def attention_kernel(x_ref, wqkv_ref, wout_ref, gamma_ref, bias_ref, o_ref):
    # x_ref:     (M, d)        f32, M = Bt * n  (Bt windows x n tokens per grid step)
    # wqkv_ref:  (d, 3*d)      bf16 fused QKV weight, lane slabs [Q | K | V],
    #                          head-major within each slab; 1/sqrt(dh) folded into Q.
    # wout_ref:  (d, d)        bf16 output projection (rows head-major).
    # gamma_ref: (1, d)        f32 LayerNorm weight (beta == 0, eps = 1e-5).
    # bias_ref:  (heads, n, n) f32 relative-position bias.
    # o_ref:     (M, d)        f32
    M, d = x_ref.shape
    heads, n, _ = bias_ref.shape
    dh = d // heads
    bt = M // n
    inv_d = 1.0 / d

    x = x_ref[...]

    # --- LayerNorm (two-pass mean / variance, matches F.layer_norm with beta=0) ---
    mean = jnp.sum(x, axis=-1, keepdims=True) * inv_d
    xc = x - mean
    var = jnp.sum(xc * xc, axis=-1, keepdims=True) * inv_d
    xn = xc * lax.rsqrt(var + 1e-5) * gamma_ref[...]
    xn = xn.astype(jnp.bfloat16)                                    # (M, d)

    # --- fused QKV projection: single full-width matmul, K=d, N=3d ---
    qkv = jnp.dot(xn, wqkv_ref[...],
                  preferred_element_type=jnp.float32)               # (M, 3d) f32

    def split_heads(t2):
        # (M, d) lane-contiguous slab -> (heads*bt, n, dh) batch-per-head
        t = t2.reshape(bt, n, heads, dh)
        t = jnp.transpose(t, (2, 0, 1, 3))                          # (heads, bt, n, dh)
        return t.reshape(heads * bt, n, dh).astype(jnp.bfloat16)

    q = split_heads(qkv[:, :d])             # query scale already folded into weight
    k = split_heads(qkv[:, d:2 * d])
    v = split_heads(qkv[:, 2 * d:])

    # --- biased softmax attention, batched over heads x windows ---
    sim = jnp.einsum("bqd,bkd->bqk", q, k,
                     preferred_element_type=jnp.float32)            # (heads*bt, n, n)
    # implicit broadcast of the (heads, 1, n, n) bias — no materialized copy
    sim = sim.reshape(heads, bt, n, n) + bias_ref[...][:, None]
    sim = sim.reshape(heads * bt, n, n)
    sim = sim - jnp.max(sim, axis=-1, keepdims=True)
    p = jnp.exp(sim)
    attn = p * pl.reciprocal(jnp.sum(p, axis=-1, keepdims=True), approx=True)
    attn = attn.astype(jnp.bfloat16)

    ctx = jnp.einsum("bqk,bkd->bqd", attn, v,
                     preferred_element_type=jnp.float32)            # (heads*bt, n, dh)

    # --- fused output projection: merge heads back onto lanes, single K=d matmul ---
    ctx = jnp.transpose(ctx.reshape(heads, bt, n, dh), (1, 2, 0, 3))  # (bt, n, heads, dh)
    ctx = ctx.reshape(M, d).astype(jnp.bfloat16)
    o_ref[...] = jnp.dot(ctx, wout_ref[...],
                         preferred_element_type=jnp.float32)        # (M, d) f32


def _vmem_capacity_bytes():
    try:
        return int(pltpu.get_tpu_info().vmem_capacity_bytes)
    except Exception:
        return 64 * 1024 * 1024   # conservative default (v7x per-TC VMEM)


def _pick_block_windows(num_windows, n, d, heads, vmem_bytes):
    """Largest divisor Bt of num_windows whose working set fits the VMEM budget,
    preferring >= 2 grid steps (v7x has 2 TensorCores) and an even step count."""
    # rough VMEM bytes per activation row: in/out blocks (double-buffered) plus
    # xn, qkv, q/k/v, sim/attn, ctx temporaries
    per_row = 50 * d + 4 * heads * n
    budget = int(0.40 * vmem_bytes)
    max_rows = max(n, budget // max(per_row, 1))
    divisors = [t for t in range(1, num_windows + 1) if num_windows % t == 0]
    fit = [t for t in divisors if t * n <= max_rows] or [1]
    multi = [t for t in fit if num_windows // t >= 2] or fit
    bt = max(multi)
    even = [t for t in multi if (num_windows // t) % 2 == 0]
    if even and max(even) * 2 >= bt:
        bt = max(even)
    return bt


def windowed_attention(x, w_qkv, w_out, gamma, bias, block_windows=None):
    """x: (b, h, w, w1, w2, d) f32.  Returns the same shape (f32)."""
    b, hgt, wid, w1, w2, d = x.shape
    heads = bias.shape[0]
    dh = d // heads
    n = w1 * w2
    B = b * hgt * wid

    vmem_bytes = _vmem_capacity_bytes()
    if block_windows is None:
        block_windows = _pick_block_windows(B, n, d, heads, vmem_bytes)
    bt = block_windows
    assert B % bt == 0
    m_blk = bt * n

    x2 = x.reshape(B * n, d)
    gamma2 = gamma.reshape(1, d)

    # Fused QKV weight (d, 3d) bf16 with 1/sqrt(dh) folded into the Q columns;
    # column layout is three lane-contiguous slabs [Q | K | V], head-major inside.
    scale = dh ** -0.5
    w_qkv_f = jnp.concatenate([w_qkv[:, :d] * scale, w_qkv[:, d:]], axis=1)
    w_qkv_f = w_qkv_f.astype(jnp.bfloat16)
    w_out_f = w_out.astype(jnp.bfloat16)
    bias_f32 = bias.astype(jnp.float32)

    vmem_limit = int(min(100 * 1024 * 1024, 0.75 * vmem_bytes))

    def run(single_buffer_consts):
        def const_spec(shape, index_map):
            # Constant-index blocks are DMA'd once; single-buffer them to halve
            # their VMEM footprint (feedback item).
            if single_buffer_consts:
                return pl.BlockSpec(shape, index_map, pipeline_mode=pl.Buffered(1))
            return pl.BlockSpec(shape, index_map)

        grid_spec = pltpu.PrefetchScalarGridSpec(
            num_scalar_prefetch=0,
            grid=(B // bt,),
            in_specs=[
                pl.BlockSpec((m_blk, d), lambda i: (i, 0)),
                const_spec((d, 3 * d), lambda i: (0, 0)),
                const_spec((d, d), lambda i: (0, 0)),
                const_spec((1, d), lambda i: (0, 0)),
                const_spec((heads, n, n), lambda i: (0, 0, 0)),
            ],
            out_specs=pl.BlockSpec((m_blk, d), lambda i: (i, 0)),
        )
        out = pl.pallas_call(
            attention_kernel,
            out_shape=jax.ShapeDtypeStruct((B * n, d), jnp.float32),
            grid_spec=grid_spec,
            compiler_params=pltpu.CompilerParams(
                dimension_semantics=("parallel",),
                vmem_limit_bytes=vmem_limit),
        )(x2, w_qkv_f, w_out_f, gamma2, bias_f32)
        return jax.block_until_ready(out)

    try:
        out2 = run(single_buffer_consts=True)
    except Exception:
        # Older Pallas releases may reject pipeline_mode=Buffered(1); fall back.
        out2 = run(single_buffer_consts=False)

    return out2.reshape(b, hgt, wid, w1, w2, d)


def make_rel_pos_bias(emb_table, window_size):
    """Replicates the PyTorch rel_pos_indices construction + embedding lookup."""
    pos = jnp.arange(window_size)
    gi, gj = jnp.meshgrid(pos, pos, indexing="ij")
    grid = jnp.stack([gi, gj], axis=0)
    grid = grid.reshape(2, -1).T
    rel_pos = grid[:, None, :] - grid[None, :, :]
    rel_pos = rel_pos + (window_size - 1)
    idx = (rel_pos * jnp.array([2 * window_size - 1, 1])).sum(-1)
    bias = emb_table[idx]                                       # (n, n, heads)
    return jnp.transpose(bias, (2, 0, 1)).astype(jnp.float32)   # (heads, n, n)


def reference(x, w_qkv, w_out, gamma, bias):
    b, hgt, wid, w1, w2, d = x.shape
    heads = bias.shape[0]
    dh = d // heads
    n = w1 * w2
    mean = jnp.mean(x, axis=-1, keepdims=True)
    var = jnp.mean((x - mean) ** 2, axis=-1, keepdims=True)
    xn = (x - mean) / jnp.sqrt(var + 1e-5) * gamma
    xf = xn.reshape(-1, n, d)
    qkv = xf @ w_qkv
    q, k, v = jnp.split(qkv, 3, axis=-1)

    def to_heads(t):
        return jnp.transpose(t.reshape(-1, n, heads, dh), (0, 2, 1, 3))

    q, k, v = map(to_heads, (q, k, v))
    q = q * (dh ** -0.5)
    sim = jnp.einsum("bhid,bhjd->bhij", q, k) + bias[None]
    attn = jax.nn.softmax(sim, axis=-1)
    out = jnp.einsum("bhij,bhjd->bhid", attn, v)
    out = jnp.transpose(out, (0, 2, 1, 3)).reshape(-1, n, d)
    out = out @ w_out
    return out.reshape(b, hgt, wid, w1, w2, d)


if __name__ == "__main__":
    # small config: dim=64, dim_head=32 -> heads=2, window_size=4 -> n=16
    dim = 64
    dim_head = 32
    heads = dim // dim_head
    window_size = 4
    batch, height, width = 2, 2, 2

    key = jax.random.PRNGKey(0)
    k1, k2, k3, k4 = jax.random.split(key, 4)

    x = jax.random.normal(
        k1, (batch, height, width, window_size, window_size, dim), jnp.float32)
    w_qkv = jax.random.normal(k2, (dim, 3 * dim), jnp.float32) * 0.05
    w_out = jax.random.normal(k3, (dim, dim), jnp.float32) * 0.05
    gamma = jnp.ones((dim,), jnp.float32)
    emb_table = jax.random.normal(
        k4, ((2 * window_size - 1) ** 2, heads), jnp.float32) * 0.02

    bias = make_rel_pos_bias(emb_table, window_size)

    out = windowed_attention(x, w_qkv, w_out, gamma, bias)
    out = jax.block_until_ready(out)

    ref = reference(x, w_qkv, w_out, gamma, bias)
    assert out.shape == ref.shape
    # bf16 MXU operands + approx reciprocal -> ~1e-2 relative error vs f32 ref.
    assert jnp.allclose(out, ref, atol=3e-2, rtol=3e-2), "mismatch vs reference"

    print("KERNEL_OK")
</pallas_src>

<mosaic_0001>
module attributes {stable_mosaic.version = 11 : i64} {
  func.func @attention_kernel(%arg0: i32, %arg1: memref<64x64xf32, #tpu.memory_space<vmem>>, %arg2: memref<64x192xbf16, #tpu.memory_space<vmem>>, %arg3: memref<64x64xbf16, #tpu.memory_space<vmem>>, %arg4: memref<1x64xf32, #tpu.memory_space<vmem>>, %arg5: memref<2x16x16xf32, #tpu.memory_space<vmem>>, %arg6: memref<64x64xf32, #tpu.memory_space<vmem>>) attributes {dimension_semantics = [#tpu.dimension_semantics<parallel>], iteration_bounds = array<i64: 2>, scalar_prefetch = 0 : i64, scratch_operands = 0 : i64, tpu.core_type = #tpu.core_type<tc>, window_params = [{transform_indices = @transform_0, window_bounds = array<i64: 64, 64>}, {pipeline_mode = #tpu.pipeline_mode<synchronous>, transform_indices = @transform_1, window_bounds = array<i64: 64, 192>}, {pipeline_mode = #tpu.pipeline_mode<synchronous>, transform_indices = @transform_2, window_bounds = array<i64: 64, 64>}, {pipeline_mode = #tpu.pipeline_mode<synchronous>, transform_indices = @transform_3, window_bounds = array<i64: 1, 64>}, {pipeline_mode = #tpu.pipeline_mode<synchronous>, transform_indices = @transform_4, window_bounds = array<i64: 2, 16, 16>}, {transform_indices = @transform_5, window_bounds = array<i64: 64, 64>}]} {
    %c0 = arith.constant 0 : index
    %c0_0 = arith.constant 0 : index
    %0 = vector.load %arg1[%c0, %c0_0] : memref<64x64xf32, #tpu.memory_space<vmem>>, vector<64x64xf32>
    %cst = arith.constant dense<0.000000e+00> : vector<64xf32>
    %1 = vector.multi_reduction <add>, %0, %cst [1] : vector<64x64xf32> to vector<64xf32>
    %2 = vector.shape_cast %1 : vector<64xf32> to vector<64x1xf32>
    %cst_1 = arith.constant 1.562500e-02 : f32
    %3 = vector.broadcast %cst_1 : f32 to vector<64x1xf32>
    %4 = arith.mulf %2, %3 : vector<64x1xf32>
    %5 = vector.broadcast %4 : vector<64x1xf32> to vector<64x64xf32>
    %6 = arith.subf %0, %5 : vector<64x64xf32>
    %7 = arith.mulf %6, %6 : vector<64x64xf32>
    %cst_2 = arith.constant dense<0.000000e+00> : vector<64xf32>
    %8 = vector.multi_reduction <add>, %7, %cst_2 [1] : vector<64x64xf32> to vector<64xf32>
    %9 = vector.shape_cast %8 : vector<64xf32> to vector<64x1xf32>
    %cst_3 = arith.constant 1.562500e-02 : f32
    %10 = vector.broadcast %cst_3 : f32 to vector<64x1xf32>
    %11 = arith.mulf %9, %10 : vector<64x1xf32>
    %cst_4 = arith.constant 9.99999974E-6 : f32
    %12 = vector.broadcast %cst_4 : f32 to vector<64x1xf32>
    %13 = arith.addf %11, %12 : vector<64x1xf32>
    %14 = math.rsqrt %13 : vector<64x1xf32>
    %15 = vector.broadcast %14 : vector<64x1xf32> to vector<64x64xf32>
    %16 = arith.mulf %6, %15 : vector<64x64xf32>
    %c0_5 = arith.constant 0 : index
    %c0_6 = arith.constant 0 : index
    %17 = vector.load %arg4[%c0_5, %c0_6] : memref<1x64xf32, #tpu.memory_space<vmem>>, vector<1x64xf32>
    %18 = vector.broadcast %17 : vector<1x64xf32> to vector<64x64xf32>
    %19 = arith.mulf %16, %18 : vector<64x64xf32>
    %20 = arith.truncf %19 : vector<64x64xf32> to vector<64x64xbf16>
    %c0_7 = arith.constant 0 : index
    %c0_8 = arith.constant 0 : index
    %21 = vector.load %arg2[%c0_7, %c0_8] : memref<64x192xbf16, #tpu.memory_space<vmem>>, vector<64x192xbf16>
    %cst_9 = arith.constant dense<0.000000e+00> : vector<64x192xf32>
    %22 = tpu.matmul %20, %21, %cst_9 {dimension_numbers = #tpu.dot_dimension_numbers<[1], [0], [0], [1], [0, 0, 1, 1], [], []>} : vector<64x64xbf16>, vector<64x192xbf16>, vector<64x192xf32> -> vector<64x192xf32>
    %23 = vector.extract_strided_slice %22 {offsets = [0, 0], sizes = [64, 64], strides = [1, 1]} : vector<64x192xf32> to vector<64x64xf32>
    %24 = vector.shape_cast %23 : vector<64x64xf32> to vector<4x16x2x32xf32>
    %25 = tpu.transpose %24, [2, 0, 1, 3] : vector<4x16x2x32xf32> -> vector<2x4x16x32xf32>
    %26 = vector.shape_cast %25 : vector<2x4x16x32xf32> to vector<8x16x32xf32>
    %27 = arith.truncf %26 : vector<8x16x32xf32> to vector<8x16x32xbf16>
    %28 = vector.extract_strided_slice %22 {offsets = [0, 64], sizes = [64, 64], strides = [1, 1]} : vector<64x192xf32> to vector<64x64xf32>
    %29 = vector.shape_cast %28 : vector<64x64xf32> to vector<4x16x2x32xf32>
    %30 = tpu.transpose %29, [2, 0, 1, 3] : vector<4x16x2x32xf32> -> vector<2x4x16x32xf32>
    %31 = vector.shape_cast %30 : vector<2x4x16x32xf32> to vector<8x16x32xf32>
    %32 = arith.truncf %31 : vector<8x16x32xf32> to vector<8x16x32xbf16>
    %33 = vector.extract_strided_slice %22 {offsets = [0, 128], sizes = [64, 64], strides = [1, 1]} : vector<64x192xf32> to vector<64x64xf32>
    %34 = vector.shape_cast %33 : vector<64x64xf32> to vector<4x16x2x32xf32>
    %35 = tpu.transpose %34, [2, 0, 1, 3] : vector<4x16x2x32xf32> -> vector<2x4x16x32xf32>
    %36 = vector.shape_cast %35 : vector<2x4x16x32xf32> to vector<8x16x32xf32>
    %37 = arith.truncf %36 : vector<8x16x32xf32> to vector<8x16x32xbf16>
    "tpu.trace_start"() <{level = 10 : i32, message = "bqd,bkd->bqk"}> : () -> ()
    %cst_10 = arith.constant dense<0.000000e+00> : vector<8x16x16xf32>
    %38 = tpu.matmul %27, %32, %cst_10 {dimension_numbers = #tpu.dot_dimension_numbers<[2], [2], [1], [1], [0, 0, 0, 1, 1, 1], [0], [0]>} : vector<8x16x32xbf16>, vector<8x16x32xbf16>, vector<8x16x16xf32> -> vector<8x16x16xf32>
    "tpu.trace_stop"() : () -> ()
    %39 = vector.shape_cast %38 : vector<8x16x16xf32> to vector<2x4x16x16xf32>
    %c0_11 = arith.constant 0 : index
    %c0_12 = arith.constant 0 : index
    %c0_13 = arith.constant 0 : index
    %40 = vector.load %arg5[%c0_11, %c0_12, %c0_13] : memref<2x16x16xf32, #tpu.memory_space<vmem>>, vector<2x16x16xf32>
    %41 = vector.shape_cast %40 : vector<2x16x16xf32> to vector<2x1x16x16xf32>
    %42 = vector.broadcast %41 : vector<2x1x16x16xf32> to vector<2x4x16x16xf32>
    %43 = arith.addf %39, %42 : vector<2x4x16x16xf32>
    %44 = vector.shape_cast %43 : vector<2x4x16x16xf32> to vector<8x16x16xf32>
    %cst_14 = arith.constant dense<0xFF800000> : vector<8x16xf32>
    %45 = vector.multi_reduction <maximumf>, %44, %cst_14 [2] : vector<8x16x16xf32> to vector<8x16xf32>
    %46 = vector.shape_cast %45 : vector<8x16xf32> to vector<8x16x1xf32>
    %47 = vector.broadcast %46 : vector<8x16x1xf32> to vector<8x16x16xf32>
    %48 = arith.subf %44, %47 : vector<8x16x16xf32>
    %49 = math.exp %48 : vector<8x16x16xf32>
    %cst_15 = arith.constant dense<0.000000e+00> : vector<8x16xf32>
    %50 = vector.multi_reduction <add>, %49, %cst_15 [2] : vector<8x16x16xf32> to vector<8x16xf32>
    %51 = vector.shape_cast %50 : vector<8x16xf32> to vector<8x16x1xf32>
    %52 = tpu.reciprocal %51 {approx = true} : vector<8x16x1xf32> -> vector<8x16x1xf32>
    %53 = vector.broadcast %52 : vector<8x16x1xf32> to vector<8x16x16xf32>
    %54 = arith.mulf %49, %53 : vector<8x16x16xf32>
    %55 = arith.truncf %54 : vector<8x16x16xf32> to vector<8x16x16xbf16>
    "tpu.trace_start"() <{level = 10 : i32, message = "bqk,bkd->bqd"}> : () -> ()
    %cst_16 = arith.constant dense<0.000000e+00> : vector<8x16x32xf32>
    %56 = tpu.matmul %55, %37, %cst_16 {dimension_numbers = #tpu.dot_dimension_numbers<[2], [1], [1], [2], [0, 0, 0, 1, 1, 2], [0], [0]>} : vector<8x16x16xbf16>, vector<8x16x32xbf16>, vector<8x16x32xf32> -> vector<8x16x32xf32>
    "tpu.trace_stop"() : () -> ()
    %57 = vector.shape_cast %56 : vector<8x16x32xf32> to vector<2x4x16x32xf32>
    %58 = tpu.transpose %57, [1, 2, 0, 3] : vector<2x4x16x32xf32> -> vector<4x16x2x32xf32>
    %59 = vector.shape_cast %58 : vector<4x16x2x32xf32> to vector<64x64xf32>
    %60 = arith.truncf %59 : vector<64x64xf32> to vector<64x64xbf16>
    %c0_17 = arith.constant 0 : index
    %c0_18 = arith.constant 0 : index
    %61 = vector.load %arg3[%c0_17, %c0_18] : memref<64x64xbf16, #tpu.memory_space<vmem>>, vector<64x64xbf16>
    %cst_19 = arith.constant dense<0.000000e+00> : vector<64x64xf32>
    %62 = tpu.matmul %60, %61, %cst_19 {dimension_numbers = #tpu.dot_dimension_numbers<[1], [0], [0], [1], [0, 0, 1, 1], [], []>} : vector<64x64xbf16>, vector<64x64xbf16>, vector<64x64xf32> -> vector<64x64xf32>
    %c0_20 = arith.constant 0 : index
    %c0_21 = arith.constant 0 : index
    %63 = vector.load %arg6[%c0_20, %c0_21] : memref<64x64xf32, #tpu.memory_space<vmem>>, vector<64x64xf32>
    tpu.vector_store %arg6[%c0_20, %c0_21], %62 {strides = array<i32>} : memref<64x64xf32, #tpu.memory_space<vmem>>, vector<64x64xf32>,
    return
  }
  func.func @transform_0(%arg0: i32) -> (i32, i32) {
    %c0_i32 = arith.constant 0 : i32
    %c0_i32_0 = arith.constant 0 : i32
    return %arg0, %c0_i32 : i32, i32
  }
  func.func @transform_1(%arg0: i32) -> (i32, i32) {
    %c0_i32 = arith.constant 0 : i32
    %c0_i32_0 = arith.constant 0 : i32
    %c0_i32_1 = arith.constant 0 : i32
    return %c0_i32, %c0_i32_0 : i32, i32
  }
  func.func @transform_2(%arg0: i32) -> (i32, i32) {
    %c0_i32 = arith.constant 0 : i32
    %c0_i32_0 = arith.constant 0 : i32
    %c0_i32_1 = arith.constant 0 : i32
    return %c0_i32, %c0_i32_0 : i32, i32
  }
  func.func @transform_3(%arg0: i32) -> (i32, i32) {
    %c0_i32 = arith.constant 0 : i32
    %c0_i32_0 = arith.constant 0 : i32
    %c0_i32_1 = arith.constant 0 : i32
    return %c0_i32, %c0_i32_0 : i32, i32
  }
  func.func @transform_4(%arg0: i32) -> (i32, i32, i32) {
    %c0_i32 = arith.constant 0 : i32
    %c0_i32_0 = arith.constant 0 : i32
    %c0_i32_1 = arith.constant 0 : i32
    %c0_i32_2 = arith.constant 0 : i32
    return %c0_i32, %c0_i32_0, %c0_i32_1 : i32, i32, i32
  }
  func.func @transform_5(%arg0: i32) -> (i32, i32) {
    %c0_i32 = arith.constant 0 : i32
    %c0_i32_0 = arith.constant 0 : i32
    return %arg0, %c0_i32 : i32, i32
  }
}

module attributes {stable_mosaic.version = 11 : i64} {
  func.func @attention_kernel(%arg0: i32, %arg1: memref<64x64xf32, #tpu.memory_space<vmem>>, %arg2: memref<64x192xbf16, #tpu.memory_space<vmem>>, %arg3: memref<64x64xbf16, #tpu.memory_space<vmem>>, %arg4: memref<1x64xf32, #tpu.memory_space<vmem>>, %arg5: memref<2x16x16xf32, #tpu.memory_space<vmem>>, %arg6: memref<64x64xf32, #tpu.memory_space<vmem>>) attributes {dimension_semantics = [#tpu.dimension_semantics<parallel>], iteration_bounds = array<i64: 2>, scalar_prefetch = 0 : i64, scratch_operands = 0 : i64, tpu.core_type = #tpu.core_type<tc>, window_params = [{transform_indices = @transform_0, window_bounds = array<i64: 64, 64>}, {pipeline_mode = #tpu.pipeline_mode<synchronous>, transform_indices = @transform_1, window_bounds = array<i64: 64, 192>}, {pipeline_mode = #tpu.pipeline_mode<synchronous>, transform_indices = @transform_2, window_bounds = array<i64: 64, 64>}, {pipeline_mode = #tpu.pipeline_mode<synchronous>, transform_indices = @transform_3, window_bounds = array<i64: 1, 64>}, {pipeline_mode = #tpu.pipeline_mode<synchronous>, transform_indices = @transform_4, window_bounds = array<i64: 2, 16, 16>}, {transform_indices = @transform_5, window_bounds = array<i64: 64, 64>}]} {
    %c0 = arith.constant 0 : index
    %c0_0 = arith.constant 0 : index
    %0 = vector.load %arg1[%c0, %c0_0] : memref<64x64xf32, #tpu.memory_space<vmem>>, vector<64x64xf32>
    %cst = arith.constant dense<0.000000e+00> : vector<64xf32>
    %1 = vector.multi_reduction <add>, %0, %cst [1] : vector<64x64xf32> to vector<64xf32>
    %2 = vector.shape_cast %1 : vector<64xf32> to vector<64x1xf32>
    %cst_1 = arith.constant 1.562500e-02 : f32
    %3 = vector.broadcast %cst_1 : f32 to vector<64x1xf32>
    %4 = arith.mulf %2, %3 : vector<64x1xf32>
    %5 = vector.broadcast %4 : vector<64x1xf32> to vector<64x64xf32>
    %6 = arith.subf %0, %5 : vector<64x64xf32>
    %7 = arith.mulf %6, %6 : vector<64x64xf32>
    %cst_2 = arith.constant dense<0.000000e+00> : vector<64xf32>
    %8 = vector.multi_reduction <add>, %7, %cst_2 [1] : vector<64x64xf32> to vector<64xf32>
    %9 = vector.shape_cast %8 : vector<64xf32> to vector<64x1xf32>
    %cst_3 = arith.constant 1.562500e-02 : f32
    %10 = vector.broadcast %cst_3 : f32 to vector<64x1xf32>
    %11 = arith.mulf %9, %10 : vector<64x1xf32>
    %cst_4 = arith.constant 9.99999974E-6 : f32
    %12 = vector.broadcast %cst_4 : f32 to vector<64x1xf32>
    %13 = arith.addf %11, %12 : vector<64x1xf32>
    %14 = math.rsqrt %13 : vector<64x1xf32>
    %15 = vector.broadcast %14 : vector<64x1xf32> to vector<64x64xf32>
    %16 = arith.mulf %6, %15 : vector<64x64xf32>
    %c0_5 = arith.constant 0 : index
    %c0_6 = arith.constant 0 : index
    %17 = vector.load %arg4[%c0_5, %c0_6] : memref<1x64xf32, #tpu.memory_space<vmem>>, vector<1x64xf32>
    %18 = vector.broadcast %17 : vector<1x64xf32> to vector<64x64xf32>
    %19 = arith.mulf %16, %18 : vector<64x64xf32>
    %20 = arith.truncf %19 : vector<64x64xf32> to vector<64x64xbf16>
    %c0_7 = arith.constant 0 : index
    %c0_8 = arith.constant 0 : index
    %21 = vector.load %arg2[%c0_7, %c0_8] : memref<64x192xbf16, #tpu.memory_space<vmem>>, vector<64x192xbf16>
    %cst_9 = arith.constant dense<0.000000e+00> : vector<64x192xf32>
    %22 = tpu.matmul %20, %21, %cst_9 {dimension_numbers = #tpu.dot_dimension_numbers<[1], [0], [0], [1], [0, 0, 1, 1], [], []>} : vector<64x64xbf16>, vector<64x192xbf16>, vector<64x192xf32> -> vector<64x192xf32>
    %23 = vector.extract_strided_slice %22 {offsets = [0, 0], sizes = [64, 64], strides = [1, 1]} : vector<64x192xf32> to vector<64x64xf32>
    %24 = vector.shape_cast %23 : vector<64x64xf32> to vector<4x16x2x32xf32>
    %25 = tpu.transpose %24, [2, 0, 1, 3] : vector<4x16x2x32xf32> -> vector<2x4x16x32xf32>
    %26 = vector.shape_cast %25 : vector<2x4x16x32xf32> to vector<8x16x32xf32>
    %27 = arith.truncf %26 : vector<8x16x32xf32> to vector<8x16x32xbf16>
    %28 = vector.extract_strided_slice %22 {offsets = [0, 64], sizes = [64, 64], strides = [1, 1]} : vector<64x192xf32> to vector<64x64xf32>
    %29 = vector.shape_cast %28 : vector<64x64xf32> to vector<4x16x2x32xf32>
    %30 = tpu.transpose %29, [2, 0, 1, 3] : vector<4x16x2x32xf32> -> vector<2x4x16x32xf32>
    %31 = vector.shape_cast %30 : vector<2x4x16x32xf32> to vector<8x16x32xf32>
    %32 = arith.truncf %31 : vector<8x16x32xf32> to vector<8x16x32xbf16>
    %33 = vector.extract_strided_slice %22 {offsets = [0, 128], sizes = [64, 64], strides = [1, 1]} : vector<64x192xf32> to vector<64x64xf32>
    %34 = vector.shape_cast %33 : vector<64x64xf32> to vector<4x16x2x32xf32>
    %35 = tpu.transpose %34, [2, 0, 1, 3] : vector<4x16x2x32xf32> -> vector<2x4x16x32xf32>
    %36 = vector.shape_cast %35 : vector<2x4x16x32xf32> to vector<8x16x32xf32>
    %37 = arith.truncf %36 : vector<8x16x32xf32> to vector<8x16x32xbf16>
    "tpu.trace_start"() <{level = 10 : i32, message = "bqd,bkd->bqk"}> : () -> ()
    %cst_10 = arith.constant dense<0.000000e+00> : vector<8x16x16xf32>
    %38 = tpu.matmul %27, %32, %cst_10 {dimension_numbers = #tpu.dot_dimension_numbers<[2], [2], [1], [1], [0, 0, 0, 1, 1, 1], [0], [0]>} : vector<8x16x32xbf16>, vector<8x16x32xbf16>, vector<8x16x16xf32> -> vector<8x16x16xf32>
    "tpu.trace_stop"() : () -> ()
    %39 = vector.shape_cast %38 : vector<8x16x16xf32> to vector<2x4x16x16xf32>
    %c0_11 = arith.constant 0 : index
    %c0_12 = arith.constant 0 : index
    %c0_13 = arith.constant 0 : index
    %40 = vector.load %arg5[%c0_11, %c0_12, %c0_13] : memref<2x16x16xf32, #tpu.memory_space<vmem>>, vector<2x16x16xf32>
    %41 = vector.shape_cast %40 : vector<2x16x16xf32> to vector<2x1x16x16xf32>
    %42 = vector.broadcast %41 : vector<2x1x16x16xf32> to vector<2x4x16x16xf32>
    %43 = arith.addf %39, %42 : vector<2x4x16x16xf32>
    %44 = vector.shape_cast %43 : vector<2x4x16x16xf32> to vector<8x16x16xf32>
    %cst_14 = arith.constant dense<0xFF800000> : vector<8x16xf32>
    %45 = vector.multi_reduction <maximumf>, %44, %cst_14 [2] : vector<8x16x16xf32> to vector<8x16xf32>
    %46 = vector.shape_cast %45 : vector<8x16xf32> to vector<8x16x1xf32>
    %47 = vector.broadcast %46 : vector<8x16x1xf32> to vector<8x16x16xf32>
    %48 = arith.subf %44, %47 : vector<8x16x16xf32>
    %49 = math.exp %48 : vector<8x16x16xf32>
    %cst_15 = arith.constant dense<0.000000e+00> : vector<8x16xf32>
    %50 = vector.multi_reduction <add>, %49, %cst_15 [2] : vector<8x16x16xf32> to vector<8x16xf32>
    %51 = vector.shape_cast %50 : vector<8x16xf32> to vector<8x16x1xf32>
    %52 = tpu.reciprocal %51 {approx = true} : vector<8x16x1xf32> -> vector<8x16x1xf32>
    %53 = vector.broadcast %52 : vector<8x16x1xf32> to vector<8x16x16xf32>
    %54 = arith.mulf %49, %53 : vector<8x16x16xf32>
    %55 = arith.truncf %54 : vector<8x16x16xf32> to vector<8x16x16xbf16>
    "tpu.trace_start"() <{level = 10 : i32, message = "bqk,bkd->bqd"}> : () -> ()
    %cst_16 = arith.constant dense<0.000000e+00> : vector<8x16x32xf32>
    %56 = tpu.matmul %55, %37, %cst_16 {dimension_numbers = #tpu.dot_dimension_numbers<[2], [1], [1], [2], [0, 0, 0, 1, 1, 2], [0], [0]>} : vector<8x16x16xbf16>, vector<8x16x32xbf16>, vector<8x16x32xf32> -> vector<8x16x32xf32>
    "tpu.trace_stop"() : () -> ()
    %57 = vector.shape_cast %56 : vector<8x16x32xf32> to vector<2x4x16x32xf32>
    %58 = tpu.transpose %57, [1, 2, 0, 3] : vector<2x4x16x32xf32> -> vector<4x16x2x32xf32>
    %59 = vector.shape_cast %58 : vector<4x16x2x32xf32> to vector<64x64xf32>
    %60 = arith.truncf %59 : vector<64x64xf32> to vector<64x64xbf16>
    %c0_17 = arith.constant 0 : index
    %c0_18 = arith.constant 0 : index
    %61 = vector.load %arg3[%c0_17, %c0_18] : memref<64x64xbf16, #tpu.memory_space<vmem>>, vector<64x64xbf16>
    %cst_19 = arith.constant dense<0.000000e+00> : vector<64x64xf32>
    %62 = tpu.matmul %60, %61, %cst_19 {dimension_numbers = #tpu.dot_dimension_numbers<[1], [0], [0], [1], [0, 0, 1, 1], [], []>} : vector<64x64xbf16>, vector<64x64xbf16>, vector<64x64xf32> -> vector<64x64xf32>
    %c0_20 = arith.constant 0 : index
    %c0_21 = arith.constant 0 : index
    %63 = vector.load %arg6[%c0_20, %c0_21] : memref<64x64xf32, #tpu.memory_space<vmem>>, vector<64x64xf32>
    tpu.vector_store %arg6[%c0_20, %c0_21], %62 {strides = array<i32>} : memref<64x64xf32, #tpu.memory_space<vmem>>, vector<64x64xf32>,
    return
  }
  func.func @transform_0(%arg0: i32) -> (i32, i32) {
    %c0_i32 = arith.constant 0 : i32
    %c0_i32_0 = arith.constant 0 : i32
    return %arg0, %c0_i32 : i32, i32
  }
  func.func @transform_1(%arg0: i32) -> (i32, i32) {
    %c0_i32 = arith.constant 0 : i32
    %c0_i32_0 = arith.constant 0 : i32
    %c0_i32_1 = arith.constant 0 : i32
    return %c0_i32, %c0_i32_0 : i32, i32
  }
  func.func @transform_2(%arg0: i32) -> (i32, i32) {
    %c0_i32 = arith.constant 0 : i32
    %c0_i32_0 = arith.constant 0 : i32
    %c0_i32_1 = arith.constant 0 : i32
    return %c0_i32, %c0_i32_0 : i32, i32
  }
  func.func @transform_3(%arg0: i32) -> (i32, i32) {
    %c0_i32 = arith.constant 0 : i32
    %c0_i32_0 = arith.constant 0 : i32
    %c0_i32_1 = arith.constant 0 : i32
    return %c0_i32, %c0_i32_0 : i32, i32
  }
  func.func @transform_4(%arg0: i32) -> (i32, i32, i32) {
    %c0_i32 = arith.constant 0 : i32
    %c0_i32_0 = arith.constant 0 : i32
    %c0_i32_1 = arith.constant 0 : i32
    %c0_i32_2 = arith.constant 0 : i32
    return %c0_i32, %c0_i32_0, %c0_i32_1 : i32, i32, i32
  }
  func.func @transform_5(%arg0: i32) -> (i32, i32) {
    %c0_i32 = arith.constant 0 : i32
    %c0_i32_0 = arith.constant 0 : i32
    return %arg0, %c0_i32 : i32, i32
  }
}

</mosaic_0001>

<llo_original>
// kernel: tpu_custom_call.1
$region0: #{tpu_custom_call.1}
  #allocation0 [shape = 'u32[]', space=smem, size = 0x4, offset = 0x4, fixed_abs, tag = 'smem constant byte address 0x4 - core index']
  #allocation1 [shape = 'u32[144,128]{1,0:T(1,128)}', space=vmem, size = 0x12000, scoped, tag = 'internal scratch']
  %s0 = inlined_call_operand.vmem [shape: f32[128,64], index: 0, kind: input, shape index: {}]
  %s1 = inlined_call_operand.vmem [shape: bf16[64,192], index: 1, kind: input, shape index: {}]
  %s2 = inlined_call_operand.vmem [shape: bf16[64,64], index: 2, kind: input, shape index: {}]
  %s3 = inlined_call_operand.vmem [shape: f32[1,64], index: 3, kind: input, shape index: {}]
  %s4 = inlined_call_operand.vmem [shape: f32[2,16,16], index: 4, kind: input, shape index: {}]
  %s5 = inlined_call_operand.vmem [shape: f32[128,64], index: 5, kind: output, shape index: {}]
  %s6 = sld [smem:[#allocation0]]
  $region53: #{tpu_custom_call.1} parent=0
    _
  %s8 = ssub.s32 1, %s6
  %s9 = scalar_select 0, %s8, %s6
  loop: start=0, step=1, limit=4
  $region2: #{tpu_custom_call.1} parent=0 // loop_pre_header
    _
  $region3: #{tpu_custom_call.1} parent=0 // loop_header
    %s11 = sphi 0, %s15
    %p12 = scmp.ge.s32.totalorder %s11, 4
    %s21 = sphi 0, %s23
    %s24 = sphi 0, %s21
    %s25 = sphi 0, %s24
    %s41 = sphi 0, %s25
    %s45 = sphi 0, %s45
    %s47 = sphi 0, %s45
    %s48 = sphi 0, %s47
    %s62 = sphi 0, %s48
    %s66 = sphi 0, %s66
    %s68 = sphi 0, %s66
    %s69 = sphi 0, %s68
    %s83 = sphi 0, %s69
    %s87 = sphi 0, %s87
    %s89 = sphi 0, %s87
    %s90 = sphi 0, %s89
    %s104 = sphi 0, %s90
    %s108 = sphi 0, %s108
    %s110 = sphi 0, %s108
    %s111 = sphi 0, %s110
    %s125 = sphi 0, %s111
    %s131 = sphi 0, %s133
    %s134 = sphi 0, %s131
    %s135 = sphi 0, %s134
    %s151 = sphi 0, %s135
  $region4: #{tpu_custom_call.1} parent=0 // loop_header_branch
    %14 = sbr.rel (%p12) target = $region8
  $region5: #{tpu_custom_call.1} parent=0 // loop_body
    %s16 = ssub.s32 %s11, 1
    %s17 = ssub.s32 %s11, 2
    %s18 = sadd.s32 %s11, 1
    %s19 = ssub.s32 %s11, %s18
    %p20 = scmp.eq.s32.totalorder %s19, 0
    %s22 = sadd.s32 %s21, 1
    %s23 = scalar_select %p20, %s21, %s22
    %p26 = pneg %p20
    %p27 = scmp.eq.s32.totalorder %s11, 1
    %p28 = por %p26, %p27
    %p29 = scmp.ne.s32.totalorder %s21, %s24
    %p30 = scmp.eq.s32.totalorder %s11, 0
    %p31 = por %p29, %p30
    %p32 = scmp.ne.s32.totalorder %s21, %s24
    %p33 = scmp.eq.s32.totalorder %s16, 1
    %p34 = por %p32, %p33
    %p35 = scmp.ne.s32.totalorder %s24, %s25
    %p36 = scmp.eq.s32.totalorder %s16, 0
    %p37 = por %p35, %p36
    %p38 = scmp.ne.s32.totalorder %s24, %s25
    %p39 = scmp.eq.s32.totalorder %s17, 1
    %p40 = por %p38, %p39
    %p42 = scmp.ne.s32.totalorder %s25, %s41
    %p43 = scmp.eq.s32.totalorder %s17, 0
    %p44 = por %p42, %p43
    %s46 = sadd.s32 %s45, 1
    %p49 = scmp.eq.s32.totalorder %s11, 1
    %p50 = scmp.ne.s32.totalorder %s45, %s47
    %p51 = scmp.eq.s32.totalorder %s11, 0
    %p52 = por %p50, %p51
    %p53 = scmp.ne.s32.totalorder %s45, %s47
    %p54 = scmp.eq.s32.totalorder %s16, 1
    %p55 = por %p53, %p54
    %p56 = scmp.ne.s32.totalorder %s47, %s48
    %p57 = scmp.eq.s32.totalorder %s16, 0
    %p58 = por %p56, %p57
    %p59 = scmp.ne.s32.totalorder %s47, %s48
    %p60 = scmp.eq.s32.totalorder %s17, 1
    %p61 = por %p59, %p60
    %p63 = scmp.ne.s32.totalorder %s48, %s62
    %p64 = scmp.eq.s32.totalorder %s17, 0
    %p65 = por %p63, %p64
    %s67 = sadd.s32 %s66, 1
    %p70 = scmp.eq.s32.totalorder %s11, 1
    %p71 = scmp.ne.s32.totalorder %s66, %s68
    %p72 = scmp.eq.s32.totalorder %s11, 0
    %p73 = por %p71, %p72
    %p74 = scmp.ne.s32.totalorder %s66, %s68
    %p75 = scmp.eq.s32.totalorder %s16, 1
    %p76 = por %p74, %p75
    %p77 = scmp.ne.s32.totalorder %s68, %s69
    %p78 = scmp.eq.s32.totalorder %s16, 0
    %p79 = por %p77, %p78
    %p80 = scmp.ne.s32.totalorder %s68, %s69
    %p81 = scmp.eq.s32.totalorder %s17, 1
    %p82 = por %p80, %p81
    %p84 = scmp.ne.s32.totalorder %s69, %s83
    %p85 = scmp.eq.s32.totalorder %s17, 0
    %p86 = por %p84, %p85
    %s88 = sadd.s32 %s87, 1
    %p91 = scmp.eq.s32.totalorder %s11, 1
    %p92 = scmp.ne.s32.totalorder %s87, %s89
    %p93 = scmp.eq.s32.totalorder %s11, 0
    %p94 = por %p92, %p93
    %p95 = scmp.ne.s32.totalorder %s87, %s89
    %p96 = scmp.eq.s32.totalorder %s16, 1
    %p97 = por %p95, %p96
    %p98 = scmp.ne.s32.totalorder %s89, %s90
    %p99 = scmp.eq.s32.totalorder %s16, 0
    %p100 = por %p98, %p99
    %p101 = scmp.ne.s32.totalorder %s89, %s90
    %p102 = scmp.eq.s32.totalorder %s17, 1
    %p103 = por %p101, %p102
    %p105 = scmp.ne.s32.totalorder %s90, %s104
    %p106 = scmp.eq.s32.totalorder %s17, 0
    %p107 = por %p105, %p106
    %s109 = sadd.s32 %s108, 1
    %p112 = scmp.eq.s32.totalorder %s11, 1
    %p113 = scmp.ne.s32.totalorder %s108, %s110
    %p114 = scmp.eq.s32.totalorder %s11, 0
    %p115 = por %p113, %p114
    %p116 = scmp.ne.s32.totalorder %s108, %s110
    %p117 = scmp.eq.s32.totalorder %s16, 1
    %p118 = por %p116, %p117
    %p119 = scmp.ne.s32.totalorder %s110, %s111
    %p120 = scmp.eq.s32.totalorder %s16, 0
    %p121 = por %p119, %p120
    %p122 = scmp.ne.s32.totalorder %s110, %s111
    %p123 = scmp.eq.s32.totalorder %s17, 1
    %p124 = por %p122, %p123
    %p126 = scmp.ne.s32.totalorder %s111, %s125
    %p127 = scmp.eq.s32.totalorder %s17, 0
    %p128 = por %p126, %p127
    %s129 = ssub.s32 %s11, %s18
    %p130 = scmp.eq.s32.totalorder %s129, 0
    %s132 = sadd.s32 %s131, 1
    %s133 = scalar_select %p130, %s131, %s132
    %p136 = pneg %p130
    %p137 = scmp.eq.s32.totalorder %s11, 1
    %p138 = por %p136, %p137
    %p139 = scmp.ne.s32.totalorder %s131, %s134
    %p140 = scmp.eq.s32.totalorder %s11, 0
    %p141 = por %p139, %p140
    %p142 = scmp.ne.s32.totalorder %s131, %s134
    %p143 = scmp.eq.s32.totalorder %s16, 1
    %p144 = por %p142, %p143
    %p145 = scmp.ne.s32.totalorder %s134, %s135
    %p146 = scmp.eq.s32.totalorder %s16, 0
    %p147 = por %p145, %p146
    %p148 = scmp.ne.s32.totalorder %s134, %s135
    %p149 = scmp.eq.s32.totalorder %s17, 1
    %p150 = por %p148, %p149
    %p152 = scmp.ne.s32.totalorder %s135, %s151
    %p153 = scmp.eq.s32.totalorder %s17, 0
    %p154 = por %p152, %p153
    %p155 = scmp.le.s32.totalorder 1, %s11
    %p156 = scmp.lt.s32.totalorder %s11, 3
    %p157 = pnand %p155, %p156
    %p158 = pneg %p157
    // Predicated region
    $region9: #{tpu_custom_call.1} parent=5 // pred_check
      _
    $region10: #{tpu_custom_call.1} parent=5 // pred_check_branch
      %160 = sbr.rel (%p157) target = $region12
    $region11: #{tpu_custom_call.1} parent=5 // pred_region
      %s161 = ssub.s32 %s11, 1
      // Predicated region
      $region13: #{tpu_custom_call.1} parent=11 // pred_check
        %p162 = pneg %p58
      $region14: #{tpu_custom_call.1} parent=11 // pred_check_branch
        %164 = sbr.rel (%p162) target = $region16
      $region15: #{tpu_custom_call.1} parent=11 // pred_region
        _
      $region16: #{tpu_custom_call.1} parent=11 // pred_fallthru
        _
      // Predicated region
      $region17: #{tpu_custom_call.1} parent=11 // pred_check
        %p165 = pneg %p79
      $region18: #{tpu_custom_call.1} parent=11 // pred_check_branch
        %167 = sbr.rel (%p165) target = $region20
      $region19: #{tpu_custom_call.1} parent=11 // pred_region
        _
      $region20: #{tpu_custom_call.1} parent=11 // pred_fallthru
        _
      // Predicated region
      $region21: #{tpu_custom_call.1} parent=11 // pred_check
        %p168 = pneg %p100
      $region22: #{tpu_custom_call.1} parent=11 // pred_check_branch
        %170 = sbr.rel (%p168) target = $region24
      $region23: #{tpu_custom_call.1} parent=11 // pred_region
        _
      $region24: #{tpu_custom_call.1} parent=11 // pred_fallthru
        _
      // Predicated region
      $region25: #{tpu_custom_call.1} parent=11 // pred_check
        %p171 = pneg %p121
      $region26: #{tpu_custom_call.1} parent=11 // pred_check_branch
        %173 = sbr.rel (%p171) target = $region28
      $region27: #{tpu_custom_call.1} parent=11 // pred_region
        _
      $region28: #{tpu_custom_call.1} parent=11 // pred_fallthru
        _
    $region12: #{tpu_custom_call.1} parent=5 // pred_fallthru
      _
    %p174 = scmp.lt.s32.totalorder %s11, 2
    // Predicated region
    $region29: #{tpu_custom_call.1} parent=5 // pred_check
      %p175 = pneg %p174
    $region30: #{tpu_custom_call.1} parent=5 // pred_check_branch
      %177 = sbr.rel (%p175) target = $region32
    $region31: #{tpu_custom_call.1} parent=5 // pred_region
      // Predicated region
      $region33: #{tpu_custom_call.1} parent=31 // pred_check
        %p178 = pneg %p31
      $region34: #{tpu_custom_call.1} parent=31 // pred_check_branch
        %180 = sbr.rel (%p178) target = $region36
      $region35: #{tpu_custom_call.1} parent=31 // pred_region
        %s181 = smul.u32 8, %s11
        %p182 = scmp.lt.s32.totalorder %s181, 15
        %s183 = scalar_select %p182, %s181, 15
        %s184 = smul.addr %s183, 8
        %s185 = scalar_lea.vmem %s0, %s184
        %s186 = smul.u32 8, %s11
      $region36: #{tpu_custom_call.1} parent=31 // pred_fallthru
        _
    $region32: #{tpu_custom_call.1} parent=5 // pred_fallthru
      _
    %p187 = scmp.le.s32.totalorder 1, %s11
    %p188 = scmp.lt.s32.totalorder %s11, 3
    %p189 = pnand %p187, %p188
    %p190 = pneg %p189
    // Predicated region
    $region37: #{tpu_custom_call.1} parent=5 // pred_check
      _
    $region38: #{tpu_custom_call.1} parent=5 // pred_check_branch
      %192 = sbr.rel (%p189) target = $region40
    $region39: #{tpu_custom_call.1} parent=5 // pred_region
      %s193 = ssub.s32 %s11, 1
      %s194 = smul.u32 8, %s16
      %p195 = scmp.lt.s32.totalorder %s194, 15
      %s196 = scalar_select %p195, %s194, 15
      %s197 = smul.addr %s196, 8
      %s198 = scalar_lea.vmem %s0, %s197
      %p199 = pneg %p37
      %p200 = pneg %p34
      %p201 = pneg %p58
      %p202 = pneg %p55
      %p203 = pneg %p79
      %p204 = pneg %p76
      %p205 = pneg %p100
      %p206 = pneg %p97
      %p207 = pneg %p121
      %p208 = pneg %p118
      %p209 = pneg %p147
      %p210 = pneg %p144
      %s211 = smul.u32 8, %s16
      %p212 = scmp.lt.s32.totalorder %s211, 15
      %s213 = scalar_select %p212, %s211, 15
      %s214 = smul.addr %s213, 8
      %s215 = scalar_lea.vmem %s5, %s214
      %s216 = smul.u32 8, %s16
      %p217 = scmp.lt.s32.totalorder %s216, 15
      %s218 = scalar_select %p217, %s216, 15
      %s219 = smul.addr %s218, 8
      %s220 = scalar_lea.vmem %s0, %s219
      %s221 = smul.u32 8, %s16
      %s222 = smul.u32 8, %s16
      %p223 = scmp.lt.s32.totalorder %s222, 15
      %s224 = scalar_select %p223, %s222, 15
      %s225 = smul.addr %s224, 8
      %s226 = scalar_lea.vmem %s5, %s225
      %s227 = smul.u32 8, %s16
      %v229 = vld [vmem:[%s220] sm:$0xff]
      %v230 = vld [vmem:[%s220 + $0x8] sm:$0xff]
      %v231 = vld [vmem:[%s220 + $0x10] sm:$0xff]
      %v232 = vld [vmem:[%s220 + $0x18] sm:$0xff]
      %v233 = vld [vmem:[%s220 + $0x20] sm:$0xff]
      %v234 = vld [vmem:[%s220 + $0x28] sm:$0xff]
      %v235 = vld [vmem:[%s220 + $0x30] sm:$0xff]
      %v236 = vld [vmem:[%s220 + $0x38] sm:$0xff]
      %vm237 = vcmask 523264
      %v238 = vsel %vm237, %v229, 0.0
      %239 = vadd.xlane.f32.xlu0 %v238
      %v240 = vpop.xlane.xlu0 %239
      %v241 = vsel %vm237, %v230, 0.0
      %242 = vadd.xlane.f32.xlu0 %v241
      %v243 = vpop.xlane.xlu0 %242
      %v244 = vsel %vm237, %v231, 0.0
      %245 = vadd.xlane.f32.xlu0 %v244
      %v246 = vpop.xlane.xlu0 %245
      %v247 = vsel %vm237, %v232, 0.0
      %248 = vadd.xlane.f32.xlu0 %v247
      %v249 = vpop.xlane.xlu0 %248
      %v250 = vsel %vm237, %v233, 0.0
      %251 = vadd.xlane.f32.xlu0 %v250
      %v252 = vpop.xlane.xlu0 %251
      %v253 = vsel %vm237, %v234, 0.0
      %254 = vadd.xlane.f32.xlu0 %v253
      %v255 = vpop.xlane.xlu0 %254
      %v256 = vsel %vm237, %v235, 0.0
      %257 = vadd.xlane.f32.xlu0 %v256
      %v258 = vpop.xlane.xlu0 %257
      %v259 = vsel %vm237, %v236, 0.0
      %260 = vadd.xlane.f32.xlu0 %v259
      %v261 = vpop.xlane.xlu0 %260
      %v262 = vmul.f32 %v240, 0.015625
      %v263 = vmul.f32 %v243, 0.015625
      %v264 = vmul.f32 %v246, 0.015625
      %v265 = vmul.f32 %v249, 0.015625
      %v266 = vmul.f32 %v252, 0.015625
      %v267 = vmul.f32 %v255, 0.015625
      %v268 = vmul.f32 %v258, 0.015625
      %v269 = vmul.f32 %v261, 0.015625
      %v270 = vsub.f32 %v229, %v262
      %v271 = vsub.f32 %v230, %v263
      %v272 = vsub.f32 %v231, %v264
      %v273 = vsub.f32 %v232, %v265
      %v274 = vsub.f32 %v233, %v266
      %v275 = vsub.f32 %v234, %v267
      %v276 = vsub.f32 %v235, %v268
      %v277 = vsub.f32 %v236, %v269
      %v278 = vmul.f32 %v270, %v270
      %v279 = vmul.f32 %v271, %v271
      %v280 = vmul.f32 %v272, %v272
      %v281 = vmul.f32 %v273, %v273
      %v282 = vmul.f32 %v274, %v274
      %v283 = vmul.f32 %v275, %v275
      %v284 = vmul.f32 %v276, %v276
      %v285 = vmul.f32 %v277, %v277
      %v286 = vsel %vm237, %v278, 0.0
      %287 = vadd.xlane.f32.xlu0 %v286
      %v288 = vpop.xlane.xlu0 %287
      %v289 = vsel %vm237, %v279, 0.0
      %290 = vadd.xlane.f32.xlu0 %v289
      %v291 = vpop.xlane.xlu0 %290
      %v292 = vsel %vm237, %v280, 0.0
      %293 = vadd.xlane.f32.xlu0 %v292
      %v294 = vpop.xlane.xlu0 %293
      %v295 = vsel %vm237, %v281, 0.0
      %296 = vadd.xlane.f32.xlu0 %v295
      %v297 = vpop.xlane.xlu0 %296
      %v298 = vsel %vm237, %v282, 0.0
      %299 = vadd.xlane.f32.xlu0 %v298
      %v300 = vpop.xlane.xlu0 %299
      %v301 = vsel %vm237, %v283, 0.0
      %302 = vadd.xlane.f32.xlu0 %v301
      %v303 = vpop.xlane.xlu0 %302
      %v304 = vsel %vm237, %v284, 0.0
      %305 = vadd.xlane.f32.xlu0 %v304
      %v306 = vpop.xlane.xlu0 %305
      %v307 = vsel %vm237, %v285, 0.0
      %308 = vadd.xlane.f32.xlu0 %v307
      %v309 = vpop.xlane.xlu0 %308
      %v310 = vmul.f32 %v288, 0.015625
      %v311 = vmul.f32 %v291, 0.015625
      %v312 = vmul.f32 %v294, 0.015625
      %v313 = vmul.f32 %v297, 0.015625
      %v314 = vmul.f32 %v300, 0.015625
      %v315 = vmul.f32 %v303, 0.015625
      %v316 = vmul.f32 %v306, 0.015625
      %v317 = vmul.f32 %v309, 0.015625
      %v318 = vadd.f32 %v310, 1e-05
      %v319 = vadd.f32 %v311, 1e-05
      %v320 = vadd.f32 %v312, 1e-05
      %v321 = vadd.f32 %v313, 1e-05
      %v322 = vadd.f32 %v314, 1e-05
      %v323 = vadd.f32 %v315, 1e-05
      %v324 = vadd.f32 %v316, 1e-05
      %v325 = vadd.f32 %v317, 1e-05
      %v326 = vrsqrt.pop %v318
      %v327 = vrsqrt.pop %v319
      %v328 = vrsqrt.pop %v320
      %v329 = vrsqrt.pop %v321
      %v330 = vrsqrt.pop %v322
      %v331 = vrsqrt.pop %v323
      %v332 = vrsqrt.pop %v324
      %v333 = vrsqrt.pop %v325
      %v334 = vmul.f32 %v270, %v326
      %v335 = vmul.f32 %v271, %v327
      %v336 = vmul.f32 %v272, %v328
      %v337 = vmul.f32 %v273, %v329
      %v338 = vmul.f32 %v274, %v330
      %v339 = vmul.f32 %v275, %v331
      %v340 = vmul.f32 %v276, %v332
      %v341 = vmul.f32 %v277, %v333
      %v342 = vld [vmem:[%s3] sm:$0x1]
      %v344 = vlaneseq
      %v345 = vshrl.u32 %v344, 7
      %v346 = vsub.s32 0, %v345
      %v347 = vrot.slane %v342, %v346
      %v349 = vmul.f32 %v334, %v347
      %v350 = vmul.f32 %v335, %v347
      %v351 = vmul.f32 %v336, %v347
      %v352 = vmul.f32 %v337, %v347
      %v353 = vmul.f32 %v338, %v347
      %v354 = vmul.f32 %v339, %v347
      %v355 = vmul.f32 %v340, %v347
      %v356 = vmul.f32 %v341, %v347
      %v357 = vpack.c.bf16 %v350, %v349
      %v358 = vpack.c.bf16 %v352, %v351
      %v359 = vpack.c.bf16 %v354, %v353
      %v360 = vpack.c.bf16 %v356, %v355
      %v361 = vld [vmem:[%s1] sm:$0xff]
      %v362 = vld [vmem:[%s1 + $0x8] sm:$0xff]
      %v363 = vld [vmem:[%s1 + $0x10] sm:$0xff]
      %v364 = vld [vmem:[%s1 + $0x18] sm:$0xff]
      %v365 = vld [vmem:[%s1 + $0x20] sm:$0xff]
      %v366 = vld [vmem:[%s1 + $0x28] sm:$0xff]
      %v367 = vld [vmem:[%s1 + $0x30] sm:$0xff]
      %v368 = vld [vmem:[%s1 + $0x38] sm:$0xff]
      %v377 = vunpack.c.l.b16 %v361
      %v378 = vunpack.c.h.b16 %v361
      %v379 = vunpack.c.l.b16 %v362
      %v380 = vunpack.c.h.b16 %v362
      %v381 = vunpack.c.l.b16 %v363
      %v382 = vunpack.c.h.b16 %v363
      %v383 = vunpack.c.l.b16 %v364
      %v384 = vunpack.c.h.b16 %v364
      %v385 = vunpack.c.l.b16 %v365
      %v386 = vunpack.c.h.b16 %v365
      %v387 = vunpack.c.l.b16 %v366
      %v388 = vunpack.c.h.b16 %v366
      %v389 = vunpack.c.l.b16 %v367
      %v390 = vunpack.c.h.b16 %v367
      %v391 = vunpack.c.l.b16 %v368
      %v392 = vunpack.c.h.b16 %v368
      %v393 = vpack.c.b16 %v379, %v377
      %v394 = vpack.c.b16 %v380, %v378
      %v395 = vpack.c.b16 %v383, %v381
      %v396 = vpack.c.b16 %v384, %v382
      %v397 = vpack.c.b16 %v387, %v385
      %v398 = vpack.c.b16 %v388, %v386
      %v399 = vpack.c.b16 %v391, %v389
      %v400 = vpack.c.b16 %v392, %v390
      %v410 = vsel %vm237, %v357, 0
      %v413 = vsel %vm237, %v358, 0
      %v416 = vsel %vm237, %v359, 0
      %v419 = vsel %vm237, %v360, 0
      %421 = vmatprep.subr.bf16.mxu0 0
      %422 = vmatpush1.bf16.msra.mxu0 0
      %423 = vmatprep.subr.bf16.mxu0 0
      %424 = vmatpush1.bf16.msra.mxu0 0
      %425 = vmatprep.subr.bf16.mxu0 0
      %426 = vmatpush1.bf16.msra.mxu0 0
      %427 = vmatprep.subr.bf16.mxu0 0
      %428 = vmatpush1.bf16.msra.mxu0 0
      %429 = vmatprep.subr.bf16.mxu0 %v400
      %430 = vmatpush1.bf16.msra.mxu0 %v399
      %431 = vmatprep.subr.bf16.mxu0 %v398
      %432 = vmatpush1.bf16.msra.mxu0 %v397
      %433 = vmatprep.subr.bf16.mxu0 %v396
      %434 = vmatpush1.bf16.msra.mxu0 %v395
      %435 = vmatprep.subr.bf16.mxu0 %v394
      %436 = vmatpush1.bf16.msra.mxu0 %v393
      %437 = vmatprep.subr.bf16.mxu0 0
      %438 = vmatpush2.bf16.msra.mxu0 0
      %439 = vmatprep.subr.bf16.mxu0 0
      %440 = vmatpush2.bf16.msra.mxu0 0
      %441 = vmatprep.subr.bf16.mxu0 0
      %442 = vmatpush2.bf16.msra.mxu0 0
      %443 = vmatprep.subr.bf16.mxu0 0
      %444 = vmatpush2.bf16.msra.mxu0 0
      %445 = vmatprep.subr.bf16.mxu0 0
      %446 = vmatpush2.bf16.msra.mxu0 0
      %447 = vmatprep.subr.bf16.mxu0 0
      %448 = vmatpush2.bf16.msra.mxu0 0
      %449 = vmatprep.subr.bf16.mxu0 0
      %450 = vmatpush2.bf16.msra.mxu0 0
      %451 = vmatprep.subr.bf16.mxu0 0
      %452 = vmatpush2.bf16.msra.mxu0 0
      %453 = vmatprep.mubr.bf16.mxu0 0
      %454 = vmatmul.mubr.bf16.gmra.mxu0 %v410
      %v455 = vpop.f32.mrf.mxu0
      %v456 = vadd.f32 0.0, %v455
      %v457 = vpop.f32.mrf.mxu0
      %v458 = vadd.f32 0.0, %v457
      %v459 = vpop.f32.mrf.mxu0
      %v460 = vadd.f32 0.0, %v459
      %v461 = vpop.f32.mrf.mxu0
      %v462 = vadd.f32 0.0, %v461
      %463 = vmatprep.mubr.bf16.mxu0 0
      %464 = vmatmul.mubr.bf16.gmra.mxu0 %v413
      %v465 = vpop.f32.mrf.mxu0
      %v466 = vadd.f32 0.0, %v465
      %v467 = vpop.f32.mrf.mxu0
      %v468 = vadd.f32 0.0, %v467
      %v469 = vpop.f32.mrf.mxu0
      %v470 = vadd.f32 0.0, %v469
      %v471 = vpop.f32.mrf.mxu0
      %v472 = vadd.f32 0.0, %v471
      %473 = vmatprep.mubr.bf16.mxu0 0
      %474 = vmatmul.mubr.bf16.gmra.mxu0 %v416
      %v475 = vpop.f32.mrf.mxu0
      %v476 = vadd.f32 0.0, %v475
      %v477 = vpop.f32.mrf.mxu0
      %v478 = vadd.f32 0.0, %v477
      %v479 = vpop.f32.mrf.mxu0
      %v480 = vadd.f32 0.0, %v479
      %v481 = vpop.f32.mrf.mxu0
      %v482 = vadd.f32 0.0, %v481
      %483 = vmatprep.mubr.bf16.mxu0 0
      %484 = vmatmul.mubr.bf16.gmra.mxu0 %v419
      %v485 = vpop.f32.mrf.mxu0
      %v486 = vadd.f32 0.0, %v485
      %v487 = vpop.f32.mrf.mxu0
      %v488 = vadd.f32 0.0, %v487
      %v489 = vpop.f32.mrf.mxu0
      %v490 = vadd.f32 0.0, %v489
      %v491 = vpop.f32.mrf.mxu0
      %v492 = vadd.f32 0.0, %v491
      %493 = vdwg.mxu0
      %502 = vrot.lane.b32.xlu0 %v456, 96
      %v503 = vpop.permute.xlu0 %502
      %504 = vrot.lane.b32.xlu0 %v460, 96
      %v505 = vpop.permute.xlu0 %504
      %506 = vrot.lane.b32.xlu0 %v466, 96
      %v507 = vpop.permute.xlu0 %506
      %508 = vrot.lane.b32.xlu0 %v470, 96
      %v509 = vpop.permute.xlu0 %508
      %510 = vrot.lane.b32.xlu0 %v476, 96
      %v511 = vpop.permute.xlu0 %510
      %512 = vrot.lane.b32.xlu0 %v480, 96
      %v513 = vpop.permute.xlu0 %512
      %514 = vrot.lane.b32.xlu0 %v486, 96
      %v515 = vpop.permute.xlu0 %514
      %516 = vrot.lane.b32.xlu0 %v490, 96
      %v517 = vpop.permute.xlu0 %516
      %v526 = vcombine.high %v456, 0.0
      %v528 = vunpack.c.l.s4 1983009808
      %v529 = vunpack.c.0.s8 %v528
      %v530 = vlaneseq
      %v531 = vshrl.u32 %v530, 7
      %v532 = vsub.s32 %v529, %v531
      %v533 = vrot.slane %v456, %v532
      %v535 = vunpack.c.l.s4 1983009808
      %v536 = vunpack.c.0.s8 %v535
      %v537 = vlaneseq
      %v538 = vshrl.u32 %v537, 7
      %v539 = vsub.s32 %v536, %v538
      %v540 = vrot.slane %v526, %v539
      %v541 = vcombine.high %v503, 0.0
      %v543 = vunpack.c.l.s4 1983009808
      %v544 = vunpack.c.0.s8 %v543
      %v545 = vlaneseq
      %v546 = vshrl.u32 %v545, 7
      %v547 = vsub.s32 %v544, %v546
      %v548 = vrot.slane %v503, %v547
      %v550 = vunpack.c.l.s4 1983009808
      %v551 = vunpack.c.0.s8 %v550
      %v552 = vlaneseq
      %v553 = vshrl.u32 %v552, 7
      %v554 = vsub.s32 %v551, %v553
      %v555 = vrot.slane %v541, %v554
      %v556 = vcombine.low %v533, %v548
      %v557 = vcombine.high %v533, %v548
      %v559 = vunpack.c.l.s4 1934713408
      %v560 = vunpack.c.0.s8 %v559
      %v561 = vlaneseq
      %v562 = vshrl.u32 %v561, 7
      %v563 = vsub.s32 %v560, %v562
      %v564 = vrot.slane %v556, %v563
      %v566 = vunpack.c.l.s4 1934713408
      %v567 = vunpack.c.0.s8 %v566
      %v568 = vlaneseq
      %v569 = vshrl.u32 %v568, 7
      %v570 = vsub.s32 %v567, %v569
      %v571 = vrot.slane %v557, %v570
      %v572 = vcombine.low %v540, %v555
      %v573 = vcombine.high %v540, %v555
      %v575 = vunpack.c.l.s4 1934713408
      %v576 = vunpack.c.0.s8 %v575
      %v577 = vlaneseq
      %v578 = vshrl.u32 %v577, 7
      %v579 = vsub.s32 %v576, %v578
      %v580 = vrot.slane %v572, %v579
      %v582 = vunpack.c.l.s4 1934713408
      %v583 = vunpack.c.0.s8 %v582
      %v584 = vlaneseq
      %v585 = vshrl.u32 %v584, 7
      %v586 = vsub.s32 %v583, %v585
      %v587 = vrot.slane %v573, %v586
      %v588 = vcombine.high %v564, 0.0
      %v589 = vcombine.high %v571, 0.0
      %v590 = vcombine.high %v580, 0.0
      %v591 = vcombine.high %v587, 0.0
      %v592 = vcombine.high %v460, 0.0
      %v594 = vunpack.c.l.s4 1983009808
      %v595 = vunpack.c.0.s8 %v594
      %v596 = vlaneseq
      %v597 = vshrl.u32 %v596, 7
      %v598 = vsub.s32 %v595, %v597
      %v599 = vrot.slane %v460, %v598
      %v601 = vunpack.c.l.s4 1983009808
      %v602 = vunpack.c.0.s8 %v601
      %v603 = vlaneseq
      %v604 = vshrl.u32 %v603, 7
      %v605 = vsub.s32 %v602, %v604
      %v606 = vrot.slane %v592, %v605
      %v607 = vcombine.high %v505, 0.0
      %v609 = vunpack.c.l.s4 1983009808
      %v610 = vunpack.c.0.s8 %v609
      %v611 = vlaneseq
      %v612 = vshrl.u32 %v611, 7
      %v613 = vsub.s32 %v610, %v612
      %v614 = vrot.slane %v505, %v613
      %v616 = vunpack.c.l.s4 1983009808
      %v617 = vunpack.c.0.s8 %v616
      %v618 = vlaneseq
      %v619 = vshrl.u32 %v618, 7
      %v620 = vsub.s32 %v617, %v619
      %v621 = vrot.slane %v607, %v620
      %v622 = vcombine.low %v599, %v614
      %v623 = vcombine.high %v599, %v614
      %v625 = vunpack.c.l.s4 1934713408
      %v626 = vunpack.c.0.s8 %v625
      %v627 = vlaneseq
      %v628 = vshrl.u32 %v627, 7
      %v629 = vsub.s32 %v626, %v628
      %v630 = vrot.slane %v622, %v629
      %v632 = vunpack.c.l.s4 1934713408
      %v633 = vunpack.c.0.s8 %v632
      %v634 = vlaneseq
      %v635 = vshrl.u32 %v634, 7
      %v636 = vsub.s32 %v633, %v635
      %v637 = vrot.slane %v623, %v636
      %v638 = vcombine.low %v606, %v621
      %v639 = vcombine.high %v606, %v621
      %v641 = vunpack.c.l.s4 1934713408
      %v642 = vunpack.c.0.s8 %v641
      %v643 = vlaneseq
      %v644 = vshrl.u32 %v643, 7
      %v645 = vsub.s32 %v642, %v644
      %v646 = vrot.slane %v638, %v645
      %v648 = vunpack.c.l.s4 1934713408
      %v649 = vunpack.c.0.s8 %v648
      %v650 = vlaneseq
      %v651 = vshrl.u32 %v650, 7
      %v652 = vsub.s32 %v649, %v651
      %v653 = vrot.slane %v639, %v652
      %v654 = vcombine.high %v630, 0.0
      %v655 = vcombine.high %v637, 0.0
      %v656 = vcombine.high %v646, 0.0
      %v657 = vcombine.high %v653, 0.0
      %v658 = vcombine.high %v466, 0.0
      %v660 = vunpack.c.l.s4 1983009808
      %v661 = vunpack.c.0.s8 %v660
      %v662 = vlaneseq
      %v663 = vshrl.u32 %v662, 7
      %v664 = vsub.s32 %v661, %v663
      %v665 = vrot.slane %v466, %v664
      %v667 = vunpack.c.l.s4 1983009808
      %v668 = vunpack.c.0.s8 %v667
      %v669 = vlaneseq
      %v670 = vshrl.u32 %v669, 7
      %v671 = vsub.s32 %v668, %v670
      %v672 = vrot.slane %v658, %v671
      %v673 = vcombine.high %v507, 0.0
      %v675 = vunpack.c.l.s4 1983009808
      %v676 = vunpack.c.0.s8 %v675
      %v677 = vlaneseq
      %v678 = vshrl.u32 %v677, 7
      %v679 = vsub.s32 %v676, %v678
      %v680 = vrot.slane %v507, %v679
      %v682 = vunpack.c.l.s4 1983009808
      %v683 = vunpack.c.0.s8 %v682
      %v684 = vlaneseq
      %v685 = vshrl.u32 %v684, 7
      %v686 = vsub.s32 %v683, %v685
      %v687 = vrot.slane %v673, %v686
      %v688 = vcombine.low %v665, %v680
      %v689 = vcombine.high %v665, %v680
      %v691 = vunpack.c.l.s4 1934713408
      %v692 = vunpack.c.0.s8 %v691
      %v693 = vlaneseq
      %v694 = vshrl.u32 %v693, 7
      %v695 = vsub.s32 %v692, %v694
      %v696 = vrot.slane %v688, %v695
      %v698 = vunpack.c.l.s4 1934713408
      %v699 = vunpack.c.0.s8 %v698
      %v700 = vlaneseq
      %v701 = vshrl.u32 %v700, 7
      %v702 = vsub.s32 %v699, %v701
      %v703 = vrot.slane %v689, %v702
      %v704 = vcombine.low %v672, %v687
      %v705 = vcombine.high %v672, %v687
      %v707 = vunpack.c.l.s4 1934713408
      %v708 = vunpack.c.0.s8 %v707
      %v709 = vlaneseq
      %v710 = vshrl.u32 %v709, 7
      %v711 = vsub.s32 %v708, %v710
      %v712 = vrot.slane %v704, %v711
      %v714 = vunpack.c.l.s4 1934713408
      %v715 = vunpack.c.0.s8 %v714
      %v716 = vlaneseq
      %v717 = vshrl.u32 %v716, 7
      %v718 = vsub.s32 %v715, %v717
      %v719 = vrot.slane %v705, %v718
      %v720 = vcombine.high %v696, 0.0
      %v721 = vcombine.high %v703, 0.0
      %v722 = vcombine.high %v712, 0.0
      %v723 = vcombine.high %v719, 0.0
      %v724 = vcombine.high %v470, 0.0
      %v726 = vunpack.c.l.s4 1983009808
      %v727 = vunpack.c.0.s8 %v726
      %v728 = vlaneseq
      %v729 = vshrl.u32 %v728, 7
      %v730 = vsub.s32 %v727, %v729
      %v731 = vrot.slane %v470, %v730
      %v733 = vunpack.c.l.s4 1983009808
      %v734 = vunpack.c.0.s8 %v733
      %v735 = vlaneseq
      %v736 = vshrl.u32 %v735, 7
      %v737 = vsub.s32 %v734, %v736
      %v738 = vrot.slane %v724, %v737
      %v739 = vcombine.high %v509, 0.0
      %v741 = vunpack.c.l.s4 1983009808
      %v742 = vunpack.c.0.s8 %v741
      %v743 = vlaneseq
      %v744 = vshrl.u32 %v743, 7
      %v745 = vsub.s32 %v742, %v744
      %v746 = vrot.slane %v509, %v745
      %v748 = vunpack.c.l.s4 1983009808
      %v749 = vunpack.c.0.s8 %v748
      %v750 = vlaneseq
      %v751 = vshrl.u32 %v750, 7
      %v752 = vsub.s32 %v749, %v751
      %v753 = vrot.slane %v739, %v752
      %v754 = vcombine.low %v731, %v746
      %v755 = vcombine.high %v731, %v746
      %v757 = vunpack.c.l.s4 1934713408
      %v758 = vunpack.c.0.s8 %v757
      %v759 = vlaneseq
      %v760 = vshrl.u32 %v759, 7
      %v761 = vsub.s32 %v758, %v760
      %v762 = vrot.slane %v754, %v761
      %v764 = vunpack.c.l.s4 1934713408
      %v765 = vunpack.c.0.s8 %v764
      %v766 = vlaneseq
      %v767 = vshrl.u32 %v766, 7
      %v768 = vsub.s32 %v765, %v767
      %v769 = vrot.slane %v755, %v768
      %v770 = vcombine.low %v738, %v753
      %v771 = vcombine.high %v738, %v753
      %v773 = vunpack.c.l.s4 1934713408
      %v774 = vunpack.c.0.s8 %v773
      %v775 = vlaneseq
      %v776 = vshrl.u32 %v775, 7
      %v777 = vsub.s32 %v774, %v776
      %v778 = vrot.slane %v770, %v777
      %v780 = vunpack.c.l.s4 1934713408
      %v781 = vunpack.c.0.s8 %v780
      %v782 = vlaneseq
      %v783 = vshrl.u32 %v782, 7
      %v784 = vsub.s32 %v781, %v783
      %v785 = vrot.slane %v771, %v784
      %v786 = vcombine.high %v762, 0.0
      %v787 = vcombine.high %v769, 0.0
      %v788 = vcombine.high %v778, 0.0
      %v789 = vcombine.high %v785, 0.0
      %v790 = vcombine.high %v476, 0.0
      %v792 = vunpack.c.l.s4 1983009808
      %v793 = vunpack.c.0.s8 %v792
      %v794 = vlaneseq
      %v795 = vshrl.u32 %v794, 7
      %v796 = vsub.s32 %v793, %v795
      %v797 = vrot.slane %v476, %v796
      %v799 = vunpack.c.l.s4 1983009808
      %v800 = vunpack.c.0.s8 %v799
      %v801 = vlaneseq
      %v802 = vshrl.u32 %v801, 7
      %v803 = vsub.s32 %v800, %v802
      %v804 = vrot.slane %v790, %v803
      %v805 = vcombine.high %v511, 0.0
      %v807 = vunpack.c.l.s4 1983009808
      %v808 = vunpack.c.0.s8 %v807
      %v809 = vlaneseq
      %v810 = vshrl.u32 %v809, 7
      %v811 = vsub.s32 %v808, %v810
      %v812 = vrot.slane %v511, %v811
      %v814 = vunpack.c.l.s4 1983009808
      %v815 = vunpack.c.0.s8 %v814
      %v816 = vlaneseq
      %v817 = vshrl.u32 %v816, 7
      %v818 = vsub.s32 %v815, %v817
      %v819 = vrot.slane %v805, %v818
      %v820 = vcombine.low %v797, %v812
      %v821 = vcombine.high %v797, %v812
      %v823 = vunpack.c.l.s4 1934713408
      %v824 = vunpack.c.0.s8 %v823
      %v825 = vlaneseq
      %v826 = vshrl.u32 %v825, 7
      %v827 = vsub.s32 %v824, %v826
      %v828 = vrot.slane %v820, %v827
      %v830 = vunpack.c.l.s4 1934713408
      %v831 = vunpack.c.0.s8 %v830
      %v832 = vlaneseq
      %v833 = vshrl.u32 %v832, 7
      %v834 = vsub.s32 %v831, %v833
      %v835 = vrot.slane %v821, %v834
      %v836 = vcombine.low %v804, %v819
      %v837 = vcombine.high %v804, %v819
      %v839 = vunpack.c.l.s4 1934713408
      %v840 = vunpack.c.0.s8 %v839
      %v841 = vlaneseq
      %v842 = vshrl.u32 %v841, 7
      %v843 = vsub.s32 %v840, %v842
      %v844 = vrot.slane %v836, %v843
      %v846 = vunpack.c.l.s4 1934713408
      %v847 = vunpack.c.0.s8 %v846
      %v848 = vlaneseq
      %v849 = vshrl.u32 %v848, 7
      %v850 = vsub.s32 %v847, %v849
      %v851 = vrot.slane %v837, %v850
      %v852 = vcombine.high %v828, 0.0
      %v853 = vcombine.high %v835, 0.0
      %v854 = vcombine.high %v844, 0.0
      %v855 = vcombine.high %v851, 0.0
      %v856 = vcombine.high %v480, 0.0
      %v858 = vunpack.c.l.s4 1983009808
      %v859 = vunpack.c.0.s8 %v858
      %v860 = vlaneseq
      %v861 = vshrl.u32 %v860, 7
      %v862 = vsub.s32 %v859, %v861
      %v863 = vrot.slane %v480, %v862
      %v865 = vunpack.c.l.s4 1983009808
      %v866 = vunpack.c.0.s8 %v865
      %v867 = vlaneseq
      %v868 = vshrl.u32 %v867, 7
      %v869 = vsub.s32 %v866, %v868
      %v870 = vrot.slane %v856, %v869
      %v871 = vcombine.high %v513, 0.0
      %v873 = vunpack.c.l.s4 1983009808
      %v874 = vunpack.c.0.s8 %v873
      %v875 = vlaneseq
      %v876 = vshrl.u32 %v875, 7
      %v877 = vsub.s32 %v874, %v876
      %v878 = vrot.slane %v513, %v877
      %v880 = vunpack.c.l.s4 1983009808
      %v881 = vunpack.c.0.s8 %v880
      %v882 = vlaneseq
      %v883 = vshrl.u32 %v882, 7
      %v884 = vsub.s32 %v881, %v883
      %v885 = vrot.slane %v871, %v884
      %v886 = vcombine.low %v863, %v878
      %v887 = vcombine.high %v863, %v878
      %v889 = vunpack.c.l.s4 1934713408
      %v890 = vunpack.c.0.s8 %v889
      %v891 = vlaneseq
      %v892 = vshrl.u32 %v891, 7
      %v893 = vsub.s32 %v890, %v892
      %v894 = vrot.slane %v886, %v893
      %v896 = vunpack.c.l.s4 1934713408
      %v897 = vunpack.c.0.s8 %v896
      %v898 = vlaneseq
      %v899 = vshrl.u32 %v898, 7
      %v900 = vsub.s32 %v897, %v899
      %v901 = vrot.slane %v887, %v900
      %v902 = vcombine.low %v870, %v885
      %v903 = vcombine.high %v870, %v885
      %v905 = vunpack.c.l.s4 1934713408
      %v906 = vunpack.c.0.s8 %v905
      %v907 = vlaneseq
      %v908 = vshrl.u32 %v907, 7
      %v909 = vsub.s32 %v906, %v908
      %v910 = vrot.slane %v902, %v909
      %v912 = vunpack.c.l.s4 1934713408
      %v913 = vunpack.c.0.s8 %v912
      %v914 = vlaneseq
      %v915 = vshrl.u32 %v914, 7
      %v916 = vsub.s32 %v913, %v915
      %v917 = vrot.slane %v903, %v916
      %v918 = vcombine.high %v894, 0.0
      %v919 = vcombine.high %v901, 0.0
      %v920 = vcombine.high %v910, 0.0
      %v921 = vcombine.high %v917, 0.0
      %v922 = vcombine.high %v486, 0.0
      %v924 = vunpack.c.l.s4 1983009808
      %v925 = vunpack.c.0.s8 %v924
      %v926 = vlaneseq
      %v927 = vshrl.u32 %v926, 7
      %v928 = vsub.s32 %v925, %v927
      %v929 = vrot.slane %v486, %v928
      %v931 = vunpack.c.l.s4 1983009808
      %v932 = vunpack.c.0.s8 %v931
      %v933 = vlaneseq
      %v934 = vshrl.u32 %v933, 7
      %v935 = vsub.s32 %v932, %v934
      %v936 = vrot.slane %v922, %v935
      %v937 = vcombine.high %v515, 0.0
      %v939 = vunpack.c.l.s4 1983009808
      %v940 = vunpack.c.0.s8 %v939
      %v941 = vlaneseq
      %v942 = vshrl.u32 %v941, 7
      %v943 = vsub.s32 %v940, %v942
      %v944 = vrot.slane %v515, %v943
      %v946 = vunpack.c.l.s4 1983009808
      %v947 = vunpack.c.0.s8 %v946
      %v948 = vlaneseq
      %v949 = vshrl.u32 %v948, 7
      %v950 = vsub.s32 %v947, %v949
      %v951 = vrot.slane %v937, %v950
      %v952 = vcombine.low %v929, %v944
      %v953 = vcombine.high %v929, %v944
      %v955 = vunpack.c.l.s4 1934713408
      %v956 = vunpack.c.0.s8 %v955
      %v957 = vlaneseq
      %v958 = vshrl.u32 %v957, 7
      %v959 = vsub.s32 %v956, %v958
      %v960 = vrot.slane %v952, %v959
      %v962 = vunpack.c.l.s4 1934713408
      %v963 = vunpack.c.0.s8 %v962
      %v964 = vlaneseq
      %v965 = vshrl.u32 %v964, 7
      %v966 = vsub.s32 %v963, %v965
      %v967 = vrot.slane %v953, %v966
      %v968 = vcombine.low %v936, %v951
      %v969 = vcombine.high %v936, %v951
      %v971 = vunpack.c.l.s4 1934713408
      %v972 = vunpack.c.0.s8 %v971
      %v973 = vlaneseq
      %v974 = vshrl.u32 %v973, 7
      %v975 = vsub.s32 %v972, %v974
      %v976 = vrot.slane %v968, %v975
      %v978 = vunpack.c.l.s4 1934713408
      %v979 = vunpack.c.0.s8 %v978
      %v980 = vlaneseq
      %v981 = vshrl.u32 %v980, 7
      %v982 = vsub.s32 %v979, %v981
      %v983 = vrot.slane %v969, %v982
      %v984 = vcombine.high %v960, 0.0
      %v985 = vcombine.high %v967, 0.0
      %v986 = vcombine.high %v976, 0.0
      %v987 = vcombine.high %v983, 0.0
      %v988 = vcombine.high %v490, 0.0
      %v990 = vunpack.c.l.s4 1983009808
      %v991 = vunpack.c.0.s8 %v990
      %v992 = vlaneseq
      %v993 = vshrl.u32 %v992, 7
      %v994 = vsub.s32 %v991, %v993
      %v995 = vrot.slane %v490, %v994
      %v997 = vunpack.c.l.s4 1983009808
      %v998 = vunpack.c.0.s8 %v997
      %v999 = vlaneseq
      %v1000 = vshrl.u32 %v999, 7
      %v1001 = vsub.s32 %v998, %v1000
      %v1002 = vrot.slane %v988, %v1001
      %v1003 = vcombine.high %v517, 0.0
      %v1005 = vunpack.c.l.s4 1983009808
      %v1006 = vunpack.c.0.s8 %v1005
      %v1007 = vlaneseq
      %v1008 = vshrl.u32 %v1007, 7
      %v1009 = vsub.s32 %v1006, %v1008
      %v1010 = vrot.slane %v517, %v1009
      %v1012 = vunpack.c.l.s4 1983009808
      %v1013 = vunpack.c.0.s8 %v1012
      %v1014 = vlaneseq
      %v1015 = vshrl.u32 %v1014, 7
      %v1016 = vsub.s32 %v1013, %v1015
      %v1017 = vrot.slane %v1003, %v1016
      %v1018 = vcombine.low %v995, %v1010
      %v1019 = vcombine.high %v995, %v1010
      %v1021 = vunpack.c.l.s4 1934713408
      %v1022 = vunpack.c.0.s8 %v1021
      %v1023 = vlaneseq
      %v1024 = vshrl.u32 %v1023, 7
      %v1025 = vsub.s32 %v1022, %v1024
      %v1026 = vrot.slane %v1018, %v1025
      %v1028 = vunpack.c.l.s4 1934713408
      %v1029 = vunpack.c.0.s8 %v1028
      %v1030 = vlaneseq
      %v1031 = vshrl.u32 %v1030, 7
      %v1032 = vsub.s32 %v1029, %v1031
      %v1033 = vrot.slane %v1019, %v1032
      %v1034 = vcombine.low %v1002, %v1017
      %v1035 = vcombine.high %v1002, %v1017
      %v1037 = vunpack.c.l.s4 1934713408
      %v1038 = vunpack.c.0.s8 %v1037
      %v1039 = vlaneseq
      %v1040 = vshrl.u32 %v1039, 7
      %v1041 = vsub.s32 %v1038, %v1040
      %v1042 = vrot.slane %v1034, %v1041
      %v1044 = vunpack.c.l.s4 1934713408
      %v1045 = vunpack.c.0.s8 %v1044
      %v1046 = vlaneseq
      %v1047 = vshrl.u32 %v1046, 7
      %v1048 = vsub.s32 %v1045, %v1047
      %v1049 = vrot.slane %v1035, %v1048
      %v1050 = vcombine.high %v1026, 0.0
      %v1051 = vcombine.high %v1033, 0.0
      %v1052 = vcombine.high %v1042, 0.0
      %v1053 = vcombine.high %v1049, 0.0
      %v1054 = vcombine.low %v564, %v571
      %v1056 = vunpack.c.l.s4 1983009808
      %v1057 = vunpack.c.0.s8 %v1056
      %v1058 = vlaneseq
      %v1059 = vshrl.u32 %v1058, 7
      %v1060 = vsub.s32 %v1057, %v1059
      %v1061 = vrot.slane %v1054, %v1060
      %v1062 = vcombine.low %v588, %v589
      %v1064 = vunpack.c.l.s4 1983009808
      %v1065 = vunpack.c.0.s8 %v1064
      %v1066 = vlaneseq
      %v1067 = vshrl.u32 %v1066, 7
      %v1068 = vsub.s32 %v1065, %v1067
      %v1069 = vrot.slane %v1062, %v1068
      %v1070 = vcombine.low %v580, %v587
      %v1072 = vunpack.c.l.s4 1983009808
      %v1073 = vunpack.c.0.s8 %v1072
      %v1074 = vlaneseq
      %v1075 = vshrl.u32 %v1074, 7
      %v1076 = vsub.s32 %v1073, %v1075
      %v1077 = vrot.slane %v1070, %v1076
      %v1078 = vcombine.low %v590, %v591
      %v1080 = vunpack.c.l.s4 1983009808
      %v1081 = vunpack.c.0.s8 %v1080
      %v1082 = vlaneseq
      %v1083 = vshrl.u32 %v1082, 7
      %v1084 = vsub.s32 %v1081, %v1083
      %v1085 = vrot.slane %v1078, %v1084
      %v1086 = vcombine.low %v1061, %v1069
      %v1088 = vunpack.c.l.s4 1934713408
      %v1089 = vunpack.c.0.s8 %v1088
      %v1090 = vlaneseq
      %v1091 = vshrl.u32 %v1090, 7
      %v1092 = vsub.s32 %v1089, %v1091
      %v1093 = vrot.slane %v1086, %v1092
      %v1094 = vcombine.low %v1077, %v1085
      %v1096 = vunpack.c.l.s4 1934713408
      %v1097 = vunpack.c.0.s8 %v1096
      %v1098 = vlaneseq
      %v1099 = vshrl.u32 %v1098, 7
      %v1100 = vsub.s32 %v1097, %v1099
      %v1101 = vrot.slane %v1094, %v1100
      %v1102 = vcombine.low %v1093, %v1101
      %v1103 = vcombine.high %v1093, %v1101
      %v1104 = vcombine.low %v630, %v637
      %v1106 = vunpack.c.l.s4 1983009808
      %v1107 = vunpack.c.0.s8 %v1106
      %v1108 = vlaneseq
      %v1109 = vshrl.u32 %v1108, 7
      %v1110 = vsub.s32 %v1107, %v1109
      %v1111 = vrot.slane %v1104, %v1110
      %v1112 = vcombine.low %v654, %v655
      %v1114 = vunpack.c.l.s4 1983009808
      %v1115 = vunpack.c.0.s8 %v1114
      %v1116 = vlaneseq
      %v1117 = vshrl.u32 %v1116, 7
      %v1118 = vsub.s32 %v1115, %v1117
      %v1119 = vrot.slane %v1112, %v1118
      %v1120 = vcombine.low %v646, %v653
      %v1122 = vunpack.c.l.s4 1983009808
      %v1123 = vunpack.c.0.s8 %v1122
      %v1124 = vlaneseq
      %v1125 = vshrl.u32 %v1124, 7
      %v1126 = vsub.s32 %v1123, %v1125
      %v1127 = vrot.slane %v1120, %v1126
      %v1128 = vcombine.low %v656, %v657
      %v1130 = vunpack.c.l.s4 1983009808
      %v1131 = vunpack.c.0.s8 %v1130
      %v1132 = vlaneseq
      %v1133 = vshrl.u32 %v1132, 7
      %v1134 = vsub.s32 %v1131, %v1133
      %v1135 = vrot.slane %v1128, %v1134
      %v1136 = vcombine.low %v1111, %v1119
      %v1138 = vunpack.c.l.s4 1934713408
      %v1139 = vunpack.c.0.s8 %v1138
      %v1140 = vlaneseq
      %v1141 = vshrl.u32 %v1140, 7
      %v1142 = vsub.s32 %v1139, %v1141
      %v1143 = vrot.slane %v1136, %v1142
      %v1144 = vcombine.low %v1127, %v1135
      %v1146 = vunpack.c.l.s4 1934713408
      %v1147 = vunpack.c.0.s8 %v1146
      %v1148 = vlaneseq
      %v1149 = vshrl.u32 %v1148, 7
      %v1150 = vsub.s32 %v1147, %v1149
      %v1151 = vrot.slane %v1144, %v1150
      %v1152 = vcombine.low %v1143, %v1151
      %v1153 = vcombine.high %v1143, %v1151
      %v1154 = vcombine.low %v696, %v703
      %v1156 = vunpack.c.l.s4 1983009808
      %v1157 = vunpack.c.0.s8 %v1156
      %v1158 = vlaneseq
      %v1159 = vshrl.u32 %v1158, 7
      %v1160 = vsub.s32 %v1157, %v1159
      %v1161 = vrot.slane %v1154, %v1160
      %v1162 = vcombine.low %v720, %v721
      %v1164 = vunpack.c.l.s4 1983009808
      %v1165 = vunpack.c.0.s8 %v1164
      %v1166 = vlaneseq
      %v1167 = vshrl.u32 %v1166, 7
      %v1168 = vsub.s32 %v1165, %v1167
      %v1169 = vrot.slane %v1162, %v1168
      %v1170 = vcombine.low %v712, %v719
      %v1172 = vunpack.c.l.s4 1983009808
      %v1173 = vunpack.c.0.s8 %v1172
      %v1174 = vlaneseq
      %v1175 = vshrl.u32 %v1174, 7
      %v1176 = vsub.s32 %v1173, %v1175
      %v1177 = vrot.slane %v1170, %v1176
      %v1178 = vcombine.low %v722, %v723
      %v1180 = vunpack.c.l.s4 1983009808
      %v1181 = vunpack.c.0.s8 %v1180
      %v1182 = vlaneseq
      %v1183 = vshrl.u32 %v1182, 7
      %v1184 = vsub.s32 %v1181, %v1183
      %v1185 = vrot.slane %v1178, %v1184
      %v1186 = vcombine.low %v1161, %v1169
      %v1188 = vunpack.c.l.s4 1934713408
      %v1189 = vunpack.c.0.s8 %v1188
      %v1190 = vlaneseq
      %v1191 = vshrl.u32 %v1190, 7
      %v1192 = vsub.s32 %v1189, %v1191
      %v1193 = vrot.slane %v1186, %v1192
      %v1194 = vcombine.low %v1177, %v1185
      %v1196 = vunpack.c.l.s4 1934713408
      %v1197 = vunpack.c.0.s8 %v1196
      %v1198 = vlaneseq
      %v1199 = vshrl.u32 %v1198, 7
      %v1200 = vsub.s32 %v1197, %v1199
      %v1201 = vrot.slane %v1194, %v1200
      %v1202 = vcombine.low %v1193, %v1201
      %v1203 = vcombine.high %v1193, %v1201
      %v1204 = vcombine.low %v762, %v769
      %v1206 = vunpack.c.l.s4 1983009808
      %v1207 = vunpack.c.0.s8 %v1206
      %v1208 = vlaneseq
      %v1209 = vshrl.u32 %v1208, 7
      %v1210 = vsub.s32 %v1207, %v1209
      %v1211 = vrot.slane %v1204, %v1210
      %v1212 = vcombine.low %v786, %v787
      %v1214 = vunpack.c.l.s4 1983009808
      %v1215 = vunpack.c.0.s8 %v1214
      %v1216 = vlaneseq
      %v1217 = vshrl.u32 %v1216, 7
      %v1218 = vsub.s32 %v1215, %v1217
      %v1219 = vrot.slane %v1212, %v1218
      %v1220 = vcombine.low %v778, %v785
      %v1222 = vunpack.c.l.s4 1983009808
      %v1223 = vunpack.c.0.s8 %v1222
      %v1224 = vlaneseq
      %v1225 = vshrl.u32 %v1224, 7
      %v1226 = vsub.s32 %v1223, %v1225
      %v1227 = vrot.slane %v1220, %v1226
      %v1228 = vcombine.low %v788, %v789
      %v1230 = vunpack.c.l.s4 1983009808
      %v1231 = vunpack.c.0.s8 %v1230
      %v1232 = vlaneseq
      %v1233 = vshrl.u32 %v1232, 7
      %v1234 = vsub.s32 %v1231, %v1233
      %v1235 = vrot.slane %v1228, %v1234
      %v1236 = vcombine.low %v1211, %v1219
      %v1238 = vunpack.c.l.s4 1934713408
      %v1239 = vunpack.c.0.s8 %v1238
      %v1240 = vlaneseq
      %v1241 = vshrl.u32 %v1240, 7
      %v1242 = vsub.s32 %v1239, %v1241
      %v1243 = vrot.slane %v1236, %v1242
      %v1244 = vcombine.low %v1227, %v1235
      %v1246 = vunpack.c.l.s4 1934713408
      %v1247 = vunpack.c.0.s8 %v1246
      %v1248 = vlaneseq
      %v1249 = vshrl.u32 %v1248, 7
      %v1250 = vsub.s32 %v1247, %v1249
      %v1251 = vrot.slane %v1244, %v1250
      %v1252 = vcombine.low %v1243, %v1251
      %v1253 = vcombine.high %v1243, %v1251
      %v1254 = vcombine.low %v828, %v835
      %v1256 = vunpack.c.l.s4 1983009808
      %v1257 = vunpack.c.0.s8 %v1256
      %v1258 = vlaneseq
      %v1259 = vshrl.u32 %v1258, 7
      %v1260 = vsub.s32 %v1257, %v1259
      %v1261 = vrot.slane %v1254, %v1260
      %v1262 = vcombine.low %v852, %v853
      %v1264 = vunpack.c.l.s4 1983009808
      %v1265 = vunpack.c.0.s8 %v1264
      %v1266 = vlaneseq
      %v1267 = vshrl.u32 %v1266, 7
      %v1268 = vsub.s32 %v1265, %v1267
      %v1269 = vrot.slane %v1262, %v1268
      %v1270 = vcombine.low %v844, %v851
      %v1272 = vunpack.c.l.s4 1983009808
      %v1273 = vunpack.c.0.s8 %v1272
      %v1274 = vlaneseq
      %v1275 = vshrl.u32 %v1274, 7
      %v1276 = vsub.s32 %v1273, %v1275
      %v1277 = vrot.slane %v1270, %v1276
      %v1278 = vcombine.low %v854, %v855
      %v1280 = vunpack.c.l.s4 1983009808
      %v1281 = vunpack.c.0.s8 %v1280
      %v1282 = vlaneseq
      %v1283 = vshrl.u32 %v1282, 7
      %v1284 = vsub.s32 %v1281, %v1283
      %v1285 = vrot.slane %v1278, %v1284
      %v1286 = vcombine.low %v1261, %v1269
      %v1288 = vunpack.c.l.s4 1934713408
      %v1289 = vunpack.c.0.s8 %v1288
      %v1290 = vlaneseq
      %v1291 = vshrl.u32 %v1290, 7
      %v1292 = vsub.s32 %v1289, %v1291
      %v1293 = vrot.slane %v1286, %v1292
      %v1294 = vcombine.low %v1277, %v1285
      %v1296 = vunpack.c.l.s4 1934713408
      %v1297 = vunpack.c.0.s8 %v1296
      %v1298 = vlaneseq
      %v1299 = vshrl.u32 %v1298, 7
      %v1300 = vsub.s32 %v1297, %v1299
      %v1301 = vrot.slane %v1294, %v1300
      %v1302 = vcombine.low %v1293, %v1301
      %v1303 = vcombine.high %v1293, %v1301
      %v1304 = vcombine.low %v894, %v901
      %v1306 = vunpack.c.l.s4 1983009808
      %v1307 = vunpack.c.0.s8 %v1306
      %v1308 = vlaneseq
      %v1309 = vshrl.u32 %v1308, 7
      %v1310 = vsub.s32 %v1307, %v1309
      %v1311 = vrot.slane %v1304, %v1310
      %v1312 = vcombine.low %v918, %v919
      %v1314 = vunpack.c.l.s4 1983009808
      %v1315 = vunpack.c.0.s8 %v1314
      %v1316 = vlaneseq
      %v1317 = vshrl.u32 %v1316, 7
      %v1318 = vsub.s32 %v1315, %v1317
      %v1319 = vrot.slane %v1312, %v1318
      %v1320 = vcombine.low %v910, %v917
      %v1322 = vunpack.c.l.s4 1983009808
      %v1323 = vunpack.c.0.s8 %v1322
      %v1324 = vlaneseq
      %v1325 = vshrl.u32 %v1324, 7
      %v1326 = vsub.s32 %v1323, %v1325
      %v1327 = vrot.slane %v1320, %v1326
      %v1328 = vcombine.low %v920, %v921
      %v1330 = vunpack.c.l.s4 1983009808
      %v1331 = vunpack.c.0.s8 %v1330
      %v1332 = vlaneseq
      %v1333 = vshrl.u32 %v1332, 7
      %v1334 = vsub.s32 %v1331, %v1333
      %v1335 = vrot.slane %v1328, %v1334
      %v1336 = vcombine.low %v1311, %v1319
      %v1338 = vunpack.c.l.s4 1934713408
      %v1339 = vunpack.c.0.s8 %v1338
      %v1340 = vlaneseq
      %v1341 = vshrl.u32 %v1340, 7
      %v1342 = vsub.s32 %v1339, %v1341
      %v1343 = vrot.slane %v1336, %v1342
      %v1344 = vcombine.low %v1327, %v1335
      %v1346 = vunpack.c.l.s4 1934713408
      %v1347 = vunpack.c.0.s8 %v1346
      %v1348 = vlaneseq
      %v1349 = vshrl.u32 %v1348, 7
      %v1350 = vsub.s32 %v1347, %v1349
      %v1351 = vrot.slane %v1344, %v1350
      %v1352 = vcombine.low %v1343, %v1351
      %v1353 = vcombine.high %v1343, %v1351
      %v1354 = vcombine.low %v960, %v967
      %v1356 = vunpack.c.l.s4 1983009808
      %v1357 = vunpack.c.0.s8 %v1356
      %v1358 = vlaneseq
      %v1359 = vshrl.u32 %v1358, 7
      %v1360 = vsub.s32 %v1357, %v1359
      %v1361 = vrot.slane %v1354, %v1360
      %v1362 = vcombine.low %v984, %v985
      %v1364 = vunpack.c.l.s4 1983009808
      %v1365 = vunpack.c.0.s8 %v1364
      %v1366 = vlaneseq
      %v1367 = vshrl.u32 %v1366, 7
      %v1368 = vsub.s32 %v1365, %v1367
      %v1369 = vrot.slane %v1362, %v1368
      %v1370 = vcombine.low %v976, %v983
      %v1372 = vunpack.c.l.s4 1983009808
      %v1373 = vunpack.c.0.s8 %v1372
      %v1374 = vlaneseq
      %v1375 = vshrl.u32 %v1374, 7
      %v1376 = vsub.s32 %v1373, %v1375
      %v1377 = vrot.slane %v1370, %v1376
      %v1378 = vcombine.low %v986, %v987
      %v1380 = vunpack.c.l.s4 1983009808
      %v1381 = vunpack.c.0.s8 %v1380
      %v1382 = vlaneseq
      %v1383 = vshrl.u32 %v1382, 7
      %v1384 = vsub.s32 %v1381, %v1383
      %v1385 = vrot.slane %v1378, %v1384
      %v1386 = vcombine.low %v1361, %v1369
      %v1388 = vunpack.c.l.s4 1934713408
      %v1389 = vunpack.c.0.s8 %v1388
      %v1390 = vlaneseq
      %v1391 = vshrl.u32 %v1390, 7
      %v1392 = vsub.s32 %v1389, %v1391
      %v1393 = vrot.slane %v1386, %v1392
      %v1394 = vcombine.low %v1377, %v1385
      %v1396 = vunpack.c.l.s4 1934713408
      %v1397 = vunpack.c.0.s8 %v1396
      %v1398 = vlaneseq
      %v1399 = vshrl.u32 %v1398, 7
      %v1400 = vsub.s32 %v1397, %v1399
      %v1401 = vrot.slane %v1394, %v1400
      %v1402 = vcombine.low %v1393, %v1401
      %v1403 = vcombine.high %v1393, %v1401
      %v1404 = vcombine.low %v1026, %v1033
      %v1406 = vunpack.c.l.s4 1983009808
      %v1407 = vunpack.c.0.s8 %v1406
      %v1408 = vlaneseq
      %v1409 = vshrl.u32 %v1408, 7
      %v1410 = vsub.s32 %v1407, %v1409
      %v1411 = vrot.slane %v1404, %v1410
      %v1412 = vcombine.low %v1050, %v1051
      %v1414 = vunpack.c.l.s4 1983009808
      %v1415 = vunpack.c.0.s8 %v1414
      %v1416 = vlaneseq
      %v1417 = vshrl.u32 %v1416, 7
      %v1418 = vsub.s32 %v1415, %v1417
      %v1419 = vrot.slane %v1412, %v1418
      %v1420 = vcombine.low %v1042, %v1049
      %v1422 = vunpack.c.l.s4 1983009808
      %v1423 = vunpack.c.0.s8 %v1422
      %v1424 = vlaneseq
      %v1425 = vshrl.u32 %v1424, 7
      %v1426 = vsub.s32 %v1423, %v1425
      %v1427 = vrot.slane %v1420, %v1426
      %v1428 = vcombine.low %v1052, %v1053
      %v1430 = vunpack.c.l.s4 1983009808
      %v1431 = vunpack.c.0.s8 %v1430
      %v1432 = vlaneseq
      %v1433 = vshrl.u32 %v1432, 7
      %v1434 = vsub.s32 %v1431, %v1433
      %v1435 = vrot.slane %v1428, %v1434
      %v1436 = vcombine.low %v1411, %v1419
      %v1438 = vunpack.c.l.s4 1934713408
      %v1439 = vunpack.c.0.s8 %v1438
      %v1440 = vlaneseq
      %v1441 = vshrl.u32 %v1440, 7
      %v1442 = vsub.s32 %v1439, %v1441
      %v1443 = vrot.slane %v1436, %v1442
      %v1444 = vcombine.low %v1427, %v1435
      %v1446 = vunpack.c.l.s4 1934713408
      %v1447 = vunpack.c.0.s8 %v1446
      %v1448 = vlaneseq
      %v1449 = vshrl.u32 %v1448, 7
      %v1450 = vsub.s32 %v1447, %v1449
      %v1451 = vrot.slane %v1444, %v1450
      %v1452 = vcombine.low %v1443, %v1451
      %v1453 = vcombine.high %v1443, %v1451
      %v1454 = vpack.c.bf16 %v1152, %v1102
      %v1455 = vpack.c.bf16 %v1252, %v1202
      %v1456 = vpack.c.bf16 %v1352, %v1302
      %v1457 = vpack.c.bf16 %v1452, %v1402
      %v1458 = vpack.c.bf16 %v1153, %v1103
      %v1459 = vpack.c.bf16 %v1253, %v1203
      %v1460 = vpack.c.bf16 %v1353, %v1303
      %v1461 = vpack.c.bf16 %v1453, %v1403
      %1462 = vrot.lane.b32.xlu0 %v456, 64
      %v1463 = vpop.permute.xlu0 %1462
      %1464 = vrot.lane.b32.xlu0 %v460, 64
      %v1465 = vpop.permute.xlu0 %1464
      %1466 = vrot.lane.b32.xlu0 %v466, 64
      %v1467 = vpop.permute.xlu0 %1466
      %1468 = vrot.lane.b32.xlu0 %v470, 64
      %v1469 = vpop.permute.xlu0 %1468
      %1470 = vrot.lane.b32.xlu0 %v476, 64
      %v1471 = vpop.permute.xlu0 %1470
      %1472 = vrot.lane.b32.xlu0 %v480, 64
      %v1473 = vpop.permute.xlu0 %1472
      %1474 = vrot.lane.b32.xlu0 %v486, 64
      %v1475 = vpop.permute.xlu0 %1474
      %1476 = vrot.lane.b32.xlu0 %v490, 64
      %v1477 = vpop.permute.xlu0 %1476
      %1478 = vrot.lane.b32.xlu0 %v503, 64
      %v1479 = vpop.permute.xlu0 %1478
      %1480 = vrot.lane.b32.xlu0 %v505, 64
      %v1481 = vpop.permute.xlu0 %1480
      %1482 = vrot.lane.b32.xlu0 %v507, 64
      %v1483 = vpop.permute.xlu0 %1482
      %1484 = vrot.lane.b32.xlu0 %v509, 64
      %v1485 = vpop.permute.xlu0 %1484
      %1486 = vrot.lane.b32.xlu0 %v511, 64
      %v1487 = vpop.permute.xlu0 %1486
      %1488 = vrot.lane.b32.xlu0 %v513, 64
      %v1489 = vpop.permute.xlu0 %1488
      %1490 = vrot.lane.b32.xlu0 %v515, 64
      %v1491 = vpop.permute.xlu0 %1490
      %1492 = vrot.lane.b32.xlu0 %v517, 64
      %v1493 = vpop.permute.xlu0 %1492
      %v1510 = vcombine.high %v1463, 0.0
      %v1512 = vunpack.c.l.s4 1983009808
      %v1513 = vunpack.c.0.s8 %v1512
      %v1514 = vlaneseq
      %v1515 = vshrl.u32 %v1514, 7
      %v1516 = vsub.s32 %v1513, %v1515
      %v1517 = vrot.slane %v1463, %v1516
      %v1519 = vunpack.c.l.s4 1983009808
      %v1520 = vunpack.c.0.s8 %v1519
      %v1521 = vlaneseq
      %v1522 = vshrl.u32 %v1521, 7
      %v1523 = vsub.s32 %v1520, %v1522
      %v1524 = vrot.slane %v1510, %v1523
      %v1525 = vcombine.high %v1479, 0.0
      %v1527 = vunpack.c.l.s4 1983009808
      %v1528 = vunpack.c.0.s8 %v1527
      %v1529 = vlaneseq
      %v1530 = vshrl.u32 %v1529, 7
      %v1531 = vsub.s32 %v1528, %v1530
      %v1532 = vrot.slane %v1479, %v1531
      %v1534 = vunpack.c.l.s4 1983009808
      %v1535 = vunpack.c.0.s8 %v1534
      %v1536 = vlaneseq
      %v1537 = vshrl.u32 %v1536, 7
      %v1538 = vsub.s32 %v1535, %v1537
      %v1539 = vrot.slane %v1525, %v1538
      %v1540 = vcombine.low %v1517, %v1532
      %v1541 = vcombine.high %v1517, %v1532
      %v1543 = vunpack.c.l.s4 1934713408
      %v1544 = vunpack.c.0.s8 %v1543
      %v1545 = vlaneseq
      %v1546 = vshrl.u32 %v1545, 7
      %v1547 = vsub.s32 %v1544, %v1546
      %v1548 = vrot.slane %v1540, %v1547
      %v1550 = vunpack.c.l.s4 1934713408
      %v1551 = vunpack.c.0.s8 %v1550
      %v1552 = vlaneseq
      %v1553 = vshrl.u32 %v1552, 7
      %v1554 = vsub.s32 %v1551, %v1553
      %v1555 = vrot.slane %v1541, %v1554
      %v1556 = vcombine.low %v1524, %v1539
      %v1557 = vcombine.high %v1524, %v1539
      %v1559 = vunpack.c.l.s4 1934713408
      %v1560 = vunpack.c.0.s8 %v1559
      %v1561 = vlaneseq
      %v1562 = vshrl.u32 %v1561, 7
      %v1563 = vsub.s32 %v1560, %v1562
      %v1564 = vrot.slane %v1556, %v1563
      %v1566 = vunpack.c.l.s4 1934713408
      %v1567 = vunpack.c.0.s8 %v1566
      %v1568 = vlaneseq
      %v1569 = vshrl.u32 %v1568, 7
      %v1570 = vsub.s32 %v1567, %v1569
      %v1571 = vrot.slane %v1557, %v1570
      %v1572 = vcombine.high %v1548, 0.0
      %v1573 = vcombine.high %v1555, 0.0
      %v1574 = vcombine.high %v1564, 0.0
      %v1575 = vcombine.high %v1571, 0.0
      %v1576 = vcombine.high %v1465, 0.0
      %v1578 = vunpack.c.l.s4 1983009808
      %v1579 = vunpack.c.0.s8 %v1578
      %v1580 = vlaneseq
      %v1581 = vshrl.u32 %v1580, 7
      %v1582 = vsub.s32 %v1579, %v1581
      %v1583 = vrot.slane %v1465, %v1582
      %v1585 = vunpack.c.l.s4 1983009808
      %v1586 = vunpack.c.0.s8 %v1585
      %v1587 = vlaneseq
      %v1588 = vshrl.u32 %v1587, 7
      %v1589 = vsub.s32 %v1586, %v1588
      %v1590 = vrot.slane %v1576, %v1589
      %v1591 = vcombine.high %v1481, 0.0
      %v1593 = vunpack.c.l.s4 1983009808
      %v1594 = vunpack.c.0.s8 %v1593
      %v1595 = vlaneseq
      %v1596 = vshrl.u32 %v1595, 7
      %v1597 = vsub.s32 %v1594, %v1596
      %v1598 = vrot.slane %v1481, %v1597
      %v1600 = vunpack.c.l.s4 1983009808
      %v1601 = vunpack.c.0.s8 %v1600
      %v1602 = vlaneseq
      %v1603 = vshrl.u32 %v1602, 7
      %v1604 = vsub.s32 %v1601, %v1603
      %v1605 = vrot.slane %v1591, %v1604
      %v1606 = vcombine.low %v1583, %v1598
      %v1607 = vcombine.high %v1583, %v1598
      %v1609 = vunpack.c.l.s4 1934713408
      %v1610 = vunpack.c.0.s8 %v1609
      %v1611 = vlaneseq
      %v1612 = vshrl.u32 %v1611, 7
      %v1613 = vsub.s32 %v1610, %v1612
      %v1614 = vrot.slane %v1606, %v1613
      %v1616 = vunpack.c.l.s4 1934713408
      %v1617 = vunpack.c.0.s8 %v1616
      %v1618 = vlaneseq
      %v1619 = vshrl.u32 %v1618, 7
      %v1620 = vsub.s32 %v1617, %v1619
      %v1621 = vrot.slane %v1607, %v1620
      %v1622 = vcombine.low %v1590, %v1605
      %v1623 = vcombine.high %v1590, %v1605
      %v1625 = vunpack.c.l.s4 1934713408
      %v1626 = vunpack.c.0.s8 %v1625
      %v1627 = vlaneseq
      %v1628 = vshrl.u32 %v1627, 7
      %v1629 = vsub.s32 %v1626, %v1628
      %v1630 = vrot.slane %v1622, %v1629
      %v1632 = vunpack.c.l.s4 1934713408
      %v1633 = vunpack.c.0.s8 %v1632
      %v1634 = vlaneseq
      %v1635 = vshrl.u32 %v1634, 7
      %v1636 = vsub.s32 %v1633, %v1635
      %v1637 = vrot.slane %v1623, %v1636
      %v1638 = vcombine.high %v1614, 0.0
      %v1639 = vcombine.high %v1621, 0.0
      %v1640 = vcombine.high %v1630, 0.0
      %v1641 = vcombine.high %v1637, 0.0
      %v1642 = vcombine.high %v1467, 0.0
      %v1644 = vunpack.c.l.s4 1983009808
      %v1645 = vunpack.c.0.s8 %v1644
      %v1646 = vlaneseq
      %v1647 = vshrl.u32 %v1646, 7
      %v1648 = vsub.s32 %v1645, %v1647
      %v1649 = vrot.slane %v1467, %v1648
      %v1651 = vunpack.c.l.s4 1983009808
      %v1652 = vunpack.c.0.s8 %v1651
      %v1653 = vlaneseq
      %v1654 = vshrl.u32 %v1653, 7
      %v1655 = vsub.s32 %v1652, %v1654
      %v1656 = vrot.slane %v1642, %v1655
      %v1657 = vcombine.high %v1483, 0.0
      %v1659 = vunpack.c.l.s4 1983009808
      %v1660 = vunpack.c.0.s8 %v1659
      %v1661 = vlaneseq
      %v1662 = vshrl.u32 %v1661, 7
      %v1663 = vsub.s32 %v1660, %v1662
      %v1664 = vrot.slane %v1483, %v1663
      %v1666 = vunpack.c.l.s4 1983009808
      %v1667 = vunpack.c.0.s8 %v1666
      %v1668 = vlaneseq
      %v1669 = vshrl.u32 %v1668, 7
      %v1670 = vsub.s32 %v1667, %v1669
      %v1671 = vrot.slane %v1657, %v1670
      %v1672 = vcombine.low %v1649, %v1664
      %v1673 = vcombine.high %v1649, %v1664
      %v1675 = vunpack.c.l.s4 1934713408
      %v1676 = vunpack.c.0.s8 %v1675
      %v1677 = vlaneseq
      %v1678 = vshrl.u32 %v1677, 7
      %v1679 = vsub.s32 %v1676, %v1678
      %v1680 = vrot.slane %v1672, %v1679
      %v1682 = vunpack.c.l.s4 1934713408
      %v1683 = vunpack.c.0.s8 %v1682
      %v1684 = vlaneseq
      %v1685 = vshrl.u32 %v1684, 7
      %v1686 = vsub.s32 %v1683, %v1685
      %v1687 = vrot.slane %v1673, %v1686
      %v1688 = vcombine.low %v1656, %v1671
      %v1689 = vcombine.high %v1656, %v1671
      %v1691 = vunpack.c.l.s4 1934713408
      %v1692 = vunpack.c.0.s8 %v1691
      %v1693 = vlaneseq
      %v1694 = vshrl.u32 %v1693, 7
      %v1695 = vsub.s32 %v1692, %v1694
      %v1696 = vrot.slane %v1688, %v1695
      %v1698 = vunpack.c.l.s4 1934713408
      %v1699 = vunpack.c.0.s8 %v1698
      %v1700 = vlaneseq
      %v1701 = vshrl.u32 %v1700, 7
      %v1702 = vsub.s32 %v1699, %v1701
      %v1703 = vrot.slane %v1689, %v1702
      %v1704 = vcombine.high %v1680, 0.0
      %v1705 = vcombine.high %v1687, 0.0
      %v1706 = vcombine.high %v1696, 0.0
      %v1707 = vcombine.high %v1703, 0.0
      %v1708 = vcombine.high %v1469, 0.0
      %v1710 = vunpack.c.l.s4 1983009808
      %v1711 = vunpack.c.0.s8 %v1710
      %v1712 = vlaneseq
      %v1713 = vshrl.u32 %v1712, 7
      %v1714 = vsub.s32 %v1711, %v1713
      %v1715 = vrot.slane %v1469, %v1714
      %v1717 = vunpack.c.l.s4 1983009808
      %v1718 = vunpack.c.0.s8 %v1717
      %v1719 = vlaneseq
      %v1720 = vshrl.u32 %v1719, 7
      %v1721 = vsub.s32 %v1718, %v1720
      %v1722 = vrot.slane %v1708, %v1721
      %v1723 = vcombine.high %v1485, 0.0
      %v1725 = vunpack.c.l.s4 1983009808
      %v1726 = vunpack.c.0.s8 %v1725
      %v1727 = vlaneseq
      %v1728 = vshrl.u32 %v1727, 7
      %v1729 = vsub.s32 %v1726, %v1728
      %v1730 = vrot.slane %v1485, %v1729
      %v1732 = vunpack.c.l.s4 1983009808
      %v1733 = vunpack.c.0.s8 %v1732
      %v1734 = vlaneseq
      %v1735 = vshrl.u32 %v1734, 7
      %v1736 = vsub.s32 %v1733, %v1735
      %v1737 = vrot.slane %v1723, %v1736
      %v1738 = vcombine.low %v1715, %v1730
      %v1739 = vcombine.high %v1715, %v1730
      %v1741 = vunpack.c.l.s4 1934713408
      %v1742 = vunpack.c.0.s8 %v1741
      %v1743 = vlaneseq
      %v1744 = vshrl.u32 %v1743, 7
      %v1745 = vsub.s32 %v1742, %v1744
      %v1746 = vrot.slane %v1738, %v1745
      %v1748 = vunpack.c.l.s4 1934713408
      %v1749 = vunpack.c.0.s8 %v1748
      %v1750 = vlaneseq
      %v1751 = vshrl.u32 %v1750, 7
      %v1752 = vsub.s32 %v1749, %v1751
      %v1753 = vrot.slane %v1739, %v1752
      %v1754 = vcombine.low %v1722, %v1737
      %v1755 = vcombine.high %v1722, %v1737
      %v1757 = vunpack.c.l.s4 1934713408
      %v1758 = vunpack.c.0.s8 %v1757
      %v1759 = vlaneseq
      %v1760 = vshrl.u32 %v1759, 7
      %v1761 = vsub.s32 %v1758, %v1760
      %v1762 = vrot.slane %v1754, %v1761
      %v1764 = vunpack.c.l.s4 1934713408
      %v1765 = vunpack.c.0.s8 %v1764
      %v1766 = vlaneseq
      %v1767 = vshrl.u32 %v1766, 7
      %v1768 = vsub.s32 %v1765, %v1767
      %v1769 = vrot.slane %v1755, %v1768
      %v1770 = vcombine.high %v1746, 0.0
      %v1771 = vcombine.high %v1753, 0.0
      %v1772 = vcombine.high %v1762, 0.0
      %v1773 = vcombine.high %v1769, 0.0
      %v1774 = vcombine.high %v1471, 0.0
      %v1776 = vunpack.c.l.s4 1983009808
      %v1777 = vunpack.c.0.s8 %v1776
      %v1778 = vlaneseq
      %v1779 = vshrl.u32 %v1778, 7
      %v1780 = vsub.s32 %v1777, %v1779
      %v1781 = vrot.slane %v1471, %v1780
      %v1783 = vunpack.c.l.s4 1983009808
      %v1784 = vunpack.c.0.s8 %v1783
      %v1785 = vlaneseq
      %v1786 = vshrl.u32 %v1785, 7
      %v1787 = vsub.s32 %v1784, %v1786
      %v1788 = vrot.slane %v1774, %v1787
      %v1789 = vcombine.high %v1487, 0.0
      %v1791 = vunpack.c.l.s4 1983009808
      %v1792 = vunpack.c.0.s8 %v1791
      %v1793 = vlaneseq
      %v1794 = vshrl.u32 %v1793, 7
      %v1795 = vsub.s32 %v1792, %v1794
      %v1796 = vrot.slane %v1487, %v1795
      %v1798 = vunpack.c.l.s4 1983009808
      %v1799 = vunpack.c.0.s8 %v1798
      %v1800 = vlaneseq
      %v1801 = vshrl.u32 %v1800, 7
      %v1802 = vsub.s32 %v1799, %v1801
      %v1803 = vrot.slane %v1789, %v1802
      %v1804 = vcombine.low %v1781, %v1796
      %v1805 = vcombine.high %v1781, %v1796
      %v1807 = vunpack.c.l.s4 1934713408
      %v1808 = vunpack.c.0.s8 %v1807
      %v1809 = vlaneseq
      %v1810 = vshrl.u32 %v1809, 7
      %v1811 = vsub.s32 %v1808, %v1810
      %v1812 = vrot.slane %v1804, %v1811
      %v1814 = vunpack.c.l.s4 1934713408
      %v1815 = vunpack.c.0.s8 %v1814
      %v1816 = vlaneseq
      %v1817 = vshrl.u32 %v1816, 7
      %v1818 = vsub.s32 %v1815, %v1817
      %v1819 = vrot.slane %v1805, %v1818
      %v1820 = vcombine.low %v1788, %v1803
      %v1821 = vcombine.high %v1788, %v1803
      %v1823 = vunpack.c.l.s4 1934713408
      %v1824 = vunpack.c.0.s8 %v1823
      %v1825 = vlaneseq
      %v1826 = vshrl.u32 %v1825, 7
      %v1827 = vsub.s32 %v1824, %v1826
      %v1828 = vrot.slane %v1820, %v1827
      %v1830 = vunpack.c.l.s4 1934713408
      %v1831 = vunpack.c.0.s8 %v1830
      %v1832 = vlaneseq
      %v1833 = vshrl.u32 %v1832, 7
      %v1834 = vsub.s32 %v1831, %v1833
      %v1835 = vrot.slane %v1821, %v1834
      %v1836 = vcombine.high %v1812, 0.0
      %v1837 = vcombine.high %v1819, 0.0
      %v1838 = vcombine.high %v1828, 0.0
      %v1839 = vcombine.high %v1835, 0.0
      %v1840 = vcombine.high %v1473, 0.0
      %v1842 = vunpack.c.l.s4 1983009808
      %v1843 = vunpack.c.0.s8 %v1842
      %v1844 = vlaneseq
      %v1845 = vshrl.u32 %v1844, 7
      %v1846 = vsub.s32 %v1843, %v1845
      %v1847 = vrot.slane %v1473, %v1846
      %v1849 = vunpack.c.l.s4 1983009808
      %v1850 = vunpack.c.0.s8 %v1849
      %v1851 = vlaneseq
      %v1852 = vshrl.u32 %v1851, 7
      %v1853 = vsub.s32 %v1850, %v1852
      %v1854 = vrot.slane %v1840, %v1853
      %v1855 = vcombine.high %v1489, 0.0
      %v1857 = vunpack.c.l.s4 1983009808
      %v1858 = vunpack.c.0.s8 %v1857
      %v1859 = vlaneseq
      %v1860 = vshrl.u32 %v1859, 7
      %v1861 = vsub.s32 %v1858, %v1860
      %v1862 = vrot.slane %v1489, %v1861
      %v1864 = vunpack.c.l.s4 1983009808
      %v1865 = vunpack.c.0.s8 %v1864
      %v1866 = vlaneseq
      %v1867 = vshrl.u32 %v1866, 7
      %v1868 = vsub.s32 %v1865, %v1867
      %v1869 = vrot.slane %v1855, %v1868
      %v1870 = vcombine.low %v1847, %v1862
      %v1871 = vcombine.high %v1847, %v1862
      %v1873 = vunpack.c.l.s4 1934713408
      %v1874 = vunpack.c.0.s8 %v1873
      %v1875 = vlaneseq
      %v1876 = vshrl.u32 %v1875, 7
      %v1877 = vsub.s32 %v1874, %v1876
      %v1878 = vrot.slane %v1870, %v1877
      %v1880 = vunpack.c.l.s4 1934713408
      %v1881 = vunpack.c.0.s8 %v1880
      %v1882 = vlaneseq
      %v1883 = vshrl.u32 %v1882, 7
      %v1884 = vsub.s32 %v1881, %v1883
      %v1885 = vrot.slane %v1871, %v1884
      %v1886 = vcombine.low %v1854, %v1869
      %v1887 = vcombine.high %v1854, %v1869
      %v1889 = vunpack.c.l.s4 1934713408
      %v1890 = vunpack.c.0.s8 %v1889
      %v1891 = vlaneseq
      %v1892 = vshrl.u32 %v1891, 7
      %v1893 = vsub.s32 %v1890, %v1892
      %v1894 = vrot.slane %v1886, %v1893
      %v1896 = vunpack.c.l.s4 1934713408
      %v1897 = vunpack.c.0.s8 %v1896
      %v1898 = vlaneseq
      %v1899 = vshrl.u32 %v1898, 7
      %v1900 = vsub.s32 %v1897, %v1899
      %v1901 = vrot.slane %v1887, %v1900
      %v1902 = vcombine.high %v1878, 0.0
      %v1903 = vcombine.high %v1885, 0.0
      %v1904 = vcombine.high %v1894, 0.0
      %v1905 = vcombine.high %v1901, 0.0
      %v1906 = vcombine.high %v1475, 0.0
      %v1908 = vunpack.c.l.s4 1983009808
      %v1909 = vunpack.c.0.s8 %v1908
      %v1910 = vlaneseq
      %v1911 = vshrl.u32 %v1910, 7
      %v1912 = vsub.s32 %v1909, %v1911
      %v1913 = vrot.slane %v1475, %v1912
      %v1915 = vunpack.c.l.s4 1983009808
      %v1916 = vunpack.c.0.s8 %v1915
      %v1917 = vlaneseq
      %v1918 = vshrl.u32 %v1917, 7
      %v1919 = vsub.s32 %v1916, %v1918
      %v1920 = vrot.slane %v1906, %v1919
      %v1921 = vcombine.high %v1491, 0.0
      %v1923 = vunpack.c.l.s4 1983009808
      %v1924 = vunpack.c.0.s8 %v1923
      %v1925 = vlaneseq
      %v1926 = vshrl.u32 %v1925, 7
      %v1927 = vsub.s32 %v1924, %v1926
      %v1928 = vrot.slane %v1491, %v1927
      %v1930 = vunpack.c.l.s4 1983009808
      %v1931 = vunpack.c.0.s8 %v1930
      %v1932 = vlaneseq
      %v1933 = vshrl.u32 %v1932, 7
      %v1934 = vsub.s32 %v1931, %v1933
      %v1935 = vrot.slane %v1921, %v1934
      %v1936 = vcombine.low %v1913, %v1928
      %v1937 = vcombine.high %v1913, %v1928
      %v1939 = vunpack.c.l.s4 1934713408
      %v1940 = vunpack.c.0.s8 %v1939
      %v1941 = vlaneseq
      %v1942 = vshrl.u32 %v1941, 7
      %v1943 = vsub.s32 %v1940, %v1942
      %v1944 = vrot.slane %v1936, %v1943
      %v1946 = vunpack.c.l.s4 1934713408
      %v1947 = vunpack.c.0.s8 %v1946
      %v1948 = vlaneseq
      %v1949 = vshrl.u32 %v1948, 7
      %v1950 = vsub.s32 %v1947, %v1949
      %v1951 = vrot.slane %v1937, %v1950
      %v1952 = vcombine.low %v1920, %v1935
      %v1953 = vcombine.high %v1920, %v1935
      %v1955 = vunpack.c.l.s4 1934713408
      %v1956 = vunpack.c.0.s8 %v1955
      %v1957 = vlaneseq
      %v1958 = vshrl.u32 %v1957, 7
      %v1959 = vsub.s32 %v1956, %v1958
      %v1960 = vrot.slane %v1952, %v1959
      %v1962 = vunpack.c.l.s4 1934713408
      %v1963 = vunpack.c.0.s8 %v1962
      %v1964 = vlaneseq
      %v1965 = vshrl.u32 %v1964, 7
      %v1966 = vsub.s32 %v1963, %v1965
      %v1967 = vrot.slane %v1953, %v1966
      %v1968 = vcombine.high %v1944, 0.0
      %v1969 = vcombine.high %v1951, 0.0
      %v1970 = vcombine.high %v1960, 0.0
      %v1971 = vcombine.high %v1967, 0.0
      %v1972 = vcombine.high %v1477, 0.0
      %v1974 = vunpack.c.l.s4 1983009808
      %v1975 = vunpack.c.0.s8 %v1974
      %v1976 = vlaneseq
      %v1977 = vshrl.u32 %v1976, 7
      %v1978 = vsub.s32 %v1975, %v1977
      %v1979 = vrot.slane %v1477, %v1978
      %v1981 = vunpack.c.l.s4 1983009808
      %v1982 = vunpack.c.0.s8 %v1981
      %v1983 = vlaneseq
      %v1984 = vshrl.u32 %v1983, 7
      %v1985 = vsub.s32 %v1982, %v1984
      %v1986 = vrot.slane %v1972, %v1985
      %v1987 = vcombine.high %v1493, 0.0
      %v1989 = vunpack.c.l.s4 1983009808
      %v1990 = vunpack.c.0.s8 %v1989
      %v1991 = vlaneseq
      %v1992 = vshrl.u32 %v1991, 7
      %v1993 = vsub.s32 %v1990, %v1992
      %v1994 = vrot.slane %v1493, %v1993
      %v1996 = vunpack.c.l.s4 1983009808
      %v1997 = vunpack.c.0.s8 %v1996
      %v1998 = vlaneseq
      %v1999 = vshrl.u32 %v1998, 7
      %v2000 = vsub.s32 %v1997, %v1999
      %v2001 = vrot.slane %v1987, %v2000
      %v2002 = vcombine.low %v1979, %v1994
      %v2003 = vcombine.high %v1979, %v1994
      %v2005 = vunpack.c.l.s4 1934713408
      %v2006 = vunpack.c.0.s8 %v2005
      %v2007 = vlaneseq
      %v2008 = vshrl.u32 %v2007, 7
      %v2009 = vsub.s32 %v2006, %v2008
      %v2010 = vrot.slane %v2002, %v2009
      %v2012 = vunpack.c.l.s4 1934713408
      %v2013 = vunpack.c.0.s8 %v2012
      %v2014 = vlaneseq
      %v2015 = vshrl.u32 %v2014, 7
      %v2016 = vsub.s32 %v2013, %v2015
      %v2017 = vrot.slane %v2003, %v2016
      %v2018 = vcombine.low %v1986, %v2001
      %v2019 = vcombine.high %v1986, %v2001
      %v2021 = vunpack.c.l.s4 1934713408
      %v2022 = vunpack.c.0.s8 %v2021
      %v2023 = vlaneseq
      %v2024 = vshrl.u32 %v2023, 7
      %v2025 = vsub.s32 %v2022, %v2024
      %v2026 = vrot.slane %v2018, %v2025
      %v2028 = vunpack.c.l.s4 1934713408
      %v2029 = vunpack.c.0.s8 %v2028
      %v2030 = vlaneseq
      %v2031 = vshrl.u32 %v2030, 7
      %v2032 = vsub.s32 %v2029, %v2031
      %v2033 = vrot.slane %v2019, %v2032
      %v2034 = vcombine.high %v2010, 0.0
      %v2035 = vcombine.high %v2017, 0.0
      %v2036 = vcombine.high %v2026, 0.0
      %v2037 = vcombine.high %v2033, 0.0
      %v2038 = vcombine.low %v1548, %v1555
      %v2040 = vunpack.c.l.s4 1983009808
      %v2041 = vunpack.c.0.s8 %v2040
      %v2042 = vlaneseq
      %v2043 = vshrl.u32 %v2042, 7
      %v2044 = vsub.s32 %v2041, %v2043
      %v2045 = vrot.slane %v2038, %v2044
      %v2046 = vcombine.low %v1572, %v1573
      %v2048 = vunpack.c.l.s4 1983009808
      %v2049 = vunpack.c.0.s8 %v2048
      %v2050 = vlaneseq
      %v2051 = vshrl.u32 %v2050, 7
      %v2052 = vsub.s32 %v2049, %v2051
      %v2053 = vrot.slane %v2046, %v2052
      %v2054 = vcombine.low %v1564, %v1571
      %v2056 = vunpack.c.l.s4 1983009808
      %v2057 = vunpack.c.0.s8 %v2056
      %v2058 = vlaneseq
      %v2059 = vshrl.u32 %v2058, 7
      %v2060 = vsub.s32 %v2057, %v2059
      %v2061 = vrot.slane %v2054, %v2060
      %v2062 = vcombine.low %v1574, %v1575
      %v2064 = vunpack.c.l.s4 1983009808
      %v2065 = vunpack.c.0.s8 %v2064
      %v2066 = vlaneseq
      %v2067 = vshrl.u32 %v2066, 7
      %v2068 = vsub.s32 %v2065, %v2067
      %v2069 = vrot.slane %v2062, %v2068
      %v2070 = vcombine.low %v2045, %v2053
      %v2072 = vunpack.c.l.s4 1934713408
      %v2073 = vunpack.c.0.s8 %v2072
      %v2074 = vlaneseq
      %v2075 = vshrl.u32 %v2074, 7
      %v2076 = vsub.s32 %v2073, %v2075
      %v2077 = vrot.slane %v2070, %v2076
      %v2078 = vcombine.low %v2061, %v2069
      %v2080 = vunpack.c.l.s4 1934713408
      %v2081 = vunpack.c.0.s8 %v2080
      %v2082 = vlaneseq
      %v2083 = vshrl.u32 %v2082, 7
      %v2084 = vsub.s32 %v2081, %v2083
      %v2085 = vrot.slane %v2078, %v2084
      %v2086 = vcombine.low %v2077, %v2085
      %v2087 = vcombine.high %v2077, %v2085
      %v2088 = vcombine.low %v1614, %v1621
      %v2090 = vunpack.c.l.s4 1983009808
      %v2091 = vunpack.c.0.s8 %v2090
      %v2092 = vlaneseq
      %v2093 = vshrl.u32 %v2092, 7
      %v2094 = vsub.s32 %v2091, %v2093
      %v2095 = vrot.slane %v2088, %v2094
      %v2096 = vcombine.low %v1638, %v1639
      %v2098 = vunpack.c.l.s4 1983009808
      %v2099 = vunpack.c.0.s8 %v2098
      %v2100 = vlaneseq
      %v2101 = vshrl.u32 %v2100, 7
      %v2102 = vsub.s32 %v2099, %v2101
      %v2103 = vrot.slane %v2096, %v2102
      %v2104 = vcombine.low %v1630, %v1637
      %v2106 = vunpack.c.l.s4 1983009808
      %v2107 = vunpack.c.0.s8 %v2106
      %v2108 = vlaneseq
      %v2109 = vshrl.u32 %v2108, 7
      %v2110 = vsub.s32 %v2107, %v2109
      %v2111 = vrot.slane %v2104, %v2110
      %v2112 = vcombine.low %v1640, %v1641
      %v2114 = vunpack.c.l.s4 1983009808
      %v2115 = vunpack.c.0.s8 %v2114
      %v2116 = vlaneseq
      %v2117 = vshrl.u32 %v2116, 7
      %v2118 = vsub.s32 %v2115, %v2117
      %v2119 = vrot.slane %v2112, %v2118
      %v2120 = vcombine.low %v2095, %v2103
      %v2122 = vunpack.c.l.s4 1934713408
      %v2123 = vunpack.c.0.s8 %v2122
      %v2124 = vlaneseq
      %v2125 = vshrl.u32 %v2124, 7
      %v2126 = vsub.s32 %v2123, %v2125
      %v2127 = vrot.slane %v2120, %v2126
      %v2128 = vcombine.low %v2111, %v2119
      %v2130 = vunpack.c.l.s4 1934713408
      %v2131 = vunpack.c.0.s8 %v2130
      %v2132 = vlaneseq
      %v2133 = vshrl.u32 %v2132, 7
      %v2134 = vsub.s32 %v2131, %v2133
      %v2135 = vrot.slane %v2128, %v2134
      %v2136 = vcombine.low %v2127, %v2135
      %v2137 = vcombine.high %v2127, %v2135
      %v2138 = vcombine.low %v1680, %v1687
      %v2140 = vunpack.c.l.s4 1983009808
      %v2141 = vunpack.c.0.s8 %v2140
      %v2142 = vlaneseq
      %v2143 = vshrl.u32 %v2142, 7
      %v2144 = vsub.s32 %v2141, %v2143
      %v2145 = vrot.slane %v2138, %v2144
      %v2146 = vcombine.low %v1704, %v1705
      %v2148 = vunpack.c.l.s4 1983009808
      %v2149 = vunpack.c.0.s8 %v2148
      %v2150 = vlaneseq
      %v2151 = vshrl.u32 %v2150, 7
      %v2152 = vsub.s32 %v2149, %v2151
      %v2153 = vrot.slane %v2146, %v2152
      %v2154 = vcombine.low %v1696, %v1703
      %v2156 = vunpack.c.l.s4 1983009808
      %v2157 = vunpack.c.0.s8 %v2156
      %v2158 = vlaneseq
      %v2159 = vshrl.u32 %v2158, 7
      %v2160 = vsub.s32 %v2157, %v2159
      %v2161 = vrot.slane %v2154, %v2160
      %v2162 = vcombine.low %v1706, %v1707
      %v2164 = vunpack.c.l.s4 1983009808
      %v2165 = vunpack.c.0.s8 %v2164
      %v2166 = vlaneseq
      %v2167 = vshrl.u32 %v2166, 7
      %v2168 = vsub.s32 %v2165, %v2167
      %v2169 = vrot.slane %v2162, %v2168
      %v2170 = vcombine.low %v2145, %v2153
      %v2172 = vunpack.c.l.s4 1934713408
      %v2173 = vunpack.c.0.s8 %v2172
      %v2174 = vlaneseq
      %v2175 = vshrl.u32 %v2174, 7
      %v2176 = vsub.s32 %v2173, %v2175
      %v2177 = vrot.slane %v2170, %v2176
      %v2178 = vcombine.low %v2161, %v2169
      %v2180 = vunpack.c.l.s4 1934713408
      %v2181 = vunpack.c.0.s8 %v2180
      %v2182 = vlaneseq
      %v2183 = vshrl.u32 %v2182, 7
      %v2184 = vsub.s32 %v2181, %v2183
      %v2185 = vrot.slane %v2178, %v2184
      %v2186 = vcombine.low %v2177, %v2185
      %v2187 = vcombine.high %v2177, %v2185
      %v2188 = vcombine.low %v1746, %v1753
      %v2190 = vunpack.c.l.s4 1983009808
      %v2191 = vunpack.c.0.s8 %v2190
      %v2192 = vlaneseq
      %v2193 = vshrl.u32 %v2192, 7
      %v2194 = vsub.s32 %v2191, %v2193
      %v2195 = vrot.slane %v2188, %v2194
      %v2196 = vcombine.low %v1770, %v1771
      %v2198 = vunpack.c.l.s4 1983009808
      %v2199 = vunpack.c.0.s8 %v2198
      %v2200 = vlaneseq
      %v2201 = vshrl.u32 %v2200, 7
      %v2202 = vsub.s32 %v2199, %v2201
      %v2203 = vrot.slane %v2196, %v2202
      %v2204 = vcombine.low %v1762, %v1769
      %v2206 = vunpack.c.l.s4 1983009808
      %v2207 = vunpack.c.0.s8 %v2206
      %v2208 = vlaneseq
      %v2209 = vshrl.u32 %v2208, 7
      %v2210 = vsub.s32 %v2207, %v2209
      %v2211 = vrot.slane %v2204, %v2210
      %v2212 = vcombine.low %v1772, %v1773
      %v2214 = vunpack.c.l.s4 1983009808
      %v2215 = vunpack.c.0.s8 %v2214
      %v2216 = vlaneseq
      %v2217 = vshrl.u32 %v2216, 7
      %v2218 = vsub.s32 %v2215, %v2217
      %v2219 = vrot.slane %v2212, %v2218
      %v2220 = vcombine.low %v2195, %v2203
      %v2222 = vunpack.c.l.s4 1934713408
      %v2223 = vunpack.c.0.s8 %v2222
      %v2224 = vlaneseq
      %v2225 = vshrl.u32 %v2224, 7
      %v2226 = vsub.s32 %v2223, %v2225
      %v2227 = vrot.slane %v2220, %v2226
      %v2228 = vcombine.low %v2211, %v2219
      %v2230 = vunpack.c.l.s4 1934713408
      %v2231 = vunpack.c.0.s8 %v2230
      %v2232 = vlaneseq
      %v2233 = vshrl.u32 %v2232, 7
      %v2234 = vsub.s32 %v2231, %v2233
      %v2235 = vrot.slane %v2228, %v2234
      %v2236 = vcombine.low %v2227, %v2235
      %v2237 = vcombine.high %v2227, %v2235
      %v2238 = vcombine.low %v1812, %v1819
      %v2240 = vunpack.c.l.s4 1983009808
      %v2241 = vunpack.c.0.s8 %v2240
      %v2242 = vlaneseq
      %v2243 = vshrl.u32 %v2242, 7
      %v2244 = vsub.s32 %v2241, %v2243
      %v2245 = vrot.slane %v2238, %v2244
      %v2246 = vcombine.low %v1836, %v1837
      %v2248 = vunpack.c.l.s4 1983009808
      %v2249 = vunpack.c.0.s8 %v2248
      %v2250 = vlaneseq
      %v2251 = vshrl.u32 %v2250, 7
      %v2252 = vsub.s32 %v2249, %v2251
      %v2253 = vrot.slane %v2246, %v2252
      %v2254 = vcombine.low %v1828, %v1835
      %v2256 = vunpack.c.l.s4 1983009808
      %v2257 = vunpack.c.0.s8 %v2256
      %v2258 = vlaneseq
      %v2259 = vshrl.u32 %v2258, 7
      %v2260 = vsub.s32 %v2257, %v2259
      %v2261 = vrot.slane %v2254, %v2260
      %v2262 = vcombine.low %v1838, %v1839
      %v2264 = vunpack.c.l.s4 1983009808
      %v2265 = vunpack.c.0.s8 %v2264
      %v2266 = vlaneseq
      %v2267 = vshrl.u32 %v2266, 7
      %v2268 = vsub.s32 %v2265, %v2267
      %v2269 = vrot.slane %v2262, %v2268
      %v2270 = vcombine.low %v2245, %v2253
      %v2272 = vunpack.c.l.s4 1934713408
      %v2273 = vunpack.c.0.s8 %v2272
      %v2274 = vlaneseq
      %v2275 = vshrl.u32 %v2274, 7
      %v2276 = vsub.s32 %v2273, %v2275
      %v2277 = vrot.slane %v2270, %v2276
      %v2278 = vcombine.low %v2261, %v2269
      %v2280 = vunpack.c.l.s4 1934713408
      %v2281 = vunpack.c.0.s8 %v2280
      %v2282 = vlaneseq
      %v2283 = vshrl.u32 %v2282, 7
      %v2284 = vsub.s32 %v2281, %v2283
      %v2285 = vrot.slane %v2278, %v2284
      %v2286 = vcombine.low %v2277, %v2285
      %v2287 = vcombine.high %v2277, %v2285
      %v2288 = vcombine.low %v1878, %v1885
      %v2290 = vunpack.c.l.s4 1983009808
      %v2291 = vunpack.c.0.s8 %v2290
      %v2292 = vlaneseq
      %v2293 = vshrl.u32 %v2292, 7
      %v2294 = vsub.s32 %v2291, %v2293
      %v2295 = vrot.slane %v2288, %v2294
      %v2296 = vcombine.low %v1902, %v1903
      %v2298 = vunpack.c.l.s4 1983009808
      %v2299 = vunpack.c.0.s8 %v2298
      %v2300 = vlaneseq
      %v2301 = vshrl.u32 %v2300, 7
      %v2302 = vsub.s32 %v2299, %v2301
      %v2303 = vrot.slane %v2296, %v2302
      %v2304 = vcombine.low %v1894, %v1901
      %v2306 = vunpack.c.l.s4 1983009808
      %v2307 = vunpack.c.0.s8 %v2306
      %v2308 = vlaneseq
      %v2309 = vshrl.u32 %v2308, 7
      %v2310 = vsub.s32 %v2307, %v2309
      %v2311 = vrot.slane %v2304, %v2310
      %v2312 = vcombine.low %v1904, %v1905
      %v2314 = vunpack.c.l.s4 1983009808
      %v2315 = vunpack.c.0.s8 %v2314
      %v2316 = vlaneseq
      %v2317 = vshrl.u32 %v2316, 7
      %v2318 = vsub.s32 %v2315, %v2317
      %v2319 = vrot.slane %v2312, %v2318
      %v2320 = vcombine.low %v2295, %v2303
      %v2322 = vunpack.c.l.s4 1934713408
      %v2323 = vunpack.c.0.s8 %v2322
      %v2324 = vlaneseq
      %v2325 = vshrl.u32 %v2324, 7
      %v2326 = vsub.s32 %v2323, %v2325
      %v2327 = vrot.slane %v2320, %v2326
      %v2328 = vcombine.low %v2311, %v2319
      %v2330 = vunpack.c.l.s4 1934713408
      %v2331 = vunpack.c.0.s8 %v2330
      %v2332 = vlaneseq
      %v2333 = vshrl.u32 %v2332, 7
      %v2334 = vsub.s32 %v2331, %v2333
      %v2335 = vrot.slane %v2328, %v2334
      %v2336 = vcombine.low %v2327, %v2335
      %v2337 = vcombine.high %v2327, %v2335
      %v2338 = vcombine.low %v1944, %v1951
      %v2340 = vunpack.c.l.s4 1983009808
      %v2341 = vunpack.c.0.s8 %v2340
      %v2342 = vlaneseq
      %v2343 = vshrl.u32 %v2342, 7
      %v2344 = vsub.s32 %v2341, %v2343
      %v2345 = vrot.slane %v2338, %v2344
      %v2346 = vcombine.low %v1968, %v1969
      %v2348 = vunpack.c.l.s4 1983009808
      %v2349 = vunpack.c.0.s8 %v2348
      %v2350 = vlaneseq
      %v2351 = vshrl.u32 %v2350, 7
      %v2352 = vsub.s32 %v2349, %v2351
      %v2353 = vrot.slane %v2346, %v2352
      %v2354 = vcombine.low %v1960, %v1967
      %v2356 = vunpack.c.l.s4 1983009808
      %v2357 = vunpack.c.0.s8 %v2356
      %v2358 = vlaneseq
      %v2359 = vshrl.u32 %v2358, 7
      %v2360 = vsub.s32 %v2357, %v2359
      %v2361 = vrot.slane %v2354, %v2360
      %v2362 = vcombine.low %v1970, %v1971
      %v2364 = vunpack.c.l.s4 1983009808
      %v2365 = vunpack.c.0.s8 %v2364
      %v2366 = vlaneseq
      %v2367 = vshrl.u32 %v2366, 7
      %v2368 = vsub.s32 %v2365, %v2367
      %v2369 = vrot.slane %v2362, %v2368
      %v2370 = vcombine.low %v2345, %v2353
      %v2372 = vunpack.c.l.s4 1934713408
      %v2373 = vunpack.c.0.s8 %v2372
      %v2374 = vlaneseq
      %v2375 = vshrl.u32 %v2374, 7
      %v2376 = vsub.s32 %v2373, %v2375
      %v2377 = vrot.slane %v2370, %v2376
      %v2378 = vcombine.low %v2361, %v2369
      %v2380 = vunpack.c.l.s4 1934713408
      %v2381 = vunpack.c.0.s8 %v2380
      %v2382 = vlaneseq
      %v2383 = vshrl.u32 %v2382, 7
      %v2384 = vsub.s32 %v2381, %v2383
      %v2385 = vrot.slane %v2378, %v2384
      %v2386 = vcombine.low %v2377, %v2385
      %v2387 = vcombine.high %v2377, %v2385
      %v2388 = vcombine.low %v2010, %v2017
      %v2390 = vunpack.c.l.s4 1983009808
      %v2391 = vunpack.c.0.s8 %v2390
      %v2392 = vlaneseq
      %v2393 = vshrl.u32 %v2392, 7
      %v2394 = vsub.s32 %v2391, %v2393
      %v2395 = vrot.slane %v2388, %v2394
      %v2396 = vcombine.low %v2034, %v2035
      %v2398 = vunpack.c.l.s4 1983009808
      %v2399 = vunpack.c.0.s8 %v2398
      %v2400 = vlaneseq
      %v2401 = vshrl.u32 %v2400, 7
      %v2402 = vsub.s32 %v2399, %v2401
      %v2403 = vrot.slane %v2396, %v2402
      %v2404 = vcombine.low %v2026, %v2033
      %v2406 = vunpack.c.l.s4 1983009808
      %v2407 = vunpack.c.0.s8 %v2406
      %v2408 = vlaneseq
      %v2409 = vshrl.u32 %v2408, 7
      %v2410 = vsub.s32 %v2407, %v2409
      %v2411 = vrot.slane %v2404, %v2410
      %v2412 = vcombine.low %v2036, %v2037
      %v2414 = vunpack.c.l.s4 1983009808
      %v2415 = vunpack.c.0.s8 %v2414
      %v2416 = vlaneseq
      %v2417 = vshrl.u32 %v2416, 7
      %v2418 = vsub.s32 %v2415, %v2417
      %v2419 = vrot.slane %v2412, %v2418
      %v2420 = vcombine.low %v2395, %v2403
      %v2422 = vunpack.c.l.s4 1934713408
      %v2423 = vunpack.c.0.s8 %v2422
      %v2424 = vlaneseq
      %v2425 = vshrl.u32 %v2424, 7
      %v2426 = vsub.s32 %v2423, %v2425
      %v2427 = vrot.slane %v2420, %v2426
      %v2428 = vcombine.low %v2411, %v2419
      %v2430 = vunpack.c.l.s4 1934713408
      %v2431 = vunpack.c.0.s8 %v2430
      %v2432 = vlaneseq
      %v2433 = vshrl.u32 %v2432, 7
      %v2434 = vsub.s32 %v2431, %v2433
      %v2435 = vrot.slane %v2428, %v2434
      %v2436 = vcombine.low %v2427, %v2435
      %v2437 = vcombine.high %v2427, %v2435
      %v2438 = vpack.c.bf16 %v2136, %v2086
      %v2439 = vpack.c.bf16 %v2236, %v2186
      %v2440 = vpack.c.bf16 %v2336, %v2286
      %v2441 = vpack.c.bf16 %v2436, %v2386
      %v2442 = vpack.c.bf16 %v2137, %v2087
      %v2443 = vpack.c.bf16 %v2237, %v2187
      %v2444 = vpack.c.bf16 %v2337, %v2287
      %v2445 = vpack.c.bf16 %v2437, %v2387
      %2454 = vrot.lane.b32.xlu0 %v458, 96
      %v2455 = vpop.permute.xlu0 %2454
      %2456 = vrot.lane.b32.xlu0 %v462, 96
      %v2457 = vpop.permute.xlu0 %2456
      %2458 = vrot.lane.b32.xlu0 %v468, 96
      %v2459 = vpop.permute.xlu0 %2458
      %2460 = vrot.lane.b32.xlu0 %v472, 96
      %v2461 = vpop.permute.xlu0 %2460
      %2462 = vrot.lane.b32.xlu0 %v478, 96
      %v2463 = vpop.permute.xlu0 %2462
      %2464 = vrot.lane.b32.xlu0 %v482, 96
      %v2465 = vpop.permute.xlu0 %2464
      %2466 = vrot.lane.b32.xlu0 %v488, 96
      %v2467 = vpop.permute.xlu0 %2466
      %2468 = vrot.lane.b32.xlu0 %v492, 96
      %v2469 = vpop.permute.xlu0 %2468
      %v2478 = vcombine.high %v458, 0.0
      %v2480 = vunpack.c.l.s4 1983009808
      %v2481 = vunpack.c.0.s8 %v2480
      %v2482 = vlaneseq
      %v2483 = vshrl.u32 %v2482, 7
      %v2484 = vsub.s32 %v2481, %v2483
      %v2485 = vrot.slane %v458, %v2484
      %v2487 = vunpack.c.l.s4 1983009808
      %v2488 = vunpack.c.0.s8 %v2487
      %v2489 = vlaneseq
      %v2490 = vshrl.u32 %v2489, 7
      %v2491 = vsub.s32 %v2488, %v2490
      %v2492 = vrot.slane %v2478, %v2491
      %v2493 = vcombine.high %v2455, 0.0
      %v2495 = vunpack.c.l.s4 1983009808
      %v2496 = vunpack.c.0.s8 %v2495
      %v2497 = vlaneseq
      %v2498 = vshrl.u32 %v2497, 7
      %v2499 = vsub.s32 %v2496, %v2498
      %v2500 = vrot.slane %v2455, %v2499
      %v2502 = vunpack.c.l.s4 1983009808
      %v2503 = vunpack.c.0.s8 %v2502
      %v2504 = vlaneseq
      %v2505 = vshrl.u32 %v2504, 7
      %v2506 = vsub.s32 %v2503, %v2505
      %v2507 = vrot.slane %v2493, %v2506
      %v2508 = vcombine.low %v2485, %v2500
      %v2509 = vcombine.high %v2485, %v2500
      %v2511 = vunpack.c.l.s4 1934713408
      %v2512 = vunpack.c.0.s8 %v2511
      %v2513 = vlaneseq
      %v2514 = vshrl.u32 %v2513, 7
      %v2515 = vsub.s32 %v2512, %v2514
      %v2516 = vrot.slane %v2508, %v2515
      %v2518 = vunpack.c.l.s4 1934713408
      %v2519 = vunpack.c.0.s8 %v2518
      %v2520 = vlaneseq
      %v2521 = vshrl.u32 %v2520, 7
      %v2522 = vsub.s32 %v2519, %v2521
      %v2523 = vrot.slane %v2509, %v2522
      %v2524 = vcombine.low %v2492, %v2507
      %v2525 = vcombine.high %v2492, %v2507
      %v2527 = vunpack.c.l.s4 1934713408
      %v2528 = vunpack.c.0.s8 %v2527
      %v2529 = vlaneseq
      %v2530 = vshrl.u32 %v2529, 7
      %v2531 = vsub.s32 %v2528, %v2530
      %v2532 = vrot.slane %v2524, %v2531
      %v2534 = vunpack.c.l.s4 1934713408
      %v2535 = vunpack.c.0.s8 %v2534
      %v2536 = vlaneseq
      %v2537 = vshrl.u32 %v2536, 7
      %v2538 = vsub.s32 %v2535, %v2537
      %v2539 = vrot.slane %v2525, %v2538
      %v2540 = vcombine.high %v2516, 0.0
      %v2541 = vcombine.high %v2523, 0.0
      %v2542 = vcombine.high %v2532, 0.0
      %v2543 = vcombine.high %v2539, 0.0
      %v2544 = vcombine.high %v462, 0.0
      %v2546 = vunpack.c.l.s4 1983009808
      %v2547 = vunpack.c.0.s8 %v2546
      %v2548 = vlaneseq
      %v2549 = vshrl.u32 %v2548, 7
      %v2550 = vsub.s32 %v2547, %v2549
      %v2551 = vrot.slane %v462, %v2550
      %v2553 = vunpack.c.l.s4 1983009808
      %v2554 = vunpack.c.0.s8 %v2553
      %v2555 = vlaneseq
      %v2556 = vshrl.u32 %v2555, 7
      %v2557 = vsub.s32 %v2554, %v2556
      %v2558 = vrot.slane %v2544, %v2557
      %v2559 = vcombine.high %v2457, 0.0
      %v2561 = vunpack.c.l.s4 1983009808
      %v2562 = vunpack.c.0.s8 %v2561
      %v2563 = vlaneseq
      %v2564 = vshrl.u32 %v2563, 7
      %v2565 = vsub.s32 %v2562, %v2564
      %v2566 = vrot.slane %v2457, %v2565
      %v2568 = vunpack.c.l.s4 1983009808
      %v2569 = vunpack.c.0.s8 %v2568
      %v2570 = vlaneseq
      %v2571 = vshrl.u32 %v2570, 7
      %v2572 = vsub.s32 %v2569, %v2571
      %v2573 = vrot.slane %v2559, %v2572
      %v2574 = vcombine.low %v2551, %v2566
      %v2575 = vcombine.high %v2551, %v2566
      %v2577 = vunpack.c.l.s4 1934713408
      %v2578 = vunpack.c.0.s8 %v2577
      %v2579 = vlaneseq
      %v2580 = vshrl.u32 %v2579, 7
      %v2581 = vsub.s32 %v2578, %v2580
      %v2582 = vrot.slane %v2574, %v2581
      %v2584 = vunpack.c.l.s4 1934713408
      %v2585 = vunpack.c.0.s8 %v2584
      %v2586 = vlaneseq
      %v2587 = vshrl.u32 %v2586, 7
      %v2588 = vsub.s32 %v2585, %v2587
      %v2589 = vrot.slane %v2575, %v2588
      %v2590 = vcombine.low %v2558, %v2573
      %v2591 = vcombine.high %v2558, %v2573
      %v2593 = vunpack.c.l.s4 1934713408
      %v2594 = vunpack.c.0.s8 %v2593
      %v2595 = vlaneseq
      %v2596 = vshrl.u32 %v2595, 7
      %v2597 = vsub.s32 %v2594, %v2596
      %v2598 = vrot.slane %v2590, %v2597
      %v2600 = vunpack.c.l.s4 1934713408
      %v2601 = vunpack.c.0.s8 %v2600
      %v2602 = vlaneseq
      %v2603 = vshrl.u32 %v2602, 7
      %v2604 = vsub.s32 %v2601, %v2603
      %v2605 = vrot.slane %v2591, %v2604
      %v2606 = vcombine.high %v2582, 0.0
      %v2607 = vcombine.high %v2589, 0.0
      %v2608 = vcombine.high %v2598, 0.0
      %v2609 = vcombine.high %v2605, 0.0
      %v2610 = vcombine.high %v468, 0.0
      %v2612 = vunpack.c.l.s4 1983009808
      %v2613 = vunpack.c.0.s8 %v2612
      %v2614 = vlaneseq
      %v2615 = vshrl.u32 %v2614, 7
      %v2616 = vsub.s32 %v2613, %v2615
      %v2617 = vrot.slane %v468, %v2616
      %v2619 = vunpack.c.l.s4 1983009808
      %v2620 = vunpack.c.0.s8 %v2619
      %v2621 = vlaneseq
      %v2622 = vshrl.u32 %v2621, 7
      %v2623 = vsub.s32 %v2620, %v2622
      %v2624 = vrot.slane %v2610, %v2623
      %v2625 = vcombine.high %v2459, 0.0
      %v2627 = vunpack.c.l.s4 1983009808
      %v2628 = vunpack.c.0.s8 %v2627
      %v2629 = vlaneseq
      %v2630 = vshrl.u32 %v2629, 7
      %v2631 = vsub.s32 %v2628, %v2630
      %v2632 = vrot.slane %v2459, %v2631
      %v2634 = vunpack.c.l.s4 1983009808
      %v2635 = vunpack.c.0.s8 %v2634
      %v2636 = vlaneseq
      %v2637 = vshrl.u32 %v2636, 7
      %v2638 = vsub.s32 %v2635, %v2637
      %v2639 = vrot.slane %v2625, %v2638
      %v2640 = vcombine.low %v2617, %v2632
      %v2641 = vcombine.high %v2617, %v2632
      %v2643 = vunpack.c.l.s4 1934713408
      %v2644 = vunpack.c.0.s8 %v2643
      %v2645 = vlaneseq
      %v2646 = vshrl.u32 %v2645, 7
      %v2647 = vsub.s32 %v2644, %v2646
      %v2648 = vrot.slane %v2640, %v2647
      %v2650 = vunpack.c.l.s4 1934713408
      %v2651 = vunpack.c.0.s8 %v2650
      %v2652 = vlaneseq
      %v2653 = vshrl.u32 %v2652, 7
      %v2654 = vsub.s32 %v2651, %v2653
      %v2655 = vrot.slane %v2641, %v2654
      %v2656 = vcombine.low %v2624, %v2639
      %v2657 = vcombine.high %v2624, %v2639
      %v2659 = vunpack.c.l.s4 1934713408
      %v2660 = vunpack.c.0.s8 %v2659
      %v2661 = vlaneseq
      %v2662 = vshrl.u32 %v2661, 7
      %v2663 = vsub.s32 %v2660, %v2662
      %v2664 = vrot.slane %v2656, %v2663
      %v2666 = vunpack.c.l.s4 1934713408
      %v2667 = vunpack.c.0.s8 %v2666
      %v2668 = vlaneseq
      %v2669 = vshrl.u32 %v2668, 7
      %v2670 = vsub.s32 %v2667, %v2669
      %v2671 = vrot.slane %v2657, %v2670
      %v2672 = vcombine.high %v2648, 0.0
      %v2673 = vcombine.high %v2655, 0.0
      %v2674 = vcombine.high %v2664, 0.0
      %v2675 = vcombine.high %v2671, 0.0
      %v2676 = vcombine.high %v472, 0.0
      %v2678 = vunpack.c.l.s4 1983009808
      %v2679 = vunpack.c.0.s8 %v2678
      %v2680 = vlaneseq
      %v2681 = vshrl.u32 %v2680, 7
      %v2682 = vsub.s32 %v2679, %v2681
      %v2683 = vrot.slane %v472, %v2682
      %v2685 = vunpack.c.l.s4 1983009808
      %v2686 = vunpack.c.0.s8 %v2685
      %v2687 = vlaneseq
      %v2688 = vshrl.u32 %v2687, 7
      %v2689 = vsub.s32 %v2686, %v2688
      %v2690 = vrot.slane %v2676, %v2689
      %v2691 = vcombine.high %v2461, 0.0
      %v2693 = vunpack.c.l.s4 1983009808
      %v2694 = vunpack.c.0.s8 %v2693
      %v2695 = vlaneseq
      %v2696 = vshrl.u32 %v2695, 7
      %v2697 = vsub.s32 %v2694, %v2696
      %v2698 = vrot.slane %v2461, %v2697
      %v2700 = vunpack.c.l.s4 1983009808
      %v2701 = vunpack.c.0.s8 %v2700
      %v2702 = vlaneseq
      %v2703 = vshrl.u32 %v2702, 7
      %v2704 = vsub.s32 %v2701, %v2703
      %v2705 = vrot.slane %v2691, %v2704
      %v2706 = vcombine.low %v2683, %v2698
      %v2707 = vcombine.high %v2683, %v2698
      %v2709 = vunpack.c.l.s4 1934713408
      %v2710 = vunpack.c.0.s8 %v2709
      %v2711 = vlaneseq
      %v2712 = vshrl.u32 %v2711, 7
      %v2713 = vsub.s32 %v2710, %v2712
      %v2714 = vrot.slane %v2706, %v2713
      %v2716 = vunpack.c.l.s4 1934713408
      %v2717 = vunpack.c.0.s8 %v2716
      %v2718 = vlaneseq
      %v2719 = vshrl.u32 %v2718, 7
      %v2720 = vsub.s32 %v2717, %v2719
      %v2721 = vrot.slane %v2707, %v2720
      %v2722 = vcombine.low %v2690, %v2705
      %v2723 = vcombine.high %v2690, %v2705
      %v2725 = vunpack.c.l.s4 1934713408
      %v2726 = vunpack.c.0.s8 %v2725
      %v2727 = vlaneseq
      %v2728 = vshrl.u32 %v2727, 7
      %v2729 = vsub.s32 %v2726, %v2728
      %v2730 = vrot.slane %v2722, %v2729
      %v2732 = vunpack.c.l.s4 1934713408
      %v2733 = vunpack.c.0.s8 %v2732
      %v2734 = vlaneseq
      %v2735 = vshrl.u32 %v2734, 7
      %v2736 = vsub.s32 %v2733, %v2735
      %v2737 = vrot.slane %v2723, %v2736
      %v2738 = vcombine.high %v2714, 0.0
      %v2739 = vcombine.high %v2721, 0.0
      %v2740 = vcombine.high %v2730, 0.0
      %v2741 = vcombine.high %v2737, 0.0
      %v2742 = vcombine.high %v478, 0.0
      %v2744 = vunpack.c.l.s4 1983009808
      %v2745 = vunpack.c.0.s8 %v2744
      %v2746 = vlaneseq
      %v2747 = vshrl.u32 %v2746, 7
      %v2748 = vsub.s32 %v2745, %v2747
      %v2749 = vrot.slane %v478, %v2748
      %v2751 = vunpack.c.l.s4 1983009808
      %v2752 = vunpack.c.0.s8 %v2751
      %v2753 = vlaneseq
      %v2754 = vshrl.u32 %v2753, 7
      %v2755 = vsub.s32 %v2752, %v2754
      %v2756 = vrot.slane %v2742, %v2755
      %v2757 = vcombine.high %v2463, 0.0
      %v2759 = vunpack.c.l.s4 1983009808
      %v2760 = vunpack.c.0.s8 %v2759
      %v2761 = vlaneseq
      %v2762 = vshrl.u32 %v2761, 7
      %v2763 = vsub.s32 %v2760, %v2762
      %v2764 = vrot.slane %v2463, %v2763
      %v2766 = vunpack.c.l.s4 1983009808
      %v2767 = vunpack.c.0.s8 %v2766
      %v2768 = vlaneseq
      %v2769 = vshrl.u32 %v2768, 7
      %v2770 = vsub.s32 %v2767, %v2769
      %v2771 = vrot.slane %v2757, %v2770
      %v2772 = vcombine.low %v2749, %v2764
      %v2773 = vcombine.high %v2749, %v2764
      %v2775 = vunpack.c.l.s4 1934713408
      %v2776 = vunpack.c.0.s8 %v2775
      %v2777 = vlaneseq
      %v2778 = vshrl.u32 %v2777, 7
      %v2779 = vsub.s32 %v2776, %v2778
      %v2780 = vrot.slane %v2772, %v2779
      %v2782 = vunpack.c.l.s4 1934713408
      %v2783 = vunpack.c.0.s8 %v2782
      %v2784 = vlaneseq
      %v2785 = vshrl.u32 %v2784, 7
      %v2786 = vsub.s32 %v2783, %v2785
      %v2787 = vrot.slane %v2773, %v2786
      %v2788 = vcombine.low %v2756, %v2771
      %v2789 = vcombine.high %v2756, %v2771
      %v2791 = vunpack.c.l.s4 1934713408
      %v2792 = vunpack.c.0.s8 %v2791
      %v2793 = vlaneseq
      %v2794 = vshrl.u32 %v2793, 7
      %v2795 = vsub.s32 %v2792, %v2794
      %v2796 = vrot.slane %v2788, %v2795
      %v2798 = vunpack.c.l.s4 1934713408
      %v2799 = vunpack.c.0.s8 %v2798
      %v2800 = vlaneseq
      %v2801 = vshrl.u32 %v2800, 7
      %v2802 = vsub.s32 %v2799, %v2801
      %v2803 = vrot.slane %v2789, %v2802
      %v2804 = vcombine.high %v2780, 0.0
      %v2805 = vcombine.high %v2787, 0.0
      %v2806 = vcombine.high %v2796, 0.0
      %v2807 = vcombine.high %v2803, 0.0
      %v2808 = vcombine.high %v482, 0.0
      %v2810 = vunpack.c.l.s4 1983009808
      %v2811 = vunpack.c.0.s8 %v2810
      %v2812 = vlaneseq
      %v2813 = vshrl.u32 %v2812, 7
      %v2814 = vsub.s32 %v2811, %v2813
      %v2815 = vrot.slane %v482, %v2814
      %v2817 = vunpack.c.l.s4 1983009808
      %v2818 = vunpack.c.0.s8 %v2817
      %v2819 = vlaneseq
      %v2820 = vshrl.u32 %v2819, 7
      %v2821 = vsub.s32 %v2818, %v2820
      %v2822 = vrot.slane %v2808, %v2821
      %v2823 = vcombine.high %v2465, 0.0
      %v2825 = vunpack.c.l.s4 1983009808
      %v2826 = vunpack.c.0.s8 %v2825
      %v2827 = vlaneseq
      %v2828 = vshrl.u32 %v2827, 7
      %v2829 = vsub.s32 %v2826, %v2828
      %v2830 = vrot.slane %v2465, %v2829
      %v2832 = vunpack.c.l.s4 1983009808
      %v2833 = vunpack.c.0.s8 %v2832
      %v2834 = vlaneseq
      %v2835 = vshrl.u32 %v2834, 7
      %v2836 = vsub.s32 %v2833, %v2835
      %v2837 = vrot.slane %v2823, %v2836
      %v2838 = vcombine.low %v2815, %v2830
      %v2839 = vcombine.high %v2815, %v2830
      %v2841 = vunpack.c.l.s4 1934713408
      %v2842 = vunpack.c.0.s8 %v2841
      %v2843 = vlaneseq
      %v2844 = vshrl.u32 %v2843, 7
      %v2845 = vsub.s32 %v2842, %v2844
      %v2846 = vrot.slane %v2838, %v2845
      %v2848 = vunpack.c.l.s4 1934713408
      %v2849 = vunpack.c.0.s8 %v2848
      %v2850 = vlaneseq
      %v2851 = vshrl.u32 %v2850, 7
      %v2852 = vsub.s32 %v2849, %v2851
      %v2853 = vrot.slane %v2839, %v2852
      %v2854 = vcombine.low %v2822, %v2837
      %v2855 = vcombine.high %v2822, %v2837
      %v2857 = vunpack.c.l.s4 1934713408
      %v2858 = vunpack.c.0.s8 %v2857
      %v2859 = vlaneseq
      %v2860 = vshrl.u32 %v2859, 7
      %v2861 = vsub.s32 %v2858, %v2860
      %v2862 = vrot.slane %v2854, %v2861
      %v2864 = vunpack.c.l.s4 1934713408
      %v2865 = vunpack.c.0.s8 %v2864
      %v2866 = vlaneseq
      %v2867 = vshrl.u32 %v2866, 7
      %v2868 = vsub.s32 %v2865, %v2867
      %v2869 = vrot.slane %v2855, %v2868
      %v2870 = vcombine.high %v2846, 0.0
      %v2871 = vcombine.high %v2853, 0.0
      %v2872 = vcombine.high %v2862, 0.0
      %v2873 = vcombine.high %v2869, 0.0
      %v2874 = vcombine.high %v488, 0.0
      %v2876 = vunpack.c.l.s4 1983009808
      %v2877 = vunpack.c.0.s8 %v2876
      %v2878 = vlaneseq
      %v2879 = vshrl.u32 %v2878, 7
      %v2880 = vsub.s32 %v2877, %v2879
      %v2881 = vrot.slane %v488, %v2880
      %v2883 = vunpack.c.l.s4 1983009808
      %v2884 = vunpack.c.0.s8 %v2883
      %v2885 = vlaneseq
      %v2886 = vshrl.u32 %v2885, 7
      %v2887 = vsub.s32 %v2884, %v2886
      %v2888 = vrot.slane %v2874, %v2887
      %v2889 = vcombine.high %v2467, 0.0
      %v2891 = vunpack.c.l.s4 1983009808
      %v2892 = vunpack.c.0.s8 %v2891
      %v2893 = vlaneseq
      %v2894 = vshrl.u32 %v2893, 7
      %v2895 = vsub.s32 %v2892, %v2894
      %v2896 = vrot.slane %v2467, %v2895
      %v2898 = vunpack.c.l.s4 1983009808
      %v2899 = vunpack.c.0.s8 %v2898
      %v2900 = vlaneseq
      %v2901 = vshrl.u32 %v2900, 7
      %v2902 = vsub.s32 %v2899, %v2901
      %v2903 = vrot.slane %v2889, %v2902
      %v2904 = vcombine.low %v2881, %v2896
      %v2905 = vcombine.high %v2881, %v2896
      %v2907 = vunpack.c.l.s4 1934713408
      %v2908 = vunpack.c.0.s8 %v2907
      %v2909 = vlaneseq
      %v2910 = vshrl.u32 %v2909, 7
      %v2911 = vsub.s32 %v2908, %v2910
      %v2912 = vrot.slane %v2904, %v2911
      %v2914 = vunpack.c.l.s4 1934713408
      %v2915 = vunpack.c.0.s8 %v2914
      %v2916 = vlaneseq
      %v2917 = vshrl.u32 %v2916, 7
      %v2918 = vsub.s32 %v2915, %v2917
      %v2919 = vrot.slane %v2905, %v2918
      %v2920 = vcombine.low %v2888, %v2903
      %v2921 = vcombine.high %v2888, %v2903
      %v2923 = vunpack.c.l.s4 1934713408
      %v2924 = vunpack.c.0.s8 %v2923
      %v2925 = vlaneseq
      %v2926 = vshrl.u32 %v2925, 7
      %v2927 = vsub.s32 %v2924, %v2926
      %v2928 = vrot.slane %v2920, %v2927
      %v2930 = vunpack.c.l.s4 1934713408
      %v2931 = vunpack.c.0.s8 %v2930
      %v2932 = vlaneseq
      %v2933 = vshrl.u32 %v2932, 7
      %v2934 = vsub.s32 %v2931, %v2933
      %v2935 = vrot.slane %v2921, %v2934
      %v2936 = vcombine.high %v2912, 0.0
      %v2937 = vcombine.high %v2919, 0.0
      %v2938 = vcombine.high %v2928, 0.0
      %v2939 = vcombine.high %v2935, 0.0
      %v2940 = vcombine.high %v492, 0.0
      %v2942 = vunpack.c.l.s4 1983009808
      %v2943 = vunpack.c.0.s8 %v2942
      %v2944 = vlaneseq
      %v2945 = vshrl.u32 %v2944, 7
      %v2946 = vsub.s32 %v2943, %v2945
      %v2947 = vrot.slane %v492, %v2946
      %v2949 = vunpack.c.l.s4 1983009808
      %v2950 = vunpack.c.0.s8 %v2949
      %v2951 = vlaneseq
      %v2952 = vshrl.u32 %v2951, 7
      %v2953 = vsub.s32 %v2950, %v2952
      %v2954 = vrot.slane %v2940, %v2953
      %v2955 = vcombine.high %v2469, 0.0
      %v2957 = vunpack.c.l.s4 1983009808
      %v2958 = vunpack.c.0.s8 %v2957
      %v2959 = vlaneseq
      %v2960 = vshrl.u32 %v2959, 7
      %v2961 = vsub.s32 %v2958, %v2960
      %v2962 = vrot.slane %v2469, %v2961
      %v2964 = vunpack.c.l.s4 1983009808
      %v2965 = vunpack.c.0.s8 %v2964
      %v2966 = vlaneseq
      %v2967 = vshrl.u32 %v2966, 7
      %v2968 = vsub.s32 %v2965, %v2967
      %v2969 = vrot.slane %v2955, %v2968
      %v2970 = vcombine.low %v2947, %v2962
      %v2971 = vcombine.high %v2947, %v2962
      %v2973 = vunpack.c.l.s4 1934713408
      %v2974 = vunpack.c.0.s8 %v2973
      %v2975 = vlaneseq
      %v2976 = vshrl.u32 %v2975, 7
      %v2977 = vsub.s32 %v2974, %v2976
      %v2978 = vrot.slane %v2970, %v2977
      %v2980 = vunpack.c.l.s4 1934713408
      %v2981 = vunpack.c.0.s8 %v2980
      %v2982 = vlaneseq
      %v2983 = vshrl.u32 %v2982, 7
      %v2984 = vsub.s32 %v2981, %v2983
      %v2985 = vrot.slane %v2971, %v2984
      %v2986 = vcombine.low %v2954, %v2969
      %v2987 = vcombine.high %v2954, %v2969
      %v2989 = vunpack.c.l.s4 1934713408
      %v2990 = vunpack.c.0.s8 %v2989
      %v2991 = vlaneseq
      %v2992 = vshrl.u32 %v2991, 7
      %v2993 = vsub.s32 %v2990, %v2992
      %v2994 = vrot.slane %v2986, %v2993
      %v2996 = vunpack.c.l.s4 1934713408
      %v2997 = vunpack.c.0.s8 %v2996
      %v2998 = vlaneseq
      %v2999 = vshrl.u32 %v2998, 7
      %v3000 = vsub.s32 %v2997, %v2999
      %v3001 = vrot.slane %v2987, %v3000
      %v3002 = vcombine.high %v2978, 0.0
      %v3003 = vcombine.high %v2985, 0.0
      %v3004 = vcombine.high %v2994, 0.0
      %v3005 = vcombine.high %v3001, 0.0
      %v3006 = vcombine.low %v2516, %v2523
      %v3008 = vunpack.c.l.s4 1983009808
      %v3009 = vunpack.c.0.s8 %v3008
      %v3010 = vlaneseq
      %v3011 = vshrl.u32 %v3010, 7
      %v3012 = vsub.s32 %v3009, %v3011
      %v3013 = vrot.slane %v3006, %v3012
      %v3014 = vcombine.low %v2540, %v2541
      %v3016 = vunpack.c.l.s4 1983009808
      %v3017 = vunpack.c.0.s8 %v3016
      %v3018 = vlaneseq
      %v3019 = vshrl.u32 %v3018, 7
      %v3020 = vsub.s32 %v3017, %v3019
      %v3021 = vrot.slane %v3014, %v3020
      %v3022 = vcombine.low %v2532, %v2539
      %v3024 = vunpack.c.l.s4 1983009808
      %v3025 = vunpack.c.0.s8 %v3024
      %v3026 = vlaneseq
      %v3027 = vshrl.u32 %v3026, 7
      %v3028 = vsub.s32 %v3025, %v3027
      %v3029 = vrot.slane %v3022, %v3028
      %v3030 = vcombine.low %v2542, %v2543
      %v3032 = vunpack.c.l.s4 1983009808
      %v3033 = vunpack.c.0.s8 %v3032
      %v3034 = vlaneseq
      %v3035 = vshrl.u32 %v3034, 7
      %v3036 = vsub.s32 %v3033, %v3035
      %v3037 = vrot.slane %v3030, %v3036
      %v3038 = vcombine.low %v3013, %v3021
      %v3040 = vunpack.c.l.s4 1934713408
      %v3041 = vunpack.c.0.s8 %v3040
      %v3042 = vlaneseq
      %v3043 = vshrl.u32 %v3042, 7
      %v3044 = vsub.s32 %v3041, %v3043
      %v3045 = vrot.slane %v3038, %v3044
      %v3046 = vcombine.low %v3029, %v3037
      %v3048 = vunpack.c.l.s4 1934713408
      %v3049 = vunpack.c.0.s8 %v3048
      %v3050 = vlaneseq
      %v3051 = vshrl.u32 %v3050, 7
      %v3052 = vsub.s32 %v3049, %v3051
      %v3053 = vrot.slane %v3046, %v3052
      %v3054 = vcombine.low %v3045, %v3053
      %v3055 = vcombine.high %v3045, %v3053
      %v3056 = vcombine.low %v2582, %v2589
      %v3058 = vunpack.c.l.s4 1983009808
      %v3059 = vunpack.c.0.s8 %v3058
      %v3060 = vlaneseq
      %v3061 = vshrl.u32 %v3060, 7
      %v3062 = vsub.s32 %v3059, %v3061
      %v3063 = vrot.slane %v3056, %v3062
      %v3064 = vcombine.low %v2606, %v2607
      %v3066 = vunpack.c.l.s4 1983009808
      %v3067 = vunpack.c.0.s8 %v3066
      %v3068 = vlaneseq
      %v3069 = vshrl.u32 %v3068, 7
      %v3070 = vsub.s32 %v3067, %v3069
      %v3071 = vrot.slane %v3064, %v3070
      %v3072 = vcombine.low %v2598, %v2605
      %v3074 = vunpack.c.l.s4 1983009808
      %v3075 = vunpack.c.0.s8 %v3074
      %v3076 = vlaneseq
      %v3077 = vshrl.u32 %v3076, 7
      %v3078 = vsub.s32 %v3075, %v3077
      %v3079 = vrot.slane %v3072, %v3078
      %v3080 = vcombine.low %v2608, %v2609
      %v3082 = vunpack.c.l.s4 1983009808
      %v3083 = vunpack.c.0.s8 %v3082
      %v3084 = vlaneseq
      %v3085 = vshrl.u32 %v3084, 7
      %v3086 = vsub.s32 %v3083, %v3085
      %v3087 = vrot.slane %v3080, %v3086
      %v3088 = vcombine.low %v3063, %v3071
      %v3090 = vunpack.c.l.s4 1934713408
      %v3091 = vunpack.c.0.s8 %v3090
      %v3092 = vlaneseq
      %v3093 = vshrl.u32 %v3092, 7
      %v3094 = vsub.s32 %v3091, %v3093
      %v3095 = vrot.slane %v3088, %v3094
      %v3096 = vcombine.low %v3079, %v3087
      %v3098 = vunpack.c.l.s4 1934713408
      %v3099 = vunpack.c.0.s8 %v3098
      %v3100 = vlaneseq
      %v3101 = vshrl.u32 %v3100, 7
      %v3102 = vsub.s32 %v3099, %v3101
      %v3103 = vrot.slane %v3096, %v3102
      %v3104 = vcombine.low %v3095, %v3103
      %v3105 = vcombine.high %v3095, %v3103
      %v3106 = vcombine.low %v2648, %v2655
      %v3108 = vunpack.c.l.s4 1983009808
      %v3109 = vunpack.c.0.s8 %v3108
      %v3110 = vlaneseq
      %v3111 = vshrl.u32 %v3110, 7
      %v3112 = vsub.s32 %v3109, %v3111
      %v3113 = vrot.slane %v3106, %v3112
      %v3114 = vcombine.low %v2672, %v2673
      %v3116 = vunpack.c.l.s4 1983009808
      %v3117 = vunpack.c.0.s8 %v3116
      %v3118 = vlaneseq
      %v3119 = vshrl.u32 %v3118, 7
      %v3120 = vsub.s32 %v3117, %v3119
      %v3121 = vrot.slane %v3114, %v3120
      %v3122 = vcombine.low %v2664, %v2671
      %v3124 = vunpack.c.l.s4 1983009808
      %v3125 = vunpack.c.0.s8 %v3124
      %v3126 = vlaneseq
      %v3127 = vshrl.u32 %v3126, 7
      %v3128 = vsub.s32 %v3125, %v3127
      %v3129 = vrot.slane %v3122, %v3128
      %v3130 = vcombine.low %v2674, %v2675
      %v3132 = vunpack.c.l.s4 1983009808
      %v3133 = vunpack.c.0.s8 %v3132
      %v3134 = vlaneseq
      %v3135 = vshrl.u32 %v3134, 7
      %v3136 = vsub.s32 %v3133, %v3135
      %v3137 = vrot.slane %v3130, %v3136
      %v3138 = vcombine.low %v3113, %v3121
      %v3140 = vunpack.c.l.s4 1934713408
      %v3141 = vunpack.c.0.s8 %v3140
      %v3142 = vlaneseq
      %v3143 = vshrl.u32 %v3142, 7
      %v3144 = vsub.s32 %v3141, %v3143
      %v3145 = vrot.slane %v3138, %v3144
      %v3146 = vcombine.low %v3129, %v3137
      %v3148 = vunpack.c.l.s4 1934713408
      %v3149 = vunpack.c.0.s8 %v3148
      %v3150 = vlaneseq
      %v3151 = vshrl.u32 %v3150, 7
      %v3152 = vsub.s32 %v3149, %v3151
      %v3153 = vrot.slane %v3146, %v3152
      %v3154 = vcombine.low %v3145, %v3153
      %v3155 = vcombine.high %v3145, %v3153
      %v3156 = vcombine.low %v2714, %v2721
      %v3158 = vunpack.c.l.s4 1983009808
      %v3159 = vunpack.c.0.s8 %v3158
      %v3160 = vlaneseq
      %v3161 = vshrl.u32 %v3160, 7
      %v3162 = vsub.s32 %v3159, %v3161
      %v3163 = vrot.slane %v3156, %v3162
      %v3164 = vcombine.low %v2738, %v2739
      %v3166 = vunpack.c.l.s4 1983009808
      %v3167 = vunpack.c.0.s8 %v3166
      %v3168 = vlaneseq
      %v3169 = vshrl.u32 %v3168, 7
      %v3170 = vsub.s32 %v3167, %v3169
      %v3171 = vrot.slane %v3164, %v3170
      %v3172 = vcombine.low %v2730, %v2737
      %v3174 = vunpack.c.l.s4 1983009808
      %v3175 = vunpack.c.0.s8 %v3174
      %v3176 = vlaneseq
      %v3177 = vshrl.u32 %v3176, 7
      %v3178 = vsub.s32 %v3175, %v3177
      %v3179 = vrot.slane %v3172, %v3178
      %v3180 = vcombine.low %v2740, %v2741
      %v3182 = vunpack.c.l.s4 1983009808
      %v3183 = vunpack.c.0.s8 %v3182
      %v3184 = vlaneseq
      %v3185 = vshrl.u32 %v3184, 7
      %v3186 = vsub.s32 %v3183, %v3185
      %v3187 = vrot.slane %v3180, %v3186
      %v3188 = vcombine.low %v3163, %v3171
      %v3190 = vunpack.c.l.s4 1934713408
      %v3191 = vunpack.c.0.s8 %v3190
      %v3192 = vlaneseq
      %v3193 = vshrl.u32 %v3192, 7
      %v3194 = vsub.s32 %v3191, %v3193
      %v3195 = vrot.slane %v3188, %v3194
      %v3196 = vcombine.low %v3179, %v3187
      %v3198 = vunpack.c.l.s4 1934713408
      %v3199 = vunpack.c.0.s8 %v3198
      %v3200 = vlaneseq
      %v3201 = vshrl.u32 %v3200, 7
      %v3202 = vsub.s32 %v3199, %v3201
      %v3203 = vrot.slane %v3196, %v3202
      %v3204 = vcombine.low %v3195, %v3203
      %v3205 = vcombine.high %v3195, %v3203
      %v3206 = vcombine.low %v2780, %v2787
      %v3208 = vunpack.c.l.s4 1983009808
      %v3209 = vunpack.c.0.s8 %v3208
      %v3210 = vlaneseq
      %v3211 = vshrl.u32 %v3210, 7
      %v3212 = vsub.s32 %v3209, %v3211
      %v3213 = vrot.slane %v3206, %v3212
      %v3214 = vcombine.low %v2804, %v2805
      %v3216 = vunpack.c.l.s4 1983009808
      %v3217 = vunpack.c.0.s8 %v3216
      %v3218 = vlaneseq
      %v3219 = vshrl.u32 %v3218, 7
      %v3220 = vsub.s32 %v3217, %v3219
      %v3221 = vrot.slane %v3214, %v3220
      %v3222 = vcombine.low %v2796, %v2803
      %v3224 = vunpack.c.l.s4 1983009808
      %v3225 = vunpack.c.0.s8 %v3224
      %v3226 = vlaneseq
      %v3227 = vshrl.u32 %v3226, 7
      %v3228 = vsub.s32 %v3225, %v3227
      %v3229 = vrot.slane %v3222, %v3228
      %v3230 = vcombine.low %v2806, %v2807
      %v3232 = vunpack.c.l.s4 1983009808
      %v3233 = vunpack.c.0.s8 %v3232
      %v3234 = vlaneseq
      %v3235 = vshrl.u32 %v3234, 7
      %v3236 = vsub.s32 %v3233, %v3235
      %v3237 = vrot.slane %v3230, %v3236
      %v3238 = vcombine.low %v3213, %v3221
      %v3240 = vunpack.c.l.s4 1934713408
      %v3241 = vunpack.c.0.s8 %v3240
      %v3242 = vlaneseq
      %v3243 = vshrl.u32 %v3242, 7
      %v3244 = vsub.s32 %v3241, %v3243
      %v3245 = vrot.slane %v3238, %v3244
      %v3246 = vcombine.low %v3229, %v3237
      %v3248 = vunpack.c.l.s4 1934713408
      %v3249 = vunpack.c.0.s8 %v3248
      %v3250 = vlaneseq
      %v3251 = vshrl.u32 %v3250, 7
      %v3252 = vsub.s32 %v3249, %v3251
      %v3253 = vrot.slane %v3246, %v3252
      %v3254 = vcombine.low %v3245, %v3253
      %v3255 = vcombine.high %v3245, %v3253
      %v3256 = vcombine.low %v2846, %v2853
      %v3258 = vunpack.c.l.s4 1983009808
      %v3259 = vunpack.c.0.s8 %v3258
      %v3260 = vlaneseq
      %v3261 = vshrl.u32 %v3260, 7
      %v3262 = vsub.s32 %v3259, %v3261
      %v3263 = vrot.slane %v3256, %v3262
      %v3264 = vcombine.low %v2870, %v2871
      %v3266 = vunpack.c.l.s4 1983009808
      %v3267 = vunpack.c.0.s8 %v3266
      %v3268 = vlaneseq
      %v3269 = vshrl.u32 %v3268, 7
      %v3270 = vsub.s32 %v3267, %v3269
      %v3271 = vrot.slane %v3264, %v3270
      %v3272 = vcombine.low %v2862, %v2869
      %v3274 = vunpack.c.l.s4 1983009808
      %v3275 = vunpack.c.0.s8 %v3274
      %v3276 = vlaneseq
      %v3277 = vshrl.u32 %v3276, 7
      %v3278 = vsub.s32 %v3275, %v3277
      %v3279 = vrot.slane %v3272, %v3278
      %v3280 = vcombine.low %v2872, %v2873
      %v3282 = vunpack.c.l.s4 1983009808
      %v3283 = vunpack.c.0.s8 %v3282
      %v3284 = vlaneseq
      %v3285 = vshrl.u32 %v3284, 7
      %v3286 = vsub.s32 %v3283, %v3285
      %v3287 = vrot.slane %v3280, %v3286
      %v3288 = vcombine.low %v3263, %v3271
      %v3290 = vunpack.c.l.s4 1934713408
      %v3291 = vunpack.c.0.s8 %v3290
      %v3292 = vlaneseq
      %v3293 = vshrl.u32 %v3292, 7
      %v3294 = vsub.s32 %v3291, %v3293
      %v3295 = vrot.slane %v3288, %v3294
      %v3296 = vcombine.low %v3279, %v3287
      %v3298 = vunpack.c.l.s4 1934713408
      %v3299 = vunpack.c.0.s8 %v3298
      %v3300 = vlaneseq
      %v3301 = vshrl.u32 %v3300, 7
      %v3302 = vsub.s32 %v3299, %v3301
      %v3303 = vrot.slane %v3296, %v3302
      %v3304 = vcombine.low %v3295, %v3303
      %v3305 = vcombine.high %v3295, %v3303
      %v3306 = vcombine.low %v2912, %v2919
      %v3308 = vunpack.c.l.s4 1983009808
      %v3309 = vunpack.c.0.s8 %v3308
      %v3310 = vlaneseq
      %v3311 = vshrl.u32 %v3310, 7
      %v3312 = vsub.s32 %v3309, %v3311
      %v3313 = vrot.slane %v3306, %v3312
      %v3314 = vcombine.low %v2936, %v2937
      %v3316 = vunpack.c.l.s4 1983009808
      %v3317 = vunpack.c.0.s8 %v3316
      %v3318 = vlaneseq
      %v3319 = vshrl.u32 %v3318, 7
      %v3320 = vsub.s32 %v3317, %v3319
      %v3321 = vrot.slane %v3314, %v3320
      %v3322 = vcombine.low %v2928, %v2935
      %v3324 = vunpack.c.l.s4 1983009808
      %v3325 = vunpack.c.0.s8 %v3324
      %v3326 = vlaneseq
      %v3327 = vshrl.u32 %v3326, 7
      %v3328 = vsub.s32 %v3325, %v3327
      %v3329 = vrot.slane %v3322, %v3328
      %v3330 = vcombine.low %v2938, %v2939
      %v3332 = vunpack.c.l.s4 1983009808
      %v3333 = vunpack.c.0.s8 %v3332
      %v3334 = vlaneseq
      %v3335 = vshrl.u32 %v3334, 7
      %v3336 = vsub.s32 %v3333, %v3335
      %v3337 = vrot.slane %v3330, %v3336
      %v3338 = vcombine.low %v3313, %v3321
      %v3340 = vunpack.c.l.s4 1934713408
      %v3341 = vunpack.c.0.s8 %v3340
      %v3342 = vlaneseq
      %v3343 = vshrl.u32 %v3342, 7
      %v3344 = vsub.s32 %v3341, %v3343
      %v3345 = vrot.slane %v3338, %v3344
      %v3346 = vcombine.low %v3329, %v3337
      %v3348 = vunpack.c.l.s4 1934713408
      %v3349 = vunpack.c.0.s8 %v3348
      %v3350 = vlaneseq
      %v3351 = vshrl.u32 %v3350, 7
      %v3352 = vsub.s32 %v3349, %v3351
      %v3353 = vrot.slane %v3346, %v3352
      %v3354 = vcombine.low %v3345, %v3353
      %v3355 = vcombine.high %v3345, %v3353
      %v3356 = vcombine.low %v2978, %v2985
      %v3358 = vunpack.c.l.s4 1983009808
      %v3359 = vunpack.c.0.s8 %v3358
      %v3360 = vlaneseq
      %v3361 = vshrl.u32 %v3360, 7
      %v3362 = vsub.s32 %v3359, %v3361
      %v3363 = vrot.slane %v3356, %v3362
      %v3364 = vcombine.low %v3002, %v3003
      %v3366 = vunpack.c.l.s4 1983009808
      %v3367 = vunpack.c.0.s8 %v3366
      %v3368 = vlaneseq
      %v3369 = vshrl.u32 %v3368, 7
      %v3370 = vsub.s32 %v3367, %v3369
      %v3371 = vrot.slane %v3364, %v3370
      %v3372 = vcombine.low %v2994, %v3001
      %v3374 = vunpack.c.l.s4 1983009808
      %v3375 = vunpack.c.0.s8 %v3374
      %v3376 = vlaneseq
      %v3377 = vshrl.u32 %v3376, 7
      %v3378 = vsub.s32 %v3375, %v3377
      %v3379 = vrot.slane %v3372, %v3378
      %v3380 = vcombine.low %v3004, %v3005
      %v3382 = vunpack.c.l.s4 1983009808
      %v3383 = vunpack.c.0.s8 %v3382
      %v3384 = vlaneseq
      %v3385 = vshrl.u32 %v3384, 7
      %v3386 = vsub.s32 %v3383, %v3385
      %v3387 = vrot.slane %v3380, %v3386
      %v3388 = vcombine.low %v3363, %v3371
      %v3390 = vunpack.c.l.s4 1934713408
      %v3391 = vunpack.c.0.s8 %v3390
      %v3392 = vlaneseq
      %v3393 = vshrl.u32 %v3392, 7
      %v3394 = vsub.s32 %v3391, %v3393
      %v3395 = vrot.slane %v3388, %v3394
      %v3396 = vcombine.low %v3379, %v3387
      %v3398 = vunpack.c.l.s4 1934713408
      %v3399 = vunpack.c.0.s8 %v3398
      %v3400 = vlaneseq
      %v3401 = vshrl.u32 %v3400, 7
      %v3402 = vsub.s32 %v3399, %v3401
      %v3403 = vrot.slane %v3396, %v3402
      %v3404 = vcombine.low %v3395, %v3403
      %v3405 = vcombine.high %v3395, %v3403
      %v3406 = vpack.c.bf16 %v3104, %v3054
      %v3407 = vpack.c.bf16 %v3204, %v3154
      %v3408 = vpack.c.bf16 %v3304, %v3254
      %v3409 = vpack.c.bf16 %v3404, %v3354
      %v3410 = vpack.c.bf16 %v3105, %v3055
      %v3411 = vpack.c.bf16 %v3205, %v3155
      %v3412 = vpack.c.bf16 %v3305, %v3255
      %v3413 = vpack.c.bf16 %v3405, %v3355
      %vm3414 = vcmask 261120
      %v3416 = vsel %vm3414, %v1454, 0
      %v3419 = vsel %vm3414, %v2438, 0
      %3421 = vmatprep.subr.bf16.mxu0 0
      %3422 = vmatpush1.bf16.xpose.msra.mxu0 0
      %3423 = vmatprep.subr.bf16.mxu0 0
      %3424 = vmatpush1.bf16.xpose.msra.mxu0 0
      %3425 = vmatprep.subr.bf16.mxu0 0
      %3426 = vmatpush1.bf16.xpose.msra.mxu0 0
      %3427 = vmatprep.subr.bf16.mxu0 0
      %3428 = vmatpush1.bf16.xpose.msra.mxu0 0
      %3429 = vmatprep.subr.bf16.mxu0 0
      %3430 = vmatpush1.bf16.xpose.msra.mxu0 0
      %3431 = vmatprep.subr.bf16.mxu0 0
      %3432 = vmatpush1.bf16.xpose.msra.mxu0 0
      %3433 = vmatprep.subr.bf16.mxu0 0
      %3434 = vmatpush1.bf16.xpose.msra.mxu0 0
      %3435 = vmatprep.subr.bf16.mxu0 0
      %3436 = vmatpush1.bf16.xpose.msra.mxu0 %v3419
      %3437 = vmatprep.subr.bf16.mxu0 0
      %3438 = vmatpush2.bf16.xpose.msra.mxu0 0
      %3439 = vmatprep.subr.bf16.mxu0 0
      %3440 = vmatpush2.bf16.xpose.msra.mxu0 0
      %3441 = vmatprep.subr.bf16.mxu0 0
      %3442 = vmatpush2.bf16.xpose.msra.mxu0 0
      %3443 = vmatprep.subr.bf16.mxu0 0
      %3444 = vmatpush2.bf16.xpose.msra.mxu0 0
      %3445 = vmatprep.subr.bf16.mxu0 0
      %3446 = vmatpush2.bf16.xpose.msra.mxu0 0
      %3447 = vmatprep.subr.bf16.mxu0 0
      %3448 = vmatpush2.bf16.xpose.msra.mxu0 0
      %3449 = vmatprep.subr.bf16.mxu0 0
      %3450 = vmatpush2.bf16.xpose.msra.mxu0 0
      %3451 = vmatprep.subr.bf16.mxu0 0
      %3452 = vmatpush2.bf16.xpose.msra.mxu0 0
      %3453 = vmatprep.mubr.bf16.mxu0 0
      %3454 = vmatmul.mubr.bf16.gmra.mxu0 %v3416
      %v3455 = vpop.f32.mrf.mxu0
      %v3456 = vadd.f32 0.0, %v3455
      %v3457 = vpop.f32.mrf.mxu0
      %v3458 = vpop.f32.mrf.mxu0
      %v3459 = vadd.f32 0.0, %v3458
      %v3460 = vpop.f32.mrf.mxu0
      %3461 = vdwg.mxu0
      %v3463 = vsel %vm3414, %v1455, 0
      %v3466 = vsel %vm3414, %v2439, 0
      %3468 = vmatprep.subr.bf16.mxu0 0
      %3469 = vmatpush1.bf16.xpose.msra.mxu0 0
      %3470 = vmatprep.subr.bf16.mxu0 0
      %3471 = vmatpush1.bf16.xpose.msra.mxu0 0
      %3472 = vmatprep.subr.bf16.mxu0 0
      %3473 = vmatpush1.bf16.xpose.msra.mxu0 0
      %3474 = vmatprep.subr.bf16.mxu0 0
      %3475 = vmatpush1.bf16.xpose.msra.mxu0 0
      %3476 = vmatprep.subr.bf16.mxu0 0
      %3477 = vmatpush1.bf16.xpose.msra.mxu0 0
      %3478 = vmatprep.subr.bf16.mxu0 0
      %3479 = vmatpush1.bf16.xpose.msra.mxu0 0
      %3480 = vmatprep.subr.bf16.mxu0 0
      %3481 = vmatpush1.bf16.xpose.msra.mxu0 0
      %3482 = vmatprep.subr.bf16.mxu0 0
      %3483 = vmatpush1.bf16.xpose.msra.mxu0 %v3466
      %3484 = vmatprep.subr.bf16.mxu0 0
      %3485 = vmatpush2.bf16.xpose.msra.mxu0 0
      %3486 = vmatprep.subr.bf16.mxu0 0
      %3487 = vmatpush2.bf16.xpose.msra.mxu0 0
      %3488 = vmatprep.subr.bf16.mxu0 0
      %3489 = vmatpush2.bf16.xpose.msra.mxu0 0
      %3490 = vmatprep.subr.bf16.mxu0 0
      %3491 = vmatpush2.bf16.xpose.msra.mxu0 0
      %3492 = vmatprep.subr.bf16.mxu0 0
      %3493 = vmatpush2.bf16.xpose.msra.mxu0 0
      %3494 = vmatprep.subr.bf16.mxu0 0
      %3495 = vmatpush2.bf16.xpose.msra.mxu0 0
      %3496 = vmatprep.subr.bf16.mxu0 0
      %3497 = vmatpush2.bf16.xpose.msra.mxu0 0
      %3498 = vmatprep.subr.bf16.mxu0 0
      %3499 = vmatpush2.bf16.xpose.msra.mxu0 0
      %3500 = vmatprep.mubr.bf16.mxu0 0
      %3501 = vmatmul.mubr.bf16.gmra.mxu0 %v3463
      %v3502 = vpop.f32.mrf.mxu0
      %v3503 = vadd.f32 0.0, %v3502
      %v3504 = vpop.f32.mrf.mxu0
      %v3505 = vpop.f32.mrf.mxu0
      %v3506 = vadd.f32 0.0, %v3505
      %v3507 = vpop.f32.mrf.mxu0
      %3508 = vdwg.mxu0
      %v3510 = vsel %vm3414, %v1456, 0
      %v3513 = vsel %vm3414, %v2440, 0
      %3515 = vmatprep.subr.bf16.mxu0 0
      %3516 = vmatpush1.bf16.xpose.msra.mxu0 0
      %3517 = vmatprep.subr.bf16.mxu0 0
      %3518 = vmatpush1.bf16.xpose.msra.mxu0 0
      %3519 = vmatprep.subr.bf16.mxu0 0
      %3520 = vmatpush1.bf16.xpose.msra.mxu0 0
      %3521 = vmatprep.subr.bf16.mxu0 0
      %3522 = vmatpush1.bf16.xpose.msra.mxu0 0
      %3523 = vmatprep.subr.bf16.mxu0 0
      %3524 = vmatpush1.bf16.xpose.msra.mxu0 0
      %3525 = vmatprep.subr.bf16.mxu0 0
      %3526 = vmatpush1.bf16.xpose.msra.mxu0 0
      %3527 = vmatprep.subr.bf16.mxu0 0
      %3528 = vmatpush1.bf16.xpose.msra.mxu0 0
      %3529 = vmatprep.subr.bf16.mxu0 0
      %3530 = vmatpush1.bf16.xpose.msra.mxu0 %v3513
      %3531 = vmatprep.subr.bf16.mxu0 0
      %3532 = vmatpush2.bf16.xpose.msra.mxu0 0
      %3533 = vmatprep.subr.bf16.mxu0 0
      %3534 = vmatpush2.bf16.xpose.msra.mxu0 0
      %3535 = vmatprep.subr.bf16.mxu0 0
      %3536 = vmatpush2.bf16.xpose.msra.mxu0 0
      %3537 = vmatprep.subr.bf16.mxu0 0
      %3538 = vmatpush2.bf16.xpose.msra.mxu0 0
      %3539 = vmatprep.subr.bf16.mxu0 0
      %3540 = vmatpush2.bf16.xpose.msra.mxu0 0
      %3541 = vmatprep.subr.bf16.mxu0 0
      %3542 = vmatpush2.bf16.xpose.msra.mxu0 0
      %3543 = vmatprep.subr.bf16.mxu0 0
      %3544 = vmatpush2.bf16.xpose.msra.mxu0 0
      %3545 = vmatprep.subr.bf16.mxu0 0
      %3546 = vmatpush2.bf16.xpose.msra.mxu0 0
      %3547 = vmatprep.mubr.bf16.mxu0 0
      %3548 = vmatmul.mubr.bf16.gmra.mxu0 %v3510
      %v3549 = vpop.f32.mrf.mxu0
      %v3550 = vadd.f32 0.0, %v3549
      %v3551 = vpop.f32.mrf.mxu0
      %v3552 = vpop.f32.mrf.mxu0
      %v3553 = vadd.f32 0.0, %v3552
      %v3554 = vpop.f32.mrf.mxu0
      %3555 = vdwg.mxu0
      %v3557 = vsel %vm3414, %v1457, 0
      %v3560 = vsel %vm3414, %v2441, 0
      %3562 = vmatprep.subr.bf16.mxu0 0
      %3563 = vmatpush1.bf16.xpose.msra.mxu0 0
      %3564 = vmatprep.subr.bf16.mxu0 0
      %3565 = vmatpush1.bf16.xpose.msra.mxu0 0
      %3566 = vmatprep.subr.bf16.mxu0 0
      %3567 = vmatpush1.bf16.xpose.msra.mxu0 0
      %3568 = vmatprep.subr.bf16.mxu0 0
      %3569 = vmatpush1.bf16.xpose.msra.mxu0 0
      %3570 = vmatprep.subr.bf16.mxu0 0
      %3571 = vmatpush1.bf16.xpose.msra.mxu0 0
      %3572 = vmatprep.subr.bf16.mxu0 0
      %3573 = vmatpush1.bf16.xpose.msra.mxu0 0
      %3574 = vmatprep.subr.bf16.mxu0 0
      %3575 = vmatpush1.bf16.xpose.msra.mxu0 0
      %3576 = vmatprep.subr.bf16.mxu0 0
      %3577 = vmatpush1.bf16.xpose.msra.mxu0 %v3560
      %3578 = vmatprep.subr.bf16.mxu0 0
      %3579 = vmatpush2.bf16.xpose.msra.mxu0 0
      %3580 = vmatprep.subr.bf16.mxu0 0
      %3581 = vmatpush2.bf16.xpose.msra.mxu0 0
      %3582 = vmatprep.subr.bf16.mxu0 0
      %3583 = vmatpush2.bf16.xpose.msra.mxu0 0
      %3584 = vmatprep.subr.bf16.mxu0 0
      %3585 = vmatpush2.bf16.xpose.msra.mxu0 0
      %3586 = vmatprep.subr.bf16.mxu0 0
      %3587 = vmatpush2.bf16.xpose.msra.mxu0 0
      %3588 = vmatprep.subr.bf16.mxu0 0
      %3589 = vmatpush2.bf16.xpose.msra.mxu0 0
      %3590 = vmatprep.subr.bf16.mxu0 0
      %3591 = vmatpush2.bf16.xpose.msra.mxu0 0
      %3592 = vmatprep.subr.bf16.mxu0 0
      %3593 = vmatpush2.bf16.xpose.msra.mxu0 0
      %3594 = vmatprep.mubr.bf16.mxu0 0
      %3595 = vmatmul.mubr.bf16.gmra.mxu0 %v3557
      %v3596 = vpop.f32.mrf.mxu0
      %v3597 = vadd.f32 0.0, %v3596
      %v3598 = vpop.f32.mrf.mxu0
      %v3599 = vpop.f32.mrf.mxu0
      %v3600 = vadd.f32 0.0, %v3599
      %v3601 = vpop.f32.mrf.mxu0
      %3602 = vdwg.mxu0
      %v3604 = vsel %vm3414, %v1458, 0
      %v3607 = vsel %vm3414, %v2442, 0
      %3609 = vmatprep.subr.bf16.mxu0 0
      %3610 = vmatpush1.bf16.xpose.msra.mxu0 0
      %3611 = vmatprep.subr.bf16.mxu0 0
      %3612 = vmatpush1.bf16.xpose.msra.mxu0 0
      %3613 = vmatprep.subr.bf16.mxu0 0
      %3614 = vmatpush1.bf16.xpose.msra.mxu0 0
      %3615 = vmatprep.subr.bf16.mxu0 0
      %3616 = vmatpush1.bf16.xpose.msra.mxu0 0
      %3617 = vmatprep.subr.bf16.mxu0 0
      %3618 = vmatpush1.bf16.xpose.msra.mxu0 0
      %3619 = vmatprep.subr.bf16.mxu0 0
      %3620 = vmatpush1.bf16.xpose.msra.mxu0 0
      %3621 = vmatprep.subr.bf16.mxu0 0
      %3622 = vmatpush1.bf16.xpose.msra.mxu0 0
      %3623 = vmatprep.subr.bf16.mxu0 0
      %3624 = vmatpush1.bf16.xpose.msra.mxu0 %v3607
      %3625 = vmatprep.subr.bf16.mxu0 0
      %3626 = vmatpush2.bf16.xpose.msra.mxu0 0
      %3627 = vmatprep.subr.bf16.mxu0 0
      %3628 = vmatpush2.bf16.xpose.msra.mxu0 0
      %3629 = vmatprep.subr.bf16.mxu0 0
      %3630 = vmatpush2.bf16.xpose.msra.mxu0 0
      %3631 = vmatprep.subr.bf16.mxu0 0
      %3632 = vmatpush2.bf16.xpose.msra.mxu0 0
      %3633 = vmatprep.subr.bf16.mxu0 0
      %3634 = vmatpush2.bf16.xpose.msra.mxu0 0
      %3635 = vmatprep.subr.bf16.mxu0 0
      %3636 = vmatpush2.bf16.xpose.msra.mxu0 0
      %3637 = vmatprep.subr.bf16.mxu0 0
      %3638 = vmatpush2.bf16.xpose.msra.mxu0 0
      %3639 = vmatprep.subr.bf16.mxu0 0
      %3640 = vmatpush2.bf16.xpose.msra.mxu0 0
      %3641 = vmatprep.mubr.bf16.mxu0 0
      %3642 = vmatmul.mubr.bf16.gmra.mxu0 %v3604
      %v3643 = vpop.f32.mrf.mxu0
      %v3644 = vadd.f32 0.0, %v3643
      %v3645 = vpop.f32.mrf.mxu0
      %v3646 = vpop.f32.mrf.mxu0
      %v3647 = vadd.f32 0.0, %v3646
      %v3648 = vpop.f32.mrf.mxu0
      %3649 = vdwg.mxu0
      %v3651 = vsel %vm3414, %v1459, 0
      %v3654 = vsel %vm3414, %v2443, 0
      %3656 = vmatprep.subr.bf16.mxu0 0
      %3657 = vmatpush1.bf16.xpose.msra.mxu0 0
      %3658 = vmatprep.subr.bf16.mxu0 0
      %3659 = vmatpush1.bf16.xpose.msra.mxu0 0
      %3660 = vmatprep.subr.bf16.mxu0 0
      %3661 = vmatpush1.bf16.xpose.msra.mxu0 0
      %3662 = vmatprep.subr.bf16.mxu0 0
      %3663 = vmatpush1.bf16.xpose.msra.mxu0 0
      %3664 = vmatprep.subr.bf16.mxu0 0
      %3665 = vmatpush1.bf16.xpose.msra.mxu0 0
      %3666 = vmatprep.subr.bf16.mxu0 0
      %3667 = vmatpush1.bf16.xpose.msra.mxu0 0
      %3668 = vmatprep.subr.bf16.mxu0 0
      %3669 = vmatpush1.bf16.xpose.msra.mxu0 0
      %3670 = vmatprep.subr.bf16.mxu0 0
      %3671 = vmatpush1.bf16.xpose.msra.mxu0 %v3654
      %3672 = vmatprep.subr.bf16.mxu0 0
      %3673 = vmatpush2.bf16.xpose.msra.mxu0 0
      %3674 = vmatprep.subr.bf16.mxu0 0
      %3675 = vmatpush2.bf16.xpose.msra.mxu0 0
      %3676 = vmatprep.subr.bf16.mxu0 0
      %3677 = vmatpush2.bf16.xpose.msra.mxu0 0
      %3678 = vmatprep.subr.bf16.mxu0 0
      %3679 = vmatpush2.bf16.xpose.msra.mxu0 0
      %3680 = vmatprep.subr.bf16.mxu0 0
      %3681 = vmatpush2.bf16.xpose.msra.mxu0 0
      %3682 = vmatprep.subr.bf16.mxu0 0
      %3683 = vmatpush2.bf16.xpose.msra.mxu0 0
      %3684 = vmatprep.subr.bf16.mxu0 0
      %3685 = vmatpush2.bf16.xpose.msra.mxu0 0
      %3686 = vmatprep.subr.bf16.mxu0 0
      %3687 = vmatpush2.bf16.xpose.msra.mxu0 0
      %3688 = vmatprep.mubr.bf16.mxu0 0
      %3689 = vmatmul.mubr.bf16.gmra.mxu0 %v3651
      %v3690 = vpop.f32.mrf.mxu0
      %v3691 = vadd.f32 0.0, %v3690
      %v3692 = vpop.f32.mrf.mxu0
      %v3693 = vpop.f32.mrf.mxu0
      %v3694 = vadd.f32 0.0, %v3693
      %v3695 = vpop.f32.mrf.mxu0
      %3696 = vdwg.mxu0
      %v3698 = vsel %vm3414, %v1460, 0
      %v3701 = vsel %vm3414, %v2444, 0
      %3703 = vmatprep.subr.bf16.mxu0 0
      %3704 = vmatpush1.bf16.xpose.msra.mxu0 0
      %3705 = vmatprep.subr.bf16.mxu0 0
      %3706 = vmatpush1.bf16.xpose.msra.mxu0 0
      %3707 = vmatprep.subr.bf16.mxu0 0
      %3708 = vmatpush1.bf16.xpose.msra.mxu0 0
      %3709 = vmatprep.subr.bf16.mxu0 0
      %3710 = vmatpush1.bf16.xpose.msra.mxu0 0
      %3711 = vmatprep.subr.bf16.mxu0 0
      %3712 = vmatpush1.bf16.xpose.msra.mxu0 0
      %3713 = vmatprep.subr.bf16.mxu0 0
      %3714 = vmatpush1.bf16.xpose.msra.mxu0 0
      %3715 = vmatprep.subr.bf16.mxu0 0
      %3716 = vmatpush1.bf16.xpose.msra.mxu0 0
      %3717 = vmatprep.subr.bf16.mxu0 0
      %3718 = vmatpush1.bf16.xpose.msra.mxu0 %v3701
      %3719 = vmatprep.subr.bf16.mxu0 0
      %3720 = vmatpush2.bf16.xpose.msra.mxu0 0
      %3721 = vmatprep.subr.bf16.mxu0 0
      %3722 = vmatpush2.bf16.xpose.msra.mxu0 0
      %3723 = vmatprep.subr.bf16.mxu0 0
      %3724 = vmatpush2.bf16.xpose.msra.mxu0 0
      %3725 = vmatprep.subr.bf16.mxu0 0
      %3726 = vmatpush2.bf16.xpose.msra.mxu0 0
      %3727 = vmatprep.subr.bf16.mxu0 0
      %3728 = vmatpush2.bf16.xpose.msra.mxu0 0
      %3729 = vmatprep.subr.bf16.mxu0 0
      %3730 = vmatpush2.bf16.xpose.msra.mxu0 0
      %3731 = vmatprep.subr.bf16.mxu0 0
      %3732 = vmatpush2.bf16.xpose.msra.mxu0 0
      %3733 = vmatprep.subr.bf16.mxu0 0
      %3734 = vmatpush2.bf16.xpose.msra.mxu0 0
      %3735 = vmatprep.mubr.bf16.mxu0 0
      %3736 = vmatmul.mubr.bf16.gmra.mxu0 %v3698
      %v3737 = vpop.f32.mrf.mxu0
      %v3738 = vadd.f32 0.0, %v3737
      %v3739 = vpop.f32.mrf.mxu0
      %v3740 = vpop.f32.mrf.mxu0
      %v3741 = vadd.f32 0.0, %v3740
      %v3742 = vpop.f32.mrf.mxu0
      %3743 = vdwg.mxu0
      %v3745 = vsel %vm3414, %v1461, 0
      %v3748 = vsel %vm3414, %v2445, 0
      %3750 = vmatprep.subr.bf16.mxu0 0
      %3751 = vmatpush1.bf16.xpose.msra.mxu0 0
      %3752 = vmatprep.subr.bf16.mxu0 0
      %3753 = vmatpush1.bf16.xpose.msra.mxu0 0
      %3754 = vmatprep.subr.bf16.mxu0 0
      %3755 = vmatpush1.bf16.xpose.msra.mxu0 0
      %3756 = vmatprep.subr.bf16.mxu0 0
      %3757 = vmatpush1.bf16.xpose.msra.mxu0 0
      %3758 = vmatprep.subr.bf16.mxu0 0
      %3759 = vmatpush1.bf16.xpose.msra.mxu0 0
      %3760 = vmatprep.subr.bf16.mxu0 0
      %3761 = vmatpush1.bf16.xpose.msra.mxu0 0
      %3762 = vmatprep.subr.bf16.mxu0 0
      %3763 = vmatpush1.bf16.xpose.msra.mxu0 0
      %3764 = vmatprep.subr.bf16.mxu0 0
      %3765 = vmatpush1.bf16.xpose.msra.mxu0 %v3748
      %3766 = vmatprep.subr.bf16.mxu0 0
      %3767 = vmatpush2.bf16.xpose.msra.mxu0 0
      %3768 = vmatprep.subr.bf16.mxu0 0
      %3769 = vmatpush2.bf16.xpose.msra.mxu0 0
      %3770 = vmatprep.subr.bf16.mxu0 0
      %3771 = vmatpush2.bf16.xpose.msra.mxu0 0
      %3772 = vmatprep.subr.bf16.mxu0 0
      %3773 = vmatpush2.bf16.xpose.msra.mxu0 0
      %3774 = vmatprep.subr.bf16.mxu0 0
      %3775 = vmatpush2.bf16.xpose.msra.mxu0 0
      %3776 = vmatprep.subr.bf16.mxu0 0
      %3777 = vmatpush2.bf16.xpose.msra.mxu0 0
      %3778 = vmatprep.subr.bf16.mxu0 0
      %3779 = vmatpush2.bf16.xpose.msra.mxu0 0
      %3780 = vmatprep.subr.bf16.mxu0 0
      %3781 = vmatpush2.bf16.xpose.msra.mxu0 0
      %3782 = vmatprep.mubr.bf16.mxu0 0
      %3783 = vmatmul.mubr.bf16.gmra.mxu0 %v3745
      %v3784 = vpop.f32.mrf.mxu0
      %v3785 = vadd.f32 0.0, %v3784
      %v3786 = vpop.f32.mrf.mxu0
      %v3787 = vpop.f32.mrf.mxu0
      %v3788 = vadd.f32 0.0, %v3787
      %v3789 = vpop.f32.mrf.mxu0
      %3790 = vdwg.mxu0
      %v3791 = vld [vmem:[%s4] sm:$0xff]
      %v3792 = vld [vmem:[%s4 + $0x8] sm:$0xff]
      %v3793 = vld [vmem:[%s4 + $0x10] sm:$0xff]
      %v3794 = vld [vmem:[%s4 + $0x18] sm:$0xff]
      %v3795 = vadd.f32 %v3456, %v3791
      %v3796 = vadd.f32 %v3459, %v3792
      %v3797 = vadd.f32 %v3503, %v3791
      %v3798 = vadd.f32 %v3506, %v3792
      %v3799 = vadd.f32 %v3550, %v3791
      %v3800 = vadd.f32 %v3553, %v3792
      %v3801 = vadd.f32 %v3597, %v3791
      %v3802 = vadd.f32 %v3600, %v3792
      %v3803 = vadd.f32 %v3644, %v3793
      %v3804 = vadd.f32 %v3647, %v3794
      %v3805 = vadd.f32 %v3691, %v3793
      %v3806 = vadd.f32 %v3694, %v3794
      %v3807 = vadd.f32 %v3738, %v3793
      %v3808 = vadd.f32 %v3741, %v3794
      %v3809 = vadd.f32 %v3785, %v3793
      %v3810 = vadd.f32 %v3788, %v3794
      %vm3811 = vcmask 130048
      %v3812 = vsel %vm3811, %v3795, -inf
      %3813 = vmax.xlane.f32.xlu0 %v3812
      %v3814 = vpop.xlane.xlu0 %3813
      %v3815 = vsel %vm3811, %v3796, -inf
      %3816 = vmax.xlane.f32.xlu0 %v3815
      %v3817 = vpop.xlane.xlu0 %3816
      %v3818 = vsel %vm3811, %v3797, -inf
      %3819 = vmax.xlane.f32.xlu0 %v3818
      %v3820 = vpop.xlane.xlu0 %3819
      %v3821 = vsel %vm3811, %v3798, -inf
      %3822 = vmax.xlane.f32.xlu0 %v3821
      %v3823 = vpop.xlane.xlu0 %3822
      %v3824 = vsel %vm3811, %v3799, -inf
      %3825 = vmax.xlane.f32.xlu0 %v3824
      %v3826 = vpop.xlane.xlu0 %3825
      %v3827 = vsel %vm3811, %v3800, -inf
      %3828 = vmax.xlane.f32.xlu0 %v3827
      %v3829 = vpop.xlane.xlu0 %3828
      %v3830 = vsel %vm3811, %v3801, -inf
      %3831 = vmax.xlane.f32.xlu0 %v3830
      %v3832 = vpop.xlane.xlu0 %3831
      %v3833 = vsel %vm3811, %v3802, -inf
      %3834 = vmax.xlane.f32.xlu0 %v3833
      %v3835 = vpop.xlane.xlu0 %3834
      %v3836 = vsel %vm3811, %v3803, -inf
      %3837 = vmax.xlane.f32.xlu0 %v3836
      %v3838 = vpop.xlane.xlu0 %3837
      %v3839 = vsel %vm3811, %v3804, -inf
      %3840 = vmax.xlane.f32.xlu0 %v3839
      %v3841 = vpop.xlane.xlu0 %3840
      %v3842 = vsel %vm3811, %v3805, -inf
      %3843 = vmax.xlane.f32.xlu0 %v3842
      %v3844 = vpop.xlane.xlu0 %3843
      %v3845 = vsel %vm3811, %v3806, -inf
      %3846 = vmax.xlane.f32.xlu0 %v3845
      %v3847 = vpop.xlane.xlu0 %3846
      %v3848 = vsel %vm3811, %v3807, -inf
      %3849 = vmax.xlane.f32.xlu0 %v3848
      %v3850 = vpop.xlane.xlu0 %3849
      %v3851 = vsel %vm3811, %v3808, -inf
      %3852 = vmax.xlane.f32.xlu0 %v3851
      %v3853 = vpop.xlane.xlu0 %3852
      %v3854 = vsel %vm3811, %v3809, -inf
      %3855 = vmax.xlane.f32.xlu0 %v3854
      %v3856 = vpop.xlane.xlu0 %3855
      %v3857 = vsel %vm3811, %v3810, -inf
      %3858 = vmax.xlane.f32.xlu0 %v3857
      %v3859 = vpop.xlane.xlu0 %3858
      %v3860 = vsub.f32 %v3795, %v3814
      %v3861 = vsub.f32 %v3796, %v3817
      %v3862 = vsub.f32 %v3797, %v3820
      %v3863 = vsub.f32 %v3798, %v3823
      %v3864 = vsub.f32 %v3799, %v3826
      %v3865 = vsub.f32 %v3800, %v3829
      %v3866 = vsub.f32 %v3801, %v3832
      %v3867 = vsub.f32 %v3802, %v3835
      %v3868 = vsub.f32 %v3803, %v3838
      %v3869 = vsub.f32 %v3804, %v3841
      %v3870 = vsub.f32 %v3805, %v3844
      %v3871 = vsub.f32 %v3806, %v3847
      %v3872 = vsub.f32 %v3807, %v3850
      %v3873 = vsub.f32 %v3808, %v3853
      %v3874 = vsub.f32 %v3809, %v3856
      %v3875 = vsub.f32 %v3810, %v3859
      %v3876 = vmul.f32 %v3860, 1.442695
      %v3877 = vpow.pop %v3876
      %v3878 = vmul.f32 %v3861, 1.442695
      %v3879 = vpow.pop %v3878
      %v3880 = vmul.f32 %v3862, 1.442695
      %v3881 = vpow.pop %v3880
      %v3882 = vmul.f32 %v3863, 1.442695
      %v3883 = vpow.pop %v3882
      %v3884 = vmul.f32 %v3864, 1.442695
      %v3885 = vpow.pop %v3884
      %v3886 = vmul.f32 %v3865, 1.442695
      %v3887 = vpow.pop %v3886
      %v3888 = vmul.f32 %v3866, 1.442695
      %v3889 = vpow.pop %v3888
      %v3890 = vmul.f32 %v3867, 1.442695
      %v3891 = vpow.pop %v3890
      %v3892 = vmul.f32 %v3868, 1.442695
      %v3893 = vpow.pop %v3892
      %v3894 = vmul.f32 %v3869, 1.442695
      %v3895 = vpow.pop %v3894
      %v3896 = vmul.f32 %v3870, 1.442695
      %v3897 = vpow.pop %v3896
      %v3898 = vmul.f32 %v3871, 1.442695
      %v3899 = vpow.pop %v3898
      %v3900 = vmul.f32 %v3872, 1.442695
      %v3901 = vpow.pop %v3900
      %v3902 = vmul.f32 %v3873, 1.442695
      %v3903 = vpow.pop %v3902
      %v3904 = vmul.f32 %v3874, 1.442695
      %v3905 = vpow.pop %v3904
      %v3906 = vmul.f32 %v3875, 1.442695
      %v3907 = vpow.pop %v3906
      %v3908 = vsel %vm3811, %v3877, 0.0
      %3909 = vadd.xlane.f32.xlu0 %v3908
      %v3910 = vpop.xlane.xlu0 %3909
      %v3911 = vsel %vm3811, %v3879, 0.0
      %3912 = vadd.xlane.f32.xlu0 %v3911
      %v3913 = vpop.xlane.xlu0 %3912
      %v3914 = vsel %vm3811, %v3881, 0.0
      %3915 = vadd.xlane.f32.xlu0 %v3914
      %v3916 = vpop.xlane.xlu0 %3915
      %v3917 = vsel %vm3811, %v3883, 0.0
      %3918 = vadd.xlane.f32.xlu0 %v3917
      %v3919 = vpop.xlane.xlu0 %3918
      %v3920 = vsel %vm3811, %v3885, 0.0
      %3921 = vadd.xlane.f32.xlu0 %v3920
      %v3922 = vpop.xlane.xlu0 %3921
      %v3923 = vsel %vm3811, %v3887, 0.0
      %3924 = vadd.xlane.f32.xlu0 %v3923
      %v3925 = vpop.xlane.xlu0 %3924
      %v3926 = vsel %vm3811, %v3889, 0.0
      %3927 = vadd.xlane.f32.xlu0 %v3926
      %v3928 = vpop.xlane.xlu0 %3927
      %v3929 = vsel %vm3811, %v3891, 0.0
      %3930 = vadd.xlane.f32.xlu0 %v3929
      %v3931 = vpop.xlane.xlu0 %3930
      %v3932 = vsel %vm3811, %v3893, 0.0
      %3933 = vadd.xlane.f32.xlu0 %v3932
      %v3934 = vpop.xlane.xlu0 %3933
      %v3935 = vsel %vm3811, %v3895, 0.0
      %3936 = vadd.xlane.f32.xlu0 %v3935
      %v3937 = vpop.xlane.xlu0 %3936
      %v3938 = vsel %vm3811, %v3897, 0.0
      %3939 = vadd.xlane.f32.xlu0 %v3938
      %v3940 = vpop.xlane.xlu0 %3939
      %v3941 = vsel %vm3811, %v3899, 0.0
      %3942 = vadd.xlane.f32.xlu0 %v3941
      %v3943 = vpop.xlane.xlu0 %3942
      %v3944 = vsel %vm3811, %v3901, 0.0
      %3945 = vadd.xlane.f32.xlu0 %v3944
      %v3946 = vpop.xlane.xlu0 %3945
      %v3947 = vsel %vm3811, %v3903, 0.0
      %3948 = vadd.xlane.f32.xlu0 %v3947
      %v3949 = vpop.xlane.xlu0 %3948
      %v3950 = vsel %vm3811, %v3905, 0.0
      %3951 = vadd.xlane.f32.xlu0 %v3950
      %v3952 = vpop.xlane.xlu0 %3951
      %v3953 = vsel %vm3811, %v3907, 0.0
      %3954 = vadd.xlane.f32.xlu0 %v3953
      %v3955 = vpop.xlane.xlu0 %3954
      %v3956 = vrcp.pop %v3910
      %v3957 = vrcp.pop %v3913
      %v3958 = vrcp.pop %v3916
      %v3959 = vrcp.pop %v3919
      %v3960 = vrcp.pop %v3922
      %v3961 = vrcp.pop %v3925
      %v3962 = vrcp.pop %v3928
      %v3963 = vrcp.pop %v3931
      %v3964 = vrcp.pop %v3934
      %v3965 = vrcp.pop %v3937
      %v3966 = vrcp.pop %v3940
      %v3967 = vrcp.pop %v3943
      %v3968 = vrcp.pop %v3946
      %v3969 = vrcp.pop %v3949
      %v3970 = vrcp.pop %v3952
      %v3971 = vrcp.pop %v3955
      %v3972 = vmul.f32 %v3877, %v3956
      %v3973 = vmul.f32 %v3879, %v3957
      %v3974 = vmul.f32 %v3881, %v3958
      %v3975 = vmul.f32 %v3883, %v3959
      %v3976 = vmul.f32 %v3885, %v3960
      %v3977 = vmul.f32 %v3887, %v3961
      %v3978 = vmul.f32 %v3889, %v3962
      %v3979 = vmul.f32 %v3891, %v3963
      %v3980 = vmul.f32 %v3893, %v3964
      %v3981 = vmul.f32 %v3895, %v3965
      %v3982 = vmul.f32 %v3897, %v3966
      %v3983 = vmul.f32 %v3899, %v3967
      %v3984 = vmul.f32 %v3901, %v3968
      %v3985 = vmul.f32 %v3903, %v3969
      %v3986 = vmul.f32 %v3905, %v3970
      %v3987 = vmul.f32 %v3907, %v3971
      %v3988 = vpack.c.bf16 %v3973, %v3972
      %v3989 = vpack.c.bf16 %v3975, %v3974
      %v3990 = vpack.c.bf16 %v3977, %v3976
      %v3991 = vpack.c.bf16 %v3979, %v3978
      %v3992 = vpack.c.bf16 %v3981, %v3980
      %v3993 = vpack.c.bf16 %v3983, %v3982
      %v3994 = vpack.c.bf16 %v3985, %v3984
      %v3995 = vpack.c.bf16 %v3987, %v3986
      %v3997 = vsel %vm3811, %v3988, 0
      %3999 = vmatprep.subr.bf16.mxu0 0
      %4000 = vmatpush1.bf16.msra.mxu0 0
      %4001 = vmatprep.subr.bf16.mxu0 0
      %4002 = vmatpush1.bf16.msra.mxu0 0
      %4003 = vmatprep.subr.bf16.mxu0 0
      %4004 = vmatpush1.bf16.msra.mxu0 0
      %4005 = vmatprep.subr.bf16.mxu0 0
      %4006 = vmatpush1.bf16.msra.mxu0 0
      %4007 = vmatprep.subr.bf16.mxu0 0
      %4008 = vmatpush1.bf16.msra.mxu0 0
      %4009 = vmatprep.subr.bf16.mxu0 0
      %4010 = vmatpush1.bf16.msra.mxu0 0
      %4011 = vmatprep.subr.bf16.mxu0 0
      %4012 = vmatpush1.bf16.msra.mxu0 0
      %4013 = vmatprep.subr.bf16.mxu0 0
      %4014 = vmatpush1.bf16.msra.mxu0 %v3406
      %4015 = vmatprep.subr.bf16.mxu0 0
      %4016 = vmatpush2.bf16.msra.mxu0 0
      %4017 = vmatprep.subr.bf16.mxu0 0
      %4018 = vmatpush2.bf16.msra.mxu0 0
      %4019 = vmatprep.subr.bf16.mxu0 0
      %4020 = vmatpush2.bf16.msra.mxu0 0
      %4021 = vmatprep.subr.bf16.mxu0 0
      %4022 = vmatpush2.bf16.msra.mxu0 0
      %4023 = vmatprep.subr.bf16.mxu0 0
      %4024 = vmatpush2.bf16.msra.mxu0 0
      %4025 = vmatprep.subr.bf16.mxu0 0
      %4026 = vmatpush2.bf16.msra.mxu0 0
      %4027 = vmatprep.subr.bf16.mxu0 0
      %4028 = vmatpush2.bf16.msra.mxu0 0
      %4029 = vmatprep.subr.bf16.mxu0 0
      %4030 = vmatpush2.bf16.msra.mxu0 0
      %4031 = vmatprep.mubr.bf16.mxu0 0
      %4032 = vmatmul.mubr.bf16.gmra.mxu0 %v3997
      %v4033 = vpop.f32.mrf.mxu0
      %v4034 = vadd.f32 0.0, %v4033
      %v4035 = vpop.f32.mrf.mxu0
      %v4036 = vpop.f32.mrf.mxu0
      %v4037 = vadd.f32 0.0, %v4036
      %v4038 = vpop.f32.mrf.mxu0
      %4039 = vdwg.mxu0
      %v4041 = vsel %vm3811, %v3989, 0
      %4043 = vmatprep.subr.bf16.mxu0 0
      %4044 = vmatpush1.bf16.msra.mxu0 0
      %4045 = vmatprep.subr.bf16.mxu0 0
      %4046 = vmatpush1.bf16.msra.mxu0 0
      %4047 = vmatprep.subr.bf16.mxu0 0
      %4048 = vmatpush1.bf16.msra.mxu0 0
      %4049 = vmatprep.subr.bf16.mxu0 0
      %4050 = vmatpush1.bf16.msra.mxu0 0
      %4051 = vmatprep.subr.bf16.mxu0 0
      %4052 = vmatpush1.bf16.msra.mxu0 0
      %4053 = vmatprep.subr.bf16.mxu0 0
      %4054 = vmatpush1.bf16.msra.mxu0 0
      %4055 = vmatprep.subr.bf16.mxu0 0
      %4056 = vmatpush1.bf16.msra.mxu0 0
      %4057 = vmatprep.subr.bf16.mxu0 0
      %4058 = vmatpush1.bf16.msra.mxu0 %v3407
      %4059 = vmatprep.subr.bf16.mxu0 0
      %4060 = vmatpush2.bf16.msra.mxu0 0
      %4061 = vmatprep.subr.bf16.mxu0 0
      %4062 = vmatpush2.bf16.msra.mxu0 0
      %4063 = vmatprep.subr.bf16.mxu0 0
      %4064 = vmatpush2.bf16.msra.mxu0 0
      %4065 = vmatprep.subr.bf16.mxu0 0
      %4066 = vmatpush2.bf16.msra.mxu0 0
      %4067 = vmatprep.subr.bf16.mxu0 0
      %4068 = vmatpush2.bf16.msra.mxu0 0
      %4069 = vmatprep.subr.bf16.mxu0 0
      %4070 = vmatpush2.bf16.msra.mxu0 0
      %4071 = vmatprep.subr.bf16.mxu0 0
      %4072 = vmatpush2.bf16.msra.mxu0 0
      %4073 = vmatprep.subr.bf16.mxu0 0
      %4074 = vmatpush2.bf16.msra.mxu0 0
      %4075 = vmatprep.mubr.bf16.mxu0 0
      %4076 = vmatmul.mubr.bf16.gmra.mxu0 %v4041
      %v4077 = vpop.f32.mrf.mxu0
      %v4078 = vadd.f32 0.0, %v4077
      %v4079 = vpop.f32.mrf.mxu0
      %v4080 = vpop.f32.mrf.mxu0
      %v4081 = vadd.f32 0.0, %v4080
      %v4082 = vpop.f32.mrf.mxu0
      %4083 = vdwg.mxu0
      %v4085 = vsel %vm3811, %v3990, 0
      %4087 = vmatprep.subr.bf16.mxu0 0
      %4088 = vmatpush1.bf16.msra.mxu0 0
      %4089 = vmatprep.subr.bf16.mxu0 0
      %4090 = vmatpush1.bf16.msra.mxu0 0
      %4091 = vmatprep.subr.bf16.mxu0 0
      %4092 = vmatpush1.bf16.msra.mxu0 0
      %4093 = vmatprep.subr.bf16.mxu0 0
      %4094 = vmatpush1.bf16.msra.mxu0 0
      %4095 = vmatprep.subr.bf16.mxu0 0
      %4096 = vmatpush1.bf16.msra.mxu0 0
      %4097 = vmatprep.subr.bf16.mxu0 0
      %4098 = vmatpush1.bf16.msra.mxu0 0
      %4099 = vmatprep.subr.bf16.mxu0 0
      %4100 = vmatpush1.bf16.msra.mxu0 0
      %4101 = vmatprep.subr.bf16.mxu0 0
      %4102 = vmatpush1.bf16.msra.mxu0 %v3408
      %4103 = vmatprep.subr.bf16.mxu0 0
      %4104 = vmatpush2.bf16.msra.mxu0 0
      %4105 = vmatprep.subr.bf16.mxu0 0
      %4106 = vmatpush2.bf16.msra.mxu0 0
      %4107 = vmatprep.subr.bf16.mxu0 0
      %4108 = vmatpush2.bf16.msra.mxu0 0
      %4109 = vmatprep.subr.bf16.mxu0 0
      %4110 = vmatpush2.bf16.msra.mxu0 0
      %4111 = vmatprep.subr.bf16.mxu0 0
      %4112 = vmatpush2.bf16.msra.mxu0 0
      %4113 = vmatprep.subr.bf16.mxu0 0
      %4114 = vmatpush2.bf16.msra.mxu0 0
      %4115 = vmatprep.subr.bf16.mxu0 0
      %4116 = vmatpush2.bf16.msra.mxu0 0
      %4117 = vmatprep.subr.bf16.mxu0 0
      %4118 = vmatpush2.bf16.msra.mxu0 0
      %4119 = vmatprep.mubr.bf16.mxu0 0
      %4120 = vmatmul.mubr.bf16.gmra.mxu0 %v4085
      %v4121 = vpop.f32.mrf.mxu0
      %v4122 = vadd.f32 0.0, %v4121
      %v4123 = vpop.f32.mrf.mxu0
      %v4124 = vpop.f32.mrf.mxu0
      %v4125 = vadd.f32 0.0, %v4124
      %v4126 = vpop.f32.mrf.mxu0
      %4127 = vdwg.mxu0
      %v4129 = vsel %vm3811, %v3991, 0
      %4131 = vmatprep.subr.bf16.mxu0 0
      %4132 = vmatpush1.bf16.msra.mxu0 0
      %4133 = vmatprep.subr.bf16.mxu0 0
      %4134 = vmatpush1.bf16.msra.mxu0 0
      %4135 = vmatprep.subr.bf16.mxu0 0
      %4136 = vmatpush1.bf16.msra.mxu0 0
      %4137 = vmatprep.subr.bf16.mxu0 0
      %4138 = vmatpush1.bf16.msra.mxu0 0
      %4139 = vmatprep.subr.bf16.mxu0 0
      %4140 = vmatpush1.bf16.msra.mxu0 0
      %4141 = vmatprep.subr.bf16.mxu0 0
      %4142 = vmatpush1.bf16.msra.mxu0 0
      %4143 = vmatprep.subr.bf16.mxu0 0
      %4144 = vmatpush1.bf16.msra.mxu0 0
      %4145 = vmatprep.subr.bf16.mxu0 0
      %4146 = vmatpush1.bf16.msra.mxu0 %v3409
      %4147 = vmatprep.subr.bf16.mxu0 0
      %4148 = vmatpush2.bf16.msra.mxu0 0
      %4149 = vmatprep.subr.bf16.mxu0 0
      %4150 = vmatpush2.bf16.msra.mxu0 0
      %4151 = vmatprep.subr.bf16.mxu0 0
      %4152 = vmatpush2.bf16.msra.mxu0 0
      %4153 = vmatprep.subr.bf16.mxu0 0
      %4154 = vmatpush2.bf16.msra.mxu0 0
      %4155 = vmatprep.subr.bf16.mxu0 0
      %4156 = vmatpush2.bf16.msra.mxu0 0
      %4157 = vmatprep.subr.bf16.mxu0 0
      %4158 = vmatpush2.bf16.msra.mxu0 0
      %4159 = vmatprep.subr.bf16.mxu0 0
      %4160 = vmatpush2.bf16.msra.mxu0 0
      %4161 = vmatprep.subr.bf16.mxu0 0
      %4162 = vmatpush2.bf16.msra.mxu0 0
      %4163 = vmatprep.mubr.bf16.mxu0 0
      %4164 = vmatmul.mubr.bf16.gmra.mxu0 %v4129
      %v4165 = vpop.f32.mrf.mxu0
      %v4166 = vadd.f32 0.0, %v4165
      %v4167 = vpop.f32.mrf.mxu0
      %v4168 = vpop.f32.mrf.mxu0
      %v4169 = vadd.f32 0.0, %v4168
      %v4170 = vpop.f32.mrf.mxu0
      %4171 = vdwg.mxu0
      %v4173 = vsel %vm3811, %v3992, 0
      %4175 = vmatprep.subr.bf16.mxu0 0
      %4176 = vmatpush1.bf16.msra.mxu0 0
      %4177 = vmatprep.subr.bf16.mxu0 0
      %4178 = vmatpush1.bf16.msra.mxu0 0
      %4179 = vmatprep.subr.bf16.mxu0 0
      %4180 = vmatpush1.bf16.msra.mxu0 0
      %4181 = vmatprep.subr.bf16.mxu0 0
      %4182 = vmatpush1.bf16.msra.mxu0 0
      %4183 = vmatprep.subr.bf16.mxu0 0
      %4184 = vmatpush1.bf16.msra.mxu0 0
      %4185 = vmatprep.subr.bf16.mxu0 0
      %4186 = vmatpush1.bf16.msra.mxu0 0
      %4187 = vmatprep.subr.bf16.mxu0 0
      %4188 = vmatpush1.bf16.msra.mxu0 0
      %4189 = vmatprep.subr.bf16.mxu0 0
      %4190 = vmatpush1.bf16.msra.mxu0 %v3410
      %4191 = vmatprep.subr.bf16.mxu0 0
      %4192 = vmatpush2.bf16.msra.mxu0 0
      %4193 = vmatprep.subr.bf16.mxu0 0
      %4194 = vmatpush2.bf16.msra.mxu0 0
      %4195 = vmatprep.subr.bf16.mxu0 0
      %4196 = vmatpush2.bf16.msra.mxu0 0
      %4197 = vmatprep.subr.bf16.mxu0 0
      %4198 = vmatpush2.bf16.msra.mxu0 0
      %4199 = vmatprep.subr.bf16.mxu0 0
      %4200 = vmatpush2.bf16.msra.mxu0 0
      %4201 = vmatprep.subr.bf16.mxu0 0
      %4202 = vmatpush2.bf16.msra.mxu0 0
      %4203 = vmatprep.subr.bf16.mxu0 0
      %4204 = vmatpush2.bf16.msra.mxu0 0
      %4205 = vmatprep.subr.bf16.mxu0 0
      %4206 = vmatpush2.bf16.msra.mxu0 0
      %4207 = vmatprep.mubr.bf16.mxu0 0
      %4208 = vmatmul.mubr.bf16.gmra.mxu0 %v4173
      %v4209 = vpop.f32.mrf.mxu0
      %v4210 = vadd.f32 0.0, %v4209
      %v4211 = vpop.f32.mrf.mxu0
      %v4212 = vpop.f32.mrf.mxu0
      %v4213 = vadd.f32 0.0, %v4212
      %v4214 = vpop.f32.mrf.mxu0
      %4215 = vdwg.mxu0
      %v4217 = vsel %vm3811, %v3993, 0
      %4219 = vmatprep.subr.bf16.mxu0 0
      %4220 = vmatpush1.bf16.msra.mxu0 0
      %4221 = vmatprep.subr.bf16.mxu0 0
      %4222 = vmatpush1.bf16.msra.mxu0 0
      %4223 = vmatprep.subr.bf16.mxu0 0
      %4224 = vmatpush1.bf16.msra.mxu0 0
      %4225 = vmatprep.subr.bf16.mxu0 0
      %4226 = vmatpush1.bf16.msra.mxu0 0
      %4227 = vmatprep.subr.bf16.mxu0 0
      %4228 = vmatpush1.bf16.msra.mxu0 0
      %4229 = vmatprep.subr.bf16.mxu0 0
      %4230 = vmatpush1.bf16.msra.mxu0 0
      %4231 = vmatprep.subr.bf16.mxu0 0
      %4232 = vmatpush1.bf16.msra.mxu0 0
      %4233 = vmatprep.subr.bf16.mxu0 0
      %4234 = vmatpush1.bf16.msra.mxu0 %v3411
      %4235 = vmatprep.subr.bf16.mxu0 0
      %4236 = vmatpush2.bf16.msra.mxu0 0
      %4237 = vmatprep.subr.bf16.mxu0 0
      %4238 = vmatpush2.bf16.msra.mxu0 0
      %4239 = vmatprep.subr.bf16.mxu0 0
      %4240 = vmatpush2.bf16.msra.mxu0 0
      %4241 = vmatprep.subr.bf16.mxu0 0
      %4242 = vmatpush2.bf16.msra.mxu0 0
      %4243 = vmatprep.subr.bf16.mxu0 0
      %4244 = vmatpush2.bf16.msra.mxu0 0
      %4245 = vmatprep.subr.bf16.mxu0 0
      %4246 = vmatpush2.bf16.msra.mxu0 0
      %4247 = vmatprep.subr.bf16.mxu0 0
      %4248 = vmatpush2.bf16.msra.mxu0 0
      %4249 = vmatprep.subr.bf16.mxu0 0
      %4250 = vmatpush2.bf16.msra.mxu0 0
      %4251 = vmatprep.mubr.bf16.mxu0 0
      %4252 = vmatmul.mubr.bf16.gmra.mxu0 %v4217
      %v4253 = vpop.f32.mrf.mxu0
      %v4254 = vadd.f32 0.0, %v4253
      %v4255 = vpop.f32.mrf.mxu0
      %v4256 = vpop.f32.mrf.mxu0
      %v4257 = vadd.f32 0.0, %v4256
      %v4258 = vpop.f32.mrf.mxu0
      %4259 = vdwg.mxu0
      %v4261 = vsel %vm3811, %v3994, 0
      %4263 = vmatprep.subr.bf16.mxu0 0
      %4264 = vmatpush1.bf16.msra.mxu0 0
      %4265 = vmatprep.subr.bf16.mxu0 0
      %4266 = vmatpush1.bf16.msra.mxu0 0
      %4267 = vmatprep.subr.bf16.mxu0 0
      %4268 = vmatpush1.bf16.msra.mxu0 0
      %4269 = vmatprep.subr.bf16.mxu0 0
      %4270 = vmatpush1.bf16.msra.mxu0 0
      %4271 = vmatprep.subr.bf16.mxu0 0
      %4272 = vmatpush1.bf16.msra.mxu0 0
      %4273 = vmatprep.subr.bf16.mxu0 0
      %4274 = vmatpush1.bf16.msra.mxu0 0
      %4275 = vmatprep.subr.bf16.mxu0 0
      %4276 = vmatpush1.bf16.msra.mxu0 0
      %4277 = vmatprep.subr.bf16.mxu0 0
      %4278 = vmatpush1.bf16.msra.mxu0 %v3412
      %4279 = vmatprep.subr.bf16.mxu0 0
      %4280 = vmatpush2.bf16.msra.mxu0 0
      %4281 = vmatprep.subr.bf16.mxu0 0
      %4282 = vmatpush2.bf16.msra.mxu0 0
      %4283 = vmatprep.subr.bf16.mxu0 0
      %4284 = vmatpush2.bf16.msra.mxu0 0
      %4285 = vmatprep.subr.bf16.mxu0 0
      %4286 = vmatpush2.bf16.msra.mxu0 0
      %4287 = vmatprep.subr.bf16.mxu0 0
      %4288 = vmatpush2.bf16.msra.mxu0 0
      %4289 = vmatprep.subr.bf16.mxu0 0
      %4290 = vmatpush2.bf16.msra.mxu0 0
      %4291 = vmatprep.subr.bf16.mxu0 0
      %4292 = vmatpush2.bf16.msra.mxu0 0
      %4293 = vmatprep.subr.bf16.mxu0 0
      %4294 = vmatpush2.bf16.msra.mxu0 0
      %4295 = vmatprep.mubr.bf16.mxu0 0
      %4296 = vmatmul.mubr.bf16.gmra.mxu0 %v4261
      %v4297 = vpop.f32.mrf.mxu0
      %v4298 = vadd.f32 0.0, %v4297
      %v4299 = vpop.f32.mrf.mxu0
      %v4300 = vpop.f32.mrf.mxu0
      %v4301 = vadd.f32 0.0, %v4300
      %v4302 = vpop.f32.mrf.mxu0
      %4303 = vdwg.mxu0
      %v4305 = vsel %vm3811, %v3995, 0
      %4307 = vmatprep.subr.bf16.mxu0 0
      %4308 = vmatpush1.bf16.msra.mxu0 0
      %4309 = vmatprep.subr.bf16.mxu0 0
      %4310 = vmatpush1.bf16.msra.mxu0 0
      %4311 = vmatprep.subr.bf16.mxu0 0
      %4312 = vmatpush1.bf16.msra.mxu0 0
      %4313 = vmatprep.subr.bf16.mxu0 0
      %4314 = vmatpush1.bf16.msra.mxu0 0
      %4315 = vmatprep.subr.bf16.mxu0 0
      %4316 = vmatpush1.bf16.msra.mxu0 0
      %4317 = vmatprep.subr.bf16.mxu0 0
      %4318 = vmatpush1.bf16.msra.mxu0 0
      %4319 = vmatprep.subr.bf16.mxu0 0
      %4320 = vmatpush1.bf16.msra.mxu0 0
      %4321 = vmatprep.subr.bf16.mxu0 0
      %4322 = vmatpush1.bf16.msra.mxu0 %v3413
      %4323 = vmatprep.subr.bf16.mxu0 0
      %4324 = vmatpush2.bf16.msra.mxu0 0
      %4325 = vmatprep.subr.bf16.mxu0 0
      %4326 = vmatpush2.bf16.msra.mxu0 0
      %4327 = vmatprep.subr.bf16.mxu0 0
      %4328 = vmatpush2.bf16.msra.mxu0 0
      %4329 = vmatprep.subr.bf16.mxu0 0
      %4330 = vmatpush2.bf16.msra.mxu0 0
      %4331 = vmatprep.subr.bf16.mxu0 0
      %4332 = vmatpush2.bf16.msra.mxu0 0
      %4333 = vmatprep.subr.bf16.mxu0 0
      %4334 = vmatpush2.bf16.msra.mxu0 0
      %4335 = vmatprep.subr.bf16.mxu0 0
      %4336 = vmatpush2.bf16.msra.mxu0 0
      %4337 = vmatprep.subr.bf16.mxu0 0
      %4338 = vmatpush2.bf16.msra.mxu0 0
      %4339 = vmatprep.mubr.bf16.mxu0 0
      %4340 = vmatmul.mubr.bf16.gmra.mxu0 %v4305
      %v4341 = vpop.f32.mrf.mxu0
      %v4342 = vadd.f32 0.0, %v4341
      %v4343 = vpop.f32.mrf.mxu0
      %v4344 = vpop.f32.mrf.mxu0
      %v4345 = vadd.f32 0.0, %v4344
      %v4346 = vpop.f32.mrf.mxu0
      %4347 = vdwg.mxu0
      %v4348 = vcombine.high %v4034, 0.0
      %v4350 = vunpack.c.l.s4 1983009808
      %v4351 = vunpack.c.0.s8 %v4350
      %v4352 = vlaneseq
      %v4353 = vshrl.u32 %v4352, 7
      %v4354 = vsub.s32 %v4351, %v4353
      %v4355 = vrot.slane %v4034, %v4354
      %v4357 = vunpack.c.l.s4 1983009808
      %v4358 = vunpack.c.0.s8 %v4357
      %v4359 = vlaneseq
      %v4360 = vshrl.u32 %v4359, 7
      %v4361 = vsub.s32 %v4358, %v4360
      %v4362 = vrot.slane %v4348, %v4361
      %v4363 = vcombine.high %v4210, 0.0
      %v4365 = vunpack.c.l.s4 1983009808
      %v4366 = vunpack.c.0.s8 %v4365
      %v4367 = vlaneseq
      %v4368 = vshrl.u32 %v4367, 7
      %v4369 = vsub.s32 %v4366, %v4368
      %v4370 = vrot.slane %v4210, %v4369
      %v4372 = vunpack.c.l.s4 1983009808
      %v4373 = vunpack.c.0.s8 %v4372
      %v4374 = vlaneseq
      %v4375 = vshrl.u32 %v4374, 7
      %v4376 = vsub.s32 %v4373, %v4375
      %v4377 = vrot.slane %v4363, %v4376
      %v4378 = vcombine.low %v4355, %v4370
      %v4379 = vcombine.high %v4355, %v4370
      %v4381 = vunpack.c.l.s4 1934713408
      %v4382 = vunpack.c.0.s8 %v4381
      %v4383 = vlaneseq
      %v4384 = vshrl.u32 %v4383, 7
      %v4385 = vsub.s32 %v4382, %v4384
      %v4386 = vrot.slane %v4378, %v4385
      %v4388 = vunpack.c.l.s4 1934713408
      %v4389 = vunpack.c.0.s8 %v4388
      %v4390 = vlaneseq
      %v4391 = vshrl.u32 %v4390, 7
      %v4392 = vsub.s32 %v4389, %v4391
      %v4393 = vrot.slane %v4379, %v4392
      %v4394 = vcombine.low %v4362, %v4377
      %v4395 = vcombine.high %v4362, %v4377
      %v4397 = vunpack.c.l.s4 1934713408
      %v4398 = vunpack.c.0.s8 %v4397
      %v4399 = vlaneseq
      %v4400 = vshrl.u32 %v4399, 7
      %v4401 = vsub.s32 %v4398, %v4400
      %v4402 = vrot.slane %v4394, %v4401
      %v4404 = vunpack.c.l.s4 1934713408
      %v4405 = vunpack.c.0.s8 %v4404
      %v4406 = vlaneseq
      %v4407 = vshrl.u32 %v4406, 7
      %v4408 = vsub.s32 %v4405, %v4407
      %v4409 = vrot.slane %v4395, %v4408
      %v4410 = vcombine.high %v4386, 0.0
      %v4411 = vcombine.high %v4393, 0.0
      %v4412 = vcombine.high %v4402, 0.0
      %v4413 = vcombine.high %v4409, 0.0
      %v4414 = vcombine.high %v4037, 0.0
      %v4416 = vunpack.c.l.s4 1983009808
      %v4417 = vunpack.c.0.s8 %v4416
      %v4418 = vlaneseq
      %v4419 = vshrl.u32 %v4418, 7
      %v4420 = vsub.s32 %v4417, %v4419
      %v4421 = vrot.slane %v4037, %v4420
      %v4423 = vunpack.c.l.s4 1983009808
      %v4424 = vunpack.c.0.s8 %v4423
      %v4425 = vlaneseq
      %v4426 = vshrl.u32 %v4425, 7
      %v4427 = vsub.s32 %v4424, %v4426
      %v4428 = vrot.slane %v4414, %v4427
      %v4429 = vcombine.high %v4213, 0.0
      %v4431 = vunpack.c.l.s4 1983009808
      %v4432 = vunpack.c.0.s8 %v4431
      %v4433 = vlaneseq
      %v4434 = vshrl.u32 %v4433, 7
      %v4435 = vsub.s32 %v4432, %v4434
      %v4436 = vrot.slane %v4213, %v4435
      %v4438 = vunpack.c.l.s4 1983009808
      %v4439 = vunpack.c.0.s8 %v4438
      %v4440 = vlaneseq
      %v4441 = vshrl.u32 %v4440, 7
      %v4442 = vsub.s32 %v4439, %v4441
      %v4443 = vrot.slane %v4429, %v4442
      %v4444 = vcombine.low %v4421, %v4436
      %v4445 = vcombine.high %v4421, %v4436
      %v4447 = vunpack.c.l.s4 1934713408
      %v4448 = vunpack.c.0.s8 %v4447
      %v4449 = vlaneseq
      %v4450 = vshrl.u32 %v4449, 7
      %v4451 = vsub.s32 %v4448, %v4450
      %v4452 = vrot.slane %v4444, %v4451
      %v4454 = vunpack.c.l.s4 1934713408
      %v4455 = vunpack.c.0.s8 %v4454
      %v4456 = vlaneseq
      %v4457 = vshrl.u32 %v4456, 7
      %v4458 = vsub.s32 %v4455, %v4457
      %v4459 = vrot.slane %v4445, %v4458
      %v4460 = vcombine.low %v4428, %v4443
      %v4461 = vcombine.high %v4428, %v4443
      %v4463 = vunpack.c.l.s4 1934713408
      %v4464 = vunpack.c.0.s8 %v4463
      %v4465 = vlaneseq
      %v4466 = vshrl.u32 %v4465, 7
      %v4467 = vsub.s32 %v4464, %v4466
      %v4468 = vrot.slane %v4460, %v4467
      %v4470 = vunpack.c.l.s4 1934713408
      %v4471 = vunpack.c.0.s8 %v4470
      %v4472 = vlaneseq
      %v4473 = vshrl.u32 %v4472, 7
      %v4474 = vsub.s32 %v4471, %v4473
      %v4475 = vrot.slane %v4461, %v4474
      %v4476 = vcombine.high %v4452, 0.0
      %v4477 = vcombine.high %v4459, 0.0
      %v4478 = vcombine.high %v4468, 0.0
      %v4479 = vcombine.high %v4475, 0.0
      %v4480 = vcombine.high %v4078, 0.0
      %v4482 = vunpack.c.l.s4 1983009808
      %v4483 = vunpack.c.0.s8 %v4482
      %v4484 = vlaneseq
      %v4485 = vshrl.u32 %v4484, 7
      %v4486 = vsub.s32 %v4483, %v4485
      %v4487 = vrot.slane %v4078, %v4486
      %v4489 = vunpack.c.l.s4 1983009808
      %v4490 = vunpack.c.0.s8 %v4489
      %v4491 = vlaneseq
      %v4492 = vshrl.u32 %v4491, 7
      %v4493 = vsub.s32 %v4490, %v4492
      %v4494 = vrot.slane %v4480, %v4493
      %v4495 = vcombine.high %v4254, 0.0
      %v4497 = vunpack.c.l.s4 1983009808
      %v4498 = vunpack.c.0.s8 %v4497
      %v4499 = vlaneseq
      %v4500 = vshrl.u32 %v4499, 7
      %v4501 = vsub.s32 %v4498, %v4500
      %v4502 = vrot.slane %v4254, %v4501
      %v4504 = vunpack.c.l.s4 1983009808
      %v4505 = vunpack.c.0.s8 %v4504
      %v4506 = vlaneseq
      %v4507 = vshrl.u32 %v4506, 7
      %v4508 = vsub.s32 %v4505, %v4507
      %v4509 = vrot.slane %v4495, %v4508
      %v4510 = vcombine.low %v4487, %v4502
      %v4511 = vcombine.high %v4487, %v4502
      %v4513 = vunpack.c.l.s4 1934713408
      %v4514 = vunpack.c.0.s8 %v4513
      %v4515 = vlaneseq
      %v4516 = vshrl.u32 %v4515, 7
      %v4517 = vsub.s32 %v4514, %v4516
      %v4518 = vrot.slane %v4510, %v4517
      %v4520 = vunpack.c.l.s4 1934713408
      %v4521 = vunpack.c.0.s8 %v4520
      %v4522 = vlaneseq
      %v4523 = vshrl.u32 %v4522, 7
      %v4524 = vsub.s32 %v4521, %v4523
      %v4525 = vrot.slane %v4511, %v4524
      %v4526 = vcombine.low %v4494, %v4509
      %v4527 = vcombine.high %v4494, %v4509
      %v4529 = vunpack.c.l.s4 1934713408
      %v4530 = vunpack.c.0.s8 %v4529
      %v4531 = vlaneseq
      %v4532 = vshrl.u32 %v4531, 7
      %v4533 = vsub.s32 %v4530, %v4532
      %v4534 = vrot.slane %v4526, %v4533
      %v4536 = vunpack.c.l.s4 1934713408
      %v4537 = vunpack.c.0.s8 %v4536
      %v4538 = vlaneseq
      %v4539 = vshrl.u32 %v4538, 7
      %v4540 = vsub.s32 %v4537, %v4539
      %v4541 = vrot.slane %v4527, %v4540
      %v4542 = vcombine.high %v4518, 0.0
      %v4543 = vcombine.high %v4525, 0.0
      %v4544 = vcombine.high %v4534, 0.0
      %v4545 = vcombine.high %v4541, 0.0
      %v4546 = vcombine.high %v4081, 0.0
      %v4548 = vunpack.c.l.s4 1983009808
      %v4549 = vunpack.c.0.s8 %v4548
      %v4550 = vlaneseq
      %v4551 = vshrl.u32 %v4550, 7
      %v4552 = vsub.s32 %v4549, %v4551
      %v4553 = vrot.slane %v4081, %v4552
      %v4555 = vunpack.c.l.s4 1983009808
      %v4556 = vunpack.c.0.s8 %v4555
      %v4557 = vlaneseq
      %v4558 = vshrl.u32 %v4557, 7
      %v4559 = vsub.s32 %v4556, %v4558
      %v4560 = vrot.slane %v4546, %v4559
      %v4561 = vcombine.high %v4257, 0.0
      %v4563 = vunpack.c.l.s4 1983009808
      %v4564 = vunpack.c.0.s8 %v4563
      %v4565 = vlaneseq
      %v4566 = vshrl.u32 %v4565, 7
      %v4567 = vsub.s32 %v4564, %v4566
      %v4568 = vrot.slane %v4257, %v4567
      %v4570 = vunpack.c.l.s4 1983009808
      %v4571 = vunpack.c.0.s8 %v4570
      %v4572 = vlaneseq
      %v4573 = vshrl.u32 %v4572, 7
      %v4574 = vsub.s32 %v4571, %v4573
      %v4575 = vrot.slane %v4561, %v4574
      %v4576 = vcombine.low %v4553, %v4568
      %v4577 = vcombine.high %v4553, %v4568
      %v4579 = vunpack.c.l.s4 1934713408
      %v4580 = vunpack.c.0.s8 %v4579
      %v4581 = vlaneseq
      %v4582 = vshrl.u32 %v4581, 7
      %v4583 = vsub.s32 %v4580, %v4582
      %v4584 = vrot.slane %v4576, %v4583
      %v4586 = vunpack.c.l.s4 1934713408
      %v4587 = vunpack.c.0.s8 %v4586
      %v4588 = vlaneseq
      %v4589 = vshrl.u32 %v4588, 7
      %v4590 = vsub.s32 %v4587, %v4589
      %v4591 = vrot.slane %v4577, %v4590
      %v4592 = vcombine.low %v4560, %v4575
      %v4593 = vcombine.high %v4560, %v4575
      %v4595 = vunpack.c.l.s4 1934713408
      %v4596 = vunpack.c.0.s8 %v4595
      %v4597 = vlaneseq
      %v4598 = vshrl.u32 %v4597, 7
      %v4599 = vsub.s32 %v4596, %v4598
      %v4600 = vrot.slane %v4592, %v4599
      %v4602 = vunpack.c.l.s4 1934713408
      %v4603 = vunpack.c.0.s8 %v4602
      %v4604 = vlaneseq
      %v4605 = vshrl.u32 %v4604, 7
      %v4606 = vsub.s32 %v4603, %v4605
      %v4607 = vrot.slane %v4593, %v4606
      %v4608 = vcombine.high %v4584, 0.0
      %v4609 = vcombine.high %v4591, 0.0
      %v4610 = vcombine.high %v4600, 0.0
      %v4611 = vcombine.high %v4607, 0.0
      %v4612 = vcombine.high %v4122, 0.0
      %v4614 = vunpack.c.l.s4 1983009808
      %v4615 = vunpack.c.0.s8 %v4614
      %v4616 = vlaneseq
      %v4617 = vshrl.u32 %v4616, 7
      %v4618 = vsub.s32 %v4615, %v4617
      %v4619 = vrot.slane %v4122, %v4618
      %v4621 = vunpack.c.l.s4 1983009808
      %v4622 = vunpack.c.0.s8 %v4621
      %v4623 = vlaneseq
      %v4624 = vshrl.u32 %v4623, 7
      %v4625 = vsub.s32 %v4622, %v4624
      %v4626 = vrot.slane %v4612, %v4625
      %v4627 = vcombine.high %v4298, 0.0
      %v4629 = vunpack.c.l.s4 1983009808
      %v4630 = vunpack.c.0.s8 %v4629
      %v4631 = vlaneseq
      %v4632 = vshrl.u32 %v4631, 7
      %v4633 = vsub.s32 %v4630, %v4632
      %v4634 = vrot.slane %v4298, %v4633
      %v4636 = vunpack.c.l.s4 1983009808
      %v4637 = vunpack.c.0.s8 %v4636
      %v4638 = vlaneseq
      %v4639 = vshrl.u32 %v4638, 7
      %v4640 = vsub.s32 %v4637, %v4639
      %v4641 = vrot.slane %v4627, %v4640
      %v4642 = vcombine.low %v4619, %v4634
      %v4643 = vcombine.high %v4619, %v4634
      %v4645 = vunpack.c.l.s4 1934713408
      %v4646 = vunpack.c.0.s8 %v4645
      %v4647 = vlaneseq
      %v4648 = vshrl.u32 %v4647, 7
      %v4649 = vsub.s32 %v4646, %v4648
      %v4650 = vrot.slane %v4642, %v4649
      %v4652 = vunpack.c.l.s4 1934713408
      %v4653 = vunpack.c.0.s8 %v4652
      %v4654 = vlaneseq
      %v4655 = vshrl.u32 %v4654, 7
      %v4656 = vsub.s32 %v4653, %v4655
      %v4657 = vrot.slane %v4643, %v4656
      %v4658 = vcombine.low %v4626, %v4641
      %v4659 = vcombine.high %v4626, %v4641
      %v4661 = vunpack.c.l.s4 1934713408
      %v4662 = vunpack.c.0.s8 %v4661
      %v4663 = vlaneseq
      %v4664 = vshrl.u32 %v4663, 7
      %v4665 = vsub.s32 %v4662, %v4664
      %v4666 = vrot.slane %v4658, %v4665
      %v4668 = vunpack.c.l.s4 1934713408
      %v4669 = vunpack.c.0.s8 %v4668
      %v4670 = vlaneseq
      %v4671 = vshrl.u32 %v4670, 7
      %v4672 = vsub.s32 %v4669, %v4671
      %v4673 = vrot.slane %v4659, %v4672
      %v4674 = vcombine.high %v4650, 0.0
      %v4675 = vcombine.high %v4657, 0.0
      %v4676 = vcombine.high %v4666, 0.0
      %v4677 = vcombine.high %v4673, 0.0
      %v4678 = vcombine.high %v4125, 0.0
      %v4680 = vunpack.c.l.s4 1983009808
      %v4681 = vunpack.c.0.s8 %v4680
      %v4682 = vlaneseq
      %v4683 = vshrl.u32 %v4682, 7
      %v4684 = vsub.s32 %v4681, %v4683
      %v4685 = vrot.slane %v4125, %v4684
      %v4687 = vunpack.c.l.s4 1983009808
      %v4688 = vunpack.c.0.s8 %v4687
      %v4689 = vlaneseq
      %v4690 = vshrl.u32 %v4689, 7
      %v4691 = vsub.s32 %v4688, %v4690
      %v4692 = vrot.slane %v4678, %v4691
      %v4693 = vcombine.high %v4301, 0.0
      %v4695 = vunpack.c.l.s4 1983009808
      %v4696 = vunpack.c.0.s8 %v4695
      %v4697 = vlaneseq
      %v4698 = vshrl.u32 %v4697, 7
      %v4699 = vsub.s32 %v4696, %v4698
      %v4700 = vrot.slane %v4301, %v4699
      %v4702 = vunpack.c.l.s4 1983009808
      %v4703 = vunpack.c.0.s8 %v4702
      %v4704 = vlaneseq
      %v4705 = vshrl.u32 %v4704, 7
      %v4706 = vsub.s32 %v4703, %v4705
      %v4707 = vrot.slane %v4693, %v4706
      %v4708 = vcombine.low %v4685, %v4700
      %v4709 = vcombine.high %v4685, %v4700
      %v4711 = vunpack.c.l.s4 1934713408
      %v4712 = vunpack.c.0.s8 %v4711
      %v4713 = vlaneseq
      %v4714 = vshrl.u32 %v4713, 7
      %v4715 = vsub.s32 %v4712, %v4714
      %v4716 = vrot.slane %v4708, %v4715
      %v4718 = vunpack.c.l.s4 1934713408
      %v4719 = vunpack.c.0.s8 %v4718
      %v4720 = vlaneseq
      %v4721 = vshrl.u32 %v4720, 7
      %v4722 = vsub.s32 %v4719, %v4721
      %v4723 = vrot.slane %v4709, %v4722
      %v4724 = vcombine.low %v4692, %v4707
      %v4725 = vcombine.high %v4692, %v4707
      %v4727 = vunpack.c.l.s4 1934713408
      %v4728 = vunpack.c.0.s8 %v4727
      %v4729 = vlaneseq
      %v4730 = vshrl.u32 %v4729, 7
      %v4731 = vsub.s32 %v4728, %v4730
      %v4732 = vrot.slane %v4724, %v4731
      %v4734 = vunpack.c.l.s4 1934713408
      %v4735 = vunpack.c.0.s8 %v4734
      %v4736 = vlaneseq
      %v4737 = vshrl.u32 %v4736, 7
      %v4738 = vsub.s32 %v4735, %v4737
      %v4739 = vrot.slane %v4725, %v4738
      %v4740 = vcombine.high %v4716, 0.0
      %v4741 = vcombine.high %v4723, 0.0
      %v4742 = vcombine.high %v4732, 0.0
      %v4743 = vcombine.high %v4739, 0.0
      %v4744 = vcombine.high %v4166, 0.0
      %v4746 = vunpack.c.l.s4 1983009808
      %v4747 = vunpack.c.0.s8 %v4746
      %v4748 = vlaneseq
      %v4749 = vshrl.u32 %v4748, 7
      %v4750 = vsub.s32 %v4747, %v4749
      %v4751 = vrot.slane %v4166, %v4750
      %v4753 = vunpack.c.l.s4 1983009808
      %v4754 = vunpack.c.0.s8 %v4753
      %v4755 = vlaneseq
      %v4756 = vshrl.u32 %v4755, 7
      %v4757 = vsub.s32 %v4754, %v4756
      %v4758 = vrot.slane %v4744, %v4757
      %v4759 = vcombine.high %v4342, 0.0
      %v4761 = vunpack.c.l.s4 1983009808
      %v4762 = vunpack.c.0.s8 %v4761
      %v4763 = vlaneseq
      %v4764 = vshrl.u32 %v4763, 7
      %v4765 = vsub.s32 %v4762, %v4764
      %v4766 = vrot.slane %v4342, %v4765
      %v4768 = vunpack.c.l.s4 1983009808
      %v4769 = vunpack.c.0.s8 %v4768
      %v4770 = vlaneseq
      %v4771 = vshrl.u32 %v4770, 7
      %v4772 = vsub.s32 %v4769, %v4771
      %v4773 = vrot.slane %v4759, %v4772
      %v4774 = vcombine.low %v4751, %v4766
      %v4775 = vcombine.high %v4751, %v4766
      %v4777 = vunpack.c.l.s4 1934713408
      %v4778 = vunpack.c.0.s8 %v4777
      %v4779 = vlaneseq
      %v4780 = vshrl.u32 %v4779, 7
      %v4781 = vsub.s32 %v4778, %v4780
      %v4782 = vrot.slane %v4774, %v4781
      %v4784 = vunpack.c.l.s4 1934713408
      %v4785 = vunpack.c.0.s8 %v4784
      %v4786 = vlaneseq
      %v4787 = vshrl.u32 %v4786, 7
      %v4788 = vsub.s32 %v4785, %v4787
      %v4789 = vrot.slane %v4775, %v4788
      %v4790 = vcombine.low %v4758, %v4773
      %v4791 = vcombine.high %v4758, %v4773
      %v4793 = vunpack.c.l.s4 1934713408
      %v4794 = vunpack.c.0.s8 %v4793
      %v4795 = vlaneseq
      %v4796 = vshrl.u32 %v4795, 7
      %v4797 = vsub.s32 %v4794, %v4796
      %v4798 = vrot.slane %v4790, %v4797
      %v4800 = vunpack.c.l.s4 1934713408
      %v4801 = vunpack.c.0.s8 %v4800
      %v4802 = vlaneseq
      %v4803 = vshrl.u32 %v4802, 7
      %v4804 = vsub.s32 %v4801, %v4803
      %v4805 = vrot.slane %v4791, %v4804
      %v4806 = vcombine.high %v4782, 0.0
      %v4807 = vcombine.high %v4789, 0.0
      %v4808 = vcombine.high %v4798, 0.0
      %v4809 = vcombine.high %v4805, 0.0
      %v4810 = vcombine.high %v4169, 0.0
      %v4812 = vunpack.c.l.s4 1983009808
      %v4813 = vunpack.c.0.s8 %v4812
      %v4814 = vlaneseq
      %v4815 = vshrl.u32 %v4814, 7
      %v4816 = vsub.s32 %v4813, %v4815
      %v4817 = vrot.slane %v4169, %v4816
      %v4819 = vunpack.c.l.s4 1983009808
      %v4820 = vunpack.c.0.s8 %v4819
      %v4821 = vlaneseq
      %v4822 = vshrl.u32 %v4821, 7
      %v4823 = vsub.s32 %v4820, %v4822
      %v4824 = vrot.slane %v4810, %v4823
      %v4825 = vcombine.high %v4345, 0.0
      %v4827 = vunpack.c.l.s4 1983009808
      %v4828 = vunpack.c.0.s8 %v4827
      %v4829 = vlaneseq
      %v4830 = vshrl.u32 %v4829, 7
      %v4831 = vsub.s32 %v4828, %v4830
      %v4832 = vrot.slane %v4345, %v4831
      %v4834 = vunpack.c.l.s4 1983009808
      %v4835 = vunpack.c.0.s8 %v4834
      %v4836 = vlaneseq
      %v4837 = vshrl.u32 %v4836, 7
      %v4838 = vsub.s32 %v4835, %v4837
      %v4839 = vrot.slane %v4825, %v4838
      %v4840 = vcombine.low %v4817, %v4832
      %v4841 = vcombine.high %v4817, %v4832
      %v4843 = vunpack.c.l.s4 1934713408
      %v4844 = vunpack.c.0.s8 %v4843
      %v4845 = vlaneseq
      %v4846 = vshrl.u32 %v4845, 7
      %v4847 = vsub.s32 %v4844, %v4846
      %v4848 = vrot.slane %v4840, %v4847
      %v4850 = vunpack.c.l.s4 1934713408
      %v4851 = vunpack.c.0.s8 %v4850
      %v4852 = vlaneseq
      %v4853 = vshrl.u32 %v4852, 7
      %v4854 = vsub.s32 %v4851, %v4853
      %v4855 = vrot.slane %v4841, %v4854
      %v4856 = vcombine.low %v4824, %v4839
      %v4857 = vcombine.high %v4824, %v4839
      %v4859 = vunpack.c.l.s4 1934713408
      %v4860 = vunpack.c.0.s8 %v4859
      %v4861 = vlaneseq
      %v4862 = vshrl.u32 %v4861, 7
      %v4863 = vsub.s32 %v4860, %v4862
      %v4864 = vrot.slane %v4856, %v4863
      %v4866 = vunpack.c.l.s4 1934713408
      %v4867 = vunpack.c.0.s8 %v4866
      %v4868 = vlaneseq
      %v4869 = vshrl.u32 %v4868, 7
      %v4870 = vsub.s32 %v4867, %v4869
      %v4871 = vrot.slane %v4857, %v4870
      %v4872 = vcombine.high %v4848, 0.0
      %v4873 = vcombine.high %v4855, 0.0
      %v4874 = vcombine.high %v4864, 0.0
      %v4875 = vcombine.high %v4871, 0.0
      %v4876 = vcombine.low %v4386, %v4393
      %v4878 = vunpack.c.l.s4 1983009808
      %v4879 = vunpack.c.0.s8 %v4878
      %v4880 = vlaneseq
      %v4881 = vshrl.u32 %v4880, 7
      %v4882 = vsub.s32 %v4879, %v4881
      %v4883 = vrot.slane %v4876, %v4882
      %v4884 = vcombine.low %v4410, %v4411
      %v4886 = vunpack.c.l.s4 1983009808
      %v4887 = vunpack.c.0.s8 %v4886
      %v4888 = vlaneseq
      %v4889 = vshrl.u32 %v4888, 7
      %v4890 = vsub.s32 %v4887, %v4889
      %v4891 = vrot.slane %v4884, %v4890
      %v4892 = vcombine.low %v4402, %v4409
      %v4894 = vunpack.c.l.s4 1983009808
      %v4895 = vunpack.c.0.s8 %v4894
      %v4896 = vlaneseq
      %v4897 = vshrl.u32 %v4896, 7
      %v4898 = vsub.s32 %v4895, %v4897
      %v4899 = vrot.slane %v4892, %v4898
      %v4900 = vcombine.low %v4412, %v4413
      %v4902 = vunpack.c.l.s4 1983009808
      %v4903 = vunpack.c.0.s8 %v4902
      %v4904 = vlaneseq
      %v4905 = vshrl.u32 %v4904, 7
      %v4906 = vsub.s32 %v4903, %v4905
      %v4907 = vrot.slane %v4900, %v4906
      %v4908 = vcombine.low %v4883, %v4891
      %v4910 = vunpack.c.l.s4 1934713408
      %v4911 = vunpack.c.0.s8 %v4910
      %v4912 = vlaneseq
      %v4913 = vshrl.u32 %v4912, 7
      %v4914 = vsub.s32 %v4911, %v4913
      %v4915 = vrot.slane %v4908, %v4914
      %v4916 = vcombine.low %v4899, %v4907
      %v4918 = vunpack.c.l.s4 1934713408
      %v4919 = vunpack.c.0.s8 %v4918
      %v4920 = vlaneseq
      %v4921 = vshrl.u32 %v4920, 7
      %v4922 = vsub.s32 %v4919, %v4921
      %v4923 = vrot.slane %v4916, %v4922
      %v4924 = vcombine.low %v4915, %v4923
      %v4925 = vcombine.high %v4915, %v4923
      %v4926 = vcombine.low %v4452, %v4459
      %v4928 = vunpack.c.l.s4 1983009808
      %v4929 = vunpack.c.0.s8 %v4928
      %v4930 = vlaneseq
      %v4931 = vshrl.u32 %v4930, 7
      %v4932 = vsub.s32 %v4929, %v4931
      %v4933 = vrot.slane %v4926, %v4932
      %v4934 = vcombine.low %v4476, %v4477
      %v4936 = vunpack.c.l.s4 1983009808
      %v4937 = vunpack.c.0.s8 %v4936
      %v4938 = vlaneseq
      %v4939 = vshrl.u32 %v4938, 7
      %v4940 = vsub.s32 %v4937, %v4939
      %v4941 = vrot.slane %v4934, %v4940
      %v4942 = vcombine.low %v4468, %v4475
      %v4944 = vunpack.c.l.s4 1983009808
      %v4945 = vunpack.c.0.s8 %v4944
      %v4946 = vlaneseq
      %v4947 = vshrl.u32 %v4946, 7
      %v4948 = vsub.s32 %v4945, %v4947
      %v4949 = vrot.slane %v4942, %v4948
      %v4950 = vcombine.low %v4478, %v4479
      %v4952 = vunpack.c.l.s4 1983009808
      %v4953 = vunpack.c.0.s8 %v4952
      %v4954 = vlaneseq
      %v4955 = vshrl.u32 %v4954, 7
      %v4956 = vsub.s32 %v4953, %v4955
      %v4957 = vrot.slane %v4950, %v4956
      %v4958 = vcombine.low %v4933, %v4941
      %v4960 = vunpack.c.l.s4 1934713408
      %v4961 = vunpack.c.0.s8 %v4960
      %v4962 = vlaneseq
      %v4963 = vshrl.u32 %v4962, 7
      %v4964 = vsub.s32 %v4961, %v4963
      %v4965 = vrot.slane %v4958, %v4964
      %v4966 = vcombine.low %v4949, %v4957
      %v4968 = vunpack.c.l.s4 1934713408
      %v4969 = vunpack.c.0.s8 %v4968
      %v4970 = vlaneseq
      %v4971 = vshrl.u32 %v4970, 7
      %v4972 = vsub.s32 %v4969, %v4971
      %v4973 = vrot.slane %v4966, %v4972
      %v4974 = vcombine.low %v4965, %v4973
      %v4975 = vcombine.high %v4965, %v4973
      %v4976 = vcombine.low %v4518, %v4525
      %v4978 = vunpack.c.l.s4 1983009808
      %v4979 = vunpack.c.0.s8 %v4978
      %v4980 = vlaneseq
      %v4981 = vshrl.u32 %v4980, 7
      %v4982 = vsub.s32 %v4979, %v4981
      %v4983 = vrot.slane %v4976, %v4982
      %v4984 = vcombine.low %v4542, %v4543
      %v4986 = vunpack.c.l.s4 1983009808
      %v4987 = vunpack.c.0.s8 %v4986
      %v4988 = vlaneseq
      %v4989 = vshrl.u32 %v4988, 7
      %v4990 = vsub.s32 %v4987, %v4989
      %v4991 = vrot.slane %v4984, %v4990
      %v4992 = vcombine.low %v4534, %v4541
      %v4994 = vunpack.c.l.s4 1983009808
      %v4995 = vunpack.c.0.s8 %v4994
      %v4996 = vlaneseq
      %v4997 = vshrl.u32 %v4996, 7
      %v4998 = vsub.s32 %v4995, %v4997
      %v4999 = vrot.slane %v4992, %v4998
      %v5000 = vcombine.low %v4544, %v4545
      %v5002 = vunpack.c.l.s4 1983009808
      %v5003 = vunpack.c.0.s8 %v5002
      %v5004 = vlaneseq
      %v5005 = vshrl.u32 %v5004, 7
      %v5006 = vsub.s32 %v5003, %v5005
      %v5007 = vrot.slane %v5000, %v5006
      %v5008 = vcombine.low %v4983, %v4991
      %v5010 = vunpack.c.l.s4 1934713408
      %v5011 = vunpack.c.0.s8 %v5010
      %v5012 = vlaneseq
      %v5013 = vshrl.u32 %v5012, 7
      %v5014 = vsub.s32 %v5011, %v5013
      %v5015 = vrot.slane %v5008, %v5014
      %v5016 = vcombine.low %v4999, %v5007
      %v5018 = vunpack.c.l.s4 1934713408
      %v5019 = vunpack.c.0.s8 %v5018
      %v5020 = vlaneseq
      %v5021 = vshrl.u32 %v5020, 7
      %v5022 = vsub.s32 %v5019, %v5021
      %v5023 = vrot.slane %v5016, %v5022
      %v5024 = vcombine.low %v5015, %v5023
      %v5025 = vcombine.high %v5015, %v5023
      %v5026 = vcombine.low %v4584, %v4591
      %v5028 = vunpack.c.l.s4 1983009808
      %v5029 = vunpack.c.0.s8 %v5028
      %v5030 = vlaneseq
      %v5031 = vshrl.u32 %v5030, 7
      %v5032 = vsub.s32 %v5029, %v5031
      %v5033 = vrot.slane %v5026, %v5032
      %v5034 = vcombine.low %v4608, %v4609
      %v5036 = vunpack.c.l.s4 1983009808
      %v5037 = vunpack.c.0.s8 %v5036
      %v5038 = vlaneseq
      %v5039 = vshrl.u32 %v5038, 7
      %v5040 = vsub.s32 %v5037, %v5039
      %v5041 = vrot.slane %v5034, %v5040
      %v5042 = vcombine.low %v4600, %v4607
      %v5044 = vunpack.c.l.s4 1983009808
      %v5045 = vunpack.c.0.s8 %v5044
      %v5046 = vlaneseq
      %v5047 = vshrl.u32 %v5046, 7
      %v5048 = vsub.s32 %v5045, %v5047
      %v5049 = vrot.slane %v5042, %v5048
      %v5050 = vcombine.low %v4610, %v4611
      %v5052 = vunpack.c.l.s4 1983009808
      %v5053 = vunpack.c.0.s8 %v5052
      %v5054 = vlaneseq
      %v5055 = vshrl.u32 %v5054, 7
      %v5056 = vsub.s32 %v5053, %v5055
      %v5057 = vrot.slane %v5050, %v5056
      %v5058 = vcombine.low %v5033, %v5041
      %v5060 = vunpack.c.l.s4 1934713408
      %v5061 = vunpack.c.0.s8 %v5060
      %v5062 = vlaneseq
      %v5063 = vshrl.u32 %v5062, 7
      %v5064 = vsub.s32 %v5061, %v5063
      %v5065 = vrot.slane %v5058, %v5064
      %v5066 = vcombine.low %v5049, %v5057
      %v5068 = vunpack.c.l.s4 1934713408
      %v5069 = vunpack.c.0.s8 %v5068
      %v5070 = vlaneseq
      %v5071 = vshrl.u32 %v5070, 7
      %v5072 = vsub.s32 %v5069, %v5071
      %v5073 = vrot.slane %v5066, %v5072
      %v5074 = vcombine.low %v5065, %v5073
      %v5075 = vcombine.high %v5065, %v5073
      %v5076 = vcombine.low %v4650, %v4657
      %v5078 = vunpack.c.l.s4 1983009808
      %v5079 = vunpack.c.0.s8 %v5078
      %v5080 = vlaneseq
      %v5081 = vshrl.u32 %v5080, 7
      %v5082 = vsub.s32 %v5079, %v5081
      %v5083 = vrot.slane %v5076, %v5082
      %v5084 = vcombine.low %v4674, %v4675
      %v5086 = vunpack.c.l.s4 1983009808
      %v5087 = vunpack.c.0.s8 %v5086
      %v5088 = vlaneseq
      %v5089 = vshrl.u32 %v5088, 7
      %v5090 = vsub.s32 %v5087, %v5089
      %v5091 = vrot.slane %v5084, %v5090
      %v5092 = vcombine.low %v4666, %v4673
      %v5094 = vunpack.c.l.s4 1983009808
      %v5095 = vunpack.c.0.s8 %v5094
      %v5096 = vlaneseq
      %v5097 = vshrl.u32 %v5096, 7
      %v5098 = vsub.s32 %v5095, %v5097
      %v5099 = vrot.slane %v5092, %v5098
      %v5100 = vcombine.low %v4676, %v4677
      %v5102 = vunpack.c.l.s4 1983009808
      %v5103 = vunpack.c.0.s8 %v5102
      %v5104 = vlaneseq
      %v5105 = vshrl.u32 %v5104, 7
      %v5106 = vsub.s32 %v5103, %v5105
      %v5107 = vrot.slane %v5100, %v5106
      %v5108 = vcombine.low %v5083, %v5091
      %v5110 = vunpack.c.l.s4 1934713408
      %v5111 = vunpack.c.0.s8 %v5110
      %v5112 = vlaneseq
      %v5113 = vshrl.u32 %v5112, 7
      %v5114 = vsub.s32 %v5111, %v5113
      %v5115 = vrot.slane %v5108, %v5114
      %v5116 = vcombine.low %v5099, %v5107
      %v5118 = vunpack.c.l.s4 1934713408
      %v5119 = vunpack.c.0.s8 %v5118
      %v5120 = vlaneseq
      %v5121 = vshrl.u32 %v5120, 7
      %v5122 = vsub.s32 %v5119, %v5121
      %v5123 = vrot.slane %v5116, %v5122
      %v5124 = vcombine.low %v5115, %v5123
      %v5125 = vcombine.high %v5115, %v5123
      %v5126 = vcombine.low %v4716, %v4723
      %v5128 = vunpack.c.l.s4 1983009808
      %v5129 = vunpack.c.0.s8 %v5128
      %v5130 = vlaneseq
      %v5131 = vshrl.u32 %v5130, 7
      %v5132 = vsub.s32 %v5129, %v5131
      %v5133 = vrot.slane %v5126, %v5132
      %v5134 = vcombine.low %v4740, %v4741
      %v5136 = vunpack.c.l.s4 1983009808
      %v5137 = vunpack.c.0.s8 %v5136
      %v5138 = vlaneseq
      %v5139 = vshrl.u32 %v5138, 7
      %v5140 = vsub.s32 %v5137, %v5139
      %v5141 = vrot.slane %v5134, %v5140
      %v5142 = vcombine.low %v4732, %v4739
      %v5144 = vunpack.c.l.s4 1983009808
      %v5145 = vunpack.c.0.s8 %v5144
      %v5146 = vlaneseq
      %v5147 = vshrl.u32 %v5146, 7
      %v5148 = vsub.s32 %v5145, %v5147
      %v5149 = vrot.slane %v5142, %v5148
      %v5150 = vcombine.low %v4742, %v4743
      %v5152 = vunpack.c.l.s4 1983009808
      %v5153 = vunpack.c.0.s8 %v5152
      %v5154 = vlaneseq
      %v5155 = vshrl.u32 %v5154, 7
      %v5156 = vsub.s32 %v5153, %v5155
      %v5157 = vrot.slane %v5150, %v5156
      %v5158 = vcombine.low %v5133, %v5141
      %v5160 = vunpack.c.l.s4 1934713408
      %v5161 = vunpack.c.0.s8 %v5160
      %v5162 = vlaneseq
      %v5163 = vshrl.u32 %v5162, 7
      %v5164 = vsub.s32 %v5161, %v5163
      %v5165 = vrot.slane %v5158, %v5164
      %v5166 = vcombine.low %v5149, %v5157
      %v5168 = vunpack.c.l.s4 1934713408
      %v5169 = vunpack.c.0.s8 %v5168
      %v5170 = vlaneseq
      %v5171 = vshrl.u32 %v5170, 7
      %v5172 = vsub.s32 %v5169, %v5171
      %v5173 = vrot.slane %v5166, %v5172
      %v5174 = vcombine.low %v5165, %v5173
      %v5175 = vcombine.high %v5165, %v5173
      %v5176 = vcombine.low %v4782, %v4789
      %v5178 = vunpack.c.l.s4 1983009808
      %v5179 = vunpack.c.0.s8 %v5178
      %v5180 = vlaneseq
      %v5181 = vshrl.u32 %v5180, 7
      %v5182 = vsub.s32 %v5179, %v5181
      %v5183 = vrot.slane %v5176, %v5182
      %v5184 = vcombine.low %v4806, %v4807
      %v5186 = vunpack.c.l.s4 1983009808
      %v5187 = vunpack.c.0.s8 %v5186
      %v5188 = vlaneseq
      %v5189 = vshrl.u32 %v5188, 7
      %v5190 = vsub.s32 %v5187, %v5189
      %v5191 = vrot.slane %v5184, %v5190
      %v5192 = vcombine.low %v4798, %v4805
      %v5194 = vunpack.c.l.s4 1983009808
      %v5195 = vunpack.c.0.s8 %v5194
      %v5196 = vlaneseq
      %v5197 = vshrl.u32 %v5196, 7
      %v5198 = vsub.s32 %v5195, %v5197
      %v5199 = vrot.slane %v5192, %v5198
      %v5200 = vcombine.low %v4808, %v4809
      %v5202 = vunpack.c.l.s4 1983009808
      %v5203 = vunpack.c.0.s8 %v5202
      %v5204 = vlaneseq
      %v5205 = vshrl.u32 %v5204, 7
      %v5206 = vsub.s32 %v5203, %v5205
      %v5207 = vrot.slane %v5200, %v5206
      %v5208 = vcombine.low %v5183, %v5191
      %v5210 = vunpack.c.l.s4 1934713408
      %v5211 = vunpack.c.0.s8 %v5210
      %v5212 = vlaneseq
      %v5213 = vshrl.u32 %v5212, 7
      %v5214 = vsub.s32 %v5211, %v5213
      %v5215 = vrot.slane %v5208, %v5214
      %v5216 = vcombine.low %v5199, %v5207
      %v5218 = vunpack.c.l.s4 1934713408
      %v5219 = vunpack.c.0.s8 %v5218
      %v5220 = vlaneseq
      %v5221 = vshrl.u32 %v5220, 7
      %v5222 = vsub.s32 %v5219, %v5221
      %v5223 = vrot.slane %v5216, %v5222
      %v5224 = vcombine.low %v5215, %v5223
      %v5225 = vcombine.high %v5215, %v5223
      %v5226 = vcombine.low %v4848, %v4855
      %v5228 = vunpack.c.l.s4 1983009808
      %v5229 = vunpack.c.0.s8 %v5228
      %v5230 = vlaneseq
      %v5231 = vshrl.u32 %v5230, 7
      %v5232 = vsub.s32 %v5229, %v5231
      %v5233 = vrot.slane %v5226, %v5232
      %v5234 = vcombine.low %v4872, %v4873
      %v5236 = vunpack.c.l.s4 1983009808
      %v5237 = vunpack.c.0.s8 %v5236
      %v5238 = vlaneseq
      %v5239 = vshrl.u32 %v5238, 7
      %v5240 = vsub.s32 %v5237, %v5239
      %v5241 = vrot.slane %v5234, %v5240
      %v5242 = vcombine.low %v4864, %v4871
      %v5244 = vunpack.c.l.s4 1983009808
      %v5245 = vunpack.c.0.s8 %v5244
      %v5246 = vlaneseq
      %v5247 = vshrl.u32 %v5246, 7
      %v5248 = vsub.s32 %v5245, %v5247
      %v5249 = vrot.slane %v5242, %v5248
      %v5250 = vcombine.low %v4874, %v4875
      %v5252 = vunpack.c.l.s4 1983009808
      %v5253 = vunpack.c.0.s8 %v5252
      %v5254 = vlaneseq
      %v5255 = vshrl.u32 %v5254, 7
      %v5256 = vsub.s32 %v5253, %v5255
      %v5257 = vrot.slane %v5250, %v5256
      %v5258 = vcombine.low %v5233, %v5241
      %v5260 = vunpack.c.l.s4 1934713408
      %v5261 = vunpack.c.0.s8 %v5260
      %v5262 = vlaneseq
      %v5263 = vshrl.u32 %v5262, 7
      %v5264 = vsub.s32 %v5261, %v5263
      %v5265 = vrot.slane %v5258, %v5264
      %v5266 = vcombine.low %v5249, %v5257
      %v5268 = vunpack.c.l.s4 1934713408
      %v5269 = vunpack.c.0.s8 %v5268
      %v5270 = vlaneseq
      %v5271 = vshrl.u32 %v5270, 7
      %v5272 = vsub.s32 %v5269, %v5271
      %v5273 = vrot.slane %v5266, %v5272
      %v5274 = vcombine.low %v5265, %v5273
      %v5275 = vcombine.high %v5265, %v5273
      %5284 = vrot.lane.b32.xlu0 %v4925, 32
      %v5285 = vpop.permute.xlu0 %5284
      %5286 = vrot.lane.b32.xlu0 %v4975, 32
      %v5287 = vpop.permute.xlu0 %5286
      %5288 = vrot.lane.b32.xlu0 %v5025, 32
      %v5289 = vpop.permute.xlu0 %5288
      %5290 = vrot.lane.b32.xlu0 %v5075, 32
      %v5291 = vpop.permute.xlu0 %5290
      %5292 = vrot.lane.b32.xlu0 %v5125, 32
      %v5293 = vpop.permute.xlu0 %5292
      %5294 = vrot.lane.b32.xlu0 %v5175, 32
      %v5295 = vpop.permute.xlu0 %5294
      %5296 = vrot.lane.b32.xlu0 %v5225, 32
      %v5297 = vpop.permute.xlu0 %5296
      %5298 = vrot.lane.b32.xlu0 %v5275, 32
      %v5299 = vpop.permute.xlu0 %5298
      %v5308 = vsel %vm3414, %v4924, %v5285
      %v5309 = vsel %vm3414, %v4974, %v5287
      %v5310 = vsel %vm3414, %v5024, %v5289
      %v5311 = vsel %vm3414, %v5074, %v5291
      %v5312 = vsel %vm3414, %v5124, %v5293
      %v5313 = vsel %vm3414, %v5174, %v5295
      %v5314 = vsel %vm3414, %v5224, %v5297
      %v5315 = vsel %vm3414, %v5274, %v5299
      %v5316 = vpack.c.bf16 %v5309, %v5308
      %v5317 = vpack.c.bf16 %v5311, %v5310
      %v5318 = vpack.c.bf16 %v5313, %v5312
      %v5319 = vpack.c.bf16 %v5315, %v5314
      %v5320 = vld [vmem:[%s2] sm:$0xf]
      %v5321 = vld [vmem:[%s2 + $0x4] sm:$0xf]
      %v5322 = vld [vmem:[%s2 + $0x8] sm:$0xf]
      %v5323 = vld [vmem:[%s2 + $0xc] sm:$0xf]
      %v5324 = vld [vmem:[%s2 + $0x10] sm:$0xf]
      %v5325 = vld [vmem:[%s2 + $0x14] sm:$0xf]
      %v5326 = vld [vmem:[%s2 + $0x18] sm:$0xf]
      %v5327 = vld [vmem:[%s2 + $0x1c] sm:$0xf]
      %v5336 = vunpack.c.l.b16 %v5320
      %v5337 = vunpack.c.l.b16 %v5321
      %v5338 = vunpack.c.l.b16 %v5322
      %v5339 = vunpack.c.l.b16 %v5323
      %v5340 = vunpack.c.l.b16 %v5324
      %v5341 = vunpack.c.l.b16 %v5325
      %v5342 = vunpack.c.l.b16 %v5326
      %v5343 = vunpack.c.l.b16 %v5327
      %v5344 = vpack.c.b16 %v5337, %v5336
      %v5345 = vpack.c.b16 %v5339, %v5338
      %v5346 = vpack.c.b16 %v5341, %v5340
      %v5347 = vpack.c.b16 %v5343, %v5342
      %v5353 = vsel %vm237, %v5316, 0
      %v5356 = vsel %vm237, %v5317, 0
      %v5359 = vsel %vm237, %v5318, 0
      %v5362 = vsel %vm237, %v5319, 0
      %5364 = vmatprep.subr.bf16.mxu0 0
      %5365 = vmatpush1.bf16.msra.mxu0 0
      %5366 = vmatprep.subr.bf16.mxu0 0
      %5367 = vmatpush1.bf16.msra.mxu0 0
      %5368 = vmatprep.subr.bf16.mxu0 0
      %5369 = vmatpush1.bf16.msra.mxu0 0
      %5370 = vmatprep.subr.bf16.mxu0 0
      %5371 = vmatpush1.bf16.msra.mxu0 0
      %5372 = vmatprep.subr.bf16.mxu0 0
      %5373 = vmatpush1.bf16.msra.mxu0 %v5347
      %5374 = vmatprep.subr.bf16.mxu0 0
      %5375 = vmatpush1.bf16.msra.mxu0 %v5346
      %5376 = vmatprep.subr.bf16.mxu0 0
      %5377 = vmatpush1.bf16.msra.mxu0 %v5345
      %5378 = vmatprep.subr.bf16.mxu0 0
      %5379 = vmatpush1.bf16.msra.mxu0 %v5344
      %5380 = vmatprep.subr.bf16.mxu0 0
      %5381 = vmatpush2.bf16.msra.mxu0 0
      %5382 = vmatprep.subr.bf16.mxu0 0
      %5383 = vmatpush2.bf16.msra.mxu0 0
      %5384 = vmatprep.subr.bf16.mxu0 0
      %5385 = vmatpush2.bf16.msra.mxu0 0
      %5386 = vmatprep.subr.bf16.mxu0 0
      %5387 = vmatpush2.bf16.msra.mxu0 0
      %5388 = vmatprep.subr.bf16.mxu0 0
      %5389 = vmatpush2.bf16.msra.mxu0 0
      %5390 = vmatprep.subr.bf16.mxu0 0
      %5391 = vmatpush2.bf16.msra.mxu0 0
      %5392 = vmatprep.subr.bf16.mxu0 0
      %5393 = vmatpush2.bf16.msra.mxu0 0
      %5394 = vmatprep.subr.bf16.mxu0 0
      %5395 = vmatpush2.bf16.msra.mxu0 0
      %5396 = vmatprep.mubr.bf16.mxu0 0
      %5397 = vmatmul.mubr.bf16.gmra.mxu0 %v5353
      %v5398 = vpop.f32.mrf.mxu0
      %v5399 = vadd.f32 0.0, %v5398
      %v5400 = vpop.f32.mrf.mxu0
      %v5401 = vpop.f32.mrf.mxu0
      %v5402 = vadd.f32 0.0, %v5401
      %v5403 = vpop.f32.mrf.mxu0
      %5404 = vmatprep.mubr.bf16.mxu0 0
      %5405 = vmatmul.mubr.bf16.gmra.mxu0 %v5356
      %v5406 = vpop.f32.mrf.mxu0
      %v5407 = vadd.f32 0.0, %v5406
      %v5408 = vpop.f32.mrf.mxu0
      %v5409 = vpop.f32.mrf.mxu0
      %v5410 = vadd.f32 0.0, %v5409
      %v5411 = vpop.f32.mrf.mxu0
      %5412 = vmatprep.mubr.bf16.mxu0 0
      %5413 = vmatmul.mubr.bf16.gmra.mxu0 %v5359
      %v5414 = vpop.f32.mrf.mxu0
      %v5415 = vadd.f32 0.0, %v5414
      %v5416 = vpop.f32.mrf.mxu0
      %v5417 = vpop.f32.mrf.mxu0
      %v5418 = vadd.f32 0.0, %v5417
      %v5419 = vpop.f32.mrf.mxu0
      %5420 = vmatprep.mubr.bf16.mxu0 0
      %5421 = vmatmul.mubr.bf16.gmra.mxu0 %v5362
      %v5422 = vpop.f32.mrf.mxu0
      %v5423 = vadd.f32 0.0, %v5422
      %v5424 = vpop.f32.mrf.mxu0
      %v5425 = vpop.f32.mrf.mxu0
      %v5426 = vadd.f32 0.0, %v5425
      %v5427 = vpop.f32.mrf.mxu0
      %5428 = vdwg.mxu0
      %5429 = vst.msk [vmem:[%s226] sm:$0xff] %vm237, %v5399
      %5430 = vst.msk [vmem:[%s226 + $0x8] sm:$0xff] %vm237, %v5402
      %5431 = vst.msk [vmem:[%s226 + $0x10] sm:$0xff] %vm237, %v5407
      %5432 = vst.msk [vmem:[%s226 + $0x18] sm:$0xff] %vm237, %v5410
      %5433 = vst.msk [vmem:[%s226 + $0x20] sm:$0xff] %vm237, %v5415
      %5434 = vst.msk [vmem:[%s226 + $0x28] sm:$0xff] %vm237, %v5418
      %5435 = vst.msk [vmem:[%s226 + $0x30] sm:$0xff] %vm237, %v5423
      %5436 = vst.msk [vmem:[%s226 + $0x38] sm:$0xff] %vm237, %v5426
      %s5437 = smul.u32 8, %s16
      %p5438 = scmp.lt.s32.totalorder %s5437, 15
      %s5439 = scalar_select %p5438, %s5437, 15
      %s5440 = smul.addr %s5439, 8
      %s5441 = scalar_lea.vmem %s5, %s5440
      // Predicated region
      $region41: #{tpu_custom_call.1} parent=39 // pred_check
        %p5442 = pneg %p144
      $region42: #{tpu_custom_call.1} parent=39 // pred_check_branch
        %5444 = sbr.rel (%p5442) target = $region44
      $region43: #{tpu_custom_call.1} parent=39 // pred_region
        %s5445 = smul.u32 8, %s16
      $region44: #{tpu_custom_call.1} parent=39 // pred_fallthru
        _
    $region40: #{tpu_custom_call.1} parent=5 // pred_fallthru
      _
    %p5446 = scmp.le.s32.totalorder 2, %s11
    // Predicated region
    $region45: #{tpu_custom_call.1} parent=5 // pred_check
      %p5447 = pneg %p5446
    $region46: #{tpu_custom_call.1} parent=5 // pred_check_branch
      %5449 = sbr.rel (%p5447) target = $region48
    $region47: #{tpu_custom_call.1} parent=5 // pred_region
      %s5450 = ssub.s32 %s11, 2
      // Predicated region
      $region49: #{tpu_custom_call.1} parent=47 // pred_check
        %p5451 = pneg %p150
      $region50: #{tpu_custom_call.1} parent=47 // pred_check_branch
        %5453 = sbr.rel (%p5451) target = $region52
      $region51: #{tpu_custom_call.1} parent=47 // pred_region
        %s5454 = smul.u32 8, %s17
        %p5455 = scmp.lt.s32.totalorder %s5454, 15
        %s5456 = scalar_select %p5455, %s5454, 15
        %s5457 = smul.addr %s5456, 8
        %s5458 = scalar_lea.vmem %s5, %s5457
      $region52: #{tpu_custom_call.1} parent=47 // pred_fallthru
        _
    $region48: #{tpu_custom_call.1} parent=5 // pred_fallthru
      _
  $region6: #{tpu_custom_call.1} parent=0 // loop_footer
    %s15 = sadd.s32 1, %s11
  $region7: #{tpu_custom_call.1} parent=0 // loop_footer_branch
    %10 = sbr.rel target = $region3
  $region8: #{tpu_custom_call.1} parent=0 // loop_exit
    _

// kernel: tpu_custom_call.1
$region0: #{tpu_custom_call.1}
  #allocation0 [shape = 'u32[]', space=smem, size = 0x4, offset = 0x4, fixed_abs, tag = 'smem constant byte address 0x4 - core index']
  #allocation1 [shape = 'u32[144,128]{1,0:T(1,128)}', space=vmem, size = 0x12000, scoped, tag = 'internal scratch']
  %s0 = inlined_call_operand.vmem [shape: f32[128,64], index: 0, kind: input, shape index: {}]
  %s1 = inlined_call_operand.vmem [shape: bf16[64,192], index: 1, kind: input, shape index: {}]
  %s2 = inlined_call_operand.vmem [shape: bf16[64,64], index: 2, kind: input, shape index: {}]
  %s3 = inlined_call_operand.vmem [shape: f32[1,64], index: 3, kind: input, shape index: {}]
  %s4 = inlined_call_operand.vmem [shape: f32[2,16,16], index: 4, kind: input, shape index: {}]
  %s5 = inlined_call_operand.vmem [shape: f32[128,64], index: 5, kind: output, shape index: {}]
  %s6 = sld [smem:[#allocation0]]
  $region53: #{tpu_custom_call.1} parent=0
    _
  %s8 = ssub.s32 1, %s6
  %s9 = scalar_select 0, %s8, %s6
  loop: start=0, step=1, limit=4
  $region2: #{tpu_custom_call.1} parent=0 // loop_pre_header
    _
  $region3: #{tpu_custom_call.1} parent=0 // loop_header
    %s11 = sphi 0, %s15
    %p12 = scmp.ge.s32.totalorder %s11, 4
    %s21 = sphi 0, %s23
    %s24 = sphi 0, %s21
    %s25 = sphi 0, %s24
    %s41 = sphi 0, %s25
    %s45 = sphi 0, %s45
    %s47 = sphi 0, %s45
    %s48 = sphi 0, %s47
    %s62 = sphi 0, %s48
    %s66 = sphi 0, %s66
    %s68 = sphi 0, %s66
    %s69 = sphi 0, %s68
    %s83 = sphi 0, %s69
    %s87 = sphi 0, %s87
    %s89 = sphi 0, %s87
    %s90 = sphi 0, %s89
    %s104 = sphi 0, %s90
    %s108 = sphi 0, %s108
    %s110 = sphi 0, %s108
    %s111 = sphi 0, %s110
    %s125 = sphi 0, %s111
    %s131 = sphi 0, %s133
    %s134 = sphi 0, %s131
    %s135 = sphi 0, %s134
    %s151 = sphi 0, %s135
  $region4: #{tpu_custom_call.1} parent=0 // loop_header_branch
    %14 = sbr.rel (%p12) target = $region8
  $region5: #{tpu_custom_call.1} parent=0 // loop_body
    %s16 = ssub.s32 %s11, 1
    %s17 = ssub.s32 %s11, 2
    %s18 = sadd.s32 %s11, 1
    %s19 = ssub.s32 %s11, %s18
    %p20 = scmp.eq.s32.totalorder %s19, 0
    %s22 = sadd.s32 %s21, 1
    %s23 = scalar_select %p20, %s21, %s22
    %p26 = pneg %p20
    %p27 = scmp.eq.s32.totalorder %s11, 1
    %p28 = por %p26, %p27
    %p29 = scmp.ne.s32.totalorder %s21, %s24
    %p30 = scmp.eq.s32.totalorder %s11, 0
    %p31 = por %p29, %p30
    %p32 = scmp.ne.s32.totalorder %s21, %s24
    %p33 = scmp.eq.s32.totalorder %s16, 1
    %p34 = por %p32, %p33
    %p35 = scmp.ne.s32.totalorder %s24, %s25
    %p36 = scmp.eq.s32.totalorder %s16, 0
    %p37 = por %p35, %p36
    %p38 = scmp.ne.s32.totalorder %s24, %s25
    %p39 = scmp.eq.s32.totalorder %s17, 1
    %p40 = por %p38, %p39
    %p42 = scmp.ne.s32.totalorder %s25, %s41
    %p43 = scmp.eq.s32.totalorder %s17, 0
    %p44 = por %p42, %p43
    %s46 = sadd.s32 %s45, 1
    %p49 = scmp.eq.s32.totalorder %s11, 1
    %p50 = scmp.ne.s32.totalorder %s45, %s47
    %p51 = scmp.eq.s32.totalorder %s11, 0
    %p52 = por %p50, %p51
    %p53 = scmp.ne.s32.totalorder %s45, %s47
    %p54 = scmp.eq.s32.totalorder %s16, 1
    %p55 = por %p53, %p54
    %p56 = scmp.ne.s32.totalorder %s47, %s48
    %p57 = scmp.eq.s32.totalorder %s16, 0
    %p58 = por %p56, %p57
    %p59 = scmp.ne.s32.totalorder %s47, %s48
    %p60 = scmp.eq.s32.totalorder %s17, 1
    %p61 = por %p59, %p60
    %p63 = scmp.ne.s32.totalorder %s48, %s62
    %p64 = scmp.eq.s32.totalorder %s17, 0
    %p65 = por %p63, %p64
    %s67 = sadd.s32 %s66, 1
    %p70 = scmp.eq.s32.totalorder %s11, 1
    %p71 = scmp.ne.s32.totalorder %s66, %s68
    %p72 = scmp.eq.s32.totalorder %s11, 0
    %p73 = por %p71, %p72
    %p74 = scmp.ne.s32.totalorder %s66, %s68
    %p75 = scmp.eq.s32.totalorder %s16, 1
    %p76 = por %p74, %p75
    %p77 = scmp.ne.s32.totalorder %s68, %s69
    %p78 = scmp.eq.s32.totalorder %s16, 0
    %p79 = por %p77, %p78
    %p80 = scmp.ne.s32.totalorder %s68, %s69
    %p81 = scmp.eq.s32.totalorder %s17, 1
    %p82 = por %p80, %p81
    %p84 = scmp.ne.s32.totalorder %s69, %s83
    %p85 = scmp.eq.s32.totalorder %s17, 0
    %p86 = por %p84, %p85
    %s88 = sadd.s32 %s87, 1
    %p91 = scmp.eq.s32.totalorder %s11, 1
    %p92 = scmp.ne.s32.totalorder %s87, %s89
    %p93 = scmp.eq.s32.totalorder %s11, 0
    %p94 = por %p92, %p93
    %p95 = scmp.ne.s32.totalorder %s87, %s89
    %p96 = scmp.eq.s32.totalorder %s16, 1
    %p97 = por %p95, %p96
    %p98 = scmp.ne.s32.totalorder %s89, %s90
    %p99 = scmp.eq.s32.totalorder %s16, 0
    %p100 = por %p98, %p99
    %p101 = scmp.ne.s32.totalorder %s89, %s90
    %p102 = scmp.eq.s32.totalorder %s17, 1
    %p103 = por %p101, %p102
    %p105 = scmp.ne.s32.totalorder %s90, %s104
    %p106 = scmp.eq.s32.totalorder %s17, 0
    %p107 = por %p105, %p106
    %s109 = sadd.s32 %s108, 1
    %p112 = scmp.eq.s32.totalorder %s11, 1
    %p113 = scmp.ne.s32.totalorder %s108, %s110
    %p114 = scmp.eq.s32.totalorder %s11, 0
    %p115 = por %p113, %p114
    %p116 = scmp.ne.s32.totalorder %s108, %s110
    %p117 = scmp.eq.s32.totalorder %s16, 1
    %p118 = por %p116, %p117
    %p119 = scmp.ne.s32.totalorder %s110, %s111
    %p120 = scmp.eq.s32.totalorder %s16, 0
    %p121 = por %p119, %p120
    %p122 = scmp.ne.s32.totalorder %s110, %s111
    %p123 = scmp.eq.s32.totalorder %s17, 1
    %p124 = por %p122, %p123
    %p126 = scmp.ne.s32.totalorder %s111, %s125
    %p127 = scmp.eq.s32.totalorder %s17, 0
    %p128 = por %p126, %p127
    %s129 = ssub.s32 %s11, %s18
    %p130 = scmp.eq.s32.totalorder %s129, 0
    %s132 = sadd.s32 %s131, 1
    %s133 = scalar_select %p130, %s131, %s132
    %p136 = pneg %p130
    %p137 = scmp.eq.s32.totalorder %s11, 1
    %p138 = por %p136, %p137
    %p139 = scmp.ne.s32.totalorder %s131, %s134
    %p140 = scmp.eq.s32.totalorder %s11, 0
    %p141 = por %p139, %p140
    %p142 = scmp.ne.s32.totalorder %s131, %s134
    %p143 = scmp.eq.s32.totalorder %s16, 1
    %p144 = por %p142, %p143
    %p145 = scmp.ne.s32.totalorder %s134, %s135
    %p146 = scmp.eq.s32.totalorder %s16, 0
    %p147 = por %p145, %p146
    %p148 = scmp.ne.s32.totalorder %s134, %s135
    %p149 = scmp.eq.s32.totalorder %s17, 1
    %p150 = por %p148, %p149
    %p152 = scmp.ne.s32.totalorder %s135, %s151
    %p153 = scmp.eq.s32.totalorder %s17, 0
    %p154 = por %p152, %p153
    %p155 = scmp.le.s32.totalorder 1, %s11
    %p156 = scmp.lt.s32.totalorder %s11, 3
    %p157 = pnand %p155, %p156
    %p158 = pneg %p157
    // Predicated region
    $region9: #{tpu_custom_call.1} parent=5 // pred_check
      _
    $region10: #{tpu_custom_call.1} parent=5 // pred_check_branch
      %160 = sbr.rel (%p157) target = $region12
    $region11: #{tpu_custom_call.1} parent=5 // pred_region
      %s161 = ssub.s32 %s11, 1
      // Predicated region
      $region13: #{tpu_custom_call.1} parent=11 // pred_check
        %p162 = pneg %p58
      $region14: #{tpu_custom_call.1} parent=11 // pred_check_branch
        %164 = sbr.rel (%p162) target = $region16
      $region15: #{tpu_custom_call.1} parent=11 // pred_region
        _
      $region16: #{tpu_custom_call.1} parent=11 // pred_fallthru
        _
      // Predicated region
      $region17: #{tpu_custom_call.1} parent=11 // pred_check
        %p165 = pneg %p79
      $region18: #{tpu_custom_call.1} parent=11 // pred_check_branch
        %167 = sbr.rel (%p165) target = $region20
      $region19: #{tpu_custom_call.1} parent=11 // pred_region
        _
      $region20: #{tpu_custom_call.1} parent=11 // pred_fallthru
        _
      // Predicated region
      $region21: #{tpu_custom_call.1} parent=11 // pred_check
        %p168 = pneg %p100
      $region22: #{tpu_custom_call.1} parent=11 // pred_check_branch
        %170 = sbr.rel (%p168) target = $region24
      $region23: #{tpu_custom_call.1} parent=11 // pred_region
        _
      $region24: #{tpu_custom_call.1} parent=11 // pred_fallthru
        _
      // Predicated region
      $region25: #{tpu_custom_call.1} parent=11 // pred_check
        %p171 = pneg %p121
      $region26: #{tpu_custom_call.1} parent=11 // pred_check_branch
        %173 = sbr.rel (%p171) target = $region28
      $region27: #{tpu_custom_call.1} parent=11 // pred_region
        _
      $region28: #{tpu_custom_call.1} parent=11 // pred_fallthru
        _
    $region12: #{tpu_custom_call.1} parent=5 // pred_fallthru
      _
    %p174 = scmp.lt.s32.totalorder %s11, 2
    // Predicated region
    $region29: #{tpu_custom_call.1} parent=5 // pred_check
      %p175 = pneg %p174
    $region30: #{tpu_custom_call.1} parent=5 // pred_check_branch
      %177 = sbr.rel (%p175) target = $region32
    $region31: #{tpu_custom_call.1} parent=5 // pred_region
      // Predicated region
      $region33: #{tpu_custom_call.1} parent=31 // pred_check
        %p178 = pneg %p31
      $region34: #{tpu_custom_call.1} parent=31 // pred_check_branch
        %180 = sbr.rel (%p178) target = $region36
      $region35: #{tpu_custom_call.1} parent=31 // pred_region
        %s181 = smul.u32 8, %s11
        %p182 = scmp.lt.s32.totalorder %s181, 15
        %s183 = scalar_select %p182, %s181, 15
        %s184 = smul.addr %s183, 8
        %s185 = scalar_lea.vmem %s0, %s184
        %s186 = smul.u32 8, %s11
      $region36: #{tpu_custom_call.1} parent=31 // pred_fallthru
        _
    $region32: #{tpu_custom_call.1} parent=5 // pred_fallthru
      _
    %p187 = scmp.le.s32.totalorder 1, %s11
    %p188 = scmp.lt.s32.totalorder %s11, 3
    %p189 = pnand %p187, %p188
    %p190 = pneg %p189
    // Predicated region
    $region37: #{tpu_custom_call.1} parent=5 // pred_check
      _
    $region38: #{tpu_custom_call.1} parent=5 // pred_check_branch
      %192 = sbr.rel (%p189) target = $region40
    $region39: #{tpu_custom_call.1} parent=5 // pred_region
      %s193 = ssub.s32 %s11, 1
      %s194 = smul.u32 8, %s16
      %p195 = scmp.lt.s32.totalorder %s194, 15
      %s196 = scalar_select %p195, %s194, 15
      %s197 = smul.addr %s196, 8
      %s198 = scalar_lea.vmem %s0, %s197
      %p199 = pneg %p37
      %p200 = pneg %p34
      %p201 = pneg %p58
      %p202 = pneg %p55
      %p203 = pneg %p79
      %p204 = pneg %p76
      %p205 = pneg %p100
      %p206 = pneg %p97
      %p207 = pneg %p121
      %p208 = pneg %p118
      %p209 = pneg %p147
      %p210 = pneg %p144
      %s211 = smul.u32 8, %s16
      %p212 = scmp.lt.s32.totalorder %s211, 15
      %s213 = scalar_select %p212, %s211, 15
      %s214 = smul.addr %s213, 8
      %s215 = scalar_lea.vmem %s5, %s214
      %s216 = smul.u32 8, %s16
      %p217 = scmp.lt.s32.totalorder %s216, 15
      %s218 = scalar_select %p217, %s216, 15
      %s219 = smul.addr %s218, 8
      %s220 = scalar_lea.vmem %s0, %s219
      %s221 = smul.u32 8, %s16
      %s222 = smul.u32 8, %s16
      %p223 = scmp.lt.s32.totalorder %s222, 15
      %s224 = scalar_select %p223, %s222, 15
      %s225 = smul.addr %s224, 8
      %s226 = scalar_lea.vmem %s5, %s225
      %s227 = smul.u32 8, %s16
      %v229 = vld [vmem:[%s220] sm:$0xff]
      %v230 = vld [vmem:[%s220 + $0x8] sm:$0xff]
      %v231 = vld [vmem:[%s220 + $0x10] sm:$0xff]
      %v232 = vld [vmem:[%s220 + $0x18] sm:$0xff]
      %v233 = vld [vmem:[%s220 + $0x20] sm:$0xff]
      %v234 = vld [vmem:[%s220 + $0x28] sm:$0xff]
      %v235 = vld [vmem:[%s220 + $0x30] sm:$0xff]
      %v236 = vld [vmem:[%s220 + $0x38] sm:$0xff]
      %vm237 = vcmask 523264
      %v238 = vsel %vm237, %v229, 0.0
      %239 = vadd.xlane.f32.xlu0 %v238
      %v240 = vpop.xlane.xlu0 %239
      %v241 = vsel %vm237, %v230, 0.0
      %242 = vadd.xlane.f32.xlu0 %v241
      %v243 = vpop.xlane.xlu0 %242
      %v244 = vsel %vm237, %v231, 0.0
      %245 = vadd.xlane.f32.xlu0 %v244
      %v246 = vpop.xlane.xlu0 %245
      %v247 = vsel %vm237, %v232, 0.0
      %248 = vadd.xlane.f32.xlu0 %v247
      %v249 = vpop.xlane.xlu0 %248
      %v250 = vsel %vm237, %v233, 0.0
      %251 = vadd.xlane.f32.xlu0 %v250
      %v252 = vpop.xlane.xlu0 %251
      %v253 = vsel %vm237, %v234, 0.0
      %254 = vadd.xlane.f32.xlu0 %v253
      %v255 = vpop.xlane.xlu0 %254
      %v256 = vsel %vm237, %v235, 0.0
      %257 = vadd.xlane.f32.xlu0 %v256
      %v258 = vpop.xlane.xlu0 %257
      %v259 = vsel %vm237, %v236, 0.0
      %260 = vadd.xlane.f32.xlu0 %v259
      %v261 = vpop.xlane.xlu0 %260
      %v262 = vmul.f32 %v240, 0.015625
      %v263 = vmul.f32 %v243, 0.015625
      %v264 = vmul.f32 %v246, 0.015625
      %v265 = vmul.f32 %v249, 0.015625
      %v266 = vmul.f32 %v252, 0.015625
      %v267 = vmul.f32 %v255, 0.015625
      %v268 = vmul.f32 %v258, 0.015625
      %v269 = vmul.f32 %v261, 0.015625
      %v270 = vsub.f32 %v229, %v262
      %v271 = vsub.f32 %v230, %v263
      %v272 = vsub.f32 %v231, %v264
      %v273 = vsub.f32 %v232, %v265
      %v274 = vsub.f32 %v233, %v266
      %v275 = vsub.f32 %v234, %v267
      %v276 = vsub.f32 %v235, %v268
      %v277 = vsub.f32 %v236, %v269
      %v278 = vmul.f32 %v270, %v270
      %v279 = vmul.f32 %v271, %v271
      %v280 = vmul.f32 %v272, %v272
      %v281 = vmul.f32 %v273, %v273
      %v282 = vmul.f32 %v274, %v274
      %v283 = vmul.f32 %v275, %v275
      %v284 = vmul.f32 %v276, %v276
      %v285 = vmul.f32 %v277, %v277
      %v286 = vsel %vm237, %v278, 0.0
      %287 = vadd.xlane.f32.xlu0 %v286
      %v288 = vpop.xlane.xlu0 %287
      %v289 = vsel %vm237, %v279, 0.0
      %290 = vadd.xlane.f32.xlu0 %v289
      %v291 = vpop.xlane.xlu0 %290
      %v292 = vsel %vm237, %v280, 0.0
      %293 = vadd.xlane.f32.xlu0 %v292
      %v294 = vpop.xlane.xlu0 %293
      %v295 = vsel %vm237, %v281, 0.0
      %296 = vadd.xlane.f32.xlu0 %v295
      %v297 = vpop.xlane.xlu0 %296
      %v298 = vsel %vm237, %v282, 0.0
      %299 = vadd.xlane.f32.xlu0 %v298
      %v300 = vpop.xlane.xlu0 %299
      %v301 = vsel %vm237, %v283, 0.0
      %302 = vadd.xlane.f32.xlu0 %v301
      %v303 = vpop.xlane.xlu0 %302
      %v304 = vsel %vm237, %v284, 0.0
      %305 = vadd.xlane.f32.xlu0 %v304
      %v306 = vpop.xlane.xlu0 %305
      %v307 = vsel %vm237, %v285, 0.0
      %308 = vadd.xlane.f32.xlu0 %v307
      %v309 = vpop.xlane.xlu0 %308
      %v310 = vmul.f32 %v288, 0.015625
      %v311 = vmul.f32 %v291, 0.015625
      %v312 = vmul.f32 %v294, 0.015625
      %v313 = vmul.f32 %v297, 0.015625
      %v314 = vmul.f32 %v300, 0.015625
      %v315 = vmul.f32 %v303, 0.015625
      %v316 = vmul.f32 %v306, 0.015625
      %v317 = vmul.f32 %v309, 0.015625
      %v318 = vadd.f32 %v310, 1e-05
      %v319 = vadd.f32 %v311, 1e-05
      %v320 = vadd.f32 %v312, 1e-05
      %v321 = vadd.f32 %v313, 1e-05
      %v322 = vadd.f32 %v314, 1e-05
      %v323 = vadd.f32 %v315, 1e-05
      %v324 = vadd.f32 %v316, 1e-05
      %v325 = vadd.f32 %v317, 1e-05
      %v326 = vrsqrt.pop %v318
      %v327 = vrsqrt.pop %v319
      %v328 = vrsqrt.pop %v320
      %v329 = vrsqrt.pop %v321
      %v330 = vrsqrt.pop %v322
      %v331 = vrsqrt.pop %v323
      %v332 = vrsqrt.pop %v324
      %v333 = vrsqrt.pop %v325
      %v334 = vmul.f32 %v270, %v326
      %v335 = vmul.f32 %v271, %v327
      %v336 = vmul.f32 %v272, %v328
      %v337 = vmul.f32 %v273, %v329
      %v338 = vmul.f32 %v274, %v330
      %v339 = vmul.f32 %v275, %v331
      %v340 = vmul.f32 %v276, %v332
      %v341 = vmul.f32 %v277, %v333
      %v342 = vld [vmem:[%s3] sm:$0x1]
      %v344 = vlaneseq
      %v345 = vshrl.u32 %v344, 7
      %v346 = vsub.s32 0, %v345
      %v347 = vrot.slane %v342, %v346
      %v349 = vmul.f32 %v334, %v347
      %v350 = vmul.f32 %v335, %v347
      %v351 = vmul.f32 %v336, %v347
      %v352 = vmul.f32 %v337, %v347
      %v353 = vmul.f32 %v338, %v347
      %v354 = vmul.f32 %v339, %v347
      %v355 = vmul.f32 %v340, %v347
      %v356 = vmul.f32 %v341, %v347
      %v357 = vpack.c.bf16 %v350, %v349
      %v358 = vpack.c.bf16 %v352, %v351
      %v359 = vpack.c.bf16 %v354, %v353
      %v360 = vpack.c.bf16 %v356, %v355
      %v361 = vld [vmem:[%s1] sm:$0xff]
      %v362 = vld [vmem:[%s1 + $0x8] sm:$0xff]
      %v363 = vld [vmem:[%s1 + $0x10] sm:$0xff]
      %v364 = vld [vmem:[%s1 + $0x18] sm:$0xff]
      %v365 = vld [vmem:[%s1 + $0x20] sm:$0xff]
      %v366 = vld [vmem:[%s1 + $0x28] sm:$0xff]
      %v367 = vld [vmem:[%s1 + $0x30] sm:$0xff]
      %v368 = vld [vmem:[%s1 + $0x38] sm:$0xff]
      %v377 = vunpack.c.l.b16 %v361
      %v378 = vunpack.c.h.b16 %v361
      %v379 = vunpack.c.l.b16 %v362
      %v380 = vunpack.c.h.b16 %v362
      %v381 = vunpack.c.l.b16 %v363
      %v382 = vunpack.c.h.b16 %v363
      %v383 = vunpack.c.l.b16 %v364
      %v384 = vunpack.c.h.b16 %v364
      %v385 = vunpack.c.l.b16 %v365
      %v386 = vunpack.c.h.b16 %v365
      %v387 = vunpack.c.l.b16 %v366
      %v388 = vunpack.c.h.b16 %v366
      %v389 = vunpack.c.l.b16 %v367
      %v390 = vunpack.c.h.b16 %v367
      %v391 = vunpack.c.l.b16 %v368
      %v392 = vunpack.c.h.b16 %v368
      %v393 = vpack.c.b16 %v379, %v377
      %v394 = vpack.c.b16 %v380, %v378
      %v395 = vpack.c.b16 %v383, %v381
      %v396 = vpack.c.b16 %v384, %v382
      %v397 = vpack.c.b16 %v387, %v385
      %v398 = vpack.c.b16 %v388, %v386
      %v399 = vpack.c.b16 %v391, %v389
      %v400 = vpack.c.b16 %v392, %v390
      %v410 = vsel %vm237, %v357, 0
      %v413 = vsel %vm237, %v358, 0
      %v416 = vsel %vm237, %v359, 0
      %v419 = vsel %vm237, %v360, 0
      %421 = vmatprep.subr.bf16.mxu0 0
      %422 = vmatpush1.bf16.msra.mxu0 0
      %423 = vmatprep.subr.bf16.mxu0 0
      %424 = vmatpush1.bf16.msra.mxu0 0
      %425 = vmatprep.subr.bf16.mxu0 0
      %426 = vmatpush1.bf16.msra.mxu0 0
      %427 = vmatprep.subr.bf16.mxu0 0
      %428 = vmatpush1.bf16.msra.mxu0 0
      %429 = vmatprep.subr.bf16.mxu0 %v400
      %430 = vmatpush1.bf16.msra.mxu0 %v399
      %431 = vmatprep.subr.bf16.mxu0 %v398
      %432 = vmatpush1.bf16.msra.mxu0 %v397
      %433 = vmatprep.subr.bf16.mxu0 %v396
      %434 = vmatpush1.bf16.msra.mxu0 %v395
      %435 = vmatprep.subr.bf16.mxu0 %v394
      %436 = vmatpush1.bf16.msra.mxu0 %v393
      %437 = vmatprep.subr.bf16.mxu0 0
      %438 = vmatpush2.bf16.msra.mxu0 0
      %439 = vmatprep.subr.bf16.mxu0 0
      %440 = vmatpush2.bf16.msra.mxu0 0
      %441 = vmatprep.subr.bf16.mxu0 0
      %442 = vmatpush2.bf16.msra.mxu0 0
      %443 = vmatprep.subr.bf16.mxu0 0
      %444 = vmatpush2.bf16.msra.mxu0 0
      %445 = vmatprep.subr.bf16.mxu0 0
      %446 = vmatpush2.bf16.msra.mxu0 0
      %447 = vmatprep.subr.bf16.mxu0 0
      %448 = vmatpush2.bf16.msra.mxu0 0
      %449 = vmatprep.subr.bf16.mxu0 0
      %450 = vmatpush2.bf16.msra.mxu0 0
      %451 = vmatprep.subr.bf16.mxu0 0
      %452 = vmatpush2.bf16.msra.mxu0 0
      %453 = vmatprep.mubr.bf16.mxu0 0
      %454 = vmatmul.mubr.bf16.gmra.mxu0 %v410
      %v455 = vpop.f32.mrf.mxu0
      %v456 = vadd.f32 0.0, %v455
      %v457 = vpop.f32.mrf.mxu0
      %v458 = vadd.f32 0.0, %v457
      %v459 = vpop.f32.mrf.mxu0
      %v460 = vadd.f32 0.0, %v459
      %v461 = vpop.f32.mrf.mxu0
      %v462 = vadd.f32 0.0, %v461
      %463 = vmatprep.mubr.bf16.mxu0 0
      %464 = vmatmul.mubr.bf16.gmra.mxu0 %v413
      %v465 = vpop.f32.mrf.mxu0
      %v466 = vadd.f32 0.0, %v465
      %v467 = vpop.f32.mrf.mxu0
      %v468 = vadd.f32 0.0, %v467
      %v469 = vpop.f32.mrf.mxu0
      %v470 = vadd.f32 0.0, %v469
      %v471 = vpop.f32.mrf.mxu0
      %v472 = vadd.f32 0.0, %v471
      %473 = vmatprep.mubr.bf16.mxu0 0
      %474 = vmatmul.mubr.bf16.gmra.mxu0 %v416
      %v475 = vpop.f32.mrf.mxu0
      %v476 = vadd.f32 0.0, %v475
      %v477 = vpop.f32.mrf.mxu0
      %v478 = vadd.f32 0.0, %v477
      %v479 = vpop.f32.mrf.mxu0
      %v480 = vadd.f32 0.0, %v479
      %v481 = vpop.f32.mrf.mxu0
      %v482 = vadd.f32 0.0, %v481
      %483 = vmatprep.mubr.bf16.mxu0 0
      %484 = vmatmul.mubr.bf16.gmra.mxu0 %v419
      %v485 = vpop.f32.mrf.mxu0
      %v486 = vadd.f32 0.0, %v485
      %v487 = vpop.f32.mrf.mxu0
      %v488 = vadd.f32 0.0, %v487
      %v489 = vpop.f32.mrf.mxu0
      %v490 = vadd.f32 0.0, %v489
      %v491 = vpop.f32.mrf.mxu0
      %v492 = vadd.f32 0.0, %v491
      %493 = vdwg.mxu0
      %502 = vrot.lane.b32.xlu0 %v456, 96
      %v503 = vpop.permute.xlu0 %502
      %504 = vrot.lane.b32.xlu0 %v460, 96
      %v505 = vpop.permute.xlu0 %504
      %506 = vrot.lane.b32.xlu0 %v466, 96
      %v507 = vpop.permute.xlu0 %506
      %508 = vrot.lane.b32.xlu0 %v470, 96
      %v509 = vpop.permute.xlu0 %508
      %510 = vrot.lane.b32.xlu0 %v476, 96
      %v511 = vpop.permute.xlu0 %510
      %512 = vrot.lane.b32.xlu0 %v480, 96
      %v513 = vpop.permute.xlu0 %512
      %514 = vrot.lane.b32.xlu0 %v486, 96
      %v515 = vpop.permute.xlu0 %514
      %516 = vrot.lane.b32.xlu0 %v490, 96
      %v517 = vpop.permute.xlu0 %516
      %v526 = vcombine.high %v456, 0.0
      %v528 = vunpack.c.l.s4 1983009808
      %v529 = vunpack.c.0.s8 %v528
      %v530 = vlaneseq
      %v531 = vshrl.u32 %v530, 7
      %v532 = vsub.s32 %v529, %v531
      %v533 = vrot.slane %v456, %v532
      %v535 = vunpack.c.l.s4 1983009808
      %v536 = vunpack.c.0.s8 %v535
      %v537 = vlaneseq
      %v538 = vshrl.u32 %v537, 7
      %v539 = vsub.s32 %v536, %v538
      %v540 = vrot.slane %v526, %v539
      %v541 = vcombine.high %v503, 0.0
      %v543 = vunpack.c.l.s4 1983009808
      %v544 = vunpack.c.0.s8 %v543
      %v545 = vlaneseq
      %v546 = vshrl.u32 %v545, 7
      %v547 = vsub.s32 %v544, %v546
      %v548 = vrot.slane %v503, %v547
      %v550 = vunpack.c.l.s4 1983009808
      %v551 = vunpack.c.0.s8 %v550
      %v552 = vlaneseq
      %v553 = vshrl.u32 %v552, 7
      %v554 = vsub.s32 %v551, %v553
      %v555 = vrot.slane %v541, %v554
      %v556 = vcombine.low %v533, %v548
      %v557 = vcombine.high %v533, %v548
      %v559 = vunpack.c.l.s4 1934713408
      %v560 = vunpack.c.0.s8 %v559
      %v561 = vlaneseq
      %v562 = vshrl.u32 %v561, 7
      %v563 = vsub.s32 %v560, %v562
      %v564 = vrot.slane %v556, %v563
      %v566 = vunpack.c.l.s4 1934713408
      %v567 = vunpack.c.0.s8 %v566
      %v568 = vlaneseq
      %v569 = vshrl.u32 %v568, 7
      %v570 = vsub.s32 %v567, %v569
      %v571 = vrot.slane %v557, %v570
      %v572 = vcombine.low %v540, %v555
      %v573 = vcombine.high %v540, %v555
      %v575 = vunpack.c.l.s4 1934713408
      %v576 = vunpack.c.0.s8 %v575
      %v577 = vlaneseq
      %v578 = vshrl.u32 %v577, 7
      %v579 = vsub.s32 %v576, %v578
      %v580 = vrot.slane %v572, %v579
      %v582 = vunpack.c.l.s4 1934713408
      %v583 = vunpack.c.0.s8 %v582
      %v584 = vlaneseq
      %v585 = vshrl.u32 %v584, 7
      %v586 = vsub.s32 %v583, %v585
      %v587 = vrot.slane %v573, %v586
      %v588 = vcombine.high %v564, 0.0
      %v589 = vcombine.high %v571, 0.0
      %v590 = vcombine.high %v580, 0.0
      %v591 = vcombine.high %v587, 0.0
      %v592 = vcombine.high %v460, 0.0
      %v594 = vunpack.c.l.s4 1983009808
      %v595 = vunpack.c.0.s8 %v594
      %v596 = vlaneseq
      %v597 = vshrl.u32 %v596, 7
      %v598 = vsub.s32 %v595, %v597
      %v599 = vrot.slane %v460, %v598
      %v601 = vunpack.c.l.s4 1983009808
      %v602 = vunpack.c.0.s8 %v601
      %v603 = vlaneseq
      %v604 = vshrl.u32 %v603, 7
      %v605 = vsub.s32 %v602, %v604
      %v606 = vrot.slane %v592, %v605
      %v607 = vcombine.high %v505, 0.0
      %v609 = vunpack.c.l.s4 1983009808
      %v610 = vunpack.c.0.s8 %v609
      %v611 = vlaneseq
      %v612 = vshrl.u32 %v611, 7
      %v613 = vsub.s32 %v610, %v612
      %v614 = vrot.slane %v505, %v613
      %v616 = vunpack.c.l.s4 1983009808
      %v617 = vunpack.c.0.s8 %v616
      %v618 = vlaneseq
      %v619 = vshrl.u32 %v618, 7
      %v620 = vsub.s32 %v617, %v619
      %v621 = vrot.slane %v607, %v620
      %v622 = vcombine.low %v599, %v614
      %v623 = vcombine.high %v599, %v614
      %v625 = vunpack.c.l.s4 1934713408
      %v626 = vunpack.c.0.s8 %v625
      %v627 = vlaneseq
      %v628 = vshrl.u32 %v627, 7
      %v629 = vsub.s32 %v626, %v628
      %v630 = vrot.slane %v622, %v629
      %v632 = vunpack.c.l.s4 1934713408
      %v633 = vunpack.c.0.s8 %v632
      %v634 = vlaneseq
      %v635 = vshrl.u32 %v634, 7
      %v636 = vsub.s32 %v633, %v635
      %v637 = vrot.slane %v623, %v636
      %v638 = vcombine.low %v606, %v621
      %v639 = vcombine.high %v606, %v621
      %v641 = vunpack.c.l.s4 1934713408
      %v642 = vunpack.c.0.s8 %v641
      %v643 = vlaneseq
      %v644 = vshrl.u32 %v643, 7
      %v645 = vsub.s32 %v642, %v644
      %v646 = vrot.slane %v638, %v645
      %v648 = vunpack.c.l.s4 1934713408
      %v649 = vunpack.c.0.s8 %v648
      %v650 = vlaneseq
      %v651 = vshrl.u32 %v650, 7
      %v652 = vsub.s32 %v649, %v651
      %v653 = vrot.slane %v639, %v652
      %v654 = vcombine.high %v630, 0.0
      %v655 = vcombine.high %v637, 0.0
      %v656 = vcombine.high %v646, 0.0
      %v657 = vcombine.high %v653, 0.0
      %v658 = vcombine.high %v466, 0.0
      %v660 = vunpack.c.l.s4 1983009808
      %v661 = vunpack.c.0.s8 %v660
      %v662 = vlaneseq
      %v663 = vshrl.u32 %v662, 7
      %v664 = vsub.s32 %v661, %v663
      %v665 = vrot.slane %v466, %v664
      %v667 = vunpack.c.l.s4 1983009808
      %v668 = vunpack.c.0.s8 %v667
      %v669 = vlaneseq
      %v670 = vshrl.u32 %v669, 7
      %v671 = vsub.s32 %v668, %v670
      %v672 = vrot.slane %v658, %v671
      %v673 = vcombine.high %v507, 0.0
      %v675 = vunpack.c.l.s4 1983009808
      %v676 = vunpack.c.0.s8 %v675
      %v677 = vlaneseq
      %v678 = vshrl.u32 %v677, 7
      %v679 = vsub.s32 %v676, %v678
      %v680 = vrot.slane %v507, %v679
      %v682 = vunpack.c.l.s4 1983009808
      %v683 = vunpack.c.0.s8 %v682
      %v684 = vlaneseq
      %v685 = vshrl.u32 %v684, 7
      %v686 = vsub.s32 %v683, %v685
      %v687 = vrot.slane %v673, %v686
      %v688 = vcombine.low %v665, %v680
      %v689 = vcombine.high %v665, %v680
      %v691 = vunpack.c.l.s4 1934713408
      %v692 = vunpack.c.0.s8 %v691
      %v693 = vlaneseq
      %v694 = vshrl.u32 %v693, 7
      %v695 = vsub.s32 %v692, %v694
      %v696 = vrot.slane %v688, %v695
      %v698 = vunpack.c.l.s4 1934713408
      %v699 = vunpack.c.0.s8 %v698
      %v700 = vlaneseq
      %v701 = vshrl.u32 %v700, 7
      %v702 = vsub.s32 %v699, %v701
      %v703 = vrot.slane %v689, %v702
      %v704 = vcombine.low %v672, %v687
      %v705 = vcombine.high %v672, %v687
      %v707 = vunpack.c.l.s4 1934713408
      %v708 = vunpack.c.0.s8 %v707
      %v709 = vlaneseq
      %v710 = vshrl.u32 %v709, 7
      %v711 = vsub.s32 %v708, %v710
      %v712 = vrot.slane %v704, %v711
      %v714 = vunpack.c.l.s4 1934713408
      %v715 = vunpack.c.0.s8 %v714
      %v716 = vlaneseq
      %v717 = vshrl.u32 %v716, 7
      %v718 = vsub.s32 %v715, %v717
      %v719 = vrot.slane %v705, %v718
      %v720 = vcombine.high %v696, 0.0
      %v721 = vcombine.high %v703, 0.0
      %v722 = vcombine.high %v712, 0.0
      %v723 = vcombine.high %v719, 0.0
      %v724 = vcombine.high %v470, 0.0
      %v726 = vunpack.c.l.s4 1983009808
      %v727 = vunpack.c.0.s8 %v726
      %v728 = vlaneseq
      %v729 = vshrl.u32 %v728, 7
      %v730 = vsub.s32 %v727, %v729
      %v731 = vrot.slane %v470, %v730
      %v733 = vunpack.c.l.s4 1983009808
      %v734 = vunpack.c.0.s8 %v733
      %v735 = vlaneseq
      %v736 = vshrl.u32 %v735, 7
      %v737 = vsub.s32 %v734, %v736
      %v738 = vrot.slane %v724, %v737
      %v739 = vcombine.high %v509, 0.0
      %v741 = vunpack.c.l.s4 1983009808
      %v742 = vunpack.c.0.s8 %v741
      %v743 = vlaneseq
      %v744 = vshrl.u32 %v743, 7
      %v745 = vsub.s32 %v742, %v744
      %v746 = vrot.slane %v509, %v745
      %v748 = vunpack.c.l.s4 1983009808
      %v749 = vunpack.c.0.s8 %v748
      %v750 = vlaneseq
      %v751 = vshrl.u32 %v750, 7
      %v752 = vsub.s32 %v749, %v751
      %v753 = vrot.slane %v739, %v752
      %v754 = vcombine.low %v731, %v746
      %v755 = vcombine.high %v731, %v746
      %v757 = vunpack.c.l.s4 1934713408
      %v758 = vunpack.c.0.s8 %v757
      %v759 = vlaneseq
      %v760 = vshrl.u32 %v759, 7
      %v761 = vsub.s32 %v758, %v760
      %v762 = vrot.slane %v754, %v761
      %v764 = vunpack.c.l.s4 1934713408
      %v765 = vunpack.c.0.s8 %v764
      %v766 = vlaneseq
      %v767 = vshrl.u32 %v766, 7
      %v768 = vsub.s32 %v765, %v767
      %v769 = vrot.slane %v755, %v768
      %v770 = vcombine.low %v738, %v753
      %v771 = vcombine.high %v738, %v753
      %v773 = vunpack.c.l.s4 1934713408
      %v774 = vunpack.c.0.s8 %v773
      %v775 = vlaneseq
      %v776 = vshrl.u32 %v775, 7
      %v777 = vsub.s32 %v774, %v776
      %v778 = vrot.slane %v770, %v777
      %v780 = vunpack.c.l.s4 1934713408
      %v781 = vunpack.c.0.s8 %v780
      %v782 = vlaneseq
      %v783 = vshrl.u32 %v782, 7
      %v784 = vsub.s32 %v781, %v783
      %v785 = vrot.slane %v771, %v784
      %v786 = vcombine.high %v762, 0.0
      %v787 = vcombine.high %v769, 0.0
      %v788 = vcombine.high %v778, 0.0
      %v789 = vcombine.high %v785, 0.0
      %v790 = vcombine.high %v476, 0.0
      %v792 = vunpack.c.l.s4 1983009808
      %v793 = vunpack.c.0.s8 %v792
      %v794 = vlaneseq
      %v795 = vshrl.u32 %v794, 7
      %v796 = vsub.s32 %v793, %v795
      %v797 = vrot.slane %v476, %v796
      %v799 = vunpack.c.l.s4 1983009808
      %v800 = vunpack.c.0.s8 %v799
      %v801 = vlaneseq
      %v802 = vshrl.u32 %v801, 7
      %v803 = vsub.s32 %v800, %v802
      %v804 = vrot.slane %v790, %v803
      %v805 = vcombine.high %v511, 0.0
      %v807 = vunpack.c.l.s4 1983009808
      %v808 = vunpack.c.0.s8 %v807
      %v809 = vlaneseq
      %v810 = vshrl.u32 %v809, 7
      %v811 = vsub.s32 %v808, %v810
      %v812 = vrot.slane %v511, %v811
      %v814 = vunpack.c.l.s4 1983009808
      %v815 = vunpack.c.0.s8 %v814
      %v816 = vlaneseq
      %v817 = vshrl.u32 %v816, 7
      %v818 = vsub.s32 %v815, %v817
      %v819 = vrot.slane %v805, %v818
      %v820 = vcombine.low %v797, %v812
      %v821 = vcombine.high %v797, %v812
      %v823 = vunpack.c.l.s4 1934713408
      %v824 = vunpack.c.0.s8 %v823
      %v825 = vlaneseq
      %v826 = vshrl.u32 %v825, 7
      %v827 = vsub.s32 %v824, %v826
      %v828 = vrot.slane %v820, %v827
      %v830 = vunpack.c.l.s4 1934713408
      %v831 = vunpack.c.0.s8 %v830
      %v832 = vlaneseq
      %v833 = vshrl.u32 %v832, 7
      %v834 = vsub.s32 %v831, %v833
      %v835 = vrot.slane %v821, %v834
      %v836 = vcombine.low %v804, %v819
      %v837 = vcombine.high %v804, %v819
      %v839 = vunpack.c.l.s4 1934713408
      %v840 = vunpack.c.0.s8 %v839
      %v841 = vlaneseq
      %v842 = vshrl.u32 %v841, 7
      %v843 = vsub.s32 %v840, %v842
      %v844 = vrot.slane %v836, %v843
      %v846 = vunpack.c.l.s4 1934713408
      %v847 = vunpack.c.0.s8 %v846
      %v848 = vlaneseq
      %v849 = vshrl.u32 %v848, 7
      %v850 = vsub.s32 %v847, %v849
      %v851 = vrot.slane %v837, %v850
      %v852 = vcombine.high %v828, 0.0
      %v853 = vcombine.high %v835, 0.0
      %v854 = vcombine.high %v844, 0.0
      %v855 = vcombine.high %v851, 0.0
      %v856 = vcombine.high %v480, 0.0
      %v858 = vunpack.c.l.s4 1983009808
      %v859 = vunpack.c.0.s8 %v858
      %v860 = vlaneseq
      %v861 = vshrl.u32 %v860, 7
      %v862 = vsub.s32 %v859, %v861
      %v863 = vrot.slane %v480, %v862
      %v865 = vunpack.c.l.s4 1983009808
      %v866 = vunpack.c.0.s8 %v865
      %v867 = vlaneseq
      %v868 = vshrl.u32 %v867, 7
      %v869 = vsub.s32 %v866, %v868
      %v870 = vrot.slane %v856, %v869
      %v871 = vcombine.high %v513, 0.0
      %v873 = vunpack.c.l.s4 1983009808
      %v874 = vunpack.c.0.s8 %v873
      %v875 = vlaneseq
      %v876 = vshrl.u32 %v875, 7
      %v877 = vsub.s32 %v874, %v876
      %v878 = vrot.slane %v513, %v877
      %v880 = vunpack.c.l.s4 1983009808
      %v881 = vunpack.c.0.s8 %v880
      %v882 = vlaneseq
      %v883 = vshrl.u32 %v882, 7
      %v884 = vsub.s32 %v881, %v883
      %v885 = vrot.slane %v871, %v884
      %v886 = vcombine.low %v863, %v878
      %v887 = vcombine.high %v863, %v878
      %v889 = vunpack.c.l.s4 1934713408
      %v890 = vunpack.c.0.s8 %v889
      %v891 = vlaneseq
      %v892 = vshrl.u32 %v891, 7
      %v893 = vsub.s32 %v890, %v892
      %v894 = vrot.slane %v886, %v893
      %v896 = vunpack.c.l.s4 1934713408
      %v897 = vunpack.c.0.s8 %v896
      %v898 = vlaneseq
      %v899 = vshrl.u32 %v898, 7
      %v900 = vsub.s32 %v897, %v899
      %v901 = vrot.slane %v887, %v900
      %v902 = vcombine.low %v870, %v885
      %v903 = vcombine.high %v870, %v885
      %v905 = vunpack.c.l.s4 1934713408
      %v906 = vunpack.c.0.s8 %v905
      %v907 = vlaneseq
      %v908 = vshrl.u32 %v907, 7
      %v909 = vsub.s32 %v906, %v908
      %v910 = vrot.slane %v902, %v909
      %v912 = vunpack.c.l.s4 1934713408
      %v913 = vunpack.c.0.s8 %v912
      %v914 = vlaneseq
      %v915 = vshrl.u32 %v914, 7
      %v916 = vsub.s32 %v913, %v915
      %v917 = vrot.slane %v903, %v916
      %v918 = vcombine.high %v894, 0.0
      %v919 = vcombine.high %v901, 0.0
      %v920 = vcombine.high %v910, 0.0
      %v921 = vcombine.high %v917, 0.0
      %v922 = vcombine.high %v486, 0.0
      %v924 = vunpack.c.l.s4 1983009808
      %v925 = vunpack.c.0.s8 %v924
      %v926 = vlaneseq
      %v927 = vshrl.u32 %v926, 7
      %v928 = vsub.s32 %v925, %v927
      %v929 = vrot.slane %v486, %v928
      %v931 = vunpack.c.l.s4 1983009808
      %v932 = vunpack.c.0.s8 %v931
      %v933 = vlaneseq
      %v934 = vshrl.u32 %v933, 7
      %v935 = vsub.s32 %v932, %v934
      %v936 = vrot.slane %v922, %v935
      %v937 = vcombine.high %v515, 0.0
      %v939 = vunpack.c.l.s4 1983009808
      %v940 = vunpack.c.0.s8 %v939
      %v941 = vlaneseq
      %v942 = vshrl.u32 %v941, 7
      %v943 = vsub.s32 %v940, %v942
      %v944 = vrot.slane %v515, %v943
      %v946 = vunpack.c.l.s4 1983009808
      %v947 = vunpack.c.0.s8 %v946
      %v948 = vlaneseq
      %v949 = vshrl.u32 %v948, 7
      %v950 = vsub.s32 %v947, %v949
      %v951 = vrot.slane %v937, %v950
      %v952 = vcombine.low %v929, %v944
      %v953 = vcombine.high %v929, %v944
      %v955 = vunpack.c.l.s4 1934713408
      %v956 = vunpack.c.0.s8 %v955
      %v957 = vlaneseq
      %v958 = vshrl.u32 %v957, 7
      %v959 = vsub.s32 %v956, %v958
      %v960 = vrot.slane %v952, %v959
      %v962 = vunpack.c.l.s4 1934713408
      %v963 = vunpack.c.0.s8 %v962
      %v964 = vlaneseq
      %v965 = vshrl.u32 %v964, 7
      %v966 = vsub.s32 %v963, %v965
      %v967 = vrot.slane %v953, %v966
      %v968 = vcombine.low %v936, %v951
      %v969 = vcombine.high %v936, %v951
      %v971 = vunpack.c.l.s4 1934713408
      %v972 = vunpack.c.0.s8 %v971
      %v973 = vlaneseq
      %v974 = vshrl.u32 %v973, 7
      %v975 = vsub.s32 %v972, %v974
      %v976 = vrot.slane %v968, %v975
      %v978 = vunpack.c.l.s4 1934713408
      %v979 = vunpack.c.0.s8 %v978
      %v980 = vlaneseq
      %v981 = vshrl.u32 %v980, 7
      %v982 = vsub.s32 %v979, %v981
      %v983 = vrot.slane %v969, %v982
      %v984 = vcombine.high %v960, 0.0
      %v985 = vcombine.high %v967, 0.0
      %v986 = vcombine.high %v976, 0.0
      %v987 = vcombine.high %v983, 0.0
      %v988 = vcombine.high %v490, 0.0
      %v990 = vunpack.c.l.s4 1983009808
      %v991 = vunpack.c.0.s8 %v990
      %v992 = vlaneseq
      %v993 = vshrl.u32 %v992, 7
      %v994 = vsub.s32 %v991, %v993
      %v995 = vrot.slane %v490, %v994
      %v997 = vunpack.c.l.s4 1983009808
      %v998 = vunpack.c.0.s8 %v997
      %v999 = vlaneseq
      %v1000 = vshrl.u32 %v999, 7
      %v1001 = vsub.s32 %v998, %v1000
      %v1002 = vrot.slane %v988, %v1001
      %v1003 = vcombine.high %v517, 0.0
      %v1005 = vunpack.c.l.s4 1983009808
      %v1006 = vunpack.c.0.s8 %v1005
      %v1007 = vlaneseq
      %v1008 = vshrl.u32 %v1007, 7
      %v1009 = vsub.s32 %v1006, %v1008
      %v1010 = vrot.slane %v517, %v1009
      %v1012 = vunpack.c.l.s4 1983009808
      %v1013 = vunpack.c.0.s8 %v1012
      %v1014 = vlaneseq
      %v1015 = vshrl.u32 %v1014, 7
      %v1016 = vsub.s32 %v1013, %v1015
      %v1017 = vrot.slane %v1003, %v1016
      %v1018 = vcombine.low %v995, %v1010
      %v1019 = vcombine.high %v995, %v1010
      %v1021 = vunpack.c.l.s4 1934713408
      %v1022 = vunpack.c.0.s8 %v1021
      %v1023 = vlaneseq
      %v1024 = vshrl.u32 %v1023, 7
      %v1025 = vsub.s32 %v1022, %v1024
      %v1026 = vrot.slane %v1018, %v1025
      %v1028 = vunpack.c.l.s4 1934713408
      %v1029 = vunpack.c.0.s8 %v1028
      %v1030 = vlaneseq
      %v1031 = vshrl.u32 %v1030, 7
      %v1032 = vsub.s32 %v1029, %v1031
      %v1033 = vrot.slane %v1019, %v1032
      %v1034 = vcombine.low %v1002, %v1017
      %v1035 = vcombine.high %v1002, %v1017
      %v1037 = vunpack.c.l.s4 1934713408
      %v1038 = vunpack.c.0.s8 %v1037
      %v1039 = vlaneseq
      %v1040 = vshrl.u32 %v1039, 7
      %v1041 = vsub.s32 %v1038, %v1040
      %v1042 = vrot.slane %v1034, %v1041
      %v1044 = vunpack.c.l.s4 1934713408
      %v1045 = vunpack.c.0.s8 %v1044
      %v1046 = vlaneseq
      %v1047 = vshrl.u32 %v1046, 7
      %v1048 = vsub.s32 %v1045, %v1047
      %v1049 = vrot.slane %v1035, %v1048
      %v1050 = vcombine.high %v1026, 0.0
      %v1051 = vcombine.high %v1033, 0.0
      %v1052 = vcombine.high %v1042, 0.0
      %v1053 = vcombine.high %v1049, 0.0
      %v1054 = vcombine.low %v564, %v571
      %v1056 = vunpack.c.l.s4 1983009808
      %v1057 = vunpack.c.0.s8 %v1056
      %v1058 = vlaneseq
      %v1059 = vshrl.u32 %v1058, 7
      %v1060 = vsub.s32 %v1057, %v1059
      %v1061 = vrot.slane %v1054, %v1060
      %v1062 = vcombine.low %v588, %v589
      %v1064 = vunpack.c.l.s4 1983009808
      %v1065 = vunpack.c.0.s8 %v1064
      %v1066 = vlaneseq
      %v1067 = vshrl.u32 %v1066, 7
      %v1068 = vsub.s32 %v1065, %v1067
      %v1069 = vrot.slane %v1062, %v1068
      %v1070 = vcombine.low %v580, %v587
      %v1072 = vunpack.c.l.s4 1983009808
      %v1073 = vunpack.c.0.s8 %v1072
      %v1074 = vlaneseq
      %v1075 = vshrl.u32 %v1074, 7
      %v1076 = vsub.s32 %v1073, %v1075
      %v1077 = vrot.slane %v1070, %v1076
      %v1078 = vcombine.low %v590, %v591
      %v1080 = vunpack.c.l.s4 1983009808
      %v1081 = vunpack.c.0.s8 %v1080
      %v1082 = vlaneseq
      %v1083 = vshrl.u32 %v1082, 7
      %v1084 = vsub.s32 %v1081, %v1083
      %v1085 = vrot.slane %v1078, %v1084
      %v1086 = vcombine.low %v1061, %v1069
      %v1088 = vunpack.c.l.s4 1934713408
      %v1089 = vunpack.c.0.s8 %v1088
      %v1090 = vlaneseq
      %v1091 = vshrl.u32 %v1090, 7
      %v1092 = vsub.s32 %v1089, %v1091
      %v1093 = vrot.slane %v1086, %v1092
      %v1094 = vcombine.low %v1077, %v1085
      %v1096 = vunpack.c.l.s4 1934713408
      %v1097 = vunpack.c.0.s8 %v1096
      %v1098 = vlaneseq
      %v1099 = vshrl.u32 %v1098, 7
      %v1100 = vsub.s32 %v1097, %v1099
      %v1101 = vrot.slane %v1094, %v1100
      %v1102 = vcombine.low %v1093, %v1101
      %v1103 = vcombine.high %v1093, %v1101
      %v1104 = vcombine.low %v630, %v637
      %v1106 = vunpack.c.l.s4 1983009808
      %v1107 = vunpack.c.0.s8 %v1106
      %v1108 = vlaneseq
      %v1109 = vshrl.u32 %v1108, 7
      %v1110 = vsub.s32 %v1107, %v1109
      %v1111 = vrot.slane %v1104, %v1110
      %v1112 = vcombine.low %v654, %v655
      %v1114 = vunpack.c.l.s4 1983009808
      %v1115 = vunpack.c.0.s8 %v1114
      %v1116 = vlaneseq
      %v1117 = vshrl.u32 %v1116, 7
      %v1118 = vsub.s32 %v1115, %v1117
      %v1119 = vrot.slane %v1112, %v1118
      %v1120 = vcombine.low %v646, %v653
      %v1122 = vunpack.c.l.s4 1983009808
      %v1123 = vunpack.c.0.s8 %v1122
      %v1124 = vlaneseq
      %v1125 = vshrl.u32 %v1124, 7
      %v1126 = vsub.s32 %v1123, %v1125
      %v1127 = vrot.slane %v1120, %v1126
      %v1128 = vcombine.low %v656, %v657
      %v1130 = vunpack.c.l.s4 1983009808
      %v1131 = vunpack.c.0.s8 %v1130
      %v1132 = vlaneseq
      %v1133 = vshrl.u32 %v1132, 7
      %v1134 = vsub.s32 %v1131, %v1133
      %v1135 = vrot.slane %v1128, %v1134
      %v1136 = vcombine.low %v1111, %v1119
      %v1138 = vunpack.c.l.s4 1934713408
      %v1139 = vunpack.c.0.s8 %v1138
      %v1140 = vlaneseq
      %v1141 = vshrl.u32 %v1140, 7
      %v1142 = vsub.s32 %v1139, %v1141
      %v1143 = vrot.slane %v1136, %v1142
      %v1144 = vcombine.low %v1127, %v1135
      %v1146 = vunpack.c.l.s4 1934713408
      %v1147 = vunpack.c.0.s8 %v1146
      %v1148 = vlaneseq
      %v1149 = vshrl.u32 %v1148, 7
      %v1150 = vsub.s32 %v1147, %v1149
      %v1151 = vrot.slane %v1144, %v1150
      %v1152 = vcombine.low %v1143, %v1151
      %v1153 = vcombine.high %v1143, %v1151
      %v1154 = vcombine.low %v696, %v703
      %v1156 = vunpack.c.l.s4 1983009808
      %v1157 = vunpack.c.0.s8 %v1156
      %v1158 = vlaneseq
      %v1159 = vshrl.u32 %v1158, 7
      %v1160 = vsub.s32 %v1157, %v1159
      %v1161 = vrot.slane %v1154, %v1160
      %v1162 = vcombine.low %v720, %v721
      %v1164 = vunpack.c.l.s4 1983009808
      %v1165 = vunpack.c.0.s8 %v1164
      %v1166 = vlaneseq
      %v1167 = vshrl.u32 %v1166, 7
      %v1168 = vsub.s32 %v1165, %v1167
      %v1169 = vrot.slane %v1162, %v1168
      %v1170 = vcombine.low %v712, %v719
      %v1172 = vunpack.c.l.s4 1983009808
      %v1173 = vunpack.c.0.s8 %v1172
      %v1174 = vlaneseq
      %v1175 = vshrl.u32 %v1174, 7
      %v1176 = vsub.s32 %v1173, %v1175
      %v1177 = vrot.slane %v1170, %v1176
      %v1178 = vcombine.low %v722, %v723
      %v1180 = vunpack.c.l.s4 1983009808
      %v1181 = vunpack.c.0.s8 %v1180
      %v1182 = vlaneseq
      %v1183 = vshrl.u32 %v1182, 7
      %v1184 = vsub.s32 %v1181, %v1183
      %v1185 = vrot.slane %v1178, %v1184
      %v1186 = vcombine.low %v1161, %v1169
      %v1188 = vunpack.c.l.s4 1934713408
      %v1189 = vunpack.c.0.s8 %v1188
      %v1190 = vlaneseq
      %v1191 = vshrl.u32 %v1190, 7
      %v1192 = vsub.s32 %v1189, %v1191
      %v1193 = vrot.slane %v1186, %v1192
      %v1194 = vcombine.low %v1177, %v1185
      %v1196 = vunpack.c.l.s4 1934713408
      %v1197 = vunpack.c.0.s8 %v1196
      %v1198 = vlaneseq
      %v1199 = vshrl.u32 %v1198, 7
      %v1200 = vsub.s32 %v1197, %v1199
      %v1201 = vrot.slane %v1194, %v1200
      %v1202 = vcombine.low %v1193, %v1201
      %v1203 = vcombine.high %v1193, %v1201
      %v1204 = vcombine.low %v762, %v769
      %v1206 = vunpack.c.l.s4 1983009808
      %v1207 = vunpack.c.0.s8 %v1206
      %v1208 = vlaneseq
      %v1209 = vshrl.u32 %v1208, 7
      %v1210 = vsub.s32 %v1207, %v1209
      %v1211 = vrot.slane %v1204, %v1210
      %v1212 = vcombine.low %v786, %v787
      %v1214 = vunpack.c.l.s4 1983009808
      %v1215 = vunpack.c.0.s8 %v1214
      %v1216 = vlaneseq
      %v1217 = vshrl.u32 %v1216, 7
      %v1218 = vsub.s32 %v1215, %v1217
      %v1219 = vrot.slane %v1212, %v1218
      %v1220 = vcombine.low %v778, %v785
      %v1222 = vunpack.c.l.s4 1983009808
      %v1223 = vunpack.c.0.s8 %v1222
      %v1224 = vlaneseq
      %v1225 = vshrl.u32 %v1224, 7
      %v1226 = vsub.s32 %v1223, %v1225
      %v1227 = vrot.slane %v1220, %v1226
      %v1228 = vcombine.low %v788, %v789
      %v1230 = vunpack.c.l.s4 1983009808
      %v1231 = vunpack.c.0.s8 %v1230
      %v1232 = vlaneseq
      %v1233 = vshrl.u32 %v1232, 7
      %v1234 = vsub.s32 %v1231, %v1233
      %v1235 = vrot.slane %v1228, %v1234
      %v1236 = vcombine.low %v1211, %v1219
      %v1238 = vunpack.c.l.s4 1934713408
      %v1239 = vunpack.c.0.s8 %v1238
      %v1240 = vlaneseq
      %v1241 = vshrl.u32 %v1240, 7
      %v1242 = vsub.s32 %v1239, %v1241
      %v1243 = vrot.slane %v1236, %v1242
      %v1244 = vcombine.low %v1227, %v1235
      %v1246 = vunpack.c.l.s4 1934713408
      %v1247 = vunpack.c.0.s8 %v1246
      %v1248 = vlaneseq
      %v1249 = vshrl.u32 %v1248, 7
      %v1250 = vsub.s32 %v1247, %v1249
      %v1251 = vrot.slane %v1244, %v1250
      %v1252 = vcombine.low %v1243, %v1251
      %v1253 = vcombine.high %v1243, %v1251
      %v1254 = vcombine.low %v828, %v835
      %v1256 = vunpack.c.l.s4 1983009808
      %v1257 = vunpack.c.0.s8 %v1256
      %v1258 = vlaneseq
      %v1259 = vshrl.u32 %v1258, 7
      %v1260 = vsub.s32 %v1257, %v1259
      %v1261 = vrot.slane %v1254, %v1260
      %v1262 = vcombine.low %v852, %v853
      %v1264 = vunpack.c.l.s4 1983009808
      %v1265 = vunpack.c.0.s8 %v1264
      %v1266 = vlaneseq
      %v1267 = vshrl.u32 %v1266, 7
      %v1268 = vsub.s32 %v1265, %v1267
      %v1269 = vrot.slane %v1262, %v1268
      %v1270 = vcombine.low %v844, %v851
      %v1272 = vunpack.c.l.s4 1983009808
      %v1273 = vunpack.c.0.s8 %v1272
      %v1274 = vlaneseq
      %v1275 = vshrl.u32 %v1274, 7
      %v1276 = vsub.s32 %v1273, %v1275
      %v1277 = vrot.slane %v1270, %v1276
      %v1278 = vcombine.low %v854, %v855
      %v1280 = vunpack.c.l.s4 1983009808
      %v1281 = vunpack.c.0.s8 %v1280
      %v1282 = vlaneseq
      %v1283 = vshrl.u32 %v1282, 7
      %v1284 = vsub.s32 %v1281, %v1283
      %v1285 = vrot.slane %v1278, %v1284
      %v1286 = vcombine.low %v1261, %v1269
      %v1288 = vunpack.c.l.s4 1934713408
      %v1289 = vunpack.c.0.s8 %v1288
      %v1290 = vlaneseq
      %v1291 = vshrl.u32 %v1290, 7
      %v1292 = vsub.s32 %v1289, %v1291
      %v1293 = vrot.slane %v1286, %v1292
      %v1294 = vcombine.low %v1277, %v1285
      %v1296 = vunpack.c.l.s4 1934713408
      %v1297 = vunpack.c.0.s8 %v1296
      %v1298 = vlaneseq
      %v1299 = vshrl.u32 %v1298, 7
      %v1300 = vsub.s32 %v1297, %v1299
      %v1301 = vrot.slane %v1294, %v1300
      %v1302 = vcombine.low %v1293, %v1301
      %v1303 = vcombine.high %v1293, %v1301
      %v1304 = vcombine.low %v894, %v901
      %v1306 = vunpack.c.l.s4 1983009808
      %v1307 = vunpack.c.0.s8 %v1306
      %v1308 = vlaneseq
      %v1309 = vshrl.u32 %v1308, 7
      %v1310 = vsub.s32 %v1307, %v1309
      %v1311 = vrot.slane %v1304, %v1310
      %v1312 = vcombine.low %v918, %v919
      %v1314 = vunpack.c.l.s4 1983009808
      %v1315 = vunpack.c.0.s8 %v1314
      %v1316 = vlaneseq
      %v1317 = vshrl.u32 %v1316, 7
      %v1318 = vsub.s32 %v1315, %v1317
      %v1319 = vrot.slane %v1312, %v1318
      %v1320 = vcombine.low %v910, %v917
      %v1322 = vunpack.c.l.s4 1983009808
      %v1323 = vunpack.c.0.s8 %v1322
      %v1324 = vlaneseq
      %v1325 = vshrl.u32 %v1324, 7
      %v1326 = vsub.s32 %v1323, %v1325
      %v1327 = vrot.slane %v1320, %v1326
      %v1328 = vcombine.low %v920, %v921
      %v1330 = vunpack.c.l.s4 1983009808
      %v1331 = vunpack.c.0.s8 %v1330
      %v1332 = vlaneseq
      %v1333 = vshrl.u32 %v1332, 7
      %v1334 = vsub.s32 %v1331, %v1333
      %v1335 = vrot.slane %v1328, %v1334
      %v1336 = vcombine.low %v1311, %v1319
      %v1338 = vunpack.c.l.s4 1934713408
      %v1339 = vunpack.c.0.s8 %v1338
      %v1340 = vlaneseq
      %v1341 = vshrl.u32 %v1340, 7
      %v1342 = vsub.s32 %v1339, %v1341
      %v1343 = vrot.slane %v1336, %v1342
      %v1344 = vcombine.low %v1327, %v1335
      %v1346 = vunpack.c.l.s4 1934713408
      %v1347 = vunpack.c.0.s8 %v1346
      %v1348 = vlaneseq
      %v1349 = vshrl.u32 %v1348, 7
      %v1350 = vsub.s32 %v1347, %v1349
      %v1351 = vrot.slane %v1344, %v1350
      %v1352 = vcombine.low %v1343, %v1351
      %v1353 = vcombine.high %v1343, %v1351
      %v1354 = vcombine.low %v960, %v967
      %v1356 = vunpack.c.l.s4 1983009808
      %v1357 = vunpack.c.0.s8 %v1356
      %v1358 = vlaneseq
      %v1359 = vshrl.u32 %v1358, 7
      %v1360 = vsub.s32 %v1357, %v1359
      %v1361 = vrot.slane %v1354, %v1360
      %v1362 = vcombine.low %v984, %v985
      %v1364 = vunpack.c.l.s4 1983009808
      %v1365 = vunpack.c.0.s8 %v1364
      %v1366 = vlaneseq
      %v1367 = vshrl.u32 %v1366, 7
      %v1368 = vsub.s32 %v1365, %v1367
      %v1369 = vrot.slane %v1362, %v1368
      %v1370 = vcombine.low %v976, %v983
      %v1372 = vunpack.c.l.s4 1983009808
      %v1373 = vunpack.c.0.s8 %v1372
      %v1374 = vlaneseq
      %v1375 = vshrl.u32 %v1374, 7
      %v1376 = vsub.s32 %v1373, %v1375
      %v1377 = vrot.slane %v1370, %v1376
      %v1378 = vcombine.low %v986, %v987
      %v1380 = vunpack.c.l.s4 1983009808
      %v1381 = vunpack.c.0.s8 %v1380
      %v1382 = vlaneseq
      %v1383 = vshrl.u32 %v1382, 7
      %v1384 = vsub.s32 %v1381, %v1383
      %v1385 = vrot.slane %v1378, %v1384
      %v1386 = vcombine.low %v1361, %v1369
      %v1388 = vunpack.c.l.s4 1934713408
      %v1389 = vunpack.c.0.s8 %v1388
      %v1390 = vlaneseq
      %v1391 = vshrl.u32 %v1390, 7
      %v1392 = vsub.s32 %v1389, %v1391
      %v1393 = vrot.slane %v1386, %v1392
      %v1394 = vcombine.low %v1377, %v1385
      %v1396 = vunpack.c.l.s4 1934713408
      %v1397 = vunpack.c.0.s8 %v1396
      %v1398 = vlaneseq
      %v1399 = vshrl.u32 %v1398, 7
      %v1400 = vsub.s32 %v1397, %v1399
      %v1401 = vrot.slane %v1394, %v1400
      %v1402 = vcombine.low %v1393, %v1401
      %v1403 = vcombine.high %v1393, %v1401
      %v1404 = vcombine.low %v1026, %v1033
      %v1406 = vunpack.c.l.s4 1983009808
      %v1407 = vunpack.c.0.s8 %v1406
      %v1408 = vlaneseq
      %v1409 = vshrl.u32 %v1408, 7
      %v1410 = vsub.s32 %v1407, %v1409
      %v1411 = vrot.slane %v1404, %v1410
      %v1412 = vcombine.low %v1050, %v1051
      %v1414 = vunpack.c.l.s4 1983009808
      %v1415 = vunpack.c.0.s8 %v1414
      %v1416 = vlaneseq
      %v1417 = vshrl.u32 %v1416, 7
      %v1418 = vsub.s32 %v1415, %v1417
      %v1419 = vrot.slane %v1412, %v1418
      %v1420 = vcombine.low %v1042, %v1049
      %v1422 = vunpack.c.l.s4 1983009808
      %v1423 = vunpack.c.0.s8 %v1422
      %v1424 = vlaneseq
      %v1425 = vshrl.u32 %v1424, 7
      %v1426 = vsub.s32 %v1423, %v1425
      %v1427 = vrot.slane %v1420, %v1426
      %v1428 = vcombine.low %v1052, %v1053
      %v1430 = vunpack.c.l.s4 1983009808
      %v1431 = vunpack.c.0.s8 %v1430
      %v1432 = vlaneseq
      %v1433 = vshrl.u32 %v1432, 7
      %v1434 = vsub.s32 %v1431, %v1433
      %v1435 = vrot.slane %v1428, %v1434
      %v1436 = vcombine.low %v1411, %v1419
      %v1438 = vunpack.c.l.s4 1934713408
      %v1439 = vunpack.c.0.s8 %v1438
      %v1440 = vlaneseq
      %v1441 = vshrl.u32 %v1440, 7
      %v1442 = vsub.s32 %v1439, %v1441
      %v1443 = vrot.slane %v1436, %v1442
      %v1444 = vcombine.low %v1427, %v1435
      %v1446 = vunpack.c.l.s4 1934713408
      %v1447 = vunpack.c.0.s8 %v1446
      %v1448 = vlaneseq
      %v1449 = vshrl.u32 %v1448, 7
      %v1450 = vsub.s32 %v1447, %v1449
      %v1451 = vrot.slane %v1444, %v1450
      %v1452 = vcombine.low %v1443, %v1451
      %v1453 = vcombine.high %v1443, %v1451
      %v1454 = vpack.c.bf16 %v1152, %v1102
      %v1455 = vpack.c.bf16 %v1252, %v1202
      %v1456 = vpack.c.bf16 %v1352, %v1302
      %v1457 = vpack.c.bf16 %v1452, %v1402
      %v1458 = vpack.c.bf16 %v1153, %v1103
      %v1459 = vpack.c.bf16 %v1253, %v1203
      %v1460 = vpack.c.bf16 %v1353, %v1303
      %v1461 = vpack.c.bf16 %v1453, %v1403
      %1462 = vrot.lane.b32.xlu0 %v456, 64
      %v1463 = vpop.permute.xlu0 %1462
      %1464 = vrot.lane.b32.xlu0 %v460, 64
      %v1465 = vpop.permute.xlu0 %1464
      %1466 = vrot.lane.b32.xlu0 %v466, 64
      %v1467 = vpop.permute.xlu0 %1466
      %1468 = vrot.lane.b32.xlu0 %v470, 64
      %v1469 = vpop.permute.xlu0 %1468
      %1470 = vrot.lane.b32.xlu0 %v476, 64
      %v1471 = vpop.permute.xlu0 %1470
      %1472 = vrot.lane.b32.xlu0 %v480, 64
      %v1473 = vpop.permute.xlu0 %1472
      %1474 = vrot.lane.b32.xlu0 %v486, 64
      %v1475 = vpop.permute.xlu0 %1474
      %1476 = vrot.lane.b32.xlu0 %v490, 64
      %v1477 = vpop.permute.xlu0 %1476
      %1478 = vrot.lane.b32.xlu0 %v503, 64
      %v1479 = vpop.permute.xlu0 %1478
      %1480 = vrot.lane.b32.xlu0 %v505, 64
      %v1481 = vpop.permute.xlu0 %1480
      %1482 = vrot.lane.b32.xlu0 %v507, 64
      %v1483 = vpop.permute.xlu0 %1482
      %1484 = vrot.lane.b32.xlu0 %v509, 64
      %v1485 = vpop.permute.xlu0 %1484
      %1486 = vrot.lane.b32.xlu0 %v511, 64
      %v1487 = vpop.permute.xlu0 %1486
      %1488 = vrot.lane.b32.xlu0 %v513, 64
      %v1489 = vpop.permute.xlu0 %1488
      %1490 = vrot.lane.b32.xlu0 %v515, 64
      %v1491 = vpop.permute.xlu0 %1490
      %1492 = vrot.lane.b32.xlu0 %v517, 64
      %v1493 = vpop.permute.xlu0 %1492
      %v1510 = vcombine.high %v1463, 0.0
      %v1512 = vunpack.c.l.s4 1983009808
      %v1513 = vunpack.c.0.s8 %v1512
      %v1514 = vlaneseq
      %v1515 = vshrl.u32 %v1514, 7
      %v1516 = vsub.s32 %v1513, %v1515
      %v1517 = vrot.slane %v1463, %v1516
      %v1519 = vunpack.c.l.s4 1983009808
      %v1520 = vunpack.c.0.s8 %v1519
      %v1521 = vlaneseq
      %v1522 = vshrl.u32 %v1521, 7
      %v1523 = vsub.s32 %v1520, %v1522
      %v1524 = vrot.slane %v1510, %v1523
      %v1525 = vcombine.high %v1479, 0.0
      %v1527 = vunpack.c.l.s4 1983009808
      %v1528 = vunpack.c.0.s8 %v1527
      %v1529 = vlaneseq
      %v1530 = vshrl.u32 %v1529, 7
      %v1531 = vsub.s32 %v1528, %v1530
      %v1532 = vrot.slane %v1479, %v1531
      %v1534 = vunpack.c.l.s4 1983009808
      %v1535 = vunpack.c.0.s8 %v1534
      %v1536 = vlaneseq
      %v1537 = vshrl.u32 %v1536, 7
      %v1538 = vsub.s32 %v1535, %v1537
      %v1539 = vrot.slane %v1525, %v1538
      %v1540 = vcombine.low %v1517, %v1532
      %v1541 = vcombine.high %v1517, %v1532
      %v1543 = vunpack.c.l.s4 1934713408
      %v1544 = vunpack.c.0.s8 %v1543
      %v1545 = vlaneseq
      %v1546 = vshrl.u32 %v1545, 7
      %v1547 = vsub.s32 %v1544, %v1546
      %v1548 = vrot.slane %v1540, %v1547
      %v1550 = vunpack.c.l.s4 1934713408
      %v1551 = vunpack.c.0.s8 %v1550
      %v1552 = vlaneseq
      %v1553 = vshrl.u32 %v1552, 7
      %v1554 = vsub.s32 %v1551, %v1553
      %v1555 = vrot.slane %v1541, %v1554
      %v1556 = vcombine.low %v1524, %v1539
      %v1557 = vcombine.high %v1524, %v1539
      %v1559 = vunpack.c.l.s4 1934713408
      %v1560 = vunpack.c.0.s8 %v1559
      %v1561 = vlaneseq
      %v1562 = vshrl.u32 %v1561, 7
      %v1563 = vsub.s32 %v1560, %v1562
      %v1564 = vrot.slane %v1556, %v1563
      %v1566 = vunpack.c.l.s4 1934713408
      %v1567 = vunpack.c.0.s8 %v1566
      %v1568 = vlaneseq
      %v1569 = vshrl.u32 %v1568, 7
      %v1570 = vsub.s32 %v1567, %v1569
      %v1571 = vrot.slane %v1557, %v1570
      %v1572 = vcombine.high %v1548, 0.0
      %v1573 = vcombine.high %v1555, 0.0
      %v1574 = vcombine.high %v1564, 0.0
      %v1575 = vcombine.high %v1571, 0.0
      %v1576 = vcombine.high %v1465, 0.0
      %v1578 = vunpack.c.l.s4 1983009808
      %v1579 = vunpack.c.0.s8 %v1578
      %v1580 = vlaneseq
      %v1581 = vshrl.u32 %v1580, 7
      %v1582 = vsub.s32 %v1579, %v1581
      %v1583 = vrot.slane %v1465, %v1582
      %v1585 = vunpack.c.l.s4 1983009808
      %v1586 = vunpack.c.0.s8 %v1585
      %v1587 = vlaneseq
      %v1588 = vshrl.u32 %v1587, 7
      %v1589 = vsub.s32 %v1586, %v1588
      %v1590 = vrot.slane %v1576, %v1589
      %v1591 = vcombine.high %v1481, 0.0
      %v1593 = vunpack.c.l.s4 1983009808
      %v1594 = vunpack.c.0.s8 %v1593
      %v1595 = vlaneseq
      %v1596 = vshrl.u32 %v1595, 7
      %v1597 = vsub.s32 %v1594, %v1596
      %v1598 = vrot.slane %v1481, %v1597
      %v1600 = vunpack.c.l.s4 1983009808
      %v1601 = vunpack.c.0.s8 %v1600
      %v1602 = vlaneseq
      %v1603 = vshrl.u32 %v1602, 7
      %v1604 = vsub.s32 %v1601, %v1603
      %v1605 = vrot.slane %v1591, %v1604
      %v1606 = vcombine.low %v1583, %v1598
      %v1607 = vcombine.high %v1583, %v1598
      %v1609 = vunpack.c.l.s4 1934713408
      %v1610 = vunpack.c.0.s8 %v1609
      %v1611 = vlaneseq
      %v1612 = vshrl.u32 %v1611, 7
      %v1613 = vsub.s32 %v1610, %v1612
      %v1614 = vrot.slane %v1606, %v1613
      %v1616 = vunpack.c.l.s4 1934713408
      %v1617 = vunpack.c.0.s8 %v1616
      %v1618 = vlaneseq
      %v1619 = vshrl.u32 %v1618, 7
      %v1620 = vsub.s32 %v1617, %v1619
      %v1621 = vrot.slane %v1607, %v1620
      %v1622 = vcombine.low %v1590, %v1605
      %v1623 = vcombine.high %v1590, %v1605
      %v1625 = vunpack.c.l.s4 1934713408
      %v1626 = vunpack.c.0.s8 %v1625
      %v1627 = vlaneseq
      %v1628 = vshrl.u32 %v1627, 7
      %v1629 = vsub.s32 %v1626, %v1628
      %v1630 = vrot.slane %v1622, %v1629
      %v1632 = vunpack.c.l.s4 1934713408
      %v1633 = vunpack.c.0.s8 %v1632
      %v1634 = vlaneseq
      %v1635 = vshrl.u32 %v1634, 7
      %v1636 = vsub.s32 %v1633, %v1635
      %v1637 = vrot.slane %v1623, %v1636
      %v1638 = vcombine.high %v1614, 0.0
      %v1639 = vcombine.high %v1621, 0.0
      %v1640 = vcombine.high %v1630, 0.0
      %v1641 = vcombine.high %v1637, 0.0
      %v1642 = vcombine.high %v1467, 0.0
      %v1644 = vunpack.c.l.s4 1983009808
      %v1645 = vunpack.c.0.s8 %v1644
      %v1646 = vlaneseq
      %v1647 = vshrl.u32 %v1646, 7
      %v1648 = vsub.s32 %v1645, %v1647
      %v1649 = vrot.slane %v1467, %v1648
      %v1651 = vunpack.c.l.s4 1983009808
      %v1652 = vunpack.c.0.s8 %v1651
      %v1653 = vlaneseq
      %v1654 = vshrl.u32 %v1653, 7
      %v1655 = vsub.s32 %v1652, %v1654
      %v1656 = vrot.slane %v1642, %v1655
      %v1657 = vcombine.high %v1483, 0.0
      %v1659 = vunpack.c.l.s4 1983009808
      %v1660 = vunpack.c.0.s8 %v1659
      %v1661 = vlaneseq
      %v1662 = vshrl.u32 %v1661, 7
      %v1663 = vsub.s32 %v1660, %v1662
      %v1664 = vrot.slane %v1483, %v1663
      %v1666 = vunpack.c.l.s4 1983009808
      %v1667 = vunpack.c.0.s8 %v1666
      %v1668 = vlaneseq
      %v1669 = vshrl.u32 %v1668, 7
      %v1670 = vsub.s32 %v1667, %v1669
      %v1671 = vrot.slane %v1657, %v1670
      %v1672 = vcombine.low %v1649, %v1664
      %v1673 = vcombine.high %v1649, %v1664
      %v1675 = vunpack.c.l.s4 1934713408
      %v1676 = vunpack.c.0.s8 %v1675
      %v1677 = vlaneseq
      %v1678 = vshrl.u32 %v1677, 7
      %v1679 = vsub.s32 %v1676, %v1678
      %v1680 = vrot.slane %v1672, %v1679
      %v1682 = vunpack.c.l.s4 1934713408
      %v1683 = vunpack.c.0.s8 %v1682
      %v1684 = vlaneseq
      %v1685 = vshrl.u32 %v1684, 7
      %v1686 = vsub.s32 %v1683, %v1685
      %v1687 = vrot.slane %v1673, %v1686
      %v1688 = vcombine.low %v1656, %v1671
      %v1689 = vcombine.high %v1656, %v1671
      %v1691 = vunpack.c.l.s4 1934713408
      %v1692 = vunpack.c.0.s8 %v1691
      %v1693 = vlaneseq
      %v1694 = vshrl.u32 %v1693, 7
      %v1695 = vsub.s32 %v1692, %v1694
      %v1696 = vrot.slane %v1688, %v1695
      %v1698 = vunpack.c.l.s4 1934713408
      %v1699 = vunpack.c.0.s8 %v1698
      %v1700 = vlaneseq
      %v1701 = vshrl.u32 %v1700, 7
      %v1702 = vsub.s32 %v1699, %v1701
      %v1703 = vrot.slane %v1689, %v1702
      %v1704 = vcombine.high %v1680, 0.0
      %v1705 = vcombine.high %v1687, 0.0
      %v1706 = vcombine.high %v1696, 0.0
      %v1707 = vcombine.high %v1703, 0.0
      %v1708 = vcombine.high %v1469, 0.0
      %v1710 = vunpack.c.l.s4 1983009808
      %v1711 = vunpack.c.0.s8 %v1710
      %v1712 = vlaneseq
      %v1713 = vshrl.u32 %v1712, 7
      %v1714 = vsub.s32 %v1711, %v1713
      %v1715 = vrot.slane %v1469, %v1714
      %v1717 = vunpack.c.l.s4 1983009808
      %v1718 = vunpack.c.0.s8 %v1717
      %v1719 = vlaneseq
      %v1720 = vshrl.u32 %v1719, 7
      %v1721 = vsub.s32 %v1718, %v1720
      %v1722 = vrot.slane %v1708, %v1721
      %v1723 = vcombine.high %v1485, 0.0
      %v1725 = vunpack.c.l.s4 1983009808
      %v1726 = vunpack.c.0.s8 %v1725
      %v1727 = vlaneseq
      %v1728 = vshrl.u32 %v1727, 7
      %v1729 = vsub.s32 %v1726, %v1728
      %v1730 = vrot.slane %v1485, %v1729
      %v1732 = vunpack.c.l.s4 1983009808
      %v1733 = vunpack.c.0.s8 %v1732
      %v1734 = vlaneseq
      %v1735 = vshrl.u32 %v1734, 7
      %v1736 = vsub.s32 %v1733, %v1735
      %v1737 = vrot.slane %v1723, %v1736
      %v1738 = vcombine.low %v1715, %v1730
      %v1739 = vcombine.high %v1715, %v1730
      %v1741 = vunpack.c.l.s4 1934713408
      %v1742 = vunpack.c.0.s8 %v1741
      %v1743 = vlaneseq
      %v1744 = vshrl.u32 %v1743, 7
      %v1745 = vsub.s32 %v1742, %v1744
      %v1746 = vrot.slane %v1738, %v1745
      %v1748 = vunpack.c.l.s4 1934713408
      %v1749 = vunpack.c.0.s8 %v1748
      %v1750 = vlaneseq
      %v1751 = vshrl.u32 %v1750, 7
      %v1752 = vsub.s32 %v1749, %v1751
      %v1753 = vrot.slane %v1739, %v1752
      %v1754 = vcombine.low %v1722, %v1737
      %v1755 = vcombine.high %v1722, %v1737
      %v1757 = vunpack.c.l.s4 1934713408
      %v1758 = vunpack.c.0.s8 %v1757
      %v1759 = vlaneseq
      %v1760 = vshrl.u32 %v1759, 7
      %v1761 = vsub.s32 %v1758, %v1760
      %v1762 = vrot.slane %v1754, %v1761
      %v1764 = vunpack.c.l.s4 1934713408
      %v1765 = vunpack.c.0.s8 %v1764
      %v1766 = vlaneseq
      %v1767 = vshrl.u32 %v1766, 7
      %v1768 = vsub.s32 %v1765, %v1767
      %v1769 = vrot.slane %v1755, %v1768
      %v1770 = vcombine.high %v1746, 0.0
      %v1771 = vcombine.high %v1753, 0.0
      %v1772 = vcombine.high %v1762, 0.0
      %v1773 = vcombine.high %v1769, 0.0
      %v1774 = vcombine.high %v1471, 0.0
      %v1776 = vunpack.c.l.s4 1983009808
      %v1777 = vunpack.c.0.s8 %v1776
      %v1778 = vlaneseq
      %v1779 = vshrl.u32 %v1778, 7
      %v1780 = vsub.s32 %v1777, %v1779
      %v1781 = vrot.slane %v1471, %v1780
      %v1783 = vunpack.c.l.s4 1983009808
      %v1784 = vunpack.c.0.s8 %v1783
      %v1785 = vlaneseq
      %v1786 = vshrl.u32 %v1785, 7
      %v1787 = vsub.s32 %v1784, %v1786
      %v1788 = vrot.slane %v1774, %v1787
      %v1789 = vcombine.high %v1487, 0.0
      %v1791 = vunpack.c.l.s4 1983009808
      %v1792 = vunpack.c.0.s8 %v1791
      %v1793 = vlaneseq
      %v1794 = vshrl.u32 %v1793, 7
      %v1795 = vsub.s32 %v1792, %v1794
      %v1796 = vrot.slane %v1487, %v1795
      %v1798 = vunpack.c.l.s4 1983009808
      %v1799 = vunpack.c.0.s8 %v1798
      %v1800 = vlaneseq
      %v1801 = vshrl.u32 %v1800, 7
      %v1802 = vsub.s32 %v1799, %v1801
      %v1803 = vrot.slane %v1789, %v1802
      %v1804 = vcombine.low %v1781, %v1796
      %v1805 = vcombine.high %v1781, %v1796
      %v1807 = vunpack.c.l.s4 1934713408
      %v1808 = vunpack.c.0.s8 %v1807
      %v1809 = vlaneseq
      %v1810 = vshrl.u32 %v1809, 7
      %v1811 = vsub.s32 %v1808, %v1810
      %v1812 = vrot.slane %v1804, %v1811
      %v1814 = vunpack.c.l.s4 1934713408
      %v1815 = vunpack.c.0.s8 %v1814
      %v1816 = vlaneseq
      %v1817 = vshrl.u32 %v1816, 7
      %v1818 = vsub.s32 %v1815, %v1817
      %v1819 = vrot.slane %v1805, %v1818
      %v1820 = vcombine.low %v1788, %v1803
      %v1821 = vcombine.high %v1788, %v1803
      %v1823 = vunpack.c.l.s4 1934713408
      %v1824 = vunpack.c.0.s8 %v1823
      %v1825 = vlaneseq
      %v1826 = vshrl.u32 %v1825, 7
      %v1827 = vsub.s32 %v1824, %v1826
      %v1828 = vrot.slane %v1820, %v1827
      %v1830 = vunpack.c.l.s4 1934713408
      %v1831 = vunpack.c.0.s8 %v1830
      %v1832 = vlaneseq
      %v1833 = vshrl.u32 %v1832, 7
      %v1834 = vsub.s32 %v1831, %v1833
      %v1835 = vrot.slane %v1821, %v1834
      %v1836 = vcombine.high %v1812, 0.0
      %v1837 = vcombine.high %v1819, 0.0
      %v1838 = vcombine.high %v1828, 0.0
      %v1839 = vcombine.high %v1835, 0.0
      %v1840 = vcombine.high %v1473, 0.0
      %v1842 = vunpack.c.l.s4 1983009808
      %v1843 = vunpack.c.0.s8 %v1842
      %v1844 = vlaneseq
      %v1845 = vshrl.u32 %v1844, 7
      %v1846 = vsub.s32 %v1843, %v1845
      %v1847 = vrot.slane %v1473, %v1846
      %v1849 = vunpack.c.l.s4 1983009808
      %v1850 = vunpack.c.0.s8 %v1849
      %v1851 = vlaneseq
      %v1852 = vshrl.u32 %v1851, 7
      %v1853 = vsub.s32 %v1850, %v1852
      %v1854 = vrot.slane %v1840, %v1853
      %v1855 = vcombine.high %v1489, 0.0
      %v1857 = vunpack.c.l.s4 1983009808
      %v1858 = vunpack.c.0.s8 %v1857
      %v1859 = vlaneseq
      %v1860 = vshrl.u32 %v1859, 7
      %v1861 = vsub.s32 %v1858, %v1860
      %v1862 = vrot.slane %v1489, %v1861
      %v1864 = vunpack.c.l.s4 1983009808
      %v1865 = vunpack.c.0.s8 %v1864
      %v1866 = vlaneseq
      %v1867 = vshrl.u32 %v1866, 7
      %v1868 = vsub.s32 %v1865, %v1867
      %v1869 = vrot.slane %v1855, %v1868
      %v1870 = vcombine.low %v1847, %v1862
      %v1871 = vcombine.high %v1847, %v1862
      %v1873 = vunpack.c.l.s4 1934713408
      %v1874 = vunpack.c.0.s8 %v1873
      %v1875 = vlaneseq
      %v1876 = vshrl.u32 %v1875, 7
      %v1877 = vsub.s32 %v1874, %v1876
      %v1878 = vrot.slane %v1870, %v1877
      %v1880 = vunpack.c.l.s4 1934713408
      %v1881 = vunpack.c.0.s8 %v1880
      %v1882 = vlaneseq
      %v1883 = vshrl.u32 %v1882, 7
      %v1884 = vsub.s32 %v1881, %v1883
      %v1885 = vrot.slane %v1871, %v1884
      %v1886 = vcombine.low %v1854, %v1869
      %v1887 = vcombine.high %v1854, %v1869
      %v1889 = vunpack.c.l.s4 1934713408
      %v1890 = vunpack.c.0.s8 %v1889
      %v1891 = vlaneseq
      %v1892 = vshrl.u32 %v1891, 7
      %v1893 = vsub.s32 %v1890, %v1892
      %v1894 = vrot.slane %v1886, %v1893
      %v1896 = vunpack.c.l.s4 1934713408
      %v1897 = vunpack.c.0.s8 %v1896
      %v1898 = vlaneseq
      %v1899 = vshrl.u32 %v1898, 7
      %v1900 = vsub.s32 %v1897, %v1899
      %v1901 = vrot.slane %v1887, %v1900
      %v1902 = vcombine.high %v1878, 0.0
      %v1903 = vcombine.high %v1885, 0.0
      %v1904 = vcombine.high %v1894, 0.0
      %v1905 = vcombine.high %v1901, 0.0
      %v1906 = vcombine.high %v1475, 0.0
      %v1908 = vunpack.c.l.s4 1983009808
      %v1909 = vunpack.c.0.s8 %v1908
      %v1910 = vlaneseq
      %v1911 = vshrl.u32 %v1910, 7
      %v1912 = vsub.s32 %v1909, %v1911
      %v1913 = vrot.slane %v1475, %v1912
      %v1915 = vunpack.c.l.s4 1983009808
      %v1916 = vunpack.c.0.s8 %v1915
      %v1917 = vlaneseq
      %v1918 = vshrl.u32 %v1917, 7
      %v1919 = vsub.s32 %v1916, %v1918
      %v1920 = vrot.slane %v1906, %v1919
      %v1921 = vcombine.high %v1491, 0.0
      %v1923 = vunpack.c.l.s4 1983009808
      %v1924 = vunpack.c.0.s8 %v1923
      %v1925 = vlaneseq
      %v1926 = vshrl.u32 %v1925, 7
      %v1927 = vsub.s32 %v1924, %v1926
      %v1928 = vrot.slane %v1491, %v1927
      %v1930 = vunpack.c.l.s4 1983009808
      %v1931 = vunpack.c.0.s8 %v1930
      %v1932 = vlaneseq
      %v1933 = vshrl.u32 %v1932, 7
      %v1934 = vsub.s32 %v1931, %v1933
      %v1935 = vrot.slane %v1921, %v1934
      %v1936 = vcombine.low %v1913, %v1928
      %v1937 = vcombine.high %v1913, %v1928
      %v1939 = vunpack.c.l.s4 1934713408
      %v1940 = vunpack.c.0.s8 %v1939
      %v1941 = vlaneseq
      %v1942 = vshrl.u32 %v1941, 7
      %v1943 = vsub.s32 %v1940, %v1942
      %v1944 = vrot.slane %v1936, %v1943
      %v1946 = vunpack.c.l.s4 1934713408
      %v1947 = vunpack.c.0.s8 %v1946
      %v1948 = vlaneseq
      %v1949 = vshrl.u32 %v1948, 7
      %v1950 = vsub.s32 %v1947, %v1949
      %v1951 = vrot.slane %v1937, %v1950
      %v1952 = vcombine.low %v1920, %v1935
      %v1953 = vcombine.high %v1920, %v1935
      %v1955 = vunpack.c.l.s4 1934713408
      %v1956 = vunpack.c.0.s8 %v1955
      %v1957 = vlaneseq
      %v1958 = vshrl.u32 %v1957, 7
      %v1959 = vsub.s32 %v1956, %v1958
      %v1960 = vrot.slane %v1952, %v1959
      %v1962 = vunpack.c.l.s4 1934713408
      %v1963 = vunpack.c.0.s8 %v1962
      %v1964 = vlaneseq
      %v1965 = vshrl.u32 %v1964, 7
      %v1966 = vsub.s32 %v1963, %v1965
      %v1967 = vrot.slane %v1953, %v1966
      %v1968 = vcombine.high %v1944, 0.0
      %v1969 = vcombine.high %v1951, 0.0
      %v1970 = vcombine.high %v1960, 0.0
      %v1971 = vcombine.high %v1967, 0.0
      %v1972 = vcombine.high %v1477, 0.0
      %v1974 = vunpack.c.l.s4 1983009808
      %v1975 = vunpack.c.0.s8 %v1974
      %v1976 = vlaneseq
      %v1977 = vshrl.u32 %v1976, 7
      %v1978 = vsub.s32 %v1975, %v1977
      %v1979 = vrot.slane %v1477, %v1978
      %v1981 = vunpack.c.l.s4 1983009808
      %v1982 = vunpack.c.0.s8 %v1981
      %v1983 = vlaneseq
      %v1984 = vshrl.u32 %v1983, 7
      %v1985 = vsub.s32 %v1982, %v1984
      %v1986 = vrot.slane %v1972, %v1985
      %v1987 = vcombine.high %v1493, 0.0
      %v1989 = vunpack.c.l.s4 1983009808
      %v1990 = vunpack.c.0.s8 %v1989
      %v1991 = vlaneseq
      %v1992 = vshrl.u32 %v1991, 7
      %v1993 = vsub.s32 %v1990, %v1992
      %v1994 = vrot.slane %v1493, %v1993
      %v1996 = vunpack.c.l.s4 1983009808
      %v1997 = vunpack.c.0.s8 %v1996
      %v1998 = vlaneseq
      %v1999 = vshrl.u32 %v1998, 7
      %v2000 = vsub.s32 %v1997, %v1999
      %v2001 = vrot.slane %v1987, %v2000
      %v2002 = vcombine.low %v1979, %v1994
      %v2003 = vcombine.high %v1979, %v1994
      %v2005 = vunpack.c.l.s4 1934713408
      %v2006 = vunpack.c.0.s8 %v2005
      %v2007 = vlaneseq
      %v2008 = vshrl.u32 %v2007, 7
      %v2009 = vsub.s32 %v2006, %v2008
      %v2010 = vrot.slane %v2002, %v2009
      %v2012 = vunpack.c.l.s4 1934713408
      %v2013 = vunpack.c.0.s8 %v2012
      %v2014 = vlaneseq
      %v2015 = vshrl.u32 %v2014, 7
      %v2016 = vsub.s32 %v2013, %v2015
      %v2017 = vrot.slane %v2003, %v2016
      %v2018 = vcombine.low %v1986, %v2001
      %v2019 = vcombine.high %v1986, %v2001
      %v2021 = vunpack.c.l.s4 1934713408
      %v2022 = vunpack.c.0.s8 %v2021
      %v2023 = vlaneseq
      %v2024 = vshrl.u32 %v2023, 7
      %v2025 = vsub.s32 %v2022, %v2024
      %v2026 = vrot.slane %v2018, %v2025
      %v2028 = vunpack.c.l.s4 1934713408
      %v2029 = vunpack.c.0.s8 %v2028
      %v2030 = vlaneseq
      %v2031 = vshrl.u32 %v2030, 7
      %v2032 = vsub.s32 %v2029, %v2031
      %v2033 = vrot.slane %v2019, %v2032
      %v2034 = vcombine.high %v2010, 0.0
      %v2035 = vcombine.high %v2017, 0.0
      %v2036 = vcombine.high %v2026, 0.0
      %v2037 = vcombine.high %v2033, 0.0
      %v2038 = vcombine.low %v1548, %v1555
      %v2040 = vunpack.c.l.s4 1983009808
      %v2041 = vunpack.c.0.s8 %v2040
      %v2042 = vlaneseq
      %v2043 = vshrl.u32 %v2042, 7
      %v2044 = vsub.s32 %v2041, %v2043
      %v2045 = vrot.slane %v2038, %v2044
      %v2046 = vcombine.low %v1572, %v1573
      %v2048 = vunpack.c.l.s4 1983009808
      %v2049 = vunpack.c.0.s8 %v2048
      %v2050 = vlaneseq
      %v2051 = vshrl.u32 %v2050, 7
      %v2052 = vsub.s32 %v2049, %v2051
      %v2053 = vrot.slane %v2046, %v2052
      %v2054 = vcombine.low %v1564, %v1571
      %v2056 = vunpack.c.l.s4 1983009808
      %v2057 = vunpack.c.0.s8 %v2056
      %v2058 = vlaneseq
      %v2059 = vshrl.u32 %v2058, 7
      %v2060 = vsub.s32 %v2057, %v2059
      %v2061 = vrot.slane %v2054, %v2060
      %v2062 = vcombine.low %v1574, %v1575
      %v2064 = vunpack.c.l.s4 1983009808
      %v2065 = vunpack.c.0.s8 %v2064
      %v2066 = vlaneseq
      %v2067 = vshrl.u32 %v2066, 7
      %v2068 = vsub.s32 %v2065, %v2067
      %v2069 = vrot.slane %v2062, %v2068
      %v2070 = vcombine.low %v2045, %v2053
      %v2072 = vunpack.c.l.s4 1934713408
      %v2073 = vunpack.c.0.s8 %v2072
      %v2074 = vlaneseq
      %v2075 = vshrl.u32 %v2074, 7
      %v2076 = vsub.s32 %v2073, %v2075
      %v2077 = vrot.slane %v2070, %v2076
      %v2078 = vcombine.low %v2061, %v2069
      %v2080 = vunpack.c.l.s4 1934713408
      %v2081 = vunpack.c.0.s8 %v2080
      %v2082 = vlaneseq
      %v2083 = vshrl.u32 %v2082, 7
      %v2084 = vsub.s32 %v2081, %v2083
      %v2085 = vrot.slane %v2078, %v2084
      %v2086 = vcombine.low %v2077, %v2085
      %v2087 = vcombine.high %v2077, %v2085
      %v2088 = vcombine.low %v1614, %v1621
      %v2090 = vunpack.c.l.s4 1983009808
      %v2091 = vunpack.c.0.s8 %v2090
      %v2092 = vlaneseq
      %v2093 = vshrl.u32 %v2092, 7
      %v2094 = vsub.s32 %v2091, %v2093
      %v2095 = vrot.slane %v2088, %v2094
      %v2096 = vcombine.low %v1638, %v1639
      %v2098 = vunpack.c.l.s4 1983009808
      %v2099 = vunpack.c.0.s8 %v2098
      %v2100 = vlaneseq
      %v2101 = vshrl.u32 %v2100, 7
      %v2102 = vsub.s32 %v2099, %v2101
      %v2103 = vrot.slane %v2096, %v2102
      %v2104 = vcombine.low %v1630, %v1637
      %v2106 = vunpack.c.l.s4 1983009808
      %v2107 = vunpack.c.0.s8 %v2106
      %v2108 = vlaneseq
      %v2109 = vshrl.u32 %v2108, 7
      %v2110 = vsub.s32 %v2107, %v2109
      %v2111 = vrot.slane %v2104, %v2110
      %v2112 = vcombine.low %v1640, %v1641
      %v2114 = vunpack.c.l.s4 1983009808
      %v2115 = vunpack.c.0.s8 %v2114
      %v2116 = vlaneseq
      %v2117 = vshrl.u32 %v2116, 7
      %v2118 = vsub.s32 %v2115, %v2117
      %v2119 = vrot.slane %v2112, %v2118
      %v2120 = vcombine.low %v2095, %v2103
      %v2122 = vunpack.c.l.s4 1934713408
      %v2123 = vunpack.c.0.s8 %v2122
      %v2124 = vlaneseq
      %v2125 = vshrl.u32 %v2124, 7
      %v2126 = vsub.s32 %v2123, %v2125
      %v2127 = vrot.slane %v2120, %v2126
      %v2128 = vcombine.low %v2111, %v2119
      %v2130 = vunpack.c.l.s4 1934713408
      %v2131 = vunpack.c.0.s8 %v2130
      %v2132 = vlaneseq
      %v2133 = vshrl.u32 %v2132, 7
      %v2134 = vsub.s32 %v2131, %v2133
      %v2135 = vrot.slane %v2128, %v2134
      %v2136 = vcombine.low %v2127, %v2135
      %v2137 = vcombine.high %v2127, %v2135
      %v2138 = vcombine.low %v1680, %v1687
      %v2140 = vunpack.c.l.s4 1983009808
      %v2141 = vunpack.c.0.s8 %v2140
      %v2142 = vlaneseq
      %v2143 = vshrl.u32 %v2142, 7
      %v2144 = vsub.s32 %v2141, %v2143
      %v2145 = vrot.slane %v2138, %v2144
      %v2146 = vcombine.low %v1704, %v1705
      %v2148 = vunpack.c.l.s4 1983009808
      %v2149 = vunpack.c.0.s8 %v2148
      %v2150 = vlaneseq
      %v2151 = vshrl.u32 %v2150, 7
      %v2152 = vsub.s32 %v2149, %v2151
      %v2153 = vrot.slane %v2146, %v2152
      %v2154 = vcombine.low %v1696, %v1703
      %v2156 = vunpack.c.l.s4 1983009808
      %v2157 = vunpack.c.0.s8 %v2156
      %v2158 = vlaneseq
      %v2159 = vshrl.u32 %v2158, 7
      %v2160 = vsub.s32 %v2157, %v2159
      %v2161 = vrot.slane %v2154, %v2160
      %v2162 = vcombine.low %v1706, %v1707
      %v2164 = vunpack.c.l.s4 1983009808
      %v2165 = vunpack.c.0.s8 %v2164
      %v2166 = vlaneseq
      %v2167 = vshrl.u32 %v2166, 7
      %v2168 = vsub.s32 %v2165, %v2167
      %v2169 = vrot.slane %v2162, %v2168
      %v2170 = vcombine.low %v2145, %v2153
      %v2172 = vunpack.c.l.s4 1934713408
      %v2173 = vunpack.c.0.s8 %v2172
      %v2174 = vlaneseq
      %v2175 = vshrl.u32 %v2174, 7
      %v2176 = vsub.s32 %v2173, %v2175
      %v2177 = vrot.slane %v2170, %v2176
      %v2178 = vcombine.low %v2161, %v2169
      %v2180 = vunpack.c.l.s4 1934713408
      %v2181 = vunpack.c.0.s8 %v2180
      %v2182 = vlaneseq
      %v2183 = vshrl.u32 %v2182, 7
      %v2184 = vsub.s32 %v2181, %v2183
      %v2185 = vrot.slane %v2178, %v2184
      %v2186 = vcombine.low %v2177, %v2185
      %v2187 = vcombine.high %v2177, %v2185
      %v2188 = vcombine.low %v1746, %v1753
      %v2190 = vunpack.c.l.s4 1983009808
      %v2191 = vunpack.c.0.s8 %v2190
      %v2192 = vlaneseq
      %v2193 = vshrl.u32 %v2192, 7
      %v2194 = vsub.s32 %v2191, %v2193
      %v2195 = vrot.slane %v2188, %v2194
      %v2196 = vcombine.low %v1770, %v1771
      %v2198 = vunpack.c.l.s4 1983009808
      %v2199 = vunpack.c.0.s8 %v2198
      %v2200 = vlaneseq
      %v2201 = vshrl.u32 %v2200, 7
      %v2202 = vsub.s32 %v2199, %v2201
      %v2203 = vrot.slane %v2196, %v2202
      %v2204 = vcombine.low %v1762, %v1769
      %v2206 = vunpack.c.l.s4 1983009808
      %v2207 = vunpack.c.0.s8 %v2206
      %v2208 = vlaneseq
      %v2209 = vshrl.u32 %v2208, 7
      %v2210 = vsub.s32 %v2207, %v2209
      %v2211 = vrot.slane %v2204, %v2210
      %v2212 = vcombine.low %v1772, %v1773
      %v2214 = vunpack.c.l.s4 1983009808
      %v2215 = vunpack.c.0.s8 %v2214
      %v2216 = vlaneseq
      %v2217 = vshrl.u32 %v2216, 7
      %v2218 = vsub.s32 %v2215, %v2217
      %v2219 = vrot.slane %v2212, %v2218
      %v2220 = vcombine.low %v2195, %v2203
      %v2222 = vunpack.c.l.s4 1934713408
      %v2223 = vunpack.c.0.s8 %v2222
      %v2224 = vlaneseq
      %v2225 = vshrl.u32 %v2224, 7
      %v2226 = vsub.s32 %v2223, %v2225
      %v2227 = vrot.slane %v2220, %v2226
      %v2228 = vcombine.low %v2211, %v2219
      %v2230 = vunpack.c.l.s4 1934713408
      %v2231 = vunpack.c.0.s8 %v2230
      %v2232 = vlaneseq
      %v2233 = vshrl.u32 %v2232, 7
      %v2234 = vsub.s32 %v2231, %v2233
      %v2235 = vrot.slane %v2228, %v2234
      %v2236 = vcombine.low %v2227, %v2235
      %v2237 = vcombine.high %v2227, %v2235
      %v2238 = vcombine.low %v1812, %v1819
      %v2240 = vunpack.c.l.s4 1983009808
      %v2241 = vunpack.c.0.s8 %v2240
      %v2242 = vlaneseq
      %v2243 = vshrl.u32 %v2242, 7
      %v2244 = vsub.s32 %v2241, %v2243
      %v2245 = vrot.slane %v2238, %v2244
      %v2246 = vcombine.low %v1836, %v1837
      %v2248 = vunpack.c.l.s4 1983009808
      %v2249 = vunpack.c.0.s8 %v2248
      %v2250 = vlaneseq
      %v2251 = vshrl.u32 %v2250, 7
      %v2252 = vsub.s32 %v2249, %v2251
      %v2253 = vrot.slane %v2246, %v2252
      %v2254 = vcombine.low %v1828, %v1835
      %v2256 = vunpack.c.l.s4 1983009808
      %v2257 = vunpack.c.0.s8 %v2256
      %v2258 = vlaneseq
      %v2259 = vshrl.u32 %v2258, 7
      %v2260 = vsub.s32 %v2257, %v2259
      %v2261 = vrot.slane %v2254, %v2260
      %v2262 = vcombine.low %v1838, %v1839
      %v2264 = vunpack.c.l.s4 1983009808
      %v2265 = vunpack.c.0.s8 %v2264
      %v2266 = vlaneseq
      %v2267 = vshrl.u32 %v2266, 7
      %v2268 = vsub.s32 %v2265, %v2267
      %v2269 = vrot.slane %v2262, %v2268
      %v2270 = vcombine.low %v2245, %v2253
      %v2272 = vunpack.c.l.s4 1934713408
      %v2273 = vunpack.c.0.s8 %v2272
      %v2274 = vlaneseq
      %v2275 = vshrl.u32 %v2274, 7
      %v2276 = vsub.s32 %v2273, %v2275
      %v2277 = vrot.slane %v2270, %v2276
      %v2278 = vcombine.low %v2261, %v2269
      %v2280 = vunpack.c.l.s4 1934713408
      %v2281 = vunpack.c.0.s8 %v2280
      %v2282 = vlaneseq
      %v2283 = vshrl.u32 %v2282, 7
      %v2284 = vsub.s32 %v2281, %v2283
      %v2285 = vrot.slane %v2278, %v2284
      %v2286 = vcombine.low %v2277, %v2285
      %v2287 = vcombine.high %v2277, %v2285
      %v2288 = vcombine.low %v1878, %v1885
      %v2290 = vunpack.c.l.s4 1983009808
      %v2291 = vunpack.c.0.s8 %v2290
      %v2292 = vlaneseq
      %v2293 = vshrl.u32 %v2292, 7
      %v2294 = vsub.s32 %v2291, %v2293
      %v2295 = vrot.slane %v2288, %v2294
      %v2296 = vcombine.low %v1902, %v1903
      %v2298 = vunpack.c.l.s4 1983009808
      %v2299 = vunpack.c.0.s8 %v2298
      %v2300 = vlaneseq
      %v2301 = vshrl.u32 %v2300, 7
      %v2302 = vsub.s32 %v2299, %v2301
      %v2303 = vrot.slane %v2296, %v2302
      %v2304 = vcombine.low %v1894, %v1901
      %v2306 = vunpack.c.l.s4 1983009808
      %v2307 = vunpack.c.0.s8 %v2306
      %v2308 = vlaneseq
      %v2309 = vshrl.u32 %v2308, 7
      %v2310 = vsub.s32 %v2307, %v2309
      %v2311 = vrot.slane %v2304, %v2310
      %v2312 = vcombine.low %v1904, %v1905
      %v2314 = vunpack.c.l.s4 1983009808
      %v2315 = vunpack.c.0.s8 %v2314
      %v2316 = vlaneseq
      %v2317 = vshrl.u32 %v2316, 7
      %v2318 = vsub.s32 %v2315, %v2317
      %v2319 = vrot.slane %v2312, %v2318
      %v2320 = vcombine.low %v2295, %v2303
      %v2322 = vunpack.c.l.s4 1934713408
      %v2323 = vunpack.c.0.s8 %v2322
      %v2324 = vlaneseq
      %v2325 = vshrl.u32 %v2324, 7
      %v2326 = vsub.s32 %v2323, %v2325
      %v2327 = vrot.slane %v2320, %v2326
      %v2328 = vcombine.low %v2311, %v2319
      %v2330 = vunpack.c.l.s4 1934713408
      %v2331 = vunpack.c.0.s8 %v2330
      %v2332 = vlaneseq
      %v2333 = vshrl.u32 %v2332, 7
      %v2334 = vsub.s32 %v2331, %v2333
      %v2335 = vrot.slane %v2328, %v2334
      %v2336 = vcombine.low %v2327, %v2335
      %v2337 = vcombine.high %v2327, %v2335
      %v2338 = vcombine.low %v1944, %v1951
      %v2340 = vunpack.c.l.s4 1983009808
      %v2341 = vunpack.c.0.s8 %v2340
      %v2342 = vlaneseq
      %v2343 = vshrl.u32 %v2342, 7
      %v2344 = vsub.s32 %v2341, %v2343
      %v2345 = vrot.slane %v2338, %v2344
      %v2346 = vcombine.low %v1968, %v1969
      %v2348 = vunpack.c.l.s4 1983009808
      %v2349 = vunpack.c.0.s8 %v2348
      %v2350 = vlaneseq
      %v2351 = vshrl.u32 %v2350, 7
      %v2352 = vsub.s32 %v2349, %v2351
      %v2353 = vrot.slane %v2346, %v2352
      %v2354 = vcombine.low %v1960, %v1967
      %v2356 = vunpack.c.l.s4 1983009808
      %v2357 = vunpack.c.0.s8 %v2356
      %v2358 = vlaneseq
      %v2359 = vshrl.u32 %v2358, 7
      %v2360 = vsub.s32 %v2357, %v2359
      %v2361 = vrot.slane %v2354, %v2360
      %v2362 = vcombine.low %v1970, %v1971
      %v2364 = vunpack.c.l.s4 1983009808
      %v2365 = vunpack.c.0.s8 %v2364
      %v2366 = vlaneseq
      %v2367 = vshrl.u32 %v2366, 7
      %v2368 = vsub.s32 %v2365, %v2367
      %v2369 = vrot.slane %v2362, %v2368
      %v2370 = vcombine.low %v2345, %v2353
      %v2372 = vunpack.c.l.s4 1934713408
      %v2373 = vunpack.c.0.s8 %v2372
      %v2374 = vlaneseq
      %v2375 = vshrl.u32 %v2374, 7
      %v2376 = vsub.s32 %v2373, %v2375
      %v2377 = vrot.slane %v2370, %v2376
      %v2378 = vcombine.low %v2361, %v2369
      %v2380 = vunpack.c.l.s4 1934713408
      %v2381 = vunpack.c.0.s8 %v2380
      %v2382 = vlaneseq
      %v2383 = vshrl.u32 %v2382, 7
      %v2384 = vsub.s32 %v2381, %v2383
      %v2385 = vrot.slane %v2378, %v2384
      %v2386 = vcombine.low %v2377, %v2385
      %v2387 = vcombine.high %v2377, %v2385
      %v2388 = vcombine.low %v2010, %v2017
      %v2390 = vunpack.c.l.s4 1983009808
      %v2391 = vunpack.c.0.s8 %v2390
      %v2392 = vlaneseq
      %v2393 = vshrl.u32 %v2392, 7
      %v2394 = vsub.s32 %v2391, %v2393
      %v2395 = vrot.slane %v2388, %v2394
      %v2396 = vcombine.low %v2034, %v2035
      %v2398 = vunpack.c.l.s4 1983009808
      %v2399 = vunpack.c.0.s8 %v2398
      %v2400 = vlaneseq
      %v2401 = vshrl.u32 %v2400, 7
      %v2402 = vsub.s32 %v2399, %v2401
      %v2403 = vrot.slane %v2396, %v2402
      %v2404 = vcombine.low %v2026, %v2033
      %v2406 = vunpack.c.l.s4 1983009808
      %v2407 = vunpack.c.0.s8 %v2406
      %v2408 = vlaneseq
      %v2409 = vshrl.u32 %v2408, 7
      %v2410 = vsub.s32 %v2407, %v2409
      %v2411 = vrot.slane %v2404, %v2410
      %v2412 = vcombine.low %v2036, %v2037
      %v2414 = vunpack.c.l.s4 1983009808
      %v2415 = vunpack.c.0.s8 %v2414
      %v2416 = vlaneseq
      %v2417 = vshrl.u32 %v2416, 7
      %v2418 = vsub.s32 %v2415, %v2417
      %v2419 = vrot.slane %v2412, %v2418
      %v2420 = vcombine.low %v2395, %v2403
      %v2422 = vunpack.c.l.s4 1934713408
      %v2423 = vunpack.c.0.s8 %v2422
      %v2424 = vlaneseq
      %v2425 = vshrl.u32 %v2424, 7
      %v2426 = vsub.s32 %v2423, %v2425
      %v2427 = vrot.slane %v2420, %v2426
      %v2428 = vcombine.low %v2411, %v2419
      %v2430 = vunpack.c.l.s4 1934713408
      %v2431 = vunpack.c.0.s8 %v2430
      %v2432 = vlaneseq
      %v2433 = vshrl.u32 %v2432, 7
      %v2434 = vsub.s32 %v2431, %v2433
      %v2435 = vrot.slane %v2428, %v2434
      %v2436 = vcombine.low %v2427, %v2435
      %v2437 = vcombine.high %v2427, %v2435
      %v2438 = vpack.c.bf16 %v2136, %v2086
      %v2439 = vpack.c.bf16 %v2236, %v2186
      %v2440 = vpack.c.bf16 %v2336, %v2286
      %v2441 = vpack.c.bf16 %v2436, %v2386
      %v2442 = vpack.c.bf16 %v2137, %v2087
      %v2443 = vpack.c.bf16 %v2237, %v2187
      %v2444 = vpack.c.bf16 %v2337, %v2287
      %v2445 = vpack.c.bf16 %v2437, %v2387
      %2454 = vrot.lane.b32.xlu0 %v458, 96
      %v2455 = vpop.permute.xlu0 %2454
      %2456 = vrot.lane.b32.xlu0 %v462, 96
      %v2457 = vpop.permute.xlu0 %2456
      %2458 = vrot.lane.b32.xlu0 %v468, 96
      %v2459 = vpop.permute.xlu0 %2458
      %2460 = vrot.lane.b32.xlu0 %v472, 96
      %v2461 = vpop.permute.xlu0 %2460
      %2462 = vrot.lane.b32.xlu0 %v478, 96
      %v2463 = vpop.permute.xlu0 %2462
      %2464 = vrot.lane.b32.xlu0 %v482, 96
      %v2465 = vpop.permute.xlu0 %2464
      %2466 = vrot.lane.b32.xlu0 %v488, 96
      %v2467 = vpop.permute.xlu0 %2466
      %2468 = vrot.lane.b32.xlu0 %v492, 96
      %v2469 = vpop.permute.xlu0 %2468
      %v2478 = vcombine.high %v458, 0.0
      %v2480 = vunpack.c.l.s4 1983009808
      %v2481 = vunpack.c.0.s8 %v2480
      %v2482 = vlaneseq
      %v2483 = vshrl.u32 %v2482, 7
      %v2484 = vsub.s32 %v2481, %v2483
      %v2485 = vrot.slane %v458, %v2484
      %v2487 = vunpack.c.l.s4 1983009808
      %v2488 = vunpack.c.0.s8 %v2487
      %v2489 = vlaneseq
      %v2490 = vshrl.u32 %v2489, 7
      %v2491 = vsub.s32 %v2488, %v2490
      %v2492 = vrot.slane %v2478, %v2491
      %v2493 = vcombine.high %v2455, 0.0
      %v2495 = vunpack.c.l.s4 1983009808
      %v2496 = vunpack.c.0.s8 %v2495
      %v2497 = vlaneseq
      %v2498 = vshrl.u32 %v2497, 7
      %v2499 = vsub.s32 %v2496, %v2498
      %v2500 = vrot.slane %v2455, %v2499
      %v2502 = vunpack.c.l.s4 1983009808
      %v2503 = vunpack.c.0.s8 %v2502
      %v2504 = vlaneseq
      %v2505 = vshrl.u32 %v2504, 7
      %v2506 = vsub.s32 %v2503, %v2505
      %v2507 = vrot.slane %v2493, %v2506
      %v2508 = vcombine.low %v2485, %v2500
      %v2509 = vcombine.high %v2485, %v2500
      %v2511 = vunpack.c.l.s4 1934713408
      %v2512 = vunpack.c.0.s8 %v2511
      %v2513 = vlaneseq
      %v2514 = vshrl.u32 %v2513, 7
      %v2515 = vsub.s32 %v2512, %v2514
      %v2516 = vrot.slane %v2508, %v2515
      %v2518 = vunpack.c.l.s4 1934713408
      %v2519 = vunpack.c.0.s8 %v2518
      %v2520 = vlaneseq
      %v2521 = vshrl.u32 %v2520, 7
      %v2522 = vsub.s32 %v2519, %v2521
      %v2523 = vrot.slane %v2509, %v2522
      %v2524 = vcombine.low %v2492, %v2507
      %v2525 = vcombine.high %v2492, %v2507
      %v2527 = vunpack.c.l.s4 1934713408
      %v2528 = vunpack.c.0.s8 %v2527
      %v2529 = vlaneseq
      %v2530 = vshrl.u32 %v2529, 7
      %v2531 = vsub.s32 %v2528, %v2530
      %v2532 = vrot.slane %v2524, %v2531
      %v2534 = vunpack.c.l.s4 1934713408
      %v2535 = vunpack.c.0.s8 %v2534
      %v2536 = vlaneseq
      %v2537 = vshrl.u32 %v2536, 7
      %v2538 = vsub.s32 %v2535, %v2537
      %v2539 = vrot.slane %v2525, %v2538
      %v2540 = vcombine.high %v2516, 0.0
      %v2541 = vcombine.high %v2523, 0.0
      %v2542 = vcombine.high %v2532, 0.0
      %v2543 = vcombine.high %v2539, 0.0
      %v2544 = vcombine.high %v462, 0.0
      %v2546 = vunpack.c.l.s4 1983009808
      %v2547 = vunpack.c.0.s8 %v2546
      %v2548 = vlaneseq
      %v2549 = vshrl.u32 %v2548, 7
      %v2550 = vsub.s32 %v2547, %v2549
      %v2551 = vrot.slane %v462, %v2550
      %v2553 = vunpack.c.l.s4 1983009808
      %v2554 = vunpack.c.0.s8 %v2553
      %v2555 = vlaneseq
      %v2556 = vshrl.u32 %v2555, 7
      %v2557 = vsub.s32 %v2554, %v2556
      %v2558 = vrot.slane %v2544, %v2557
      %v2559 = vcombine.high %v2457, 0.0
      %v2561 = vunpack.c.l.s4 1983009808
      %v2562 = vunpack.c.0.s8 %v2561
      %v2563 = vlaneseq
      %v2564 = vshrl.u32 %v2563, 7
      %v2565 = vsub.s32 %v2562, %v2564
      %v2566 = vrot.slane %v2457, %v2565
      %v2568 = vunpack.c.l.s4 1983009808
      %v2569 = vunpack.c.0.s8 %v2568
      %v2570 = vlaneseq
      %v2571 = vshrl.u32 %v2570, 7
      %v2572 = vsub.s32 %v2569, %v2571
      %v2573 = vrot.slane %v2559, %v2572
      %v2574 = vcombine.low %v2551, %v2566
      %v2575 = vcombine.high %v2551, %v2566
      %v2577 = vunpack.c.l.s4 1934713408
      %v2578 = vunpack.c.0.s8 %v2577
      %v2579 = vlaneseq
      %v2580 = vshrl.u32 %v2579, 7
      %v2581 = vsub.s32 %v2578, %v2580
      %v2582 = vrot.slane %v2574, %v2581
      %v2584 = vunpack.c.l.s4 1934713408
      %v2585 = vunpack.c.0.s8 %v2584
      %v2586 = vlaneseq
      %v2587 = vshrl.u32 %v2586, 7
      %v2588 = vsub.s32 %v2585, %v2587
      %v2589 = vrot.slane %v2575, %v2588
      %v2590 = vcombine.low %v2558, %v2573
      %v2591 = vcombine.high %v2558, %v2573
      %v2593 = vunpack.c.l.s4 1934713408
      %v2594 = vunpack.c.0.s8 %v2593
      %v2595 = vlaneseq
      %v2596 = vshrl.u32 %v2595, 7
      %v2597 = vsub.s32 %v2594, %v2596
      %v2598 = vrot.slane %v2590, %v2597
      %v2600 = vunpack.c.l.s4 1934713408
      %v2601 = vunpack.c.0.s8 %v2600
      %v2602 = vlaneseq
      %v2603 = vshrl.u32 %v2602, 7
      %v2604 = vsub.s32 %v2601, %v2603
      %v2605 = vrot.slane %v2591, %v2604
      %v2606 = vcombine.high %v2582, 0.0
      %v2607 = vcombine.high %v2589, 0.0
      %v2608 = vcombine.high %v2598, 0.0
      %v2609 = vcombine.high %v2605, 0.0
      %v2610 = vcombine.high %v468, 0.0
      %v2612 = vunpack.c.l.s4 1983009808
      %v2613 = vunpack.c.0.s8 %v2612
      %v2614 = vlaneseq
      %v2615 = vshrl.u32 %v2614, 7
      %v2616 = vsub.s32 %v2613, %v2615
      %v2617 = vrot.slane %v468, %v2616
      %v2619 = vunpack.c.l.s4 1983009808
      %v2620 = vunpack.c.0.s8 %v2619
      %v2621 = vlaneseq
      %v2622 = vshrl.u32 %v2621, 7
      %v2623 = vsub.s32 %v2620, %v2622
      %v2624 = vrot.slane %v2610, %v2623
      %v2625 = vcombine.high %v2459, 0.0
      %v2627 = vunpack.c.l.s4 1983009808
      %v2628 = vunpack.c.0.s8 %v2627
      %v2629 = vlaneseq
      %v2630 = vshrl.u32 %v2629, 7
      %v2631 = vsub.s32 %v2628, %v2630
      %v2632 = vrot.slane %v2459, %v2631
      %v2634 = vunpack.c.l.s4 1983009808
      %v2635 = vunpack.c.0.s8 %v2634
      %v2636 = vlaneseq
      %v2637 = vshrl.u32 %v2636, 7
      %v2638 = vsub.s32 %v2635, %v2637
      %v2639 = vrot.slane %v2625, %v2638
      %v2640 = vcombine.low %v2617, %v2632
      %v2641 = vcombine.high %v2617, %v2632
      %v2643 = vunpack.c.l.s4 1934713408
      %v2644 = vunpack.c.0.s8 %v2643
      %v2645 = vlaneseq
      %v2646 = vshrl.u32 %v2645, 7
      %v2647 = vsub.s32 %v2644, %v2646
      %v2648 = vrot.slane %v2640, %v2647
      %v2650 = vunpack.c.l.s4 1934713408
      %v2651 = vunpack.c.0.s8 %v2650
      %v2652 = vlaneseq
      %v2653 = vshrl.u32 %v2652, 7
      %v2654 = vsub.s32 %v2651, %v2653
      %v2655 = vrot.slane %v2641, %v2654
      %v2656 = vcombine.low %v2624, %v2639
      %v2657 = vcombine.high %v2624, %v2639
      %v2659 = vunpack.c.l.s4 1934713408
      %v2660 = vunpack.c.0.s8 %v2659
      %v2661 = vlaneseq
      %v2662 = vshrl.u32 %v2661, 7
      %v2663 = vsub.s32 %v2660, %v2662
      %v2664 = vrot.slane %v2656, %v2663
      %v2666 = vunpack.c.l.s4 1934713408
      %v2667 = vunpack.c.0.s8 %v2666
      %v2668 = vlaneseq
      %v2669 = vshrl.u32 %v2668, 7
      %v2670 = vsub.s32 %v2667, %v2669
      %v2671 = vrot.slane %v2657, %v2670
      %v2672 = vcombine.high %v2648, 0.0
      %v2673 = vcombine.high %v2655, 0.0
      %v2674 = vcombine.high %v2664, 0.0
      %v2675 = vcombine.high %v2671, 0.0
      %v2676 = vcombine.high %v472, 0.0
      %v2678 = vunpack.c.l.s4 1983009808
      %v2679 = vunpack.c.0.s8 %v2678
      %v2680 = vlaneseq
      %v2681 = vshrl.u32 %v2680, 7
      %v2682 = vsub.s32 %v2679, %v2681
      %v2683 = vrot.slane %v472, %v2682
      %v2685 = vunpack.c.l.s4 1983009808
      %v2686 = vunpack.c.0.s8 %v2685
      %v2687 = vlaneseq
      %v2688 = vshrl.u32 %v2687, 7
      %v2689 = vsub.s32 %v2686, %v2688
      %v2690 = vrot.slane %v2676, %v2689
      %v2691 = vcombine.high %v2461, 0.0
      %v2693 = vunpack.c.l.s4 1983009808
      %v2694 = vunpack.c.0.s8 %v2693
      %v2695 = vlaneseq
      %v2696 = vshrl.u32 %v2695, 7
      %v2697 = vsub.s32 %v2694, %v2696
      %v2698 = vrot.slane %v2461, %v2697
      %v2700 = vunpack.c.l.s4 1983009808
      %v2701 = vunpack.c.0.s8 %v2700
      %v2702 = vlaneseq
      %v2703 = vshrl.u32 %v2702, 7
      %v2704 = vsub.s32 %v2701, %v2703
      %v2705 = vrot.slane %v2691, %v2704
      %v2706 = vcombine.low %v2683, %v2698
      %v2707 = vcombine.high %v2683, %v2698
      %v2709 = vunpack.c.l.s4 1934713408
      %v2710 = vunpack.c.0.s8 %v2709
      %v2711 = vlaneseq
      %v2712 = vshrl.u32 %v2711, 7
      %v2713 = vsub.s32 %v2710, %v2712
      %v2714 = vrot.slane %v2706, %v2713
      %v2716 = vunpack.c.l.s4 1934713408
      %v2717 = vunpack.c.0.s8 %v2716
      %v2718 = vlaneseq
      %v2719 = vshrl.u32 %v2718, 7
      %v2720 = vsub.s32 %v2717, %v2719
      %v2721 = vrot.slane %v2707, %v2720
      %v2722 = vcombine.low %v2690, %v2705
      %v2723 = vcombine.high %v2690, %v2705
      %v2725 = vunpack.c.l.s4 1934713408
      %v2726 = vunpack.c.0.s8 %v2725
      %v2727 = vlaneseq
      %v2728 = vshrl.u32 %v2727, 7
      %v2729 = vsub.s32 %v2726, %v2728
      %v2730 = vrot.slane %v2722, %v2729
      %v2732 = vunpack.c.l.s4 1934713408
      %v2733 = vunpack.c.0.s8 %v2732
      %v2734 = vlaneseq
      %v2735 = vshrl.u32 %v2734, 7
      %v2736 = vsub.s32 %v2733, %v2735
      %v2737 = vrot.slane %v2723, %v2736
      %v2738 = vcombine.high %v2714, 0.0
      %v2739 = vcombine.high %v2721, 0.0
      %v2740 = vcombine.high %v2730, 0.0
      %v2741 = vcombine.high %v2737, 0.0
      %v2742 = vcombine.high %v478, 0.0
      %v2744 = vunpack.c.l.s4 1983009808
      %v2745 = vunpack.c.0.s8 %v2744
      %v2746 = vlaneseq
      %v2747 = vshrl.u32 %v2746, 7
      %v2748 = vsub.s32 %v2745, %v2747
      %v2749 = vrot.slane %v478, %v2748
      %v2751 = vunpack.c.l.s4 1983009808
      %v2752 = vunpack.c.0.s8 %v2751
      %v2753 = vlaneseq
      %v2754 = vshrl.u32 %v2753, 7
      %v2755 = vsub.s32 %v2752, %v2754
      %v2756 = vrot.slane %v2742, %v2755
      %v2757 = vcombine.high %v2463, 0.0
      %v2759 = vunpack.c.l.s4 1983009808
      %v2760 = vunpack.c.0.s8 %v2759
      %v2761 = vlaneseq
      %v2762 = vshrl.u32 %v2761, 7
      %v2763 = vsub.s32 %v2760, %v2762
      %v2764 = vrot.slane %v2463, %v2763
      %v2766 = vunpack.c.l.s4 1983009808
      %v2767 = vunpack.c.0.s8 %v2766
      %v2768 = vlaneseq
      %v2769 = vshrl.u32 %v2768, 7
      %v2770 = vsub.s32 %v2767, %v2769
      %v2771 = vrot.slane %v2757, %v2770
      %v2772 = vcombine.low %v2749, %v2764
      %v2773 = vcombine.high %v2749, %v2764
      %v2775 = vunpack.c.l.s4 1934713408
      %v2776 = vunpack.c.0.s8 %v2775
      %v2777 = vlaneseq
      %v2778 = vshrl.u32 %v2777, 7
      %v2779 = vsub.s32 %v2776, %v2778
      %v2780 = vrot.slane %v2772, %v2779
      %v2782 = vunpack.c.l.s4 1934713408
      %v2783 = vunpack.c.0.s8 %v2782
      %v2784 = vlaneseq
      %v2785 = vshrl.u32 %v2784, 7
      %v2786 = vsub.s32 %v2783, %v2785
      %v2787 = vrot.slane %v2773, %v2786
      %v2788 = vcombine.low %v2756, %v2771
      %v2789 = vcombine.high %v2756, %v2771
      %v2791 = vunpack.c.l.s4 1934713408
      %v2792 = vunpack.c.0.s8 %v2791
      %v2793 = vlaneseq
      %v2794 = vshrl.u32 %v2793, 7
      %v2795 = vsub.s32 %v2792, %v2794
      %v2796 = vrot.slane %v2788, %v2795
      %v2798 = vunpack.c.l.s4 1934713408
      %v2799 = vunpack.c.0.s8 %v2798
      %v2800 = vlaneseq
      %v2801 = vshrl.u32 %v2800, 7
      %v2802 = vsub.s32 %v2799, %v2801
      %v2803 = vrot.slane %v2789, %v2802
      %v2804 = vcombine.high %v2780, 0.0
      %v2805 = vcombine.high %v2787, 0.0
      %v2806 = vcombine.high %v2796, 0.0
      %v2807 = vcombine.high %v2803, 0.0
      %v2808 = vcombine.high %v482, 0.0
      %v2810 = vunpack.c.l.s4 1983009808
      %v2811 = vunpack.c.0.s8 %v2810
      %v2812 = vlaneseq
      %v2813 = vshrl.u32 %v2812, 7
      %v2814 = vsub.s32 %v2811, %v2813
      %v2815 = vrot.slane %v482, %v2814
      %v2817 = vunpack.c.l.s4 1983009808
      %v2818 = vunpack.c.0.s8 %v2817
      %v2819 = vlaneseq
      %v2820 = vshrl.u32 %v2819, 7
      %v2821 = vsub.s32 %v2818, %v2820
      %v2822 = vrot.slane %v2808, %v2821
      %v2823 = vcombine.high %v2465, 0.0
      %v2825 = vunpack.c.l.s4 1983009808
      %v2826 = vunpack.c.0.s8 %v2825
      %v2827 = vlaneseq
      %v2828 = vshrl.u32 %v2827, 7
      %v2829 = vsub.s32 %v2826, %v2828
      %v2830 = vrot.slane %v2465, %v2829
      %v2832 = vunpack.c.l.s4 1983009808
      %v2833 = vunpack.c.0.s8 %v2832
      %v2834 = vlaneseq
      %v2835 = vshrl.u32 %v2834, 7
      %v2836 = vsub.s32 %v2833, %v2835
      %v2837 = vrot.slane %v2823, %v2836
      %v2838 = vcombine.low %v2815, %v2830
      %v2839 = vcombine.high %v2815, %v2830
      %v2841 = vunpack.c.l.s4 1934713408
      %v2842 = vunpack.c.0.s8 %v2841
      %v2843 = vlaneseq
      %v2844 = vshrl.u32 %v2843, 7
      %v2845 = vsub.s32 %v2842, %v2844
      %v2846 = vrot.slane %v2838, %v2845
      %v2848 = vunpack.c.l.s4 1934713408
      %v2849 = vunpack.c.0.s8 %v2848
      %v2850 = vlaneseq
      %v2851 = vshrl.u32 %v2850, 7
      %v2852 = vsub.s32 %v2849, %v2851
      %v2853 = vrot.slane %v2839, %v2852
      %v2854 = vcombine.low %v2822, %v2837
      %v2855 = vcombine.high %v2822, %v2837
      %v2857 = vunpack.c.l.s4 1934713408
      %v2858 = vunpack.c.0.s8 %v2857
      %v2859 = vlaneseq
      %v2860 = vshrl.u32 %v2859, 7
      %v2861 = vsub.s32 %v2858, %v2860
      %v2862 = vrot.slane %v2854, %v2861
      %v2864 = vunpack.c.l.s4 1934713408
      %v2865 = vunpack.c.0.s8 %v2864
      %v2866 = vlaneseq
      %v2867 = vshrl.u32 %v2866, 7
      %v2868 = vsub.s32 %v2865, %v2867
      %v2869 = vrot.slane %v2855, %v2868
      %v2870 = vcombine.high %v2846, 0.0
      %v2871 = vcombine.high %v2853, 0.0
      %v2872 = vcombine.high %v2862, 0.0
      %v2873 = vcombine.high %v2869, 0.0
      %v2874 = vcombine.high %v488, 0.0
      %v2876 = vunpack.c.l.s4 1983009808
      %v2877 = vunpack.c.0.s8 %v2876
      %v2878 = vlaneseq
      %v2879 = vshrl.u32 %v2878, 7
      %v2880 = vsub.s32 %v2877, %v2879
      %v2881 = vrot.slane %v488, %v2880
      %v2883 = vunpack.c.l.s4 1983009808
      %v2884 = vunpack.c.0.s8 %v2883
      %v2885 = vlaneseq
      %v2886 = vshrl.u32 %v2885, 7
      %v2887 = vsub.s32 %v2884, %v2886
      %v2888 = vrot.slane %v2874, %v2887
      %v2889 = vcombine.high %v2467, 0.0
      %v2891 = vunpack.c.l.s4 1983009808
      %v2892 = vunpack.c.0.s8 %v2891
      %v2893 = vlaneseq
      %v2894 = vshrl.u32 %v2893, 7
      %v2895 = vsub.s32 %v2892, %v2894
      %v2896 = vrot.slane %v2467, %v2895
      %v2898 = vunpack.c.l.s4 1983009808
      %v2899 = vunpack.c.0.s8 %v2898
      %v2900 = vlaneseq
      %v2901 = vshrl.u32 %v2900, 7
      %v2902 = vsub.s32 %v2899, %v2901
      %v2903 = vrot.slane %v2889, %v2902
      %v2904 = vcombine.low %v2881, %v2896
      %v2905 = vcombine.high %v2881, %v2896
      %v2907 = vunpack.c.l.s4 1934713408
      %v2908 = vunpack.c.0.s8 %v2907
      %v2909 = vlaneseq
      %v2910 = vshrl.u32 %v2909, 7
      %v2911 = vsub.s32 %v2908, %v2910
      %v2912 = vrot.slane %v2904, %v2911
      %v2914 = vunpack.c.l.s4 1934713408
      %v2915 = vunpack.c.0.s8 %v2914
      %v2916 = vlaneseq
      %v2917 = vshrl.u32 %v2916, 7
      %v2918 = vsub.s32 %v2915, %v2917
      %v2919 = vrot.slane %v2905, %v2918
      %v2920 = vcombine.low %v2888, %v2903
      %v2921 = vcombine.high %v2888, %v2903
      %v2923 = vunpack.c.l.s4 1934713408
      %v2924 = vunpack.c.0.s8 %v2923
      %v2925 = vlaneseq
      %v2926 = vshrl.u32 %v2925, 7
      %v2927 = vsub.s32 %v2924, %v2926
      %v2928 = vrot.slane %v2920, %v2927
      %v2930 = vunpack.c.l.s4 1934713408
      %v2931 = vunpack.c.0.s8 %v2930
      %v2932 = vlaneseq
      %v2933 = vshrl.u32 %v2932, 7
      %v2934 = vsub.s32 %v2931, %v2933
      %v2935 = vrot.slane %v2921, %v2934
      %v2936 = vcombine.high %v2912, 0.0
      %v2937 = vcombine.high %v2919, 0.0
      %v2938 = vcombine.high %v2928, 0.0
      %v2939 = vcombine.high %v2935, 0.0
      %v2940 = vcombine.high %v492, 0.0
      %v2942 = vunpack.c.l.s4 1983009808
      %v2943 = vunpack.c.0.s8 %v2942
      %v2944 = vlaneseq
      %v2945 = vshrl.u32 %v2944, 7
      %v2946 = vsub.s32 %v2943, %v2945
      %v2947 = vrot.slane %v492, %v2946
      %v2949 = vunpack.c.l.s4 1983009808
      %v2950 = vunpack.c.0.s8 %v2949
      %v2951 = vlaneseq
      %v2952 = vshrl.u32 %v2951, 7
      %v2953 = vsub.s32 %v2950, %v2952
      %v2954 = vrot.slane %v2940, %v2953
      %v2955 = vcombine.high %v2469, 0.0
      %v2957 = vunpack.c.l.s4 1983009808
      %v2958 = vunpack.c.0.s8 %v2957
      %v2959 = vlaneseq
      %v2960 = vshrl.u32 %v2959, 7
      %v2961 = vsub.s32 %v2958, %v2960
      %v2962 = vrot.slane %v2469, %v2961
      %v2964 = vunpack.c.l.s4 1983009808
      %v2965 = vunpack.c.0.s8 %v2964
      %v2966 = vlaneseq
      %v2967 = vshrl.u32 %v2966, 7
      %v2968 = vsub.s32 %v2965, %v2967
      %v2969 = vrot.slane %v2955, %v2968
      %v2970 = vcombine.low %v2947, %v2962
      %v2971 = vcombine.high %v2947, %v2962
      %v2973 = vunpack.c.l.s4 1934713408
      %v2974 = vunpack.c.0.s8 %v2973
      %v2975 = vlaneseq
      %v2976 = vshrl.u32 %v2975, 7
      %v2977 = vsub.s32 %v2974, %v2976
      %v2978 = vrot.slane %v2970, %v2977
      %v2980 = vunpack.c.l.s4 1934713408
      %v2981 = vunpack.c.0.s8 %v2980
      %v2982 = vlaneseq
      %v2983 = vshrl.u32 %v2982, 7
      %v2984 = vsub.s32 %v2981, %v2983
      %v2985 = vrot.slane %v2971, %v2984
      %v2986 = vcombine.low %v2954, %v2969
      %v2987 = vcombine.high %v2954, %v2969
      %v2989 = vunpack.c.l.s4 1934713408
      %v2990 = vunpack.c.0.s8 %v2989
      %v2991 = vlaneseq
      %v2992 = vshrl.u32 %v2991, 7
      %v2993 = vsub.s32 %v2990, %v2992
      %v2994 = vrot.slane %v2986, %v2993
      %v2996 = vunpack.c.l.s4 1934713408
      %v2997 = vunpack.c.0.s8 %v2996
      %v2998 = vlaneseq
      %v2999 = vshrl.u32 %v2998, 7
      %v3000 = vsub.s32 %v2997, %v2999
      %v3001 = vrot.slane %v2987, %v3000
      %v3002 = vcombine.high %v2978, 0.0
      %v3003 = vcombine.high %v2985, 0.0
      %v3004 = vcombine.high %v2994, 0.0
      %v3005 = vcombine.high %v3001, 0.0
      %v3006 = vcombine.low %v2516, %v2523
      %v3008 = vunpack.c.l.s4 1983009808
      %v3009 = vunpack.c.0.s8 %v3008
      %v3010 = vlaneseq
      %v3011 = vshrl.u32 %v3010, 7
      %v3012 = vsub.s32 %v3009, %v3011
      %v3013 = vrot.slane %v3006, %v3012
      %v3014 = vcombine.low %v2540, %v2541
      %v3016 = vunpack.c.l.s4 1983009808
      %v3017 = vunpack.c.0.s8 %v3016
      %v3018 = vlaneseq
      %v3019 = vshrl.u32 %v3018, 7
      %v3020 = vsub.s32 %v3017, %v3019
      %v3021 = vrot.slane %v3014, %v3020
      %v3022 = vcombine.low %v2532, %v2539
      %v3024 = vunpack.c.l.s4 1983009808
      %v3025 = vunpack.c.0.s8 %v3024
      %v3026 = vlaneseq
      %v3027 = vshrl.u32 %v3026, 7
      %v3028 = vsub.s32 %v3025, %v3027
      %v3029 = vrot.slane %v3022, %v3028
      %v3030 = vcombine.low %v2542, %v2543
      %v3032 = vunpack.c.l.s4 1983009808
      %v3033 = vunpack.c.0.s8 %v3032
      %v3034 = vlaneseq
      %v3035 = vshrl.u32 %v3034, 7
      %v3036 = vsub.s32 %v3033, %v3035
      %v3037 = vrot.slane %v3030, %v3036
      %v3038 = vcombine.low %v3013, %v3021
      %v3040 = vunpack.c.l.s4 1934713408
      %v3041 = vunpack.c.0.s8 %v3040
      %v3042 = vlaneseq
      %v3043 = vshrl.u32 %v3042, 7
      %v3044 = vsub.s32 %v3041, %v3043
      %v3045 = vrot.slane %v3038, %v3044
      %v3046 = vcombine.low %v3029, %v3037
      %v3048 = vunpack.c.l.s4 1934713408
      %v3049 = vunpack.c.0.s8 %v3048
      %v3050 = vlaneseq
      %v3051 = vshrl.u32 %v3050, 7
      %v3052 = vsub.s32 %v3049, %v3051
      %v3053 = vrot.slane %v3046, %v3052
      %v3054 = vcombine.low %v3045, %v3053
      %v3055 = vcombine.high %v3045, %v3053
      %v3056 = vcombine.low %v2582, %v2589
      %v3058 = vunpack.c.l.s4 1983009808
      %v3059 = vunpack.c.0.s8 %v3058
      %v3060 = vlaneseq
      %v3061 = vshrl.u32 %v3060, 7
      %v3062 = vsub.s32 %v3059, %v3061
      %v3063 = vrot.slane %v3056, %v3062
      %v3064 = vcombine.low %v2606, %v2607
      %v3066 = vunpack.c.l.s4 1983009808
      %v3067 = vunpack.c.0.s8 %v3066
      %v3068 = vlaneseq
      %v3069 = vshrl.u32 %v3068, 7
      %v3070 = vsub.s32 %v3067, %v3069
      %v3071 = vrot.slane %v3064, %v3070
      %v3072 = vcombine.low %v2598, %v2605
      %v3074 = vunpack.c.l.s4 1983009808
      %v3075 = vunpack.c.0.s8 %v3074
      %v3076 = vlaneseq
      %v3077 = vshrl.u32 %v3076, 7
      %v3078 = vsub.s32 %v3075, %v3077
      %v3079 = vrot.slane %v3072, %v3078
      %v3080 = vcombine.low %v2608, %v2609
      %v3082 = vunpack.c.l.s4 1983009808
      %v3083 = vunpack.c.0.s8 %v3082
      %v3084 = vlaneseq
      %v3085 = vshrl.u32 %v3084, 7
      %v3086 = vsub.s32 %v3083, %v3085
      %v3087 = vrot.slane %v3080, %v3086
      %v3088 = vcombine.low %v3063, %v3071
      %v3090 = vunpack.c.l.s4 1934713408
      %v3091 = vunpack.c.0.s8 %v3090
      %v3092 = vlaneseq
      %v3093 = vshrl.u32 %v3092, 7
      %v3094 = vsub.s32 %v3091, %v3093
      %v3095 = vrot.slane %v3088, %v3094
      %v3096 = vcombine.low %v3079, %v3087
      %v3098 = vunpack.c.l.s4 1934713408
      %v3099 = vunpack.c.0.s8 %v3098
      %v3100 = vlaneseq
      %v3101 = vshrl.u32 %v3100, 7
      %v3102 = vsub.s32 %v3099, %v3101
      %v3103 = vrot.slane %v3096, %v3102
      %v3104 = vcombine.low %v3095, %v3103
      %v3105 = vcombine.high %v3095, %v3103
      %v3106 = vcombine.low %v2648, %v2655
      %v3108 = vunpack.c.l.s4 1983009808
      %v3109 = vunpack.c.0.s8 %v3108
      %v3110 = vlaneseq
      %v3111 = vshrl.u32 %v3110, 7
      %v3112 = vsub.s32 %v3109, %v3111
      %v3113 = vrot.slane %v3106, %v3112
      %v3114 = vcombine.low %v2672, %v2673
      %v3116 = vunpack.c.l.s4 1983009808
      %v3117 = vunpack.c.0.s8 %v3116
      %v3118 = vlaneseq
      %v3119 = vshrl.u32 %v3118, 7
      %v3120 = vsub.s32 %v3117, %v3119
      %v3121 = vrot.slane %v3114, %v3120
      %v3122 = vcombine.low %v2664, %v2671
      %v3124 = vunpack.c.l.s4 1983009808
      %v3125 = vunpack.c.0.s8 %v3124
      %v3126 = vlaneseq
      %v3127 = vshrl.u32 %v3126, 7
      %v3128 = vsub.s32 %v3125, %v3127
      %v3129 = vrot.slane %v3122, %v3128
      %v3130 = vcombine.low %v2674, %v2675
      %v3132 = vunpack.c.l.s4 1983009808
      %v3133 = vunpack.c.0.s8 %v3132
      %v3134 = vlaneseq
      %v3135 = vshrl.u32 %v3134, 7
      %v3136 = vsub.s32 %v3133, %v3135
      %v3137 = vrot.slane %v3130, %v3136
      %v3138 = vcombine.low %v3113, %v3121
      %v3140 = vunpack.c.l.s4 1934713408
      %v3141 = vunpack.c.0.s8 %v3140
      %v3142 = vlaneseq
      %v3143 = vshrl.u32 %v3142, 7
      %v3144 = vsub.s32 %v3141, %v3143
      %v3145 = vrot.slane %v3138, %v3144
      %v3146 = vcombine.low %v3129, %v3137
      %v3148 = vunpack.c.l.s4 1934713408
      %v3149 = vunpack.c.0.s8 %v3148
      %v3150 = vlaneseq
      %v3151 = vshrl.u32 %v3150, 7
      %v3152 = vsub.s32 %v3149, %v3151
      %v3153 = vrot.slane %v3146, %v3152
      %v3154 = vcombine.low %v3145, %v3153
      %v3155 = vcombine.high %v3145, %v3153
      %v3156 = vcombine.low %v2714, %v2721
      %v3158 = vunpack.c.l.s4 1983009808
      %v3159 = vunpack.c.0.s8 %v3158
      %v3160 = vlaneseq
      %v3161 = vshrl.u32 %v3160, 7
      %v3162 = vsub.s32 %v3159, %v3161
      %v3163 = vrot.slane %v3156, %v3162
      %v3164 = vcombine.low %v2738, %v2739
      %v3166 = vunpack.c.l.s4 1983009808
      %v3167 = vunpack.c.0.s8 %v3166
      %v3168 = vlaneseq
      %v3169 = vshrl.u32 %v3168, 7
      %v3170 = vsub.s32 %v3167, %v3169
      %v3171 = vrot.slane %v3164, %v3170
      %v3172 = vcombine.low %v2730, %v2737
      %v3174 = vunpack.c.l.s4 1983009808
      %v3175 = vunpack.c.0.s8 %v3174
      %v3176 = vlaneseq
      %v3177 = vshrl.u32 %v3176, 7
      %v3178 = vsub.s32 %v3175, %v3177
      %v3179 = vrot.slane %v3172, %v3178
      %v3180 = vcombine.low %v2740, %v2741
      %v3182 = vunpack.c.l.s4 1983009808
      %v3183 = vunpack.c.0.s8 %v3182
      %v3184 = vlaneseq
      %v3185 = vshrl.u32 %v3184, 7
      %v3186 = vsub.s32 %v3183, %v3185
      %v3187 = vrot.slane %v3180, %v3186
      %v3188 = vcombine.low %v3163, %v3171
      %v3190 = vunpack.c.l.s4 1934713408
      %v3191 = vunpack.c.0.s8 %v3190
      %v3192 = vlaneseq
      %v3193 = vshrl.u32 %v3192, 7
      %v3194 = vsub.s32 %v3191, %v3193
      %v3195 = vrot.slane %v3188, %v3194
      %v3196 = vcombine.low %v3179, %v3187
      %v3198 = vunpack.c.l.s4 1934713408
      %v3199 = vunpack.c.0.s8 %v3198
      %v3200 = vlaneseq
      %v3201 = vshrl.u32 %v3200, 7
      %v3202 = vsub.s32 %v3199, %v3201
      %v3203 = vrot.slane %v3196, %v3202
      %v3204 = vcombine.low %v3195, %v3203
      %v3205 = vcombine.high %v3195, %v3203
      %v3206 = vcombine.low %v2780, %v2787
      %v3208 = vunpack.c.l.s4 1983009808
      %v3209 = vunpack.c.0.s8 %v3208
      %v3210 = vlaneseq
      %v3211 = vshrl.u32 %v3210, 7
      %v3212 = vsub.s32 %v3209, %v3211
      %v3213 = vrot.slane %v3206, %v3212
      %v3214 = vcombine.low %v2804, %v2805
      %v3216 = vunpack.c.l.s4 1983009808
      %v3217 = vunpack.c.0.s8 %v3216
      %v3218 = vlaneseq
      %v3219 = vshrl.u32 %v3218, 7
      %v3220 = vsub.s32 %v3217, %v3219
      %v3221 = vrot.slane %v3214, %v3220
      %v3222 = vcombine.low %v2796, %v2803
      %v3224 = vunpack.c.l.s4 1983009808
      %v3225 = vunpack.c.0.s8 %v3224
      %v3226 = vlaneseq
      %v3227 = vshrl.u32 %v3226, 7
      %v3228 = vsub.s32 %v3225, %v3227
      %v3229 = vrot.slane %v3222, %v3228
      %v3230 = vcombine.low %v2806, %v2807
      %v3232 = vunpack.c.l.s4 1983009808
      %v3233 = vunpack.c.0.s8 %v3232
      %v3234 = vlaneseq
      %v3235 = vshrl.u32 %v3234, 7
      %v3236 = vsub.s32 %v3233, %v3235
      %v3237 = vrot.slane %v3230, %v3236
      %v3238 = vcombine.low %v3213, %v3221
      %v3240 = vunpack.c.l.s4 1934713408
      %v3241 = vunpack.c.0.s8 %v3240
      %v3242 = vlaneseq
      %v3243 = vshrl.u32 %v3242, 7
      %v3244 = vsub.s32 %v3241, %v3243
      %v3245 = vrot.slane %v3238, %v3244
      %v3246 = vcombine.low %v3229, %v3237
      %v3248 = vunpack.c.l.s4 1934713408
      %v3249 = vunpack.c.0.s8 %v3248
      %v3250 = vlaneseq
      %v3251 = vshrl.u32 %v3250, 7
      %v3252 = vsub.s32 %v3249, %v3251
      %v3253 = vrot.slane %v3246, %v3252
      %v3254 = vcombine.low %v3245, %v3253
      %v3255 = vcombine.high %v3245, %v3253
      %v3256 = vcombine.low %v2846, %v2853
      %v3258 = vunpack.c.l.s4 1983009808
      %v3259 = vunpack.c.0.s8 %v3258
      %v3260 = vlaneseq
      %v3261 = vshrl.u32 %v3260, 7
      %v3262 = vsub.s32 %v3259, %v3261
      %v3263 = vrot.slane %v3256, %v3262
      %v3264 = vcombine.low %v2870, %v2871
      %v3266 = vunpack.c.l.s4 1983009808
      %v3267 = vunpack.c.0.s8 %v3266
      %v3268 = vlaneseq
      %v3269 = vshrl.u32 %v3268, 7
      %v3270 = vsub.s32 %v3267, %v3269
      %v3271 = vrot.slane %v3264, %v3270
      %v3272 = vcombine.low %v2862, %v2869
      %v3274 = vunpack.c.l.s4 1983009808
      %v3275 = vunpack.c.0.s8 %v3274
      %v3276 = vlaneseq
      %v3277 = vshrl.u32 %v3276, 7
      %v3278 = vsub.s32 %v3275, %v3277
      %v3279 = vrot.slane %v3272, %v3278
      %v3280 = vcombine.low %v2872, %v2873
      %v3282 = vunpack.c.l.s4 1983009808
      %v3283 = vunpack.c.0.s8 %v3282
      %v3284 = vlaneseq
      %v3285 = vshrl.u32 %v3284, 7
      %v3286 = vsub.s32 %v3283, %v3285
      %v3287 = vrot.slane %v3280, %v3286
      %v3288 = vcombine.low %v3263, %v3271
      %v3290 = vunpack.c.l.s4 1934713408
      %v3291 = vunpack.c.0.s8 %v3290
      %v3292 = vlaneseq
      %v3293 = vshrl.u32 %v3292, 7
      %v3294 = vsub.s32 %v3291, %v3293
      %v3295 = vrot.slane %v3288, %v3294
      %v3296 = vcombine.low %v3279, %v3287
      %v3298 = vunpack.c.l.s4 1934713408
      %v3299 = vunpack.c.0.s8 %v3298
      %v3300 = vlaneseq
      %v3301 = vshrl.u32 %v3300, 7
      %v3302 = vsub.s32 %v3299, %v3301
      %v3303 = vrot.slane %v3296, %v3302
      %v3304 = vcombine.low %v3295, %v3303
      %v3305 = vcombine.high %v3295, %v3303
      %v3306 = vcombine.low %v2912, %v2919
      %v3308 = vunpack.c.l.s4 1983009808
      %v3309 = vunpack.c.0.s8 %v3308
      %v3310 = vlaneseq
      %v3311 = vshrl.u32 %v3310, 7
      %v3312 = vsub.s32 %v3309, %v3311
      %v3313 = vrot.slane %v3306, %v3312
      %v3314 = vcombine.low %v2936, %v2937
      %v3316 = vunpack.c.l.s4 1983009808
      %v3317 = vunpack.c.0.s8 %v3316
      %v3318 = vlaneseq
      %v3319 = vshrl.u32 %v3318, 7
      %v3320 = vsub.s32 %v3317, %v3319
      %v3321 = vrot.slane %v3314, %v3320
      %v3322 = vcombine.low %v2928, %v2935
      %v3324 = vunpack.c.l.s4 1983009808
      %v3325 = vunpack.c.0.s8 %v3324
      %v3326 = vlaneseq
      %v3327 = vshrl.u32 %v3326, 7
      %v3328 = vsub.s32 %v3325, %v3327
      %v3329 = vrot.slane %v3322, %v3328
      %v3330 = vcombine.low %v2938, %v2939
      %v3332 = vunpack.c.l.s4 1983009808
      %v3333 = vunpack.c.0.s8 %v3332
      %v3334 = vlaneseq
      %v3335 = vshrl.u32 %v3334, 7
      %v3336 = vsub.s32 %v3333, %v3335
      %v3337 = vrot.slane %v3330, %v3336
      %v3338 = vcombine.low %v3313, %v3321
      %v3340 = vunpack.c.l.s4 1934713408
      %v3341 = vunpack.c.0.s8 %v3340
      %v3342 = vlaneseq
      %v3343 = vshrl.u32 %v3342, 7
      %v3344 = vsub.s32 %v3341, %v3343
      %v3345 = vrot.slane %v3338, %v3344
      %v3346 = vcombine.low %v3329, %v3337
      %v3348 = vunpack.c.l.s4 1934713408
      %v3349 = vunpack.c.0.s8 %v3348
      %v3350 = vlaneseq
      %v3351 = vshrl.u32 %v3350, 7
      %v3352 = vsub.s32 %v3349, %v3351
      %v3353 = vrot.slane %v3346, %v3352
      %v3354 = vcombine.low %v3345, %v3353
      %v3355 = vcombine.high %v3345, %v3353
      %v3356 = vcombine.low %v2978, %v2985
      %v3358 = vunpack.c.l.s4 1983009808
      %v3359 = vunpack.c.0.s8 %v3358
      %v3360 = vlaneseq
      %v3361 = vshrl.u32 %v3360, 7
      %v3362 = vsub.s32 %v3359, %v3361
      %v3363 = vrot.slane %v3356, %v3362
      %v3364 = vcombine.low %v3002, %v3003
      %v3366 = vunpack.c.l.s4 1983009808
      %v3367 = vunpack.c.0.s8 %v3366
      %v3368 = vlaneseq
      %v3369 = vshrl.u32 %v3368, 7
      %v3370 = vsub.s32 %v3367, %v3369
      %v3371 = vrot.slane %v3364, %v3370
      %v3372 = vcombine.low %v2994, %v3001
      %v3374 = vunpack.c.l.s4 1983009808
      %v3375 = vunpack.c.0.s8 %v3374
      %v3376 = vlaneseq
      %v3377 = vshrl.u32 %v3376, 7
      %v3378 = vsub.s32 %v3375, %v3377
      %v3379 = vrot.slane %v3372, %v3378
      %v3380 = vcombine.low %v3004, %v3005
      %v3382 = vunpack.c.l.s4 1983009808
      %v3383 = vunpack.c.0.s8 %v3382
      %v3384 = vlaneseq
      %v3385 = vshrl.u32 %v3384, 7
      %v3386 = vsub.s32 %v3383, %v3385
      %v3387 = vrot.slane %v3380, %v3386
      %v3388 = vcombine.low %v3363, %v3371
      %v3390 = vunpack.c.l.s4 1934713408
      %v3391 = vunpack.c.0.s8 %v3390
      %v3392 = vlaneseq
      %v3393 = vshrl.u32 %v3392, 7
      %v3394 = vsub.s32 %v3391, %v3393
      %v3395 = vrot.slane %v3388, %v3394
      %v3396 = vcombine.low %v3379, %v3387
      %v3398 = vunpack.c.l.s4 1934713408
      %v3399 = vunpack.c.0.s8 %v3398
      %v3400 = vlaneseq
      %v3401 = vshrl.u32 %v3400, 7
      %v3402 = vsub.s32 %v3399, %v3401
      %v3403 = vrot.slane %v3396, %v3402
      %v3404 = vcombine.low %v3395, %v3403
      %v3405 = vcombine.high %v3395, %v3403
      %v3406 = vpack.c.bf16 %v3104, %v3054
      %v3407 = vpack.c.bf16 %v3204, %v3154
      %v3408 = vpack.c.bf16 %v3304, %v3254
      %v3409 = vpack.c.bf16 %v3404, %v3354
      %v3410 = vpack.c.bf16 %v3105, %v3055
      %v3411 = vpack.c.bf16 %v3205, %v3155
      %v3412 = vpack.c.bf16 %v3305, %v3255
      %v3413 = vpack.c.bf16 %v3405, %v3355
      %vm3414 = vcmask 261120
      %v3416 = vsel %vm3414, %v1454, 0
      %v3419 = vsel %vm3414, %v2438, 0
      %3421 = vmatprep.subr.bf16.mxu0 0
      %3422 = vmatpush1.bf16.xpose.msra.mxu0 0
      %3423 = vmatprep.subr.bf16.mxu0 0
      %3424 = vmatpush1.bf16.xpose.msra.mxu0 0
      %3425 = vmatprep.subr.bf16.mxu0 0
      %3426 = vmatpush1.bf16.xpose.msra.mxu0 0
      %3427 = vmatprep.subr.bf16.mxu0 0
      %3428 = vmatpush1.bf16.xpose.msra.mxu0 0
      %3429 = vmatprep.subr.bf16.mxu0 0
      %3430 = vmatpush1.bf16.xpose.msra.mxu0 0
      %3431 = vmatprep.subr.bf16.mxu0 0
      %3432 = vmatpush1.bf16.xpose.msra.mxu0 0
      %3433 = vmatprep.subr.bf16.mxu0 0
      %3434 = vmatpush1.bf16.xpose.msra.mxu0 0
      %3435 = vmatprep.subr.bf16.mxu0 0
      %3436 = vmatpush1.bf16.xpose.msra.mxu0 %v3419
      %3437 = vmatprep.subr.bf16.mxu0 0
      %3438 = vmatpush2.bf16.xpose.msra.mxu0 0
      %3439 = vmatprep.subr.bf16.mxu0 0
      %3440 = vmatpush2.bf16.xpose.msra.mxu0 0
      %3441 = vmatprep.subr.bf16.mxu0 0
      %3442 = vmatpush2.bf16.xpose.msra.mxu0 0
      %3443 = vmatprep.subr.bf16.mxu0 0
      %3444 = vmatpush2.bf16.xpose.msra.mxu0 0
      %3445 = vmatprep.subr.bf16.mxu0 0
      %3446 = vmatpush2.bf16.xpose.msra.mxu0 0
      %3447 = vmatprep.subr.bf16.mxu0 0
      %3448 = vmatpush2.bf16.xpose.msra.mxu0 0
      %3449 = vmatprep.subr.bf16.mxu0 0
      %3450 = vmatpush2.bf16.xpose.msra.mxu0 0
      %3451 = vmatprep.subr.bf16.mxu0 0
      %3452 = vmatpush2.bf16.xpose.msra.mxu0 0
      %3453 = vmatprep.mubr.bf16.mxu0 0
      %3454 = vmatmul.mubr.bf16.gmra.mxu0 %v3416
      %v3455 = vpop.f32.mrf.mxu0
      %v3456 = vadd.f32 0.0, %v3455
      %v3457 = vpop.f32.mrf.mxu0
      %v3458 = vpop.f32.mrf.mxu0
      %v3459 = vadd.f32 0.0, %v3458
      %v3460 = vpop.f32.mrf.mxu0
      %3461 = vdwg.mxu0
      %v3463 = vsel %vm3414, %v1455, 0
      %v3466 = vsel %vm3414, %v2439, 0
      %3468 = vmatprep.subr.bf16.mxu0 0
      %3469 = vmatpush1.bf16.xpose.msra.mxu0 0
      %3470 = vmatprep.subr.bf16.mxu0 0
      %3471 = vmatpush1.bf16.xpose.msra.mxu0 0
      %3472 = vmatprep.subr.bf16.mxu0 0
      %3473 = vmatpush1.bf16.xpose.msra.mxu0 0
      %3474 = vmatprep.subr.bf16.mxu0 0
      %3475 = vmatpush1.bf16.xpose.msra.mxu0 0
      %3476 = vmatprep.subr.bf16.mxu0 0
      %3477 = vmatpush1.bf16.xpose.msra.mxu0 0
      %3478 = vmatprep.subr.bf16.mxu0 0
      %3479 = vmatpush1.bf16.xpose.msra.mxu0 0
      %3480 = vmatprep.subr.bf16.mxu0 0
      %3481 = vmatpush1.bf16.xpose.msra.mxu0 0
      %3482 = vmatprep.subr.bf16.mxu0 0
      %3483 = vmatpush1.bf16.xpose.msra.mxu0 %v3466
      %3484 = vmatprep.subr.bf16.mxu0 0
      %3485 = vmatpush2.bf16.xpose.msra.mxu0 0
      %3486 = vmatprep.subr.bf16.mxu0 0
      %3487 = vmatpush2.bf16.xpose.msra.mxu0 0
      %3488 = vmatprep.subr.bf16.mxu0 0
      %3489 = vmatpush2.bf16.xpose.msra.mxu0 0
      %3490 = vmatprep.subr.bf16.mxu0 0
      %3491 = vmatpush2.bf16.xpose.msra.mxu0 0
      %3492 = vmatprep.subr.bf16.mxu0 0
      %3493 = vmatpush2.bf16.xpose.msra.mxu0 0
      %3494 = vmatprep.subr.bf16.mxu0 0
      %3495 = vmatpush2.bf16.xpose.msra.mxu0 0
      %3496 = vmatprep.subr.bf16.mxu0 0
      %3497 = vmatpush2.bf16.xpose.msra.mxu0 0
      %3498 = vmatprep.subr.bf16.mxu0 0
      %3499 = vmatpush2.bf16.xpose.msra.mxu0 0
      %3500 = vmatprep.mubr.bf16.mxu0 0
      %3501 = vmatmul.mubr.bf16.gmra.mxu0 %v3463
      %v3502 = vpop.f32.mrf.mxu0
      %v3503 = vadd.f32 0.0, %v3502
      %v3504 = vpop.f32.mrf.mxu0
      %v3505 = vpop.f32.mrf.mxu0
      %v3506 = vadd.f32 0.0, %v3505
      %v3507 = vpop.f32.mrf.mxu0
      %3508 = vdwg.mxu0
      %v3510 = vsel %vm3414, %v1456, 0
      %v3513 = vsel %vm3414, %v2440, 0
      %3515 = vmatprep.subr.bf16.mxu0 0
      %3516 = vmatpush1.bf16.xpose.msra.mxu0 0
      %3517 = vmatprep.subr.bf16.mxu0 0
      %3518 = vmatpush1.bf16.xpose.msra.mxu0 0
      %3519 = vmatprep.subr.bf16.mxu0 0
      %3520 = vmatpush1.bf16.xpose.msra.mxu0 0
      %3521 = vmatprep.subr.bf16.mxu0 0
      %3522 = vmatpush1.bf16.xpose.msra.mxu0 0
      %3523 = vmatprep.subr.bf16.mxu0 0
      %3524 = vmatpush1.bf16.xpose.msra.mxu0 0
      %3525 = vmatprep.subr.bf16.mxu0 0
      %3526 = vmatpush1.bf16.xpose.msra.mxu0 0
      %3527 = vmatprep.subr.bf16.mxu0 0
      %3528 = vmatpush1.bf16.xpose.msra.mxu0 0
      %3529 = vmatprep.subr.bf16.mxu0 0
      %3530 = vmatpush1.bf16.xpose.msra.mxu0 %v3513
      %3531 = vmatprep.subr.bf16.mxu0 0
      %3532 = vmatpush2.bf16.xpose.msra.mxu0 0
      %3533 = vmatprep.subr.bf16.mxu0 0
      %3534 = vmatpush2.bf16.xpose.msra.mxu0 0
      %3535 = vmatprep.subr.bf16.mxu0 0
      %3536 = vmatpush2.bf16.xpose.msra.mxu0 0
      %3537 = vmatprep.subr.bf16.mxu0 0
      %3538 = vmatpush2.bf16.xpose.msra.mxu0 0
      %3539 = vmatprep.subr.bf16.mxu0 0
      %3540 = vmatpush2.bf16.xpose.msra.mxu0 0
      %3541 = vmatprep.subr.bf16.mxu0 0
      %3542 = vmatpush2.bf16.xpose.msra.mxu0 0
      %3543 = vmatprep.subr.bf16.mxu0 0
      %3544 = vmatpush2.bf16.xpose.msra.mxu0 0
      %3545 = vmatprep.subr.bf16.mxu0 0
      %3546 = vmatpush2.bf16.xpose.msra.mxu0 0
      %3547 = vmatprep.mubr.bf16.mxu0 0
      %3548 = vmatmul.mubr.bf16.gmra.mxu0 %v3510
      %v3549 = vpop.f32.mrf.mxu0
      %v3550 = vadd.f32 0.0, %v3549
      %v3551 = vpop.f32.mrf.mxu0
      %v3552 = vpop.f32.mrf.mxu0
      %v3553 = vadd.f32 0.0, %v3552
      %v3554 = vpop.f32.mrf.mxu0
      %3555 = vdwg.mxu0
      %v3557 = vsel %vm3414, %v1457, 0
      %v3560 = vsel %vm3414, %v2441, 0
      %3562 = vmatprep.subr.bf16.mxu0 0
      %3563 = vmatpush1.bf16.xpose.msra.mxu0 0
      %3564 = vmatprep.subr.bf16.mxu0 0
      %3565 = vmatpush1.bf16.xpose.msra.mxu0 0
      %3566 = vmatprep.subr.bf16.mxu0 0
      %3567 = vmatpush1.bf16.xpose.msra.mxu0 0
      %3568 = vmatprep.subr.bf16.mxu0 0
      %3569 = vmatpush1.bf16.xpose.msra.mxu0 0
      %3570 = vmatprep.subr.bf16.mxu0 0
      %3571 = vmatpush1.bf16.xpose.msra.mxu0 0
      %3572 = vmatprep.subr.bf16.mxu0 0
      %3573 = vmatpush1.bf16.xpose.msra.mxu0 0
      %3574 = vmatprep.subr.bf16.mxu0 0
      %3575 = vmatpush1.bf16.xpose.msra.mxu0 0
      %3576 = vmatprep.subr.bf16.mxu0 0
      %3577 = vmatpush1.bf16.xpose.msra.mxu0 %v3560
      %3578 = vmatprep.subr.bf16.mxu0 0
      %3579 = vmatpush2.bf16.xpose.msra.mxu0 0
      %3580 = vmatprep.subr.bf16.mxu0 0
      %3581 = vmatpush2.bf16.xpose.msra.mxu0 0
      %3582 = vmatprep.subr.bf16.mxu0 0
      %3583 = vmatpush2.bf16.xpose.msra.mxu0 0
      %3584 = vmatprep.subr.bf16.mxu0 0
      %3585 = vmatpush2.bf16.xpose.msra.mxu0 0
      %3586 = vmatprep.subr.bf16.mxu0 0
      %3587 = vmatpush2.bf16.xpose.msra.mxu0 0
      %3588 = vmatprep.subr.bf16.mxu0 0
      %3589 = vmatpush2.bf16.xpose.msra.mxu0 0
      %3590 = vmatprep.subr.bf16.mxu0 0
      %3591 = vmatpush2.bf16.xpose.msra.mxu0 0
      %3592 = vmatprep.subr.bf16.mxu0 0
      %3593 = vmatpush2.bf16.xpose.msra.mxu0 0
      %3594 = vmatprep.mubr.bf16.mxu0 0
      %3595 = vmatmul.mubr.bf16.gmra.mxu0 %v3557
      %v3596 = vpop.f32.mrf.mxu0
      %v3597 = vadd.f32 0.0, %v3596
      %v3598 = vpop.f32.mrf.mxu0
      %v3599 = vpop.f32.mrf.mxu0
      %v3600 = vadd.f32 0.0, %v3599
      %v3601 = vpop.f32.mrf.mxu0
      %3602 = vdwg.mxu0
      %v3604 = vsel %vm3414, %v1458, 0
      %v3607 = vsel %vm3414, %v2442, 0
      %3609 = vmatprep.subr.bf16.mxu0 0
      %3610 = vmatpush1.bf16.xpose.msra.mxu0 0
      %3611 = vmatprep.subr.bf16.mxu0 0
      %3612 = vmatpush1.bf16.xpose.msra.mxu0 0
      %3613 = vmatprep.subr.bf16.mxu0 0
      %3614 = vmatpush1.bf16.xpose.msra.mxu0 0
      %3615 = vmatprep.subr.bf16.mxu0 0
      %3616 = vmatpush1.bf16.xpose.msra.mxu0 0
      %3617 = vmatprep.subr.bf16.mxu0 0
      %3618 = vmatpush1.bf16.xpose.msra.mxu0 0
      %3619 = vmatprep.subr.bf16.mxu0 0
      %3620 = vmatpush1.bf16.xpose.msra.mxu0 0
      %3621 = vmatprep.subr.bf16.mxu0 0
      %3622 = vmatpush1.bf16.xpose.msra.mxu0 0
      %3623 = vmatprep.subr.bf16.mxu0 0
      %3624 = vmatpush1.bf16.xpose.msra.mxu0 %v3607
      %3625 = vmatprep.subr.bf16.mxu0 0
      %3626 = vmatpush2.bf16.xpose.msra.mxu0 0
      %3627 = vmatprep.subr.bf16.mxu0 0
      %3628 = vmatpush2.bf16.xpose.msra.mxu0 0
      %3629 = vmatprep.subr.bf16.mxu0 0
      %3630 = vmatpush2.bf16.xpose.msra.mxu0 0
      %3631 = vmatprep.subr.bf16.mxu0 0
      %3632 = vmatpush2.bf16.xpose.msra.mxu0 0
      %3633 = vmatprep.subr.bf16.mxu0 0
      %3634 = vmatpush2.bf16.xpose.msra.mxu0 0
      %3635 = vmatprep.subr.bf16.mxu0 0
      %3636 = vmatpush2.bf16.xpose.msra.mxu0 0
      %3637 = vmatprep.subr.bf16.mxu0 0
      %3638 = vmatpush2.bf16.xpose.msra.mxu0 0
      %3639 = vmatprep.subr.bf16.mxu0 0
      %3640 = vmatpush2.bf16.xpose.msra.mxu0 0
      %3641 = vmatprep.mubr.bf16.mxu0 0
      %3642 = vmatmul.mubr.bf16.gmra.mxu0 %v3604
      %v3643 = vpop.f32.mrf.mxu0
      %v3644 = vadd.f32 0.0, %v3643
      %v3645 = vpop.f32.mrf.mxu0
      %v3646 = vpop.f32.mrf.mxu0
      %v3647 = vadd.f32 0.0, %v3646
      %v3648 = vpop.f32.mrf.mxu0
      %3649 = vdwg.mxu0
      %v3651 = vsel %vm3414, %v1459, 0
      %v3654 = vsel %vm3414, %v2443, 0
      %3656 = vmatprep.subr.bf16.mxu0 0
      %3657 = vmatpush1.bf16.xpose.msra.mxu0 0
      %3658 = vmatprep.subr.bf16.mxu0 0
      %3659 = vmatpush1.bf16.xpose.msra.mxu0 0
      %3660 = vmatprep.subr.bf16.mxu0 0
      %3661 = vmatpush1.bf16.xpose.msra.mxu0 0
      %3662 = vmatprep.subr.bf16.mxu0 0
      %3663 = vmatpush1.bf16.xpose.msra.mxu0 0
      %3664 = vmatprep.subr.bf16.mxu0 0
      %3665 = vmatpush1.bf16.xpose.msra.mxu0 0
      %3666 = vmatprep.subr.bf16.mxu0 0
      %3667 = vmatpush1.bf16.xpose.msra.mxu0 0
      %3668 = vmatprep.subr.bf16.mxu0 0
      %3669 = vmatpush1.bf16.xpose.msra.mxu0 0
      %3670 = vmatprep.subr.bf16.mxu0 0
      %3671 = vmatpush1.bf16.xpose.msra.mxu0 %v3654
      %3672 = vmatprep.subr.bf16.mxu0 0
      %3673 = vmatpush2.bf16.xpose.msra.mxu0 0
      %3674 = vmatprep.subr.bf16.mxu0 0
      %3675 = vmatpush2.bf16.xpose.msra.mxu0 0
      %3676 = vmatprep.subr.bf16.mxu0 0
      %3677 = vmatpush2.bf16.xpose.msra.mxu0 0
      %3678 = vmatprep.subr.bf16.mxu0 0
      %3679 = vmatpush2.bf16.xpose.msra.mxu0 0
      %3680 = vmatprep.subr.bf16.mxu0 0
      %3681 = vmatpush2.bf16.xpose.msra.mxu0 0
      %3682 = vmatprep.subr.bf16.mxu0 0
      %3683 = vmatpush2.bf16.xpose.msra.mxu0 0
      %3684 = vmatprep.subr.bf16.mxu0 0
      %3685 = vmatpush2.bf16.xpose.msra.mxu0 0
      %3686 = vmatprep.subr.bf16.mxu0 0
      %3687 = vmatpush2.bf16.xpose.msra.mxu0 0
      %3688 = vmatprep.mubr.bf16.mxu0 0
      %3689 = vmatmul.mubr.bf16.gmra.mxu0 %v3651
      %v3690 = vpop.f32.mrf.mxu0
      %v3691 = vadd.f32 0.0, %v3690
      %v3692 = vpop.f32.mrf.mxu0
      %v3693 = vpop.f32.mrf.mxu0
      %v3694 = vadd.f32 0.0, %v3693
      %v3695 = vpop.f32.mrf.mxu0
      %3696 = vdwg.mxu0
      %v3698 = vsel %vm3414, %v1460, 0
      %v3701 = vsel %vm3414, %v2444, 0
      %3703 = vmatprep.subr.bf16.mxu0 0
      %3704 = vmatpush1.bf16.xpose.msra.mxu0 0
      %3705 = vmatprep.subr.bf16.mxu0 0
      %3706 = vmatpush1.bf16.xpose.msra.mxu0 0
      %3707 = vmatprep.subr.bf16.mxu0 0
      %3708 = vmatpush1.bf16.xpose.msra.mxu0 0
      %3709 = vmatprep.subr.bf16.mxu0 0
      %3710 = vmatpush1.bf16.xpose.msra.mxu0 0
      %3711 = vmatprep.subr.bf16.mxu0 0
      %3712 = vmatpush1.bf16.xpose.msra.mxu0 0
      %3713 = vmatprep.subr.bf16.mxu0 0
      %3714 = vmatpush1.bf16.xpose.msra.mxu0 0
      %3715 = vmatprep.subr.bf16.mxu0 0
      %3716 = vmatpush1.bf16.xpose.msra.mxu0 0
      %3717 = vmatprep.subr.bf16.mxu0 0
      %3718 = vmatpush1.bf16.xpose.msra.mxu0 %v3701
      %3719 = vmatprep.subr.bf16.mxu0 0
      %3720 = vmatpush2.bf16.xpose.msra.mxu0 0
      %3721 = vmatprep.subr.bf16.mxu0 0
      %3722 = vmatpush2.bf16.xpose.msra.mxu0 0
      %3723 = vmatprep.subr.bf16.mxu0 0
      %3724 = vmatpush2.bf16.xpose.msra.mxu0 0
      %3725 = vmatprep.subr.bf16.mxu0 0
      %3726 = vmatpush2.bf16.xpose.msra.mxu0 0
      %3727 = vmatprep.subr.bf16.mxu0 0
      %3728 = vmatpush2.bf16.xpose.msra.mxu0 0
      %3729 = vmatprep.subr.bf16.mxu0 0
      %3730 = vmatpush2.bf16.xpose.msra.mxu0 0
      %3731 = vmatprep.subr.bf16.mxu0 0
      %3732 = vmatpush2.bf16.xpose.msra.mxu0 0
      %3733 = vmatprep.subr.bf16.mxu0 0
      %3734 = vmatpush2.bf16.xpose.msra.mxu0 0
      %3735 = vmatprep.mubr.bf16.mxu0 0
      %3736 = vmatmul.mubr.bf16.gmra.mxu0 %v3698
      %v3737 = vpop.f32.mrf.mxu0
      %v3738 = vadd.f32 0.0, %v3737
      %v3739 = vpop.f32.mrf.mxu0
      %v3740 = vpop.f32.mrf.mxu0
      %v3741 = vadd.f32 0.0, %v3740
      %v3742 = vpop.f32.mrf.mxu0
      %3743 = vdwg.mxu0
      %v3745 = vsel %vm3414, %v1461, 0
      %v3748 = vsel %vm3414, %v2445, 0
      %3750 = vmatprep.subr.bf16.mxu0 0
      %3751 = vmatpush1.bf16.xpose.msra.mxu0 0
      %3752 = vmatprep.subr.bf16.mxu0 0
      %3753 = vmatpush1.bf16.xpose.msra.mxu0 0
      %3754 = vmatprep.subr.bf16.mxu0 0
      %3755 = vmatpush1.bf16.xpose.msra.mxu0 0
      %3756 = vmatprep.subr.bf16.mxu0 0
      %3757 = vmatpush1.bf16.xpose.msra.mxu0 0
      %3758 = vmatprep.subr.bf16.mxu0 0
      %3759 = vmatpush1.bf16.xpose.msra.mxu0 0
      %3760 = vmatprep.subr.bf16.mxu0 0
      %3761 = vmatpush1.bf16.xpose.msra.mxu0 0
      %3762 = vmatprep.subr.bf16.mxu0 0
      %3763 = vmatpush1.bf16.xpose.msra.mxu0 0
      %3764 = vmatprep.subr.bf16.mxu0 0
      %3765 = vmatpush1.bf16.xpose.msra.mxu0 %v3748
      %3766 = vmatprep.subr.bf16.mxu0 0
      %3767 = vmatpush2.bf16.xpose.msra.mxu0 0
      %3768 = vmatprep.subr.bf16.mxu0 0
      %3769 = vmatpush2.bf16.xpose.msra.mxu0 0
      %3770 = vmatprep.subr.bf16.mxu0 0
      %3771 = vmatpush2.bf16.xpose.msra.mxu0 0
      %3772 = vmatprep.subr.bf16.mxu0 0
      %3773 = vmatpush2.bf16.xpose.msra.mxu0 0
      %3774 = vmatprep.subr.bf16.mxu0 0
      %3775 = vmatpush2.bf16.xpose.msra.mxu0 0
      %3776 = vmatprep.subr.bf16.mxu0 0
      %3777 = vmatpush2.bf16.xpose.msra.mxu0 0
      %3778 = vmatprep.subr.bf16.mxu0 0
      %3779 = vmatpush2.bf16.xpose.msra.mxu0 0
      %3780 = vmatprep.subr.bf16.mxu0 0
      %3781 = vmatpush2.bf16.xpose.msra.mxu0 0
      %3782 = vmatprep.mubr.bf16.mxu0 0
      %3783 = vmatmul.mubr.bf16.gmra.mxu0 %v3745
      %v3784 = vpop.f32.mrf.mxu0
      %v3785 = vadd.f32 0.0, %v3784
      %v3786 = vpop.f32.mrf.mxu0
      %v3787 = vpop.f32.mrf.mxu0
      %v3788 = vadd.f32 0.0, %v3787
      %v3789 = vpop.f32.mrf.mxu0
      %3790 = vdwg.mxu0
      %v3791 = vld [vmem:[%s4] sm:$0xff]
      %v3792 = vld [vmem:[%s4 + $0x8] sm:$0xff]
      %v3793 = vld [vmem:[%s4 + $0x10] sm:$0xff]
      %v3794 = vld [vmem:[%s4 + $0x18] sm:$0xff]
      %v3795 = vadd.f32 %v3456, %v3791
      %v3796 = vadd.f32 %v3459, %v3792
      %v3797 = vadd.f32 %v3503, %v3791
      %v3798 = vadd.f32 %v3506, %v3792
      %v3799 = vadd.f32 %v3550, %v3791
      %v3800 = vadd.f32 %v3553, %v3792
      %v3801 = vadd.f32 %v3597, %v3791
      %v3802 = vadd.f32 %v3600, %v3792
      %v3803 = vadd.f32 %v3644, %v3793
      %v3804 = vadd.f32 %v3647, %v3794
      %v3805 = vadd.f32 %v3691, %v3793
      %v3806 = vadd.f32 %v3694, %v3794
      %v3807 = vadd.f32 %v3738, %v3793
      %v3808 = vadd.f32 %v3741, %v3794
      %v3809 = vadd.f32 %v3785, %v3793
      %v3810 = vadd.f32 %v3788, %v3794
      %vm3811 = vcmask 130048
      %v3812 = vsel %vm3811, %v3795, -inf
      %3813 = vmax.xlane.f32.xlu0 %v3812
      %v3814 = vpop.xlane.xlu0 %3813
      %v3815 = vsel %vm3811, %v3796, -inf
      %3816 = vmax.xlane.f32.xlu0 %v3815
      %v3817 = vpop.xlane.xlu0 %3816
      %v3818 = vsel %vm3811, %v3797, -inf
      %3819 = vmax.xlane.f32.xlu0 %v3818
      %v3820 = vpop.xlane.xlu0 %3819
      %v3821 = vsel %vm3811, %v3798, -inf
      %3822 = vmax.xlane.f32.xlu0 %v3821
      %v3823 = vpop.xlane.xlu0 %3822
      %v3824 = vsel %vm3811, %v3799, -inf
      %3825 = vmax.xlane.f32.xlu0 %v3824
      %v3826 = vpop.xlane.xlu0 %3825
      %v3827 = vsel %vm3811, %v3800, -inf
      %3828 = vmax.xlane.f32.xlu0 %v3827
      %v3829 = vpop.xlane.xlu0 %3828
      %v3830 = vsel %vm3811, %v3801, -inf
      %3831 = vmax.xlane.f32.xlu0 %v3830
      %v3832 = vpop.xlane.xlu0 %3831
      %v3833 = vsel %vm3811, %v3802, -inf
      %3834 = vmax.xlane.f32.xlu0 %v3833
      %v3835 = vpop.xlane.xlu0 %3834
      %v3836 = vsel %vm3811, %v3803, -inf
      %3837 = vmax.xlane.f32.xlu0 %v3836
      %v3838 = vpop.xlane.xlu0 %3837
      %v3839 = vsel %vm3811, %v3804, -inf
      %3840 = vmax.xlane.f32.xlu0 %v3839
      %v3841 = vpop.xlane.xlu0 %3840
      %v3842 = vsel %vm3811, %v3805, -inf
      %3843 = vmax.xlane.f32.xlu0 %v3842
      %v3844 = vpop.xlane.xlu0 %3843
      %v3845 = vsel %vm3811, %v3806, -inf
      %3846 = vmax.xlane.f32.xlu0 %v3845
      %v3847 = vpop.xlane.xlu0 %3846
      %v3848 = vsel %vm3811, %v3807, -inf
      %3849 = vmax.xlane.f32.xlu0 %v3848
      %v3850 = vpop.xlane.xlu0 %3849
      %v3851 = vsel %vm3811, %v3808, -inf
      %3852 = vmax.xlane.f32.xlu0 %v3851
      %v3853 = vpop.xlane.xlu0 %3852
      %v3854 = vsel %vm3811, %v3809, -inf
      %3855 = vmax.xlane.f32.xlu0 %v3854
      %v3856 = vpop.xlane.xlu0 %3855
      %v3857 = vsel %vm3811, %v3810, -inf
      %3858 = vmax.xlane.f32.xlu0 %v3857
      %v3859 = vpop.xlane.xlu0 %3858
      %v3860 = vsub.f32 %v3795, %v3814
      %v3861 = vsub.f32 %v3796, %v3817
      %v3862 = vsub.f32 %v3797, %v3820
      %v3863 = vsub.f32 %v3798, %v3823
      %v3864 = vsub.f32 %v3799, %v3826
      %v3865 = vsub.f32 %v3800, %v3829
      %v3866 = vsub.f32 %v3801, %v3832
      %v3867 = vsub.f32 %v3802, %v3835
      %v3868 = vsub.f32 %v3803, %v3838
      %v3869 = vsub.f32 %v3804, %v3841
      %v3870 = vsub.f32 %v3805, %v3844
      %v3871 = vsub.f32 %v3806, %v3847
      %v3872 = vsub.f32 %v3807, %v3850
      %v3873 = vsub.f32 %v3808, %v3853
      %v3874 = vsub.f32 %v3809, %v3856
      %v3875 = vsub.f32 %v3810, %v3859
      %v3876 = vmul.f32 %v3860, 1.442695
      %v3877 = vpow.pop %v3876
      %v3878 = vmul.f32 %v3861, 1.442695
      %v3879 = vpow.pop %v3878
      %v3880 = vmul.f32 %v3862, 1.442695
      %v3881 = vpow.pop %v3880
      %v3882 = vmul.f32 %v3863, 1.442695
      %v3883 = vpow.pop %v3882
      %v3884 = vmul.f32 %v3864, 1.442695
      %v3885 = vpow.pop %v3884
      %v3886 = vmul.f32 %v3865, 1.442695
      %v3887 = vpow.pop %v3886
      %v3888 = vmul.f32 %v3866, 1.442695
      %v3889 = vpow.pop %v3888
      %v3890 = vmul.f32 %v3867, 1.442695
      %v3891 = vpow.pop %v3890
      %v3892 = vmul.f32 %v3868, 1.442695
      %v3893 = vpow.pop %v3892
      %v3894 = vmul.f32 %v3869, 1.442695
      %v3895 = vpow.pop %v3894
      %v3896 = vmul.f32 %v3870, 1.442695
      %v3897 = vpow.pop %v3896
      %v3898 = vmul.f32 %v3871, 1.442695
      %v3899 = vpow.pop %v3898
      %v3900 = vmul.f32 %v3872, 1.442695
      %v3901 = vpow.pop %v3900
      %v3902 = vmul.f32 %v3873, 1.442695
      %v3903 = vpow.pop %v3902
      %v3904 = vmul.f32 %v3874, 1.442695
      %v3905 = vpow.pop %v3904
      %v3906 = vmul.f32 %v3875, 1.442695
      %v3907 = vpow.pop %v3906
      %v3908 = vsel %vm3811, %v3877, 0.0
      %3909 = vadd.xlane.f32.xlu0 %v3908
      %v3910 = vpop.xlane.xlu0 %3909
      %v3911 = vsel %vm3811, %v3879, 0.0
      %3912 = vadd.xlane.f32.xlu0 %v3911
      %v3913 = vpop.xlane.xlu0 %3912
      %v3914 = vsel %vm3811, %v3881, 0.0
      %3915 = vadd.xlane.f32.xlu0 %v3914
      %v3916 = vpop.xlane.xlu0 %3915
      %v3917 = vsel %vm3811, %v3883, 0.0
      %3918 = vadd.xlane.f32.xlu0 %v3917
      %v3919 = vpop.xlane.xlu0 %3918
      %v3920 = vsel %vm3811, %v3885, 0.0
      %3921 = vadd.xlane.f32.xlu0 %v3920
      %v3922 = vpop.xlane.xlu0 %3921
      %v3923 = vsel %vm3811, %v3887, 0.0
      %3924 = vadd.xlane.f32.xlu0 %v3923
      %v3925 = vpop.xlane.xlu0 %3924
      %v3926 = vsel %vm3811, %v3889, 0.0
      %3927 = vadd.xlane.f32.xlu0 %v3926
      %v3928 = vpop.xlane.xlu0 %3927
      %v3929 = vsel %vm3811, %v3891, 0.0
      %3930 = vadd.xlane.f32.xlu0 %v3929
      %v3931 = vpop.xlane.xlu0 %3930
      %v3932 = vsel %vm3811, %v3893, 0.0
      %3933 = vadd.xlane.f32.xlu0 %v3932
      %v3934 = vpop.xlane.xlu0 %3933
      %v3935 = vsel %vm3811, %v3895, 0.0
      %3936 = vadd.xlane.f32.xlu0 %v3935
      %v3937 = vpop.xlane.xlu0 %3936
      %v3938 = vsel %vm3811, %v3897, 0.0
      %3939 = vadd.xlane.f32.xlu0 %v3938
      %v3940 = vpop.xlane.xlu0 %3939
      %v3941 = vsel %vm3811, %v3899, 0.0
      %3942 = vadd.xlane.f32.xlu0 %v3941
      %v3943 = vpop.xlane.xlu0 %3942
      %v3944 = vsel %vm3811, %v3901, 0.0
      %3945 = vadd.xlane.f32.xlu0 %v3944
      %v3946 = vpop.xlane.xlu0 %3945
      %v3947 = vsel %vm3811, %v3903, 0.0
      %3948 = vadd.xlane.f32.xlu0 %v3947
      %v3949 = vpop.xlane.xlu0 %3948
      %v3950 = vsel %vm3811, %v3905, 0.0
      %3951 = vadd.xlane.f32.xlu0 %v3950
      %v3952 = vpop.xlane.xlu0 %3951
      %v3953 = vsel %vm3811, %v3907, 0.0
      %3954 = vadd.xlane.f32.xlu0 %v3953
      %v3955 = vpop.xlane.xlu0 %3954
      %v3956 = vrcp.pop %v3910
      %v3957 = vrcp.pop %v3913
      %v3958 = vrcp.pop %v3916
      %v3959 = vrcp.pop %v3919
      %v3960 = vrcp.pop %v3922
      %v3961 = vrcp.pop %v3925
      %v3962 = vrcp.pop %v3928
      %v3963 = vrcp.pop %v3931
      %v3964 = vrcp.pop %v3934
      %v3965 = vrcp.pop %v3937
      %v3966 = vrcp.pop %v3940
      %v3967 = vrcp.pop %v3943
      %v3968 = vrcp.pop %v3946
      %v3969 = vrcp.pop %v3949
      %v3970 = vrcp.pop %v3952
      %v3971 = vrcp.pop %v3955
      %v3972 = vmul.f32 %v3877, %v3956
      %v3973 = vmul.f32 %v3879, %v3957
      %v3974 = vmul.f32 %v3881, %v3958
      %v3975 = vmul.f32 %v3883, %v3959
      %v3976 = vmul.f32 %v3885, %v3960
      %v3977 = vmul.f32 %v3887, %v3961
      %v3978 = vmul.f32 %v3889, %v3962
      %v3979 = vmul.f32 %v3891, %v3963
      %v3980 = vmul.f32 %v3893, %v3964
      %v3981 = vmul.f32 %v3895, %v3965
      %v3982 = vmul.f32 %v3897, %v3966
      %v3983 = vmul.f32 %v3899, %v3967
      %v3984 = vmul.f32 %v3901, %v3968
      %v3985 = vmul.f32 %v3903, %v3969
      %v3986 = vmul.f32 %v3905, %v3970
      %v3987 = vmul.f32 %v3907, %v3971
      %v3988 = vpack.c.bf16 %v3973, %v3972
      %v3989 = vpack.c.bf16 %v3975, %v3974
      %v3990 = vpack.c.bf16 %v3977, %v3976
      %v3991 = vpack.c.bf16 %v3979, %v3978
      %v3992 = vpack.c.bf16 %v3981, %v3980
      %v3993 = vpack.c.bf16 %v3983, %v3982
      %v3994 = vpack.c.bf16 %v3985, %v3984
      %v3995 = vpack.c.bf16 %v3987, %v3986
      %v3997 = vsel %vm3811, %v3988, 0
      %3999 = vmatprep.subr.bf16.mxu0 0
      %4000 = vmatpush1.bf16.msra.mxu0 0
      %4001 = vmatprep.subr.bf16.mxu0 0
      %4002 = vmatpush1.bf16.msra.mxu0 0
      %4003 = vmatprep.subr.bf16.mxu0 0
      %4004 = vmatpush1.bf16.msra.mxu0 0
      %4005 = vmatprep.subr.bf16.mxu0 0
      %4006 = vmatpush1.bf16.msra.mxu0 0
      %4007 = vmatprep.subr.bf16.mxu0 0
      %4008 = vmatpush1.bf16.msra.mxu0 0
      %4009 = vmatprep.subr.bf16.mxu0 0
      %4010 = vmatpush1.bf16.msra.mxu0 0
      %4011 = vmatprep.subr.bf16.mxu0 0
      %4012 = vmatpush1.bf16.msra.mxu0 0
      %4013 = vmatprep.subr.bf16.mxu0 0
      %4014 = vmatpush1.bf16.msra.mxu0 %v3406
      %4015 = vmatprep.subr.bf16.mxu0 0
      %4016 = vmatpush2.bf16.msra.mxu0 0
      %4017 = vmatprep.subr.bf16.mxu0 0
      %4018 = vmatpush2.bf16.msra.mxu0 0
      %4019 = vmatprep.subr.bf16.mxu0 0
      %4020 = vmatpush2.bf16.msra.mxu0 0
      %4021 = vmatprep.subr.bf16.mxu0 0
      %4022 = vmatpush2.bf16.msra.mxu0 0
      %4023 = vmatprep.subr.bf16.mxu0 0
      %4024 = vmatpush2.bf16.msra.mxu0 0
      %4025 = vmatprep.subr.bf16.mxu0 0
      %4026 = vmatpush2.bf16.msra.mxu0 0
      %4027 = vmatprep.subr.bf16.mxu0 0
      %4028 = vmatpush2.bf16.msra.mxu0 0
      %4029 = vmatprep.subr.bf16.mxu0 0
      %4030 = vmatpush2.bf16.msra.mxu0 0
      %4031 = vmatprep.mubr.bf16.mxu0 0
      %4032 = vmatmul.mubr.bf16.gmra.mxu0 %v3997
      %v4033 = vpop.f32.mrf.mxu0
      %v4034 = vadd.f32 0.0, %v4033
      %v4035 = vpop.f32.mrf.mxu0
      %v4036 = vpop.f32.mrf.mxu0
      %v4037 = vadd.f32 0.0, %v4036
      %v4038 = vpop.f32.mrf.mxu0
      %4039 = vdwg.mxu0
      %v4041 = vsel %vm3811, %v3989, 0
      %4043 = vmatprep.subr.bf16.mxu0 0
      %4044 = vmatpush1.bf16.msra.mxu0 0
      %4045 = vmatprep.subr.bf16.mxu0 0
      %4046 = vmatpush1.bf16.msra.mxu0 0
      %4047 = vmatprep.subr.bf16.mxu0 0
      %4048 = vmatpush1.bf16.msra.mxu0 0
      %4049 = vmatprep.subr.bf16.mxu0 0
      %4050 = vmatpush1.bf16.msra.mxu0 0
      %4051 = vmatprep.subr.bf16.mxu0 0
      %4052 = vmatpush1.bf16.msra.mxu0 0
      %4053 = vmatprep.subr.bf16.mxu0 0
      %4054 = vmatpush1.bf16.msra.mxu0 0
      %4055 = vmatprep.subr.bf16.mxu0 0
      %4056 = vmatpush1.bf16.msra.mxu0 0
      %4057 = vmatprep.subr.bf16.mxu0 0
      %4058 = vmatpush1.bf16.msra.mxu0 %v3407
      %4059 = vmatprep.subr.bf16.mxu0 0
      %4060 = vmatpush2.bf16.msra.mxu0 0
      %4061 = vmatprep.subr.bf16.mxu0 0
      %4062 = vmatpush2.bf16.msra.mxu0 0
      %4063 = vmatprep.subr.bf16.mxu0 0
      %4064 = vmatpush2.bf16.msra.mxu0 0
      %4065 = vmatprep.subr.bf16.mxu0 0
      %4066 = vmatpush2.bf16.msra.mxu0 0
      %4067 = vmatprep.subr.bf16.mxu0 0
      %4068 = vmatpush2.bf16.msra.mxu0 0
      %4069 = vmatprep.subr.bf16.mxu0 0
      %4070 = vmatpush2.bf16.msra.mxu0 0
      %4071 = vmatprep.subr.bf16.mxu0 0
      %4072 = vmatpush2.bf16.msra.mxu0 0
      %4073 = vmatprep.subr.bf16.mxu0 0
      %4074 = vmatpush2.bf16.msra.mxu0 0
      %4075 = vmatprep.mubr.bf16.mxu0 0
      %4076 = vmatmul.mubr.bf16.gmra.mxu0 %v4041
      %v4077 = vpop.f32.mrf.mxu0
      %v4078 = vadd.f32 0.0, %v4077
      %v4079 = vpop.f32.mrf.mxu0
      %v4080 = vpop.f32.mrf.mxu0
      %v4081 = vadd.f32 0.0, %v4080
      %v4082 = vpop.f32.mrf.mxu0
      %4083 = vdwg.mxu0
      %v4085 = vsel %vm3811, %v3990, 0
      %4087 = vmatprep.subr.bf16.mxu0 0
      %4088 = vmatpush1.bf16.msra.mxu0 0
      %4089 = vmatprep.subr.bf16.mxu0 0
      %4090 = vmatpush1.bf16.msra.mxu0 0
      %4091 = vmatprep.subr.bf16.mxu0 0
      %4092 = vmatpush1.bf16.msra.mxu0 0
      %4093 = vmatprep.subr.bf16.mxu0 0
      %4094 = vmatpush1.bf16.msra.mxu0 0
      %4095 = vmatprep.subr.bf16.mxu0 0
      %4096 = vmatpush1.bf16.msra.mxu0 0
      %4097 = vmatprep.subr.bf16.mxu0 0
      %4098 = vmatpush1.bf16.msra.mxu0 0
      %4099 = vmatprep.subr.bf16.mxu0 0
      %4100 = vmatpush1.bf16.msra.mxu0 0
      %4101 = vmatprep.subr.bf16.mxu0 0
      %4102 = vmatpush1.bf16.msra.mxu0 %v3408
      %4103 = vmatprep.subr.bf16.mxu0 0
      %4104 = vmatpush2.bf16.msra.mxu0 0
      %4105 = vmatprep.subr.bf16.mxu0 0
      %4106 = vmatpush2.bf16.msra.mxu0 0
      %4107 = vmatprep.subr.bf16.mxu0 0
      %4108 = vmatpush2.bf16.msra.mxu0 0
      %4109 = vmatprep.subr.bf16.mxu0 0
      %4110 = vmatpush2.bf16.msra.mxu0 0
      %4111 = vmatprep.subr.bf16.mxu0 0
      %4112 = vmatpush2.bf16.msra.mxu0 0
      %4113 = vmatprep.subr.bf16.mxu0 0
      %4114 = vmatpush2.bf16.msra.mxu0 0
      %4115 = vmatprep.subr.bf16.mxu0 0
      %4116 = vmatpush2.bf16.msra.mxu0 0
      %4117 = vmatprep.subr.bf16.mxu0 0
      %4118 = vmatpush2.bf16.msra.mxu0 0
      %4119 = vmatprep.mubr.bf16.mxu0 0
      %4120 = vmatmul.mubr.bf16.gmra.mxu0 %v4085
      %v4121 = vpop.f32.mrf.mxu0
      %v4122 = vadd.f32 0.0, %v4121
      %v4123 = vpop.f32.mrf.mxu0
      %v4124 = vpop.f32.mrf.mxu0
      %v4125 = vadd.f32 0.0, %v4124
      %v4126 = vpop.f32.mrf.mxu0
      %4127 = vdwg.mxu0
      %v4129 = vsel %vm3811, %v3991, 0
      %4131 = vmatprep.subr.bf16.mxu0 0
      %4132 = vmatpush1.bf16.msra.mxu0 0
      %4133 = vmatprep.subr.bf16.mxu0 0
      %4134 = vmatpush1.bf16.msra.mxu0 0
      %4135 = vmatprep.subr.bf16.mxu0 0
      %4136 = vmatpush1.bf16.msra.mxu0 0
      %4137 = vmatprep.subr.bf16.mxu0 0
      %4138 = vmatpush1.bf16.msra.mxu0 0
      %4139 = vmatprep.subr.bf16.mxu0 0
      %4140 = vmatpush1.bf16.msra.mxu0 0
      %4141 = vmatprep.subr.bf16.mxu0 0
      %4142 = vmatpush1.bf16.msra.mxu0 0
      %4143 = vmatprep.subr.bf16.mxu0 0
      %4144 = vmatpush1.bf16.msra.mxu0 0
      %4145 = vmatprep.subr.bf16.mxu0 0
      %4146 = vmatpush1.bf16.msra.mxu0 %v3409
      %4147 = vmatprep.subr.bf16.mxu0 0
      %4148 = vmatpush2.bf16.msra.mxu0 0
      %4149 = vmatprep.subr.bf16.mxu0 0
      %4150 = vmatpush2.bf16.msra.mxu0 0
      %4151 = vmatprep.subr.bf16.mxu0 0
      %4152 = vmatpush2.bf16.msra.mxu0 0
      %4153 = vmatprep.subr.bf16.mxu0 0
      %4154 = vmatpush2.bf16.msra.mxu0 0
      %4155 = vmatprep.subr.bf16.mxu0 0
      %4156 = vmatpush2.bf16.msra.mxu0 0
      %4157 = vmatprep.subr.bf16.mxu0 0
      %4158 = vmatpush2.bf16.msra.mxu0 0
      %4159 = vmatprep.subr.bf16.mxu0 0
      %4160 = vmatpush2.bf16.msra.mxu0 0
      %4161 = vmatprep.subr.bf16.mxu0 0
      %4162 = vmatpush2.bf16.msra.mxu0 0
      %4163 = vmatprep.mubr.bf16.mxu0 0
      %4164 = vmatmul.mubr.bf16.gmra.mxu0 %v4129
      %v4165 = vpop.f32.mrf.mxu0
      %v4166 = vadd.f32 0.0, %v4165
      %v4167 = vpop.f32.mrf.mxu0
      %v4168 = vpop.f32.mrf.mxu0
      %v4169 = vadd.f32 0.0, %v4168
      %v4170 = vpop.f32.mrf.mxu0
      %4171 = vdwg.mxu0
      %v4173 = vsel %vm3811, %v3992, 0
      %4175 = vmatprep.subr.bf16.mxu0 0
      %4176 = vmatpush1.bf16.msra.mxu0 0
      %4177 = vmatprep.subr.bf16.mxu0 0
      %4178 = vmatpush1.bf16.msra.mxu0 0
      %4179 = vmatprep.subr.bf16.mxu0 0
      %4180 = vmatpush1.bf16.msra.mxu0 0
      %4181 = vmatprep.subr.bf16.mxu0 0
      %4182 = vmatpush1.bf16.msra.mxu0 0
      %4183 = vmatprep.subr.bf16.mxu0 0
      %4184 = vmatpush1.bf16.msra.mxu0 0
      %4185 = vmatprep.subr.bf16.mxu0 0
      %4186 = vmatpush1.bf16.msra.mxu0 0
      %4187 = vmatprep.subr.bf16.mxu0 0
      %4188 = vmatpush1.bf16.msra.mxu0 0
      %4189 = vmatprep.subr.bf16.mxu0 0
      %4190 = vmatpush1.bf16.msra.mxu0 %v3410
      %4191 = vmatprep.subr.bf16.mxu0 0
      %4192 = vmatpush2.bf16.msra.mxu0 0
      %4193 = vmatprep.subr.bf16.mxu0 0
      %4194 = vmatpush2.bf16.msra.mxu0 0
      %4195 = vmatprep.subr.bf16.mxu0 0
      %4196 = vmatpush2.bf16.msra.mxu0 0
      %4197 = vmatprep.subr.bf16.mxu0 0
      %4198 = vmatpush2.bf16.msra.mxu0 0
      %4199 = vmatprep.subr.bf16.mxu0 0
      %4200 = vmatpush2.bf16.msra.mxu0 0
      %4201 = vmatprep.subr.bf16.mxu0 0
      %4202 = vmatpush2.bf16.msra.mxu0 0
      %4203 = vmatprep.subr.bf16.mxu0 0
      %4204 = vmatpush2.bf16.msra.mxu0 0
      %4205 = vmatprep.subr.bf16.mxu0 0
      %4206 = vmatpush2.bf16.msra.mxu0 0
      %4207 = vmatprep.mubr.bf16.mxu0 0
      %4208 = vmatmul.mubr.bf16.gmra.mxu0 %v4173
      %v4209 = vpop.f32.mrf.mxu0
      %v4210 = vadd.f32 0.0, %v4209
      %v4211 = vpop.f32.mrf.mxu0
      %v4212 = vpop.f32.mrf.mxu0
      %v4213 = vadd.f32 0.0, %v4212
      %v4214 = vpop.f32.mrf.mxu0
      %4215 = vdwg.mxu0
      %v4217 = vsel %vm3811, %v3993, 0
      %4219 = vmatprep.subr.bf16.mxu0 0
      %4220 = vmatpush1.bf16.msra.mxu0 0
      %4221 = vmatprep.subr.bf16.mxu0 0
      %4222 = vmatpush1.bf16.msra.mxu0 0
      %4223 = vmatprep.subr.bf16.mxu0 0
      %4224 = vmatpush1.bf16.msra.mxu0 0
      %4225 = vmatprep.subr.bf16.mxu0 0
      %4226 = vmatpush1.bf16.msra.mxu0 0
      %4227 = vmatprep.subr.bf16.mxu0 0
      %4228 = vmatpush1.bf16.msra.mxu0 0
      %4229 = vmatprep.subr.bf16.mxu0 0
      %4230 = vmatpush1.bf16.msra.mxu0 0
      %4231 = vmatprep.subr.bf16.mxu0 0
      %4232 = vmatpush1.bf16.msra.mxu0 0
      %4233 = vmatprep.subr.bf16.mxu0 0
      %4234 = vmatpush1.bf16.msra.mxu0 %v3411
      %4235 = vmatprep.subr.bf16.mxu0 0
      %4236 = vmatpush2.bf16.msra.mxu0 0
      %4237 = vmatprep.subr.bf16.mxu0 0
      %4238 = vmatpush2.bf16.msra.mxu0 0
      %4239 = vmatprep.subr.bf16.mxu0 0
      %4240 = vmatpush2.bf16.msra.mxu0 0
      %4241 = vmatprep.subr.bf16.mxu0 0
      %4242 = vmatpush2.bf16.msra.mxu0 0
      %4243 = vmatprep.subr.bf16.mxu0 0
      %4244 = vmatpush2.bf16.msra.mxu0 0
      %4245 = vmatprep.subr.bf16.mxu0 0
      %4246 = vmatpush2.bf16.msra.mxu0 0
      %4247 = vmatprep.subr.bf16.mxu0 0
      %4248 = vmatpush2.bf16.msra.mxu0 0
      %4249 = vmatprep.subr.bf16.mxu0 0
      %4250 = vmatpush2.bf16.msra.mxu0 0
      %4251 = vmatprep.mubr.bf16.mxu0 0
      %4252 = vmatmul.mubr.bf16.gmra.mxu0 %v4217
      %v4253 = vpop.f32.mrf.mxu0
      %v4254 = vadd.f32 0.0, %v4253
      %v4255 = vpop.f32.mrf.mxu0
      %v4256 = vpop.f32.mrf.mxu0
      %v4257 = vadd.f32 0.0, %v4256
      %v4258 = vpop.f32.mrf.mxu0
      %4259 = vdwg.mxu0
      %v4261 = vsel %vm3811, %v3994, 0
      %4263 = vmatprep.subr.bf16.mxu0 0
      %4264 = vmatpush1.bf16.msra.mxu0 0
      %4265 = vmatprep.subr.bf16.mxu0 0
      %4266 = vmatpush1.bf16.msra.mxu0 0
      %4267 = vmatprep.subr.bf16.mxu0 0
      %4268 = vmatpush1.bf16.msra.mxu0 0
      %4269 = vmatprep.subr.bf16.mxu0 0
      %4270 = vmatpush1.bf16.msra.mxu0 0
      %4271 = vmatprep.subr.bf16.mxu0 0
      %4272 = vmatpush1.bf16.msra.mxu0 0
      %4273 = vmatprep.subr.bf16.mxu0 0
      %4274 = vmatpush1.bf16.msra.mxu0 0
      %4275 = vmatprep.subr.bf16.mxu0 0
      %4276 = vmatpush1.bf16.msra.mxu0 0
      %4277 = vmatprep.subr.bf16.mxu0 0
      %4278 = vmatpush1.bf16.msra.mxu0 %v3412
      %4279 = vmatprep.subr.bf16.mxu0 0
      %4280 = vmatpush2.bf16.msra.mxu0 0
      %4281 = vmatprep.subr.bf16.mxu0 0
      %4282 = vmatpush2.bf16.msra.mxu0 0
      %4283 = vmatprep.subr.bf16.mxu0 0
      %4284 = vmatpush2.bf16.msra.mxu0 0
      %4285 = vmatprep.subr.bf16.mxu0 0
      %4286 = vmatpush2.bf16.msra.mxu0 0
      %4287 = vmatprep.subr.bf16.mxu0 0
      %4288 = vmatpush2.bf16.msra.mxu0 0
      %4289 = vmatprep.subr.bf16.mxu0 0
      %4290 = vmatpush2.bf16.msra.mxu0 0
      %4291 = vmatprep.subr.bf16.mxu0 0
      %4292 = vmatpush2.bf16.msra.mxu0 0
      %4293 = vmatprep.subr.bf16.mxu0 0
      %4294 = vmatpush2.bf16.msra.mxu0 0
      %4295 = vmatprep.mubr.bf16.mxu0 0
      %4296 = vmatmul.mubr.bf16.gmra.mxu0 %v4261
      %v4297 = vpop.f32.mrf.mxu0
      %v4298 = vadd.f32 0.0, %v4297
      %v4299 = vpop.f32.mrf.mxu0
      %v4300 = vpop.f32.mrf.mxu0
      %v4301 = vadd.f32 0.0, %v4300
      %v4302 = vpop.f32.mrf.mxu0
      %4303 = vdwg.mxu0
      %v4305 = vsel %vm3811, %v3995, 0
      %4307 = vmatprep.subr.bf16.mxu0 0
      %4308 = vmatpush1.bf16.msra.mxu0 0
      %4309 = vmatprep.subr.bf16.mxu0 0
      %4310 = vmatpush1.bf16.msra.mxu0 0
      %4311 = vmatprep.subr.bf16.mxu0 0
      %4312 = vmatpush1.bf16.msra.mxu0 0
      %4313 = vmatprep.subr.bf16.mxu0 0
      %4314 = vmatpush1.bf16.msra.mxu0 0
      %4315 = vmatprep.subr.bf16.mxu0 0
      %4316 = vmatpush1.bf16.msra.mxu0 0
      %4317 = vmatprep.subr.bf16.mxu0 0
      %4318 = vmatpush1.bf16.msra.mxu0 0
      %4319 = vmatprep.subr.bf16.mxu0 0
      %4320 = vmatpush1.bf16.msra.mxu0 0
      %4321 = vmatprep.subr.bf16.mxu0 0
      %4322 = vmatpush1.bf16.msra.mxu0 %v3413
      %4323 = vmatprep.subr.bf16.mxu0 0
      %4324 = vmatpush2.bf16.msra.mxu0 0
      %4325 = vmatprep.subr.bf16.mxu0 0
      %4326 = vmatpush2.bf16.msra.mxu0 0
      %4327 = vmatprep.subr.bf16.mxu0 0
      %4328 = vmatpush2.bf16.msra.mxu0 0
      %4329 = vmatprep.subr.bf16.mxu0 0
      %4330 = vmatpush2.bf16.msra.mxu0 0
      %4331 = vmatprep.subr.bf16.mxu0 0
      %4332 = vmatpush2.bf16.msra.mxu0 0
      %4333 = vmatprep.subr.bf16.mxu0 0
      %4334 = vmatpush2.bf16.msra.mxu0 0
      %4335 = vmatprep.subr.bf16.mxu0 0
      %4336 = vmatpush2.bf16.msra.mxu0 0
      %4337 = vmatprep.subr.bf16.mxu0 0
      %4338 = vmatpush2.bf16.msra.mxu0 0
      %4339 = vmatprep.mubr.bf16.mxu0 0
      %4340 = vmatmul.mubr.bf16.gmra.mxu0 %v4305
      %v4341 = vpop.f32.mrf.mxu0
      %v4342 = vadd.f32 0.0, %v4341
      %v4343 = vpop.f32.mrf.mxu0
      %v4344 = vpop.f32.mrf.mxu0
      %v4345 = vadd.f32 0.0, %v4344
      %v4346 = vpop.f32.mrf.mxu0
      %4347 = vdwg.mxu0
      %v4348 = vcombine.high %v4034, 0.0
      %v4350 = vunpack.c.l.s4 1983009808
      %v4351 = vunpack.c.0.s8 %v4350
      %v4352 = vlaneseq
      %v4353 = vshrl.u32 %v4352, 7
      %v4354 = vsub.s32 %v4351, %v4353
      %v4355 = vrot.slane %v4034, %v4354
      %v4357 = vunpack.c.l.s4 1983009808
      %v4358 = vunpack.c.0.s8 %v4357
      %v4359 = vlaneseq
      %v4360 = vshrl.u32 %v4359, 7
      %v4361 = vsub.s32 %v4358, %v4360
      %v4362 = vrot.slane %v4348, %v4361
      %v4363 = vcombine.high %v4210, 0.0
      %v4365 = vunpack.c.l.s4 1983009808
      %v4366 = vunpack.c.0.s8 %v4365
      %v4367 = vlaneseq
      %v4368 = vshrl.u32 %v4367, 7
      %v4369 = vsub.s32 %v4366, %v4368
      %v4370 = vrot.slane %v4210, %v4369
      %v4372 = vunpack.c.l.s4 1983009808
      %v4373 = vunpack.c.0.s8 %v4372
      %v4374 = vlaneseq
      %v4375 = vshrl.u32 %v4374, 7
      %v4376 = vsub.s32 %v4373, %v4375
      %v4377 = vrot.slane %v4363, %v4376
      %v4378 = vcombine.low %v4355, %v4370
      %v4379 = vcombine.high %v4355, %v4370
      %v4381 = vunpack.c.l.s4 1934713408
      %v4382 = vunpack.c.0.s8 %v4381
      %v4383 = vlaneseq
      %v4384 = vshrl.u32 %v4383, 7
      %v4385 = vsub.s32 %v4382, %v4384
      %v4386 = vrot.slane %v4378, %v4385
      %v4388 = vunpack.c.l.s4 1934713408
      %v4389 = vunpack.c.0.s8 %v4388
      %v4390 = vlaneseq
      %v4391 = vshrl.u32 %v4390, 7
      %v4392 = vsub.s32 %v4389, %v4391
      %v4393 = vrot.slane %v4379, %v4392
      %v4394 = vcombine.low %v4362, %v4377
      %v4395 = vcombine.high %v4362, %v4377
      %v4397 = vunpack.c.l.s4 1934713408
      %v4398 = vunpack.c.0.s8 %v4397
      %v4399 = vlaneseq
      %v4400 = vshrl.u32 %v4399, 7
      %v4401 = vsub.s32 %v4398, %v4400
      %v4402 = vrot.slane %v4394, %v4401
      %v4404 = vunpack.c.l.s4 1934713408
      %v4405 = vunpack.c.0.s8 %v4404
      %v4406 = vlaneseq
      %v4407 = vshrl.u32 %v4406, 7
      %v4408 = vsub.s32 %v4405, %v4407
      %v4409 = vrot.slane %v4395, %v4408
      %v4410 = vcombine.high %v4386, 0.0
      %v4411 = vcombine.high %v4393, 0.0
      %v4412 = vcombine.high %v4402, 0.0
      %v4413 = vcombine.high %v4409, 0.0
      %v4414 = vcombine.high %v4037, 0.0
      %v4416 = vunpack.c.l.s4 1983009808
      %v4417 = vunpack.c.0.s8 %v4416
      %v4418 = vlaneseq
      %v4419 = vshrl.u32 %v4418, 7
      %v4420 = vsub.s32 %v4417, %v4419
      %v4421 = vrot.slane %v4037, %v4420
      %v4423 = vunpack.c.l.s4 1983009808
      %v4424 = vunpack.c.0.s8 %v4423
      %v4425 = vlaneseq
      %v4426 = vshrl.u32 %v4425, 7
      %v4427 = vsub.s32 %v4424, %v4426
      %v4428 = vrot.slane %v4414, %v4427
      %v4429 = vcombine.high %v4213, 0.0
      %v4431 = vunpack.c.l.s4 1983009808
      %v4432 = vunpack.c.0.s8 %v4431
      %v4433 = vlaneseq
      %v4434 = vshrl.u32 %v4433, 7
      %v4435 = vsub.s32 %v4432, %v4434
      %v4436 = vrot.slane %v4213, %v4435
      %v4438 = vunpack.c.l.s4 1983009808
      %v4439 = vunpack.c.0.s8 %v4438
      %v4440 = vlaneseq
      %v4441 = vshrl.u32 %v4440, 7
      %v4442 = vsub.s32 %v4439, %v4441
      %v4443 = vrot.slane %v4429, %v4442
      %v4444 = vcombine.low %v4421, %v4436
      %v4445 = vcombine.high %v4421, %v4436
      %v4447 = vunpack.c.l.s4 1934713408
      %v4448 = vunpack.c.0.s8 %v4447
      %v4449 = vlaneseq
      %v4450 = vshrl.u32 %v4449, 7
      %v4451 = vsub.s32 %v4448, %v4450
      %v4452 = vrot.slane %v4444, %v4451
      %v4454 = vunpack.c.l.s4 1934713408
      %v4455 = vunpack.c.0.s8 %v4454
      %v4456 = vlaneseq
      %v4457 = vshrl.u32 %v4456, 7
      %v4458 = vsub.s32 %v4455, %v4457
      %v4459 = vrot.slane %v4445, %v4458
      %v4460 = vcombine.low %v4428, %v4443
      %v4461 = vcombine.high %v4428, %v4443
      %v4463 = vunpack.c.l.s4 1934713408
      %v4464 = vunpack.c.0.s8 %v4463
      %v4465 = vlaneseq
      %v4466 = vshrl.u32 %v4465, 7
      %v4467 = vsub.s32 %v4464, %v4466
      %v4468 = vrot.slane %v4460, %v4467
      %v4470 = vunpack.c.l.s4 1934713408
      %v4471 = vunpack.c.0.s8 %v4470
      %v4472 = vlaneseq
      %v4473 = vshrl.u32 %v4472, 7
      %v4474 = vsub.s32 %v4471, %v4473
      %v4475 = vrot.slane %v4461, %v4474
      %v4476 = vcombine.high %v4452, 0.0
      %v4477 = vcombine.high %v4459, 0.0
      %v4478 = vcombine.high %v4468, 0.0
      %v4479 = vcombine.high %v4475, 0.0
      %v4480 = vcombine.high %v4078, 0.0
      %v4482 = vunpack.c.l.s4 1983009808
      %v4483 = vunpack.c.0.s8 %v4482
      %v4484 = vlaneseq
      %v4485 = vshrl.u32 %v4484, 7
      %v4486 = vsub.s32 %v4483, %v4485
      %v4487 = vrot.slane %v4078, %v4486
      %v4489 = vunpack.c.l.s4 1983009808
      %v4490 = vunpack.c.0.s8 %v4489
      %v4491 = vlaneseq
      %v4492 = vshrl.u32 %v4491, 7
      %v4493 = vsub.s32 %v4490, %v4492
      %v4494 = vrot.slane %v4480, %v4493
      %v4495 = vcombine.high %v4254, 0.0
      %v4497 = vunpack.c.l.s4 1983009808
      %v4498 = vunpack.c.0.s8 %v4497
      %v4499 = vlaneseq
      %v4500 = vshrl.u32 %v4499, 7
      %v4501 = vsub.s32 %v4498, %v4500
      %v4502 = vrot.slane %v4254, %v4501
      %v4504 = vunpack.c.l.s4 1983009808
      %v4505 = vunpack.c.0.s8 %v4504
      %v4506 = vlaneseq
      %v4507 = vshrl.u32 %v4506, 7
      %v4508 = vsub.s32 %v4505, %v4507
      %v4509 = vrot.slane %v4495, %v4508
      %v4510 = vcombine.low %v4487, %v4502
      %v4511 = vcombine.high %v4487, %v4502
      %v4513 = vunpack.c.l.s4 1934713408
      %v4514 = vunpack.c.0.s8 %v4513
      %v4515 = vlaneseq
      %v4516 = vshrl.u32 %v4515, 7
      %v4517 = vsub.s32 %v4514, %v4516
      %v4518 = vrot.slane %v4510, %v4517
      %v4520 = vunpack.c.l.s4 1934713408
      %v4521 = vunpack.c.0.s8 %v4520
      %v4522 = vlaneseq
      %v4523 = vshrl.u32 %v4522, 7
      %v4524 = vsub.s32 %v4521, %v4523
      %v4525 = vrot.slane %v4511, %v4524
      %v4526 = vcombine.low %v4494, %v4509
      %v4527 = vcombine.high %v4494, %v4509
      %v4529 = vunpack.c.l.s4 1934713408
      %v4530 = vunpack.c.0.s8 %v4529
      %v4531 = vlaneseq
      %v4532 = vshrl.u32 %v4531, 7
      %v4533 = vsub.s32 %v4530, %v4532
      %v4534 = vrot.slane %v4526, %v4533
      %v4536 = vunpack.c.l.s4 1934713408
      %v4537 = vunpack.c.0.s8 %v4536
      %v4538 = vlaneseq
      %v4539 = vshrl.u32 %v4538, 7
      %v4540 = vsub.s32 %v4537, %v4539
      %v4541 = vrot.slane %v4527, %v4540
      %v4542 = vcombine.high %v4518, 0.0
      %v4543 = vcombine.high %v4525, 0.0
      %v4544 = vcombine.high %v4534, 0.0
      %v4545 = vcombine.high %v4541, 0.0
      %v4546 = vcombine.high %v4081, 0.0
      %v4548 = vunpack.c.l.s4 1983009808
      %v4549 = vunpack.c.0.s8 %v4548
      %v4550 = vlaneseq
      %v4551 = vshrl.u32 %v4550, 7
      %v4552 = vsub.s32 %v4549, %v4551
      %v4553 = vrot.slane %v4081, %v4552
      %v4555 = vunpack.c.l.s4 1983009808
      %v4556 = vunpack.c.0.s8 %v4555
      %v4557 = vlaneseq
      %v4558 = vshrl.u32 %v4557, 7
      %v4559 = vsub.s32 %v4556, %v4558
      %v4560 = vrot.slane %v4546, %v4559
      %v4561 = vcombine.high %v4257, 0.0
      %v4563 = vunpack.c.l.s4 1983009808
      %v4564 = vunpack.c.0.s8 %v4563
      %v4565 = vlaneseq
      %v4566 = vshrl.u32 %v4565, 7
      %v4567 = vsub.s32 %v4564, %v4566
      %v4568 = vrot.slane %v4257, %v4567
      %v4570 = vunpack.c.l.s4 1983009808
      %v4571 = vunpack.c.0.s8 %v4570
      %v4572 = vlaneseq
      %v4573 = vshrl.u32 %v4572, 7
      %v4574 = vsub.s32 %v4571, %v4573
      %v4575 = vrot.slane %v4561, %v4574
      %v4576 = vcombine.low %v4553, %v4568
      %v4577 = vcombine.high %v4553, %v4568
      %v4579 = vunpack.c.l.s4 1934713408
      %v4580 = vunpack.c.0.s8 %v4579
      %v4581 = vlaneseq
      %v4582 = vshrl.u32 %v4581, 7
      %v4583 = vsub.s32 %v4580, %v4582
      %v4584 = vrot.slane %v4576, %v4583
      %v4586 = vunpack.c.l.s4 1934713408
      %v4587 = vunpack.c.0.s8 %v4586
      %v4588 = vlaneseq
      %v4589 = vshrl.u32 %v4588, 7
      %v4590 = vsub.s32 %v4587, %v4589
      %v4591 = vrot.slane %v4577, %v4590
      %v4592 = vcombine.low %v4560, %v4575
      %v4593 = vcombine.high %v4560, %v4575
      %v4595 = vunpack.c.l.s4 1934713408
      %v4596 = vunpack.c.0.s8 %v4595
      %v4597 = vlaneseq
      %v4598 = vshrl.u32 %v4597, 7
      %v4599 = vsub.s32 %v4596, %v4598
      %v4600 = vrot.slane %v4592, %v4599
      %v4602 = vunpack.c.l.s4 1934713408
      %v4603 = vunpack.c.0.s8 %v4602
      %v4604 = vlaneseq
      %v4605 = vshrl.u32 %v4604, 7
      %v4606 = vsub.s32 %v4603, %v4605
      %v4607 = vrot.slane %v4593, %v4606
      %v4608 = vcombine.high %v4584, 0.0
      %v4609 = vcombine.high %v4591, 0.0
      %v4610 = vcombine.high %v4600, 0.0
      %v4611 = vcombine.high %v4607, 0.0
      %v4612 = vcombine.high %v4122, 0.0
      %v4614 = vunpack.c.l.s4 1983009808
      %v4615 = vunpack.c.0.s8 %v4614
      %v4616 = vlaneseq
      %v4617 = vshrl.u32 %v4616, 7
      %v4618 = vsub.s32 %v4615, %v4617
      %v4619 = vrot.slane %v4122, %v4618
      %v4621 = vunpack.c.l.s4 1983009808
      %v4622 = vunpack.c.0.s8 %v4621
      %v4623 = vlaneseq
      %v4624 = vshrl.u32 %v4623, 7
      %v4625 = vsub.s32 %v4622, %v4624
      %v4626 = vrot.slane %v4612, %v4625
      %v4627 = vcombine.high %v4298, 0.0
      %v4629 = vunpack.c.l.s4 1983009808
      %v4630 = vunpack.c.0.s8 %v4629
      %v4631 = vlaneseq
      %v4632 = vshrl.u32 %v4631, 7
      %v4633 = vsub.s32 %v4630, %v4632
      %v4634 = vrot.slane %v4298, %v4633
      %v4636 = vunpack.c.l.s4 1983009808
      %v4637 = vunpack.c.0.s8 %v4636
      %v4638 = vlaneseq
      %v4639 = vshrl.u32 %v4638, 7
      %v4640 = vsub.s32 %v4637, %v4639
      %v4641 = vrot.slane %v4627, %v4640
      %v4642 = vcombine.low %v4619, %v4634
      %v4643 = vcombine.high %v4619, %v4634
      %v4645 = vunpack.c.l.s4 1934713408
      %v4646 = vunpack.c.0.s8 %v4645
      %v4647 = vlaneseq
      %v4648 = vshrl.u32 %v4647, 7
      %v4649 = vsub.s32 %v4646, %v4648
      %v4650 = vrot.slane %v4642, %v4649
      %v4652 = vunpack.c.l.s4 1934713408
      %v4653 = vunpack.c.0.s8 %v4652
      %v4654 = vlaneseq
      %v4655 = vshrl.u32 %v4654, 7
      %v4656 = vsub.s32 %v4653, %v4655
      %v4657 = vrot.slane %v4643, %v4656
      %v4658 = vcombine.low %v4626, %v4641
      %v4659 = vcombine.high %v4626, %v4641
      %v4661 = vunpack.c.l.s4 1934713408
      %v4662 = vunpack.c.0.s8 %v4661
      %v4663 = vlaneseq
      %v4664 = vshrl.u32 %v4663, 7
      %v4665 = vsub.s32 %v4662, %v4664
      %v4666 = vrot.slane %v4658, %v4665
      %v4668 = vunpack.c.l.s4 1934713408
      %v4669 = vunpack.c.0.s8 %v4668
      %v4670 = vlaneseq
      %v4671 = vshrl.u32 %v4670, 7
      %v4672 = vsub.s32 %v4669, %v4671
      %v4673 = vrot.slane %v4659, %v4672
      %v4674 = vcombine.high %v4650, 0.0
      %v4675 = vcombine.high %v4657, 0.0
      %v4676 = vcombine.high %v4666, 0.0
      %v4677 = vcombine.high %v4673, 0.0
      %v4678 = vcombine.high %v4125, 0.0
      %v4680 = vunpack.c.l.s4 1983009808
      %v4681 = vunpack.c.0.s8 %v4680
      %v4682 = vlaneseq
      %v4683 = vshrl.u32 %v4682, 7
      %v4684 = vsub.s32 %v4681, %v4683
      %v4685 = vrot.slane %v4125, %v4684
      %v4687 = vunpack.c.l.s4 1983009808
      %v4688 = vunpack.c.0.s8 %v4687
      %v4689 = vlaneseq
      %v4690 = vshrl.u32 %v4689, 7
      %v4691 = vsub.s32 %v4688, %v4690
      %v4692 = vrot.slane %v4678, %v4691
      %v4693 = vcombine.high %v4301, 0.0
      %v4695 = vunpack.c.l.s4 1983009808
      %v4696 = vunpack.c.0.s8 %v4695
      %v4697 = vlaneseq
      %v4698 = vshrl.u32 %v4697, 7
      %v4699 = vsub.s32 %v4696, %v4698
      %v4700 = vrot.slane %v4301, %v4699
      %v4702 = vunpack.c.l.s4 1983009808
      %v4703 = vunpack.c.0.s8 %v4702
      %v4704 = vlaneseq
      %v4705 = vshrl.u32 %v4704, 7
      %v4706 = vsub.s32 %v4703, %v4705
      %v4707 = vrot.slane %v4693, %v4706
      %v4708 = vcombine.low %v4685, %v4700
      %v4709 = vcombine.high %v4685, %v4700
      %v4711 = vunpack.c.l.s4 1934713408
      %v4712 = vunpack.c.0.s8 %v4711
      %v4713 = vlaneseq
      %v4714 = vshrl.u32 %v4713, 7
      %v4715 = vsub.s32 %v4712, %v4714
      %v4716 = vrot.slane %v4708, %v4715
      %v4718 = vunpack.c.l.s4 1934713408
      %v4719 = vunpack.c.0.s8 %v4718
      %v4720 = vlaneseq
      %v4721 = vshrl.u32 %v4720, 7
      %v4722 = vsub.s32 %v4719, %v4721
      %v4723 = vrot.slane %v4709, %v4722
      %v4724 = vcombine.low %v4692, %v4707
      %v4725 = vcombine.high %v4692, %v4707
      %v4727 = vunpack.c.l.s4 1934713408
      %v4728 = vunpack.c.0.s8 %v4727
      %v4729 = vlaneseq
      %v4730 = vshrl.u32 %v4729, 7
      %v4731 = vsub.s32 %v4728, %v4730
      %v4732 = vrot.slane %v4724, %v4731
      %v4734 = vunpack.c.l.s4 1934713408
      %v4735 = vunpack.c.0.s8 %v4734
      %v4736 = vlaneseq
      %v4737 = vshrl.u32 %v4736, 7
      %v4738 = vsub.s32 %v4735, %v4737
      %v4739 = vrot.slane %v4725, %v4738
      %v4740 = vcombine.high %v4716, 0.0
      %v4741 = vcombine.high %v4723, 0.0
      %v4742 = vcombine.high %v4732, 0.0
      %v4743 = vcombine.high %v4739, 0.0
      %v4744 = vcombine.high %v4166, 0.0
      %v4746 = vunpack.c.l.s4 1983009808
      %v4747 = vunpack.c.0.s8 %v4746
      %v4748 = vlaneseq
      %v4749 = vshrl.u32 %v4748, 7
      %v4750 = vsub.s32 %v4747, %v4749
      %v4751 = vrot.slane %v4166, %v4750
      %v4753 = vunpack.c.l.s4 1983009808
      %v4754 = vunpack.c.0.s8 %v4753
      %v4755 = vlaneseq
      %v4756 = vshrl.u32 %v4755, 7
      %v4757 = vsub.s32 %v4754, %v4756
      %v4758 = vrot.slane %v4744, %v4757
      %v4759 = vcombine.high %v4342, 0.0
      %v4761 = vunpack.c.l.s4 1983009808
      %v4762 = vunpack.c.0.s8 %v4761
      %v4763 = vlaneseq
      %v4764 = vshrl.u32 %v4763, 7
      %v4765 = vsub.s32 %v4762, %v4764
      %v4766 = vrot.slane %v4342, %v4765
      %v4768 = vunpack.c.l.s4 1983009808
      %v4769 = vunpack.c.0.s8 %v4768
      %v4770 = vlaneseq
      %v4771 = vshrl.u32 %v4770, 7
      %v4772 = vsub.s32 %v4769, %v4771
      %v4773 = vrot.slane %v4759, %v4772
      %v4774 = vcombine.low %v4751, %v4766
      %v4775 = vcombine.high %v4751, %v4766
      %v4777 = vunpack.c.l.s4 1934713408
      %v4778 = vunpack.c.0.s8 %v4777
      %v4779 = vlaneseq
      %v4780 = vshrl.u32 %v4779, 7
      %v4781 = vsub.s32 %v4778, %v4780
      %v4782 = vrot.slane %v4774, %v4781
      %v4784 = vunpack.c.l.s4 1934713408
      %v4785 = vunpack.c.0.s8 %v4784
      %v4786 = vlaneseq
      %v4787 = vshrl.u32 %v4786, 7
      %v4788 = vsub.s32 %v4785, %v4787
      %v4789 = vrot.slane %v4775, %v4788
      %v4790 = vcombine.low %v4758, %v4773
      %v4791 = vcombine.high %v4758, %v4773
      %v4793 = vunpack.c.l.s4 1934713408
      %v4794 = vunpack.c.0.s8 %v4793
      %v4795 = vlaneseq
      %v4796 = vshrl.u32 %v4795, 7
      %v4797 = vsub.s32 %v4794, %v4796
      %v4798 = vrot.slane %v4790, %v4797
      %v4800 = vunpack.c.l.s4 1934713408
      %v4801 = vunpack.c.0.s8 %v4800
      %v4802 = vlaneseq
      %v4803 = vshrl.u32 %v4802, 7
      %v4804 = vsub.s32 %v4801, %v4803
      %v4805 = vrot.slane %v4791, %v4804
      %v4806 = vcombine.high %v4782, 0.0
      %v4807 = vcombine.high %v4789, 0.0
      %v4808 = vcombine.high %v4798, 0.0
      %v4809 = vcombine.high %v4805, 0.0
      %v4810 = vcombine.high %v4169, 0.0
      %v4812 = vunpack.c.l.s4 1983009808
      %v4813 = vunpack.c.0.s8 %v4812
      %v4814 = vlaneseq
      %v4815 = vshrl.u32 %v4814, 7
      %v4816 = vsub.s32 %v4813, %v4815
      %v4817 = vrot.slane %v4169, %v4816
      %v4819 = vunpack.c.l.s4 1983009808
      %v4820 = vunpack.c.0.s8 %v4819
      %v4821 = vlaneseq
      %v4822 = vshrl.u32 %v4821, 7
      %v4823 = vsub.s32 %v4820, %v4822
      %v4824 = vrot.slane %v4810, %v4823
      %v4825 = vcombine.high %v4345, 0.0
      %v4827 = vunpack.c.l.s4 1983009808
      %v4828 = vunpack.c.0.s8 %v4827
      %v4829 = vlaneseq
      %v4830 = vshrl.u32 %v4829, 7
      %v4831 = vsub.s32 %v4828, %v4830
      %v4832 = vrot.slane %v4345, %v4831
      %v4834 = vunpack.c.l.s4 1983009808
      %v4835 = vunpack.c.0.s8 %v4834
      %v4836 = vlaneseq
      %v4837 = vshrl.u32 %v4836, 7
      %v4838 = vsub.s32 %v4835, %v4837
      %v4839 = vrot.slane %v4825, %v4838
      %v4840 = vcombine.low %v4817, %v4832
      %v4841 = vcombine.high %v4817, %v4832
      %v4843 = vunpack.c.l.s4 1934713408
      %v4844 = vunpack.c.0.s8 %v4843
      %v4845 = vlaneseq
      %v4846 = vshrl.u32 %v4845, 7
      %v4847 = vsub.s32 %v4844, %v4846
      %v4848 = vrot.slane %v4840, %v4847
      %v4850 = vunpack.c.l.s4 1934713408
      %v4851 = vunpack.c.0.s8 %v4850
      %v4852 = vlaneseq
      %v4853 = vshrl.u32 %v4852, 7
      %v4854 = vsub.s32 %v4851, %v4853
      %v4855 = vrot.slane %v4841, %v4854
      %v4856 = vcombine.low %v4824, %v4839
      %v4857 = vcombine.high %v4824, %v4839
      %v4859 = vunpack.c.l.s4 1934713408
      %v4860 = vunpack.c.0.s8 %v4859
      %v4861 = vlaneseq
      %v4862 = vshrl.u32 %v4861, 7
      %v4863 = vsub.s32 %v4860, %v4862
      %v4864 = vrot.slane %v4856, %v4863
      %v4866 = vunpack.c.l.s4 1934713408
      %v4867 = vunpack.c.0.s8 %v4866
      %v4868 = vlaneseq
      %v4869 = vshrl.u32 %v4868, 7
      %v4870 = vsub.s32 %v4867, %v4869
      %v4871 = vrot.slane %v4857, %v4870
      %v4872 = vcombine.high %v4848, 0.0
      %v4873 = vcombine.high %v4855, 0.0
      %v4874 = vcombine.high %v4864, 0.0
      %v4875 = vcombine.high %v4871, 0.0
      %v4876 = vcombine.low %v4386, %v4393
      %v4878 = vunpack.c.l.s4 1983009808
      %v4879 = vunpack.c.0.s8 %v4878
      %v4880 = vlaneseq
      %v4881 = vshrl.u32 %v4880, 7
      %v4882 = vsub.s32 %v4879, %v4881
      %v4883 = vrot.slane %v4876, %v4882
      %v4884 = vcombine.low %v4410, %v4411
      %v4886 = vunpack.c.l.s4 1983009808
      %v4887 = vunpack.c.0.s8 %v4886
      %v4888 = vlaneseq
      %v4889 = vshrl.u32 %v4888, 7
      %v4890 = vsub.s32 %v4887, %v4889
      %v4891 = vrot.slane %v4884, %v4890
      %v4892 = vcombine.low %v4402, %v4409
      %v4894 = vunpack.c.l.s4 1983009808
      %v4895 = vunpack.c.0.s8 %v4894
      %v4896 = vlaneseq
      %v4897 = vshrl.u32 %v4896, 7
      %v4898 = vsub.s32 %v4895, %v4897
      %v4899 = vrot.slane %v4892, %v4898
      %v4900 = vcombine.low %v4412, %v4413
      %v4902 = vunpack.c.l.s4 1983009808
      %v4903 = vunpack.c.0.s8 %v4902
      %v4904 = vlaneseq
      %v4905 = vshrl.u32 %v4904, 7
      %v4906 = vsub.s32 %v4903, %v4905
      %v4907 = vrot.slane %v4900, %v4906
      %v4908 = vcombine.low %v4883, %v4891
      %v4910 = vunpack.c.l.s4 1934713408
      %v4911 = vunpack.c.0.s8 %v4910
      %v4912 = vlaneseq
      %v4913 = vshrl.u32 %v4912, 7
      %v4914 = vsub.s32 %v4911, %v4913
      %v4915 = vrot.slane %v4908, %v4914
      %v4916 = vcombine.low %v4899, %v4907
      %v4918 = vunpack.c.l.s4 1934713408
      %v4919 = vunpack.c.0.s8 %v4918
      %v4920 = vlaneseq
      %v4921 = vshrl.u32 %v4920, 7
      %v4922 = vsub.s32 %v4919, %v4921
      %v4923 = vrot.slane %v4916, %v4922
      %v4924 = vcombine.low %v4915, %v4923
      %v4925 = vcombine.high %v4915, %v4923
      %v4926 = vcombine.low %v4452, %v4459
      %v4928 = vunpack.c.l.s4 1983009808
      %v4929 = vunpack.c.0.s8 %v4928
      %v4930 = vlaneseq
      %v4931 = vshrl.u32 %v4930, 7
      %v4932 = vsub.s32 %v4929, %v4931
      %v4933 = vrot.slane %v4926, %v4932
      %v4934 = vcombine.low %v4476, %v4477
      %v4936 = vunpack.c.l.s4 1983009808
      %v4937 = vunpack.c.0.s8 %v4936
      %v4938 = vlaneseq
      %v4939 = vshrl.u32 %v4938, 7
      %v4940 = vsub.s32 %v4937, %v4939
      %v4941 = vrot.slane %v4934, %v4940
      %v4942 = vcombine.low %v4468, %v4475
      %v4944 = vunpack.c.l.s4 1983009808
      %v4945 = vunpack.c.0.s8 %v4944
      %v4946 = vlaneseq
      %v4947 = vshrl.u32 %v4946, 7
      %v4948 = vsub.s32 %v4945, %v4947
      %v4949 = vrot.slane %v4942, %v4948
      %v4950 = vcombine.low %v4478, %v4479
      %v4952 = vunpack.c.l.s4 1983009808
      %v4953 = vunpack.c.0.s8 %v4952
      %v4954 = vlaneseq
      %v4955 = vshrl.u32 %v4954, 7
      %v4956 = vsub.s32 %v4953, %v4955
      %v4957 = vrot.slane %v4950, %v4956
      %v4958 = vcombine.low %v4933, %v4941
      %v4960 = vunpack.c.l.s4 1934713408
      %v4961 = vunpack.c.0.s8 %v4960
      %v4962 = vlaneseq
      %v4963 = vshrl.u32 %v4962, 7
      %v4964 = vsub.s32 %v4961, %v4963
      %v4965 = vrot.slane %v4958, %v4964
      %v4966 = vcombine.low %v4949, %v4957
      %v4968 = vunpack.c.l.s4 1934713408
      %v4969 = vunpack.c.0.s8 %v4968
      %v4970 = vlaneseq
      %v4971 = vshrl.u32 %v4970, 7
      %v4972 = vsub.s32 %v4969, %v4971
      %v4973 = vrot.slane %v4966, %v4972
      %v4974 = vcombine.low %v4965, %v4973
      %v4975 = vcombine.high %v4965, %v4973
      %v4976 = vcombine.low %v4518, %v4525
      %v4978 = vunpack.c.l.s4 1983009808
      %v4979 = vunpack.c.0.s8 %v4978
      %v4980 = vlaneseq
      %v4981 = vshrl.u32 %v4980, 7
      %v4982 = vsub.s32 %v4979, %v4981
      %v4983 = vrot.slane %v4976, %v4982
      %v4984 = vcombine.low %v4542, %v4543
      %v4986 = vunpack.c.l.s4 1983009808
      %v4987 = vunpack.c.0.s8 %v4986
      %v4988 = vlaneseq
      %v4989 = vshrl.u32 %v4988, 7
      %v4990 = vsub.s32 %v4987, %v4989
      %v4991 = vrot.slane %v4984, %v4990
      %v4992 = vcombine.low %v4534, %v4541
      %v4994 = vunpack.c.l.s4 1983009808
      %v4995 = vunpack.c.0.s8 %v4994
      %v4996 = vlaneseq
      %v4997 = vshrl.u32 %v4996, 7
      %v4998 = vsub.s32 %v4995, %v4997
      %v4999 = vrot.slane %v4992, %v4998
      %v5000 = vcombine.low %v4544, %v4545
      %v5002 = vunpack.c.l.s4 1983009808
      %v5003 = vunpack.c.0.s8 %v5002
      %v5004 = vlaneseq
      %v5005 = vshrl.u32 %v5004, 7
      %v5006 = vsub.s32 %v5003, %v5005
      %v5007 = vrot.slane %v5000, %v5006
      %v5008 = vcombine.low %v4983, %v4991
      %v5010 = vunpack.c.l.s4 1934713408
      %v5011 = vunpack.c.0.s8 %v5010
      %v5012 = vlaneseq
      %v5013 = vshrl.u32 %v5012, 7
      %v5014 = vsub.s32 %v5011, %v5013
      %v5015 = vrot.slane %v5008, %v5014
      %v5016 = vcombine.low %v4999, %v5007
      %v5018 = vunpack.c.l.s4 1934713408
      %v5019 = vunpack.c.0.s8 %v5018
      %v5020 = vlaneseq
      %v5021 = vshrl.u32 %v5020, 7
      %v5022 = vsub.s32 %v5019, %v5021
      %v5023 = vrot.slane %v5016, %v5022
      %v5024 = vcombine.low %v5015, %v5023
      %v5025 = vcombine.high %v5015, %v5023
      %v5026 = vcombine.low %v4584, %v4591
      %v5028 = vunpack.c.l.s4 1983009808
      %v5029 = vunpack.c.0.s8 %v5028
      %v5030 = vlaneseq
      %v5031 = vshrl.u32 %v5030, 7
      %v5032 = vsub.s32 %v5029, %v5031
      %v5033 = vrot.slane %v5026, %v5032
      %v5034 = vcombine.low %v4608, %v4609
      %v5036 = vunpack.c.l.s4 1983009808
      %v5037 = vunpack.c.0.s8 %v5036
      %v5038 = vlaneseq
      %v5039 = vshrl.u32 %v5038, 7
      %v5040 = vsub.s32 %v5037, %v5039
      %v5041 = vrot.slane %v5034, %v5040
      %v5042 = vcombine.low %v4600, %v4607
      %v5044 = vunpack.c.l.s4 1983009808
      %v5045 = vunpack.c.0.s8 %v5044
      %v5046 = vlaneseq
      %v5047 = vshrl.u32 %v5046, 7
      %v5048 = vsub.s32 %v5045, %v5047
      %v5049 = vrot.slane %v5042, %v5048
      %v5050 = vcombine.low %v4610, %v4611
      %v5052 = vunpack.c.l.s4 1983009808
      %v5053 = vunpack.c.0.s8 %v5052
      %v5054 = vlaneseq
      %v5055 = vshrl.u32 %v5054, 7
      %v5056 = vsub.s32 %v5053, %v5055
      %v5057 = vrot.slane %v5050, %v5056
      %v5058 = vcombine.low %v5033, %v5041
      %v5060 = vunpack.c.l.s4 1934713408
      %v5061 = vunpack.c.0.s8 %v5060
      %v5062 = vlaneseq
      %v5063 = vshrl.u32 %v5062, 7
      %v5064 = vsub.s32 %v5061, %v5063
      %v5065 = vrot.slane %v5058, %v5064
      %v5066 = vcombine.low %v5049, %v5057
      %v5068 = vunpack.c.l.s4 1934713408
      %v5069 = vunpack.c.0.s8 %v5068
      %v5070 = vlaneseq
      %v5071 = vshrl.u32 %v5070, 7
      %v5072 = vsub.s32 %v5069, %v5071
      %v5073 = vrot.slane %v5066, %v5072
      %v5074 = vcombine.low %v5065, %v5073
      %v5075 = vcombine.high %v5065, %v5073
      %v5076 = vcombine.low %v4650, %v4657
      %v5078 = vunpack.c.l.s4 1983009808
      %v5079 = vunpack.c.0.s8 %v5078
      %v5080 = vlaneseq
      %v5081 = vshrl.u32 %v5080, 7
      %v5082 = vsub.s32 %v5079, %v5081
      %v5083 = vrot.slane %v5076, %v5082
      %v5084 = vcombine.low %v4674, %v4675
      %v5086 = vunpack.c.l.s4 1983009808
      %v5087 = vunpack.c.0.s8 %v5086
      %v5088 = vlaneseq
      %v5089 = vshrl.u32 %v5088, 7
      %v5090 = vsub.s32 %v5087, %v5089
      %v5091 = vrot.slane %v5084, %v5090
      %v5092 = vcombine.low %v4666, %v4673
      %v5094 = vunpack.c.l.s4 1983009808
      %v5095 = vunpack.c.0.s8 %v5094
      %v5096 = vlaneseq
      %v5097 = vshrl.u32 %v5096, 7
      %v5098 = vsub.s32 %v5095, %v5097
      %v5099 = vrot.slane %v5092, %v5098
      %v5100 = vcombine.low %v4676, %v4677
      %v5102 = vunpack.c.l.s4 1983009808
      %v5103 = vunpack.c.0.s8 %v5102
      %v5104 = vlaneseq
      %v5105 = vshrl.u32 %v5104, 7
      %v5106 = vsub.s32 %v5103, %v5105
      %v5107 = vrot.slane %v5100, %v5106
      %v5108 = vcombine.low %v5083, %v5091
      %v5110 = vunpack.c.l.s4 1934713408
      %v5111 = vunpack.c.0.s8 %v5110
      %v5112 = vlaneseq
      %v5113 = vshrl.u32 %v5112, 7
      %v5114 = vsub.s32 %v5111, %v5113
      %v5115 = vrot.slane %v5108, %v5114
      %v5116 = vcombine.low %v5099, %v5107
      %v5118 = vunpack.c.l.s4 1934713408
      %v5119 = vunpack.c.0.s8 %v5118
      %v5120 = vlaneseq
      %v5121 = vshrl.u32 %v5120, 7
      %v5122 = vsub.s32 %v5119, %v5121
      %v5123 = vrot.slane %v5116, %v5122
      %v5124 = vcombine.low %v5115, %v5123
      %v5125 = vcombine.high %v5115, %v5123
      %v5126 = vcombine.low %v4716, %v4723
      %v5128 = vunpack.c.l.s4 1983009808
      %v5129 = vunpack.c.0.s8 %v5128
      %v5130 = vlaneseq
      %v5131 = vshrl.u32 %v5130, 7
      %v5132 = vsub.s32 %v5129, %v5131
      %v5133 = vrot.slane %v5126, %v5132
      %v5134 = vcombine.low %v4740, %v4741
      %v5136 = vunpack.c.l.s4 1983009808
      %v5137 = vunpack.c.0.s8 %v5136
      %v5138 = vlaneseq
      %v5139 = vshrl.u32 %v5138, 7
      %v5140 = vsub.s32 %v5137, %v5139
      %v5141 = vrot.slane %v5134, %v5140
      %v5142 = vcombine.low %v4732, %v4739
      %v5144 = vunpack.c.l.s4 1983009808
      %v5145 = vunpack.c.0.s8 %v5144
      %v5146 = vlaneseq
      %v5147 = vshrl.u32 %v5146, 7
      %v5148 = vsub.s32 %v5145, %v5147
      %v5149 = vrot.slane %v5142, %v5148
      %v5150 = vcombine.low %v4742, %v4743
      %v5152 = vunpack.c.l.s4 1983009808
      %v5153 = vunpack.c.0.s8 %v5152
      %v5154 = vlaneseq
      %v5155 = vshrl.u32 %v5154, 7
      %v5156 = vsub.s32 %v5153, %v5155
      %v5157 = vrot.slane %v5150, %v5156
      %v5158 = vcombine.low %v5133, %v5141
      %v5160 = vunpack.c.l.s4 1934713408
      %v5161 = vunpack.c.0.s8 %v5160
      %v5162 = vlaneseq
      %v5163 = vshrl.u32 %v5162, 7
      %v5164 = vsub.s32 %v5161, %v5163
      %v5165 = vrot.slane %v5158, %v5164
      %v5166 = vcombine.low %v5149, %v5157
      %v5168 = vunpack.c.l.s4 1934713408
      %v5169 = vunpack.c.0.s8 %v5168
      %v5170 = vlaneseq
      %v5171 = vshrl.u32 %v5170, 7
      %v5172 = vsub.s32 %v5169, %v5171
      %v5173 = vrot.slane %v5166, %v5172
      %v5174 = vcombine.low %v5165, %v5173
      %v5175 = vcombine.high %v5165, %v5173
      %v5176 = vcombine.low %v4782, %v4789
      %v5178 = vunpack.c.l.s4 1983009808
      %v5179 = vunpack.c.0.s8 %v5178
      %v5180 = vlaneseq
      %v5181 = vshrl.u32 %v5180, 7
      %v5182 = vsub.s32 %v5179, %v5181
      %v5183 = vrot.slane %v5176, %v5182
      %v5184 = vcombine.low %v4806, %v4807
      %v5186 = vunpack.c.l.s4 1983009808
      %v5187 = vunpack.c.0.s8 %v5186
      %v5188 = vlaneseq
      %v5189 = vshrl.u32 %v5188, 7
      %v5190 = vsub.s32 %v5187, %v5189
      %v5191 = vrot.slane %v5184, %v5190
      %v5192 = vcombine.low %v4798, %v4805
      %v5194 = vunpack.c.l.s4 1983009808
      %v5195 = vunpack.c.0.s8 %v5194
      %v5196 = vlaneseq
      %v5197 = vshrl.u32 %v5196, 7
      %v5198 = vsub.s32 %v5195, %v5197
      %v5199 = vrot.slane %v5192, %v5198
      %v5200 = vcombine.low %v4808, %v4809
      %v5202 = vunpack.c.l.s4 1983009808
      %v5203 = vunpack.c.0.s8 %v5202
      %v5204 = vlaneseq
      %v5205 = vshrl.u32 %v5204, 7
      %v5206 = vsub.s32 %v5203, %v5205
      %v5207 = vrot.slane %v5200, %v5206
      %v5208 = vcombine.low %v5183, %v5191
      %v5210 = vunpack.c.l.s4 1934713408
      %v5211 = vunpack.c.0.s8 %v5210
      %v5212 = vlaneseq
      %v5213 = vshrl.u32 %v5212, 7
      %v5214 = vsub.s32 %v5211, %v5213
      %v5215 = vrot.slane %v5208, %v5214
      %v5216 = vcombine.low %v5199, %v5207
      %v5218 = vunpack.c.l.s4 1934713408
      %v5219 = vunpack.c.0.s8 %v5218
      %v5220 = vlaneseq
      %v5221 = vshrl.u32 %v5220, 7
      %v5222 = vsub.s32 %v5219, %v5221
      %v5223 = vrot.slane %v5216, %v5222
      %v5224 = vcombine.low %v5215, %v5223
      %v5225 = vcombine.high %v5215, %v5223
      %v5226 = vcombine.low %v4848, %v4855
      %v5228 = vunpack.c.l.s4 1983009808
      %v5229 = vunpack.c.0.s8 %v5228
      %v5230 = vlaneseq
      %v5231 = vshrl.u32 %v5230, 7
      %v5232 = vsub.s32 %v5229, %v5231
      %v5233 = vrot.slane %v5226, %v5232
      %v5234 = vcombine.low %v4872, %v4873
      %v5236 = vunpack.c.l.s4 1983009808
      %v5237 = vunpack.c.0.s8 %v5236
      %v5238 = vlaneseq
      %v5239 = vshrl.u32 %v5238, 7
      %v5240 = vsub.s32 %v5237, %v5239
      %v5241 = vrot.slane %v5234, %v5240
      %v5242 = vcombine.low %v4864, %v4871
      %v5244 = vunpack.c.l.s4 1983009808
      %v5245 = vunpack.c.0.s8 %v5244
      %v5246 = vlaneseq
      %v5247 = vshrl.u32 %v5246, 7
      %v5248 = vsub.s32 %v5245, %v5247
      %v5249 = vrot.slane %v5242, %v5248
      %v5250 = vcombine.low %v4874, %v4875
      %v5252 = vunpack.c.l.s4 1983009808
      %v5253 = vunpack.c.0.s8 %v5252
      %v5254 = vlaneseq
      %v5255 = vshrl.u32 %v5254, 7
      %v5256 = vsub.s32 %v5253, %v5255
      %v5257 = vrot.slane %v5250, %v5256
      %v5258 = vcombine.low %v5233, %v5241
      %v5260 = vunpack.c.l.s4 1934713408
      %v5261 = vunpack.c.0.s8 %v5260
      %v5262 = vlaneseq
      %v5263 = vshrl.u32 %v5262, 7
      %v5264 = vsub.s32 %v5261, %v5263
      %v5265 = vrot.slane %v5258, %v5264
      %v5266 = vcombine.low %v5249, %v5257
      %v5268 = vunpack.c.l.s4 1934713408
      %v5269 = vunpack.c.0.s8 %v5268
      %v5270 = vlaneseq
      %v5271 = vshrl.u32 %v5270, 7
      %v5272 = vsub.s32 %v5269, %v5271
      %v5273 = vrot.slane %v5266, %v5272
      %v5274 = vcombine.low %v5265, %v5273
      %v5275 = vcombine.high %v5265, %v5273
      %5284 = vrot.lane.b32.xlu0 %v4925, 32
      %v5285 = vpop.permute.xlu0 %5284
      %5286 = vrot.lane.b32.xlu0 %v4975, 32
      %v5287 = vpop.permute.xlu0 %5286
      %5288 = vrot.lane.b32.xlu0 %v5025, 32
      %v5289 = vpop.permute.xlu0 %5288
      %5290 = vrot.lane.b32.xlu0 %v5075, 32
      %v5291 = vpop.permute.xlu0 %5290
      %5292 = vrot.lane.b32.xlu0 %v5125, 32
      %v5293 = vpop.permute.xlu0 %5292
      %5294 = vrot.lane.b32.xlu0 %v5175, 32
      %v5295 = vpop.permute.xlu0 %5294
      %5296 = vrot.lane.b32.xlu0 %v5225, 32
      %v5297 = vpop.permute.xlu0 %5296
      %5298 = vrot.lane.b32.xlu0 %v5275, 32
      %v5299 = vpop.permute.xlu0 %5298
      %v5308 = vsel %vm3414, %v4924, %v5285
      %v5309 = vsel %vm3414, %v4974, %v5287
      %v5310 = vsel %vm3414, %v5024, %v5289
      %v5311 = vsel %vm3414, %v5074, %v5291
      %v5312 = vsel %vm3414, %v5124, %v5293
      %v5313 = vsel %vm3414, %v5174, %v5295
      %v5314 = vsel %vm3414, %v5224, %v5297
      %v5315 = vsel %vm3414, %v5274, %v5299
      %v5316 = vpack.c.bf16 %v5309, %v5308
      %v5317 = vpack.c.bf16 %v5311, %v5310
      %v5318 = vpack.c.bf16 %v5313, %v5312
      %v5319 = vpack.c.bf16 %v5315, %v5314
      %v5320 = vld [vmem:[%s2] sm:$0xf]
      %v5321 = vld [vmem:[%s2 + $0x4] sm:$0xf]
      %v5322 = vld [vmem:[%s2 + $0x8] sm:$0xf]
      %v5323 = vld [vmem:[%s2 + $0xc] sm:$0xf]
      %v5324 = vld [vmem:[%s2 + $0x10] sm:$0xf]
      %v5325 = vld [vmem:[%s2 + $0x14] sm:$0xf]
      %v5326 = vld [vmem:[%s2 + $0x18] sm:$0xf]
      %v5327 = vld [vmem:[%s2 + $0x1c] sm:$0xf]
      %v5336 = vunpack.c.l.b16 %v5320
      %v5337 = vunpack.c.l.b16 %v5321
      %v5338 = vunpack.c.l.b16 %v5322
      %v5339 = vunpack.c.l.b16 %v5323
      %v5340 = vunpack.c.l.b16 %v5324
      %v5341 = vunpack.c.l.b16 %v5325
      %v5342 = vunpack.c.l.b16 %v5326
      %v5343 = vunpack.c.l.b16 %v5327
      %v5344 = vpack.c.b16 %v5337, %v5336
      %v5345 = vpack.c.b16 %v5339, %v5338
      %v5346 = vpack.c.b16 %v5341, %v5340
      %v5347 = vpack.c.b16 %v5343, %v5342
      %v5353 = vsel %vm237, %v5316, 0
      %v5356 = vsel %vm237, %v5317, 0
      %v5359 = vsel %vm237, %v5318, 0
      %v5362 = vsel %vm237, %v5319, 0
      %5364 = vmatprep.subr.bf16.mxu0 0
      %5365 = vmatpush1.bf16.msra.mxu0 0
      %5366 = vmatprep.subr.bf16.mxu0 0
      %5367 = vmatpush1.bf16.msra.mxu0 0
      %5368 = vmatprep.subr.bf16.mxu0 0
      %5369 = vmatpush1.bf16.msra.mxu0 0
      %5370 = vmatprep.subr.bf16.mxu0 0
      %5371 = vmatpush1.bf16.msra.mxu0 0
      %5372 = vmatprep.subr.bf16.mxu0 0
      %5373 = vmatpush1.bf16.msra.mxu0 %v5347
      %5374 = vmatprep.subr.bf16.mxu0 0
      %5375 = vmatpush1.bf16.msra.mxu0 %v5346
      %5376 = vmatprep.subr.bf16.mxu0 0
      %5377 = vmatpush1.bf16.msra.mxu0 %v5345
      %5378 = vmatprep.subr.bf16.mxu0 0
      %5379 = vmatpush1.bf16.msra.mxu0 %v5344
      %5380 = vmatprep.subr.bf16.mxu0 0
      %5381 = vmatpush2.bf16.msra.mxu0 0
      %5382 = vmatprep.subr.bf16.mxu0 0
      %5383 = vmatpush2.bf16.msra.mxu0 0
      %5384 = vmatprep.subr.bf16.mxu0 0
      %5385 = vmatpush2.bf16.msra.mxu0 0
      %5386 = vmatprep.subr.bf16.mxu0 0
      %5387 = vmatpush2.bf16.msra.mxu0 0
      %5388 = vmatprep.subr.bf16.mxu0 0
      %5389 = vmatpush2.bf16.msra.mxu0 0
      %5390 = vmatprep.subr.bf16.mxu0 0
      %5391 = vmatpush2.bf16.msra.mxu0 0
      %5392 = vmatprep.subr.bf16.mxu0 0
      %5393 = vmatpush2.bf16.msra.mxu0 0
      %5394 = vmatprep.subr.bf16.mxu0 0
      %5395 = vmatpush2.bf16.msra.mxu0 0
      %5396 = vmatprep.mubr.bf16.mxu0 0
      %5397 = vmatmul.mubr.bf16.gmra.mxu0 %v5353
      %v5398 = vpop.f32.mrf.mxu0
      %v5399 = vadd.f32 0.0, %v5398
      %v5400 = vpop.f32.mrf.mxu0
      %v5401 = vpop.f32.mrf.mxu0
      %v5402 = vadd.f32 0.0, %v5401
      %v5403 = vpop.f32.mrf.mxu0
      %5404 = vmatprep.mubr.bf16.mxu0 0
      %5405 = vmatmul.mubr.bf16.gmra.mxu0 %v5356
      %v5406 = vpop.f32.mrf.mxu0
      %v5407 = vadd.f32 0.0, %v5406
      %v5408 = vpop.f32.mrf.mxu0
      %v5409 = vpop.f32.mrf.mxu0
      %v5410 = vadd.f32 0.0, %v5409
      %v5411 = vpop.f32.mrf.mxu0
      %5412 = vmatprep.mubr.bf16.mxu0 0
      %5413 = vmatmul.mubr.bf16.gmra.mxu0 %v5359
      %v5414 = vpop.f32.mrf.mxu0
      %v5415 = vadd.f32 0.0, %v5414
      %v5416 = vpop.f32.mrf.mxu0
      %v5417 = vpop.f32.mrf.mxu0
      %v5418 = vadd.f32 0.0, %v5417
      %v5419 = vpop.f32.mrf.mxu0
      %5420 = vmatprep.mubr.bf16.mxu0 0
      %5421 = vmatmul.mubr.bf16.gmra.mxu0 %v5362
      %v5422 = vpop.f32.mrf.mxu0
      %v5423 = vadd.f32 0.0, %v5422
      %v5424 = vpop.f32.mrf.mxu0
      %v5425 = vpop.f32.mrf.mxu0
      %v5426 = vadd.f32 0.0, %v5425
      %v5427 = vpop.f32.mrf.mxu0
      %5428 = vdwg.mxu0
      %5429 = vst.msk [vmem:[%s226] sm:$0xff] %vm237, %v5399
      %5430 = vst.msk [vmem:[%s226 + $0x8] sm:$0xff] %vm237, %v5402
      %5431 = vst.msk [vmem:[%s226 + $0x10] sm:$0xff] %vm237, %v5407
      %5432 = vst.msk [vmem:[%s226 + $0x18] sm:$0xff] %vm237, %v5410
      %5433 = vst.msk [vmem:[%s226 + $0x20] sm:$0xff] %vm237, %v5415
      %5434 = vst.msk [vmem:[%s226 + $0x28] sm:$0xff] %vm237, %v5418
      %5435 = vst.msk [vmem:[%s226 + $0x30] sm:$0xff] %vm237, %v5423
      %5436 = vst.msk [vmem:[%s226 + $0x38] sm:$0xff] %vm237, %v5426
      %s5437 = smul.u32 8, %s16
      %p5438 = scmp.lt.s32.totalorder %s5437, 15
      %s5439 = scalar_select %p5438, %s5437, 15
      %s5440 = smul.addr %s5439, 8
      %s5441 = scalar_lea.vmem %s5, %s5440
      // Predicated region
      $region41: #{tpu_custom_call.1} parent=39 // pred_check
        %p5442 = pneg %p144
      $region42: #{tpu_custom_call.1} parent=39 // pred_check_branch
        %5444 = sbr.rel (%p5442) target = $region44
      $region43: #{tpu_custom_call.1} parent=39 // pred_region
        %s5445 = smul.u32 8, %s16
      $region44: #{tpu_custom_call.1} parent=39 // pred_fallthru
        _
    $region40: #{tpu_custom_call.1} parent=5 // pred_fallthru
      _
    %p5446 = scmp.le.s32.totalorder 2, %s11
    // Predicated region
    $region45: #{tpu_custom_call.1} parent=5 // pred_check
      %p5447 = pneg %p5446
    $region46: #{tpu_custom_call.1} parent=5 // pred_check_branch
      %5449 = sbr.rel (%p5447) target = $region48
    $region47: #{tpu_custom_call.1} parent=5 // pred_region
      %s5450 = ssub.s32 %s11, 2
      // Predicated region
      $region49: #{tpu_custom_call.1} parent=47 // pred_check
        %p5451 = pneg %p150
      $region50: #{tpu_custom_call.1} parent=47 // pred_check_branch
        %5453 = sbr.rel (%p5451) target = $region52
      $region51: #{tpu_custom_call.1} parent=47 // pred_region
        %s5454 = smul.u32 8, %s17
        %p5455 = scmp.lt.s32.totalorder %s5454, 15
        %s5456 = scalar_select %p5455, %s5454, 15
        %s5457 = smul.addr %s5456, 8
        %s5458 = scalar_lea.vmem %s5, %s5457
      $region52: #{tpu_custom_call.1} parent=47 // pred_fallthru
        _
    $region48: #{tpu_custom_call.1} parent=5 // pred_fallthru
      _
  $region6: #{tpu_custom_call.1} parent=0 // loop_footer
    %s15 = sadd.s32 1, %s11
  $region7: #{tpu_custom_call.1} parent=0 // loop_footer_branch
    %10 = sbr.rel target = $region3
  $region8: #{tpu_custom_call.1} parent=0 // loop_exit
    _

</llo_original>
